<compile_context>
chip_gen: v7x
topology: tpu7x:2x2x1
jax: 0.10.0
libtpu: 0.0.40
codegen_flags: <defaults>
</compile_context>

<pallas_src>
import math

import jax
import jax.numpy as jnp
from jax.experimental import pallas as pl
from jax.experimental.pallas import tpu as pltpu

# ----- small synthetic config (mirrors the const.Config fields the module uses) -----
BATCH_SIZE = 2        # config.batch_size
HIDDEN = 32           # config.decoder_num_units
EMB = 32              # config.embedding_dim
MAXLEN = 8            # config.max_sentence_length  (encoder length S)
DECODELEN = 8         # config.decoder_output_max_length
EVENTLEN = 4          # config.event_length
EVENT_NUMBER = 5      # config.event_number
ENTITY_SIZE = 7       # config.entity_size
FUSE_DIM = 100        # self.fuse output width
CELL_NAME = "gru"     # config.cell_name  ('gru' branch of the reference module)

GRU_IN = EMB + 2 * HIDDEN                   # 96  = [emb | context | h]
GRU_OUT = 4 * HIDDEN                        # 128 = [r | z | gi_n | gh_n]
NHEAD = EVENT_NUMBER + 1 + ENTITY_SIZE      # 13  = [predict | eos | entity_tag]
HEAD_W = NHEAD + FUSE_DIM + 1               # 114 = [heads | copy a_part | next dec_score]


def _align8(x):
    return (x + 7) & ~7


# ----- packed parameter slab: row offsets (8-aligned), 128 lanes wide -----
R_GRUW = 0                                    # (96, 128) fused combine+GRU weight
R_HEADW = _align8(R_GRUW + GRU_IN)            # (64, 114) fused head weight
R_FE = _align8(R_HEADW + 2 * HIDDEN)          # (H, 100)  fuse weight, 'encoder' half
R_EVT = _align8(R_FE + HIDDEN)                # (NEV+1, E) event_embedding table
R_TRANS = _align8(R_EVT + EVENT_NUMBER + 1)   # (T, T)    CRF transitions
R_AWD = _align8(R_TRANS + ENTITY_SIZE)        # (1, H)    attn weight, decoder half
R_AWE = R_AWD + 8                             # (1, H)    attn weight, encoder half
R_SOS = R_AWE + 8                             # (1, E)    sos embedding row
R_BGRU = R_SOS + 8                            # (1, 128)  fused GRU bias
R_BHEAD = R_BGRU + 8                          # (1, 114)  fused head bias
R_FB = R_BHEAD + 8                            # (1, 100)  fuse bias
R_CW = R_FB + 8                               # (1, 100)  do_copy_linear weight
R_SC = R_CW + 8                               # row of scalars: [attn_b, copy_b]
SLAB_ROWS = _align8(R_SC + 1)
SLAB_LANES = 128

# ----- packed per-step output slab: lane offsets -----
L_PRED = 0                                    # (NEV+1) predict log-softmax
L_COPY = L_PRED + (EVENT_NUMBER + 1)          # (S+1)   copy log-softmax
L_TAG = L_COPY + (MAXLEN + 1)                 # (T)     entity-tag logits
L_BPTR = L_TAG + ENTITY_SIZE                  # (T)     Viterbi backpointers (f32)
L_FV = L_BPTR + ENTITY_SIZE                   # (T)     Viterbi forward-var after step
L_ACT = L_FV + ENTITY_SIZE                    # (1)     argmax action (boundary steps)
PACK_LANES = 128


def _fused_decoder_kernel(slab_ref, enc_ref, h_ref, out_ref):
    f32 = jnp.float32
    B, S, H = enc_ref.shape
    E = EMB
    T = ENTITY_SIZE
    NEV = EVENT_NUMBER
    F = FUSE_DIM

    def mm(a, b):
        # TODO(synk): if exact f32 parity with the PyTorch reference is needed,
        # switch these dots to a HIGHEST-precision (multi-pass) matmul.
        return jnp.dot(a, b, preferred_element_type=f32)

    def selu(v):
        alpha = 1.6732632423543772
        scale = 1.0507009873554805
        return scale * jnp.where(v > 0, v, alpha * (jnp.exp(v) - 1.0))

    def log_softmax(v):
        m = jnp.max(v, axis=1, keepdims=True)
        return v - (jnp.log(jnp.sum(jnp.exp(v - m), axis=1, keepdims=True)) + m)

    # ---- prologue-only parameters ----
    w_fe = slab_ref[R_FE:R_FE + H, 0:F]                      # (H, 100)
    fuse_b = slab_ref[R_FB:R_FB + 1, 0:F]                    # (1, 100)
    attn_wd = slab_ref[R_AWD:R_AWD + 1, 0:H]                 # (1, H)
    attn_we = slab_ref[R_AWE:R_AWE + 1, 0:H]                 # (1, H)
    sos_row = slab_ref[R_SOS:R_SOS + 1, 0:E]                 # (1, E)
    attn_b = slab_ref[R_SC:R_SC + 1, 0:1]                    # (1, 1)

    enc = enc_ref[...]                                       # (B, S, H)
    h = h_ref[...]                                           # (B, H)  GRU hidden

    # ---- step-invariant encoder work (hoisted out of the decode loop) ----
    # attention bias folded in here once instead of per step.
    enc_score = jnp.sum(enc * attn_we[None, :, :], axis=2) + attn_b                 # (B, S)
    s_enc = selu(enc)                                                               # (B, S, H)
    b_part = (mm(s_enc.reshape(B * S, H), w_fe).reshape(B, S, F)
              + fuse_b[None, :, :])                                                 # (B, S, 100)

    # step-0 attention decoder score seeded from h0; later steps get it for free
    # as the extra column of the fused head matmul.
    dec_score = jnp.sum(h * attn_wd, axis=1, keepdims=True)                         # (B, 1)

    # ---- initial decoder input / Viterbi state ----
    emb = jnp.broadcast_to(sos_row, (B, E))                                         # sos embedding
    bidx = jax.lax.broadcasted_iota(jnp.int32, (B, T), 0).astype(f32)
    # replicates the original `init_vvars[0][:][0] = 0.0`: zeroes the whole
    # batch-0 row (all T tags), which is exactly what the PyTorch indexing does.
    fv_init = jnp.where(bidx == 0.0, 0.0, -10000.0).astype(f32)
    fv = fv_init

    ids_pred = jax.lax.broadcasted_iota(jnp.int32, (B, NEV + 1), 1).astype(f32)
    ids_prev = jax.lax.broadcasted_iota(jnp.int32, (B, T, T), 2).astype(f32)

    CHUNK = EVENTLEN                          # 4 steps -> 8 rows -> one full (8,128) tile
    pad = jnp.zeros((CHUNK * B, PACK_LANES - (L_ACT + 1)), f32)
    pred_l, copy_l, tag_l, bptr_l, fv_l, act_l = [], [], [], [], [], []

    for t in range(DECODELEN):
        # per-step weight loads stay inside the unrolled loop body (cheap VMEM
        # re-loads; keeps their live ranges short -> less vreg pressure).
        w_gru = slab_ref[R_GRUW:R_GRUW + GRU_IN, 0:GRU_OUT]          # (96, 128)
        b_gru = slab_ref[R_BGRU:R_BGRU + 1, 0:GRU_OUT]               # (1, 128)
        w_head = slab_ref[R_HEADW:R_HEADW + 2 * H, 0:HEAD_W]         # (64, 114)
        b_head = slab_ref[R_BHEAD:R_BHEAD + 1, 0:HEAD_W]             # (1, 114)
        copy_w = slab_ref[R_CW:R_CW + 1, 0:F]                        # (1, 100)
        copy_b = slab_ref[R_SC:R_SC + 1, 1:2]                        # (1, 1)

        # --- calc_context: attention over encoder outputs (softmax across S) ---
        scores = enc_score + dec_score                               # (B, S)
        scores = scores - jnp.max(scores, axis=1, keepdims=True)
        ex = jnp.exp(scores)
        inv = pl.reciprocal(jnp.sum(ex, axis=1, keepdims=True), approx=True)
        aw = ex * inv                                                # (B, S)
        context = jnp.sum(aw[:, :, None] * enc, axis=1)              # (B, H)

        # --- fused combine_inputs + GRU: ONE (B,96)@(96,128) matmul ---
        # cols 0:2H = r/z pre-acts (x and h parts already summed),
        # cols 2H:3H = gi_n, cols 3H:4H = gh_n.
        g = mm(jnp.concatenate([emb, context, h], axis=1), w_gru) + b_gru
        r = jax.nn.sigmoid(g[:, 0:H])
        z = jax.nn.sigmoid(g[:, H:2 * H])
        n = jnp.tanh(g[:, 2 * H:3 * H] + r * g[:, 3 * H:4 * H])
        h = (1.0 - z) * n + z * h
        out = h                                                      # GRU output

        # --- fused heads: [predict|eos|tag | copy a_part | next dec_score] ---
        head = mm(jnp.concatenate([out, selu(out)], axis=1), w_head) + b_head   # (B, 114)
        pred_eos = head[:, 0:NEV + 1]                                # (B, 6)
        eos = head[:, NEV:NEV + 1]                                   # (B, 1)
        tag = head[:, NEV + 1:NHEAD]                                 # (B, T)
        a_part = head[:, NHEAD:NHEAD + F]                            # (B, 100)
        dec_score = head[:, NHEAD + F:NHEAD + F + 1]                 # (B, 1) for NEXT step

        pred_log = log_softmax(pred_eos)

        # --- do_copy head (encoder half precomputed in the prologue) ---
        fused = selu(a_part[:, None, :] + b_part)                    # (B, S, 100)
        copy_s = jnp.sum(fused * copy_w[None, :, :], axis=2) + copy_b
        copy_log = log_softmax(jnp.concatenate([copy_s, eos], axis=1))   # (B, S+1)

        # --- inter-step logic: argmax / event embedding / Viterbi recursion ---
        if t % EVENTLEN == 0:
            event_tab = slab_ref[R_EVT:R_EVT + NEV + 1, 0:E]         # (NEV+1, E)
            m = jnp.max(pred_log, axis=1, keepdims=True)
            amax = jnp.min(jnp.where(pred_log == m, ids_pred, float(NEV + 1)),
                           axis=1, keepdims=True)                    # (B, 1) first argmax
            # event-embedding gather as a VPU select over the 6 table rows
            emb = jnp.zeros((B, E), f32)
            for j in range(NEV + 1):
                emb = emb + jnp.where(amax == float(j), 1.0, 0.0) * event_tab[j:j + 1, :]
            action = amax
            bptr_f = jnp.zeros((B, T), f32)
            fv = fv_init                                             # reset forward var
        else:
            trans = slab_ref[R_TRANS:R_TRANS + T, 0:T]               # (T, T)
            ntv = fv[:, None, :] + trans[None, :, :]                 # (B, T, T)
            vmax = jnp.max(ntv, axis=2)                              # (B, T)
            bptr_f = jnp.min(jnp.where(ntv == vmax[:, :, None], ids_prev, float(T)),
                             axis=2)                                 # (B, T) argmax
            fv = vmax + tag
            action = jnp.zeros((B, 1), f32)

        pred_l.append(pred_log); copy_l.append(copy_log); tag_l.append(tag)
        bptr_l.append(bptr_f); fv_l.append(fv); act_l.append(action)

        # --- deferred output packing: flush every CHUNK steps as ONE full,
        #     unmasked (8,128) tile store (no read-modify-write) ---
        if (t + 1) % CHUNK == 0:
            rows = jnp.concatenate(
                [jnp.concatenate(pred_l, axis=0),
                 jnp.concatenate(copy_l, axis=0),
                 jnp.concatenate(tag_l, axis=0),
                 jnp.concatenate(bptr_l, axis=0),
                 jnp.concatenate(fv_l, axis=0),
                 jnp.concatenate(act_l, axis=0),
                 pad], axis=1)                                       # (CHUNK*B, 128)
            base = (t + 1 - CHUNK) * B
            out_ref[base:base + CHUNK * B, :] = rows
            pred_l, copy_l, tag_l, bptr_l, fv_l, act_l = [], [], [], [], [], []


def _decode_all(slab, enc, h0):
    """Run the fused decoder kernel; returns the packed (DECODELEN*B, 128) slab."""
    B = enc.shape[0]
    vmem = pl.BlockSpec(memory_space=pltpu.MemorySpace.VMEM)
    return pl.pallas_call(
        _fused_decoder_kernel,
        out_shape=jax.ShapeDtypeStruct((DECODELEN * B, PACK_LANES), jnp.float32),
        in_specs=[vmem, vmem, vmem],
        out_specs=vmem,
    )(slab, enc, h0)


def one_crf_forward(sentence, decoder_state, encoder_outputs, params):
    """OneCrfCCKSDecoder.forward (cell_name='gru')."""
    B = sentence.shape[0]
    T = ENTITY_SIZE
    trans = params["transitions"]
    h0 = decoder_state[0]                                     # (B, H) GRU hidden

    packed = _decode_all(params["slab"], encoder_outputs, h0)
    packed = packed.reshape(DECODELEN, B, PACK_LANES)

    # event-level predictions (steps 0, EVENTLEN, ...)
    pred_event_logits_list = packed[::EVENTLEN, :, L_PRED:L_PRED + EVENT_NUMBER + 1]

    # entity-tag logits; rows at event boundaries stay zero (as in the reference)
    tag_all = packed[:, :, L_TAG:L_TAG + T]
    step_is_tag = (jnp.arange(DECODELEN) % EVENTLEN != 0).astype(jnp.float32)
    pred_logits_list = tag_all * step_is_tag[:, None, None]

    # base action list: argmax actions at boundary steps, zeros elsewhere
    pred_action_list = packed[:, :, L_ACT]                     # (DECODELEN, B)

    # ---- Viterbi backtracking (vectorized over batch) for each completed chunk ----
    # TODO(synk): the original uses a data-dependent Python `break`; reproduced here
    # as a masked fixed-length walk over the stacked backpointers.
    for t_b in range(EVENTLEN, DECODELEN, EVENTLEN):
        fv_prev = packed[t_b - 1, :, L_FV:L_FV + T]            # forward var before reset
        terminal = fv_prev + trans[-1]                         # (B, T)
        best = jnp.argmax(terminal, axis=-1).astype(jnp.int32)

        rows_l = [jnp.full((B,), t_b - 1, jnp.int32)]
        vals_l = [best.astype(jnp.float32)]
        mask_l = [jnp.ones((B,), bool)]
        k = jnp.ones((B,), jnp.int32)
        stopped = jnp.zeros((B,), bool)
        for s in range(t_b - 1, t_b - EVENTLEN, -1):           # reversed(backpointers)
            bp = packed[s, :, L_BPTR:L_BPTR + T].astype(jnp.int32)     # (B, T)
            new_best = jnp.take_along_axis(bp, best[:, None], axis=1)[:, 0]
            cont = jnp.logical_and(jnp.logical_not(stopped), new_best != 0)
            k = jnp.where(cont, k + 1, k)
            rows_l.append(t_b - k)
            vals_l.append(new_best.astype(jnp.float32))
            mask_l.append(cont)
            best = jnp.where(cont, new_best, best)
            stopped = jnp.logical_or(stopped, new_best == 0)

        rows = jnp.stack(rows_l)                               # (EVENTLEN, B)
        vals = jnp.stack(vals_l)
        masks = jnp.stack(mask_l)
        oh = (rows[:, :, None] == jnp.arange(DECODELEN)[None, None, :]) & masks[:, :, None]
        upd_m = jnp.any(oh, axis=0)                            # (B, DECODELEN)
        upd_v = jnp.sum(jnp.where(oh, vals[:, :, None], 0.0), axis=0)
        pred_action_list = jnp.where(upd_m.T, upd_v.T, pred_action_list)

    return pred_action_list, pred_logits_list, pred_event_logits_list


def init_params(key):
    """Deterministic synthetic parameters matching the module's __init__ shapes,
    pre-fused (combine_inputs->GRU, heads+copy+attn column) and packed into one
    lane-dense VMEM slab for the fused kernel."""
    H, E, T, NEV, F = HIDDEN, EMB, ENTITY_SIZE, EVENT_NUMBER, FUSE_DIM
    keys = iter(jax.random.split(key, 32))

    def linear(out_f, in_f):
        bound = 1.0 / math.sqrt(in_f)
        w = jax.random.uniform(next(keys), (out_f, in_f), jnp.float32, -bound, bound)
        b = jax.random.uniform(next(keys), (out_f,), jnp.float32, -bound, bound)
        return w, b

    # embeddings actually used by forward (nn.Embedding default N(0,1))
    event_embedding = jax.random.normal(next(keys), (NEV + 1, E), jnp.float32)
    sos_embedding = jax.random.normal(next(keys), (1, E), jnp.float32)
    # note: word_embedding / entity_embedding exist in __init__ but are unused in forward.

    attn_w, attn_b = linear(1, 2 * H)          # self.attn
    comb_w, comb_b = linear(E, H + E)          # self.combine_inputs
    eos_w, eos_b = linear(1, H)                # self.do_eos
    pred_w, pred_b = linear(NEV, H)            # self.do_predict
    fuse_w, fuse_b = linear(F, 2 * H)          # self.fuse
    copy_w, copy_b = linear(1, F)              # self.do_copy_linear
    tag_w, tag_b = linear(T, H)                # self.do_entity_tag

    # GRU parameters (gate order r, z, n; init U(-1/sqrt(H), 1/sqrt(H)))
    gb = 1.0 / math.sqrt(H)
    w_ih = jax.random.uniform(next(keys), (3 * H, E), jnp.float32, -gb, gb)
    w_hh = jax.random.uniform(next(keys), (3 * H, H), jnp.float32, -gb, gb)
    b_ih = jax.random.uniform(next(keys), (3 * H,), jnp.float32, -gb, gb)
    b_hh = jax.random.uniform(next(keys), (3 * H,), jnp.float32, -gb, gb)

    trans = jax.random.normal(next(keys), (T, T), jnp.float32)
    trans = trans.at[0, :].set(-10000.0).at[:, -1].set(-10000.0)

    # ---- host-side fusions ----
    # fold combine_inputs into the GRU input matmul
    w_comb = comb_w.T                                         # (H+E, E), rows [emb | ctx]
    w_gi = w_ih.T                                             # (E, 3H)
    w_gh = w_hh.T                                             # (H, 3H)
    w_cg = w_comb @ w_gi                                      # (H+E, 3H)
    b_cg = comb_b @ w_gi + b_ih                               # (3H,)

    # one (E+2H, 4H) block-structured GRU weight; LHS order is [emb | ctx | h]
    w_gru_f = jnp.zeros((GRU_IN, GRU_OUT), jnp.float32)
    w_gru_f = w_gru_f.at[0:E + H, 0:2 * H].set(w_cg[:, 0:2 * H])
    w_gru_f = w_gru_f.at[E + H:, 0:2 * H].set(w_gh[:, 0:2 * H])
    w_gru_f = w_gru_f.at[0:E + H, 2 * H:3 * H].set(w_cg[:, 2 * H:3 * H])
    w_gru_f = w_gru_f.at[E + H:, 3 * H:4 * H].set(w_gh[:, 2 * H:3 * H])
    b_gru_f = jnp.concatenate([b_cg[:2 * H] + b_hh[:2 * H],
                               b_cg[2 * H:], b_hh[2 * H:]])   # (4H,)

    # merged head weight: columns [predict | eos | entity_tag]
    head_w = jnp.concatenate([pred_w.T, eos_w.T, tag_w.T], axis=1)       # (H, NHEAD)
    head_b = jnp.concatenate([pred_b, eos_b, tag_b], axis=0)             # (NHEAD,)

    # fused head: LHS [out | selu(out)], RHS block-diag + attn_wd column
    w_head_f = jnp.zeros((2 * H, HEAD_W), jnp.float32)
    w_head_f = w_head_f.at[0:H, 0:NHEAD].set(head_w)
    w_head_f = w_head_f.at[H:, NHEAD:NHEAD + F].set(fuse_w[:, :H].T)     # 'output' half
    w_head_f = w_head_f.at[0:H, NHEAD + F].set(attn_w[0, :H])            # next dec_score
    b_head_f = jnp.zeros((HEAD_W,), jnp.float32).at[0:NHEAD].set(head_b)

    # ---- build the packed parameter slab ----
    slab = jnp.zeros((SLAB_ROWS, SLAB_LANES), jnp.float32)
    slab = slab.at[R_GRUW:R_GRUW + GRU_IN, :GRU_OUT].set(w_gru_f)
    slab = slab.at[R_HEADW:R_HEADW + 2 * H, :HEAD_W].set(w_head_f)
    slab = slab.at[R_FE:R_FE + H, :F].set(fuse_w[:, H:].T)               # 'encoder' half
    slab = slab.at[R_EVT:R_EVT + NEV + 1, :E].set(event_embedding)
    slab = slab.at[R_TRANS:R_TRANS + T, :T].set(trans)
    slab = slab.at[R_AWD, :H].set(attn_w[0, :H])
    slab = slab.at[R_AWE, :H].set(attn_w[0, H:])
    slab = slab.at[R_SOS, :E].set(sos_embedding[0])
    slab = slab.at[R_BGRU, :GRU_OUT].set(b_gru_f)
    slab = slab.at[R_BHEAD, :HEAD_W].set(b_head_f)
    slab = slab.at[R_FB, :F].set(fuse_b)
    slab = slab.at[R_CW, :F].set(copy_w[0])
    slab = slab.at[R_SC, 0].set(attn_b[0])
    slab = slab.at[R_SC, 1].set(copy_b[0])

    return {"slab": slab, "transitions": trans}


if __name__ == "__main__":
    root = jax.random.PRNGKey(0)
    k_params, k_state, k_enc = jax.random.split(root, 3)

    params = init_params(k_params)
    sentence = jnp.zeros((BATCH_SIZE, MAXLEN), dtype=jnp.int32)  # only its batch dim is used
    decoder_state = 0.1 * jax.random.normal(k_state, (1, BATCH_SIZE, HIDDEN), jnp.float32)
    encoder_outputs = 0.1 * jax.random.normal(k_enc, (BATCH_SIZE, MAXLEN, HIDDEN), jnp.float32)

    fwd = jax.jit(one_crf_forward)
    pred_action, pred_logits, pred_event_logits = fwd(
        sentence, decoder_state, encoder_outputs, params)
    jax.block_until_ready((pred_action, pred_logits, pred_event_logits))

    assert pred_action.shape == (DECODELEN, BATCH_SIZE)
    assert pred_logits.shape == (DECODELEN, BATCH_SIZE, ENTITY_SIZE)
    assert pred_event_logits.shape == (DECODELEN // EVENTLEN, BATCH_SIZE, EVENT_NUMBER + 1)
    print("KERNEL_OK")
</pallas_src>

<mosaic_0001>
module attributes {stable_mosaic.version = 11 : i64} {
  func.func @_fused_decoder_kernel(%arg0: memref<272x128xf32, #tpu.memory_space<vmem>>, %arg1: memref<2x8x32xf32, #tpu.memory_space<vmem>>, %arg2: memref<2x32xf32, #tpu.memory_space<vmem>>, %arg3: memref<16x128xf32, #tpu.memory_space<vmem>>) attributes {dimension_semantics = [], scalar_prefetch = 0 : i64, scratch_operands = 0 : i64, tpu.core_type = #tpu.core_type<tc>} {
    %c160 = arith.constant 160 : index
    %c0 = arith.constant 0 : index
    %0 = vector.load %arg0[%c160, %c0] : memref<272x128xf32, #tpu.memory_space<vmem>>, vector<32x100xf32>
    %c248 = arith.constant 248 : index
    %c0_0 = arith.constant 0 : index
    %1 = vector.load %arg0[%c248, %c0_0] : memref<272x128xf32, #tpu.memory_space<vmem>>, vector<1x100xf32>
    %c208 = arith.constant 208 : index
    %c0_1 = arith.constant 0 : index
    %2 = vector.load %arg0[%c208, %c0_1] : memref<272x128xf32, #tpu.memory_space<vmem>>, vector<1x32xf32>
    %c216 = arith.constant 216 : index
    %c0_2 = arith.constant 0 : index
    %3 = vector.load %arg0[%c216, %c0_2] : memref<272x128xf32, #tpu.memory_space<vmem>>, vector<1x32xf32>
    %c224 = arith.constant 224 : index
    %c0_3 = arith.constant 0 : index
    %4 = vector.load %arg0[%c224, %c0_3] : memref<272x128xf32, #tpu.memory_space<vmem>>, vector<1x32xf32>
    %c264 = arith.constant 264 : index
    %c0_4 = arith.constant 0 : index
    %5 = vector.load %arg0[%c264, %c0_4] : memref<272x128xf32, #tpu.memory_space<vmem>>, vector<1x1xf32>
    %c0_5 = arith.constant 0 : index
    %c0_6 = arith.constant 0 : index
    %c0_7 = arith.constant 0 : index
    %6 = vector.load %arg1[%c0_5, %c0_6, %c0_7] : memref<2x8x32xf32, #tpu.memory_space<vmem>>, vector<2x8x32xf32>
    %c0_8 = arith.constant 0 : index
    %c0_9 = arith.constant 0 : index
    %7 = vector.load %arg2[%c0_8, %c0_9] : memref<2x32xf32, #tpu.memory_space<vmem>>, vector<2x32xf32>
    %8 = vector.shape_cast %3 : vector<1x32xf32> to vector<1x1x32xf32>
    %9 = vector.broadcast %8 : vector<1x1x32xf32> to vector<2x8x32xf32>
    %10 = arith.mulf %6, %9 : vector<2x8x32xf32>
    %cst = arith.constant dense<0.000000e+00> : vector<2x8xf32>
    %11 = vector.multi_reduction <add>, %10, %cst [2] : vector<2x8x32xf32> to vector<2x8xf32>
    %12 = vector.broadcast %5 : vector<1x1xf32> to vector<2x8xf32>
    %13 = arith.addf %11, %12 : vector<2x8xf32>
    %cst_10 = arith.constant 0.000000e+00 : f32
    %14 = vector.broadcast %cst_10 : f32 to vector<2x8x32xf32>
    %15 = arith.cmpf ogt, %6, %14 : vector<2x8x32xf32>
    %16 = math.exp %6 : vector<2x8x32xf32>
    %cst_11 = arith.constant 1.000000e+00 : f32
    %17 = vector.broadcast %cst_11 : f32 to vector<2x8x32xf32>
    %18 = arith.subf %16, %17 : vector<2x8x32xf32>
    %cst_12 = arith.constant 1.67326319 : f32
    %19 = vector.broadcast %cst_12 : f32 to vector<2x8x32xf32>
    %20 = arith.mulf %19, %18 : vector<2x8x32xf32>
    %21 = arith.select %15, %6, %20 : vector<2x8x32xi1>, vector<2x8x32xf32>
    %cst_13 = arith.constant 1.05070102 : f32
    %22 = vector.broadcast %cst_13 : f32 to vector<2x8x32xf32>
    %23 = arith.mulf %22, %21 : vector<2x8x32xf32>
    %24 = vector.shape_cast %23 : vector<2x8x32xf32> to vector<16x32xf32>
    %cst_14 = arith.constant dense<0.000000e+00> : vector<16x100xf32>
    %25 = tpu.matmul %24, %0, %cst_14 {dimension_numbers = #tpu.dot_dimension_numbers<[1], [0], [0], [1], [0, 0, 1, 1], [], []>} : vector<16x32xf32>, vector<32x100xf32>, vector<16x100xf32> -> vector<16x100xf32>
    %26 = vector.shape_cast %25 : vector<16x100xf32> to vector<2x8x100xf32>
    %27 = vector.shape_cast %1 : vector<1x100xf32> to vector<1x1x100xf32>
    %28 = vector.broadcast %27 : vector<1x1x100xf32> to vector<2x8x100xf32>
    %29 = arith.addf %26, %28 : vector<2x8x100xf32>
    %30 = vector.broadcast %2 : vector<1x32xf32> to vector<2x32xf32>
    %31 = arith.mulf %7, %30 : vector<2x32xf32>
    %cst_15 = arith.constant dense<0.000000e+00> : vector<2xf32>
    %32 = vector.multi_reduction <add>, %31, %cst_15 [1] : vector<2x32xf32> to vector<2xf32>
    %33 = vector.shape_cast %32 : vector<2xf32> to vector<2x1xf32>
    %34 = vector.shape_cast %4 : vector<1x32xf32> to vector<1x32xf32>
    %35 = vector.broadcast %34 : vector<1x32xf32> to vector<2x32xf32>
    %36 = tpu.iota {dimensions = array<i32: 0>} : vector<2x7xi32>
    %37 = arith.sitofp %36 : vector<2x7xi32> to vector<2x7xf32>
    %cst_16 = arith.constant 0.000000e+00 : f32
    %38 = vector.broadcast %cst_16 : f32 to vector<2x7xf32>
    %39 = arith.cmpf oeq, %37, %38 : vector<2x7xf32>
    %cst_17 = arith.constant 0.000000e+00 : f32
    %cst_18 = arith.constant -1.000000e+04 : f32
    %40 = vector.broadcast %cst_17 : f32 to vector<2x7xf32>
    %41 = vector.broadcast %cst_18 : f32 to vector<2x7xf32>
    %42 = arith.select %39, %40, %41 : vector<2x7xi1>, vector<2x7xf32>
    %43 = tpu.iota {dimensions = array<i32: 1>} : vector<2x6xi32>
    %44 = arith.sitofp %43 : vector<2x6xi32> to vector<2x6xf32>
    %45 = tpu.iota {dimensions = array<i32: 2>} : vector<2x7x7xi32>
    %46 = arith.sitofp %45 : vector<2x7x7xi32> to vector<2x7x7xf32>
    %cst_19 = arith.constant 0.000000e+00 : f32
    %47 = vector.broadcast %cst_19 : f32 to vector<8x91xf32>
    %c0_20 = arith.constant 0 : index
    %c0_21 = arith.constant 0 : index
    %48 = vector.load %arg0[%c0_20, %c0_21] : memref<272x128xf32, #tpu.memory_space<vmem>>, vector<96x128xf32>
    %c232 = arith.constant 232 : index
    %c0_22 = arith.constant 0 : index
    %49 = vector.load %arg0[%c232, %c0_22] : memref<272x128xf32, #tpu.memory_space<vmem>>, vector<1x128xf32>
    %c96 = arith.constant 96 : index
    %c0_23 = arith.constant 0 : index
    %50 = vector.load %arg0[%c96, %c0_23] : memref<272x128xf32, #tpu.memory_space<vmem>>, vector<64x114xf32>
    %c240 = arith.constant 240 : index
    %c0_24 = arith.constant 0 : index
    %51 = vector.load %arg0[%c240, %c0_24] : memref<272x128xf32, #tpu.memory_space<vmem>>, vector<1x114xf32>
    %c256 = arith.constant 256 : index
    %c0_25 = arith.constant 0 : index
    %52 = vector.load %arg0[%c256, %c0_25] : memref<272x128xf32, #tpu.memory_space<vmem>>, vector<1x100xf32>
    %c264_26 = arith.constant 264 : index
    %c1 = arith.constant 1 : index
    %53 = vector.load %arg0[%c264_26, %c1] : memref<272x128xf32, #tpu.memory_space<vmem>>, vector<1x1xf32>
    %54 = vector.broadcast %33 : vector<2x1xf32> to vector<2x8xf32>
    %55 = arith.addf %13, %54 : vector<2x8xf32>
    %cst_27 = arith.constant dense<0xFF800000> : vector<2xf32>
    %56 = vector.multi_reduction <maximumf>, %55, %cst_27 [1] : vector<2x8xf32> to vector<2xf32>
    %57 = vector.shape_cast %56 : vector<2xf32> to vector<2x1xf32>
    %58 = vector.broadcast %57 : vector<2x1xf32> to vector<2x8xf32>
    %59 = arith.subf %55, %58 : vector<2x8xf32>
    %60 = math.exp %59 : vector<2x8xf32>
    %cst_28 = arith.constant dense<0.000000e+00> : vector<2xf32>
    %61 = vector.multi_reduction <add>, %60, %cst_28 [1] : vector<2x8xf32> to vector<2xf32>
    %62 = vector.shape_cast %61 : vector<2xf32> to vector<2x1xf32>
    %63 = tpu.reciprocal %62 {approx = true} : vector<2x1xf32> -> vector<2x1xf32>
    %64 = vector.broadcast %63 : vector<2x1xf32> to vector<2x8xf32>
    %65 = arith.mulf %60, %64 : vector<2x8xf32>
    %66 = vector.shape_cast %65 : vector<2x8xf32> to vector<2x8x1xf32>
    %67 = vector.broadcast %66 : vector<2x8x1xf32> to vector<2x8x32xf32>
    %68 = arith.mulf %67, %6 : vector<2x8x32xf32>
    %cst_29 = arith.constant dense<0.000000e+00> : vector<2x32xf32>
    %69 = vector.multi_reduction <add>, %68, %cst_29 [1] : vector<2x8x32xf32> to vector<2x32xf32>
    %70 = tpu.concatenate %35, %69, %7 in 1 : vector<2x32xf32>, vector<2x32xf32>, vector<2x32xf32> -> vector<2x96xf32>
    %cst_30 = arith.constant dense<0.000000e+00> : vector<2x128xf32>
    %71 = tpu.matmul %70, %48, %cst_30 {dimension_numbers = #tpu.dot_dimension_numbers<[1], [0], [0], [1], [0, 0, 1, 1], [], []>} : vector<2x96xf32>, vector<96x128xf32>, vector<2x128xf32> -> vector<2x128xf32>
    %72 = vector.broadcast %49 : vector<1x128xf32> to vector<2x128xf32>
    %73 = arith.addf %71, %72 : vector<2x128xf32>
    %74 = vector.extract_strided_slice %73 {offsets = [0, 0], sizes = [2, 32], strides = [1, 1]} : vector<2x128xf32> to vector<2x32xf32>
    %75 = arith.negf %74 : vector<2x32xf32>
    %76 = math.exp %75 : vector<2x32xf32>
    %cst_31 = arith.constant 1.000000e+00 : f32
    %77 = vector.broadcast %cst_31 : f32 to vector<2x32xf32>
    %78 = arith.addf %77, %76 : vector<2x32xf32>
    %79 = arith.divf %77, %78 : vector<2x32xf32>
    %80 = vector.extract_strided_slice %73 {offsets = [0, 32], sizes = [2, 32], strides = [1, 1]} : vector<2x128xf32> to vector<2x32xf32>
    %81 = arith.negf %80 : vector<2x32xf32>
    %82 = math.exp %81 : vector<2x32xf32>
    %cst_32 = arith.constant 1.000000e+00 : f32
    %83 = vector.broadcast %cst_32 : f32 to vector<2x32xf32>
    %84 = arith.addf %83, %82 : vector<2x32xf32>
    %85 = arith.divf %83, %84 : vector<2x32xf32>
    %86 = vector.extract_strided_slice %73 {offsets = [0, 64], sizes = [2, 32], strides = [1, 1]} : vector<2x128xf32> to vector<2x32xf32>
    %87 = vector.extract_strided_slice %73 {offsets = [0, 96], sizes = [2, 32], strides = [1, 1]} : vector<2x128xf32> to vector<2x32xf32>
    %88 = arith.mulf %79, %87 : vector<2x32xf32>
    %89 = arith.addf %86, %88 : vector<2x32xf32>
    %90 = math.tanh %89 : vector<2x32xf32>
    %cst_33 = arith.constant 1.000000e+00 : f32
    %91 = vector.broadcast %cst_33 : f32 to vector<2x32xf32>
    %92 = arith.subf %91, %85 : vector<2x32xf32>
    %93 = arith.mulf %92, %90 : vector<2x32xf32>
    %94 = arith.mulf %85, %7 : vector<2x32xf32>
    %95 = arith.addf %93, %94 : vector<2x32xf32>
    %cst_34 = arith.constant 0.000000e+00 : f32
    %96 = vector.broadcast %cst_34 : f32 to vector<2x32xf32>
    %97 = arith.cmpf ogt, %95, %96 : vector<2x32xf32>
    %98 = math.exp %95 : vector<2x32xf32>
    %cst_35 = arith.constant 1.000000e+00 : f32
    %99 = vector.broadcast %cst_35 : f32 to vector<2x32xf32>
    %100 = arith.subf %98, %99 : vector<2x32xf32>
    %cst_36 = arith.constant 1.67326319 : f32
    %101 = vector.broadcast %cst_36 : f32 to vector<2x32xf32>
    %102 = arith.mulf %101, %100 : vector<2x32xf32>
    %103 = arith.select %97, %95, %102 : vector<2x32xi1>, vector<2x32xf32>
    %cst_37 = arith.constant 1.05070102 : f32
    %104 = vector.broadcast %cst_37 : f32 to vector<2x32xf32>
    %105 = arith.mulf %104, %103 : vector<2x32xf32>
    %106 = tpu.concatenate %95, %105 in 1 : vector<2x32xf32>, vector<2x32xf32> -> vector<2x64xf32>
    %cst_38 = arith.constant dense<0.000000e+00> : vector<2x114xf32>
    %107 = tpu.matmul %106, %50, %cst_38 {dimension_numbers = #tpu.dot_dimension_numbers<[1], [0], [0], [1], [0, 0, 1, 1], [], []>} : vector<2x64xf32>, vector<64x114xf32>, vector<2x114xf32> -> vector<2x114xf32>
    %108 = vector.broadcast %51 : vector<1x114xf32> to vector<2x114xf32>
    %109 = arith.addf %107, %108 : vector<2x114xf32>
    %110 = vector.extract_strided_slice %109 {offsets = [0, 0], sizes = [2, 6], strides = [1, 1]} : vector<2x114xf32> to vector<2x6xf32>
    %111 = vector.extract_strided_slice %109 {offsets = [0, 5], sizes = [2, 1], strides = [1, 1]} : vector<2x114xf32> to vector<2x1xf32>
    %112 = vector.extract_strided_slice %109 {offsets = [0, 6], sizes = [2, 7], strides = [1, 1]} : vector<2x114xf32> to vector<2x7xf32>
    %113 = vector.extract_strided_slice %109 {offsets = [0, 13], sizes = [2, 100], strides = [1, 1]} : vector<2x114xf32> to vector<2x100xf32>
    %114 = vector.extract_strided_slice %109 {offsets = [0, 113], sizes = [2, 1], strides = [1, 1]} : vector<2x114xf32> to vector<2x1xf32>
    %cst_39 = arith.constant dense<0xFF800000> : vector<2xf32>
    %115 = vector.multi_reduction <maximumf>, %110, %cst_39 [1] : vector<2x6xf32> to vector<2xf32>
    %116 = vector.shape_cast %115 : vector<2xf32> to vector<2x1xf32>
    %117 = vector.broadcast %116 : vector<2x1xf32> to vector<2x6xf32>
    %118 = arith.subf %110, %117 : vector<2x6xf32>
    %119 = math.exp %118 : vector<2x6xf32>
    %cst_40 = arith.constant dense<0.000000e+00> : vector<2xf32>
    %120 = vector.multi_reduction <add>, %119, %cst_40 [1] : vector<2x6xf32> to vector<2xf32>
    %121 = vector.shape_cast %120 : vector<2xf32> to vector<2x1xf32>
    %122 = math.log %121 : vector<2x1xf32>
    %123 = arith.addf %122, %116 : vector<2x1xf32>
    %124 = vector.broadcast %123 : vector<2x1xf32> to vector<2x6xf32>
    %125 = arith.subf %110, %124 : vector<2x6xf32>
    %126 = vector.shape_cast %113 : vector<2x100xf32> to vector<2x1x100xf32>
    %127 = vector.broadcast %126 : vector<2x1x100xf32> to vector<2x8x100xf32>
    %128 = arith.addf %127, %29 : vector<2x8x100xf32>
    %cst_41 = arith.constant 0.000000e+00 : f32
    %129 = vector.broadcast %cst_41 : f32 to vector<2x8x100xf32>
    %130 = arith.cmpf ogt, %128, %129 : vector<2x8x100xf32>
    %131 = math.exp %128 : vector<2x8x100xf32>
    %cst_42 = arith.constant 1.000000e+00 : f32
    %132 = vector.broadcast %cst_42 : f32 to vector<2x8x100xf32>
    %133 = arith.subf %131, %132 : vector<2x8x100xf32>
    %cst_43 = arith.constant 1.67326319 : f32
    %134 = vector.broadcast %cst_43 : f32 to vector<2x8x100xf32>
    %135 = arith.mulf %134, %133 : vector<2x8x100xf32>
    %136 = arith.select %130, %128, %135 : vector<2x8x100xi1>, vector<2x8x100xf32>
    %cst_44 = arith.constant 1.05070102 : f32
    %137 = vector.broadcast %cst_44 : f32 to vector<2x8x100xf32>
    %138 = arith.mulf %137, %136 : vector<2x8x100xf32>
    %139 = vector.shape_cast %52 : vector<1x100xf32> to vector<1x1x100xf32>
    %140 = vector.broadcast %139 : vector<1x1x100xf32> to vector<2x8x100xf32>
    %141 = arith.mulf %138, %140 : vector<2x8x100xf32>
    %cst_45 = arith.constant dense<0.000000e+00> : vector<2x8xf32>
    %142 = vector.multi_reduction <add>, %141, %cst_45 [2] : vector<2x8x100xf32> to vector<2x8xf32>
    %143 = vector.broadcast %53 : vector<1x1xf32> to vector<2x8xf32>
    %144 = arith.addf %142, %143 : vector<2x8xf32>
    %145 = tpu.concatenate %144, %111 in 1 : vector<2x8xf32>, vector<2x1xf32> -> vector<2x9xf32>
    %cst_46 = arith.constant dense<0xFF800000> : vector<2xf32>
    %146 = vector.multi_reduction <maximumf>, %145, %cst_46 [1] : vector<2x9xf32> to vector<2xf32>
    %147 = vector.shape_cast %146 : vector<2xf32> to vector<2x1xf32>
    %148 = vector.broadcast %147 : vector<2x1xf32> to vector<2x9xf32>
    %149 = arith.subf %145, %148 : vector<2x9xf32>
    %150 = math.exp %149 : vector<2x9xf32>
    %cst_47 = arith.constant dense<0.000000e+00> : vector<2xf32>
    %151 = vector.multi_reduction <add>, %150, %cst_47 [1] : vector<2x9xf32> to vector<2xf32>
    %152 = vector.shape_cast %151 : vector<2xf32> to vector<2x1xf32>
    %153 = math.log %152 : vector<2x1xf32>
    %154 = arith.addf %153, %147 : vector<2x1xf32>
    %155 = vector.broadcast %154 : vector<2x1xf32> to vector<2x9xf32>
    %156 = arith.subf %145, %155 : vector<2x9xf32>
    %c192 = arith.constant 192 : index
    %c0_48 = arith.constant 0 : index
    %157 = vector.load %arg0[%c192, %c0_48] : memref<272x128xf32, #tpu.memory_space<vmem>>, vector<6x32xf32>
    %cst_49 = arith.constant dense<0xFF800000> : vector<2xf32>
    %158 = vector.multi_reduction <maximumf>, %125, %cst_49 [1] : vector<2x6xf32> to vector<2xf32>
    %159 = vector.shape_cast %158 : vector<2xf32> to vector<2x1xf32>
    %160 = vector.broadcast %159 : vector<2x1xf32> to vector<2x6xf32>
    %161 = arith.cmpf oeq, %125, %160 : vector<2x6xf32>
    %cst_50 = arith.constant 6.000000e+00 : f32
    %162 = vector.broadcast %cst_50 : f32 to vector<2x6xf32>
    %163 = arith.select %161, %44, %162 : vector<2x6xi1>, vector<2x6xf32>
    %cst_51 = arith.constant dense<0x7F800000> : vector<2xf32>
    %164 = vector.multi_reduction <minimumf>, %163, %cst_51 [1] : vector<2x6xf32> to vector<2xf32>
    %165 = vector.shape_cast %164 : vector<2xf32> to vector<2x1xf32>
    %cst_52 = arith.constant 0.000000e+00 : f32
    %166 = vector.broadcast %cst_52 : f32 to vector<2x32xf32>
    %cst_53 = arith.constant 0.000000e+00 : f32
    %167 = vector.broadcast %cst_53 : f32 to vector<2x1xf32>
    %168 = arith.cmpf oeq, %165, %167 : vector<2x1xf32>
    %cst_54 = arith.constant 1.000000e+00 : f32
    %cst_55 = arith.constant 0.000000e+00 : f32
    %169 = vector.broadcast %cst_54 : f32 to vector<2x1xf32>
    %170 = vector.broadcast %cst_55 : f32 to vector<2x1xf32>
    %171 = arith.select %168, %169, %170 : vector<2x1xi1>, vector<2x1xf32>
    %172 = vector.extract_strided_slice %157 {offsets = [0, 0], sizes = [1, 32], strides = [1, 1]} : vector<6x32xf32> to vector<1x32xf32>
    %173 = vector.broadcast %171 : vector<2x1xf32> to vector<2x32xf32>
    %174 = vector.broadcast %172 : vector<1x32xf32> to vector<2x32xf32>
    %175 = arith.mulf %173, %174 : vector<2x32xf32>
    %176 = arith.addf %166, %175 : vector<2x32xf32>
    %cst_56 = arith.constant 1.000000e+00 : f32
    %177 = vector.broadcast %cst_56 : f32 to vector<2x1xf32>
    %178 = arith.cmpf oeq, %165, %177 : vector<2x1xf32>
    %cst_57 = arith.constant 1.000000e+00 : f32
    %cst_58 = arith.constant 0.000000e+00 : f32
    %179 = vector.broadcast %cst_57 : f32 to vector<2x1xf32>
    %180 = vector.broadcast %cst_58 : f32 to vector<2x1xf32>
    %181 = arith.select %178, %179, %180 : vector<2x1xi1>, vector<2x1xf32>
    %182 = vector.extract_strided_slice %157 {offsets = [1, 0], sizes = [1, 32], strides = [1, 1]} : vector<6x32xf32> to vector<1x32xf32>
    %183 = vector.broadcast %181 : vector<2x1xf32> to vector<2x32xf32>
    %184 = vector.broadcast %182 : vector<1x32xf32> to vector<2x32xf32>
    %185 = arith.mulf %183, %184 : vector<2x32xf32>
    %186 = arith.addf %176, %185 : vector<2x32xf32>
    %cst_59 = arith.constant 2.000000e+00 : f32
    %187 = vector.broadcast %cst_59 : f32 to vector<2x1xf32>
    %188 = arith.cmpf oeq, %165, %187 : vector<2x1xf32>
    %cst_60 = arith.constant 1.000000e+00 : f32
    %cst_61 = arith.constant 0.000000e+00 : f32
    %189 = vector.broadcast %cst_60 : f32 to vector<2x1xf32>
    %190 = vector.broadcast %cst_61 : f32 to vector<2x1xf32>
    %191 = arith.select %188, %189, %190 : vector<2x1xi1>, vector<2x1xf32>
    %192 = vector.extract_strided_slice %157 {offsets = [2, 0], sizes = [1, 32], strides = [1, 1]} : vector<6x32xf32> to vector<1x32xf32>
    %193 = vector.broadcast %191 : vector<2x1xf32> to vector<2x32xf32>
    %194 = vector.broadcast %192 : vector<1x32xf32> to vector<2x32xf32>
    %195 = arith.mulf %193, %194 : vector<2x32xf32>
    %196 = arith.addf %186, %195 : vector<2x32xf32>
    %cst_62 = arith.constant 3.000000e+00 : f32
    %197 = vector.broadcast %cst_62 : f32 to vector<2x1xf32>
    %198 = arith.cmpf oeq, %165, %197 : vector<2x1xf32>
    %cst_63 = arith.constant 1.000000e+00 : f32
    %cst_64 = arith.constant 0.000000e+00 : f32
    %199 = vector.broadcast %cst_63 : f32 to vector<2x1xf32>
    %200 = vector.broadcast %cst_64 : f32 to vector<2x1xf32>
    %201 = arith.select %198, %199, %200 : vector<2x1xi1>, vector<2x1xf32>
    %202 = vector.extract_strided_slice %157 {offsets = [3, 0], sizes = [1, 32], strides = [1, 1]} : vector<6x32xf32> to vector<1x32xf32>
    %203 = vector.broadcast %201 : vector<2x1xf32> to vector<2x32xf32>
    %204 = vector.broadcast %202 : vector<1x32xf32> to vector<2x32xf32>
    %205 = arith.mulf %203, %204 : vector<2x32xf32>
    %206 = arith.addf %196, %205 : vector<2x32xf32>
    %cst_65 = arith.constant 4.000000e+00 : f32
    %207 = vector.broadcast %cst_65 : f32 to vector<2x1xf32>
    %208 = arith.cmpf oeq, %165, %207 : vector<2x1xf32>
    %cst_66 = arith.constant 1.000000e+00 : f32
    %cst_67 = arith.constant 0.000000e+00 : f32
    %209 = vector.broadcast %cst_66 : f32 to vector<2x1xf32>
    %210 = vector.broadcast %cst_67 : f32 to vector<2x1xf32>
    %211 = arith.select %208, %209, %210 : vector<2x1xi1>, vector<2x1xf32>
    %212 = vector.extract_strided_slice %157 {offsets = [4, 0], sizes = [1, 32], strides = [1, 1]} : vector<6x32xf32> to vector<1x32xf32>
    %213 = vector.broadcast %211 : vector<2x1xf32> to vector<2x32xf32>
    %214 = vector.broadcast %212 : vector<1x32xf32> to vector<2x32xf32>
    %215 = arith.mulf %213, %214 : vector<2x32xf32>
    %216 = arith.addf %206, %215 : vector<2x32xf32>
    %cst_68 = arith.constant 5.000000e+00 : f32
    %217 = vector.broadcast %cst_68 : f32 to vector<2x1xf32>
    %218 = arith.cmpf oeq, %165, %217 : vector<2x1xf32>
    %cst_69 = arith.constant 1.000000e+00 : f32
    %cst_70 = arith.constant 0.000000e+00 : f32
    %219 = vector.broadcast %cst_69 : f32 to vector<2x1xf32>
    %220 = vector.broadcast %cst_70 : f32 to vector<2x1xf32>
    %221 = arith.select %218, %219, %220 : vector<2x1xi1>, vector<2x1xf32>
    %222 = vector.extract_strided_slice %157 {offsets = [5, 0], sizes = [1, 32], strides = [1, 1]} : vector<6x32xf32> to vector<1x32xf32>
    %223 = vector.broadcast %221 : vector<2x1xf32> to vector<2x32xf32>
    %224 = vector.broadcast %222 : vector<1x32xf32> to vector<2x32xf32>
    %225 = arith.mulf %223, %224 : vector<2x32xf32>
    %226 = arith.addf %216, %225 : vector<2x32xf32>
    %cst_71 = arith.constant 0.000000e+00 : f32
    %227 = vector.broadcast %cst_71 : f32 to vector<2x7xf32>
    %c0_72 = arith.constant 0 : index
    %c0_73 = arith.constant 0 : index
    %228 = vector.load %arg0[%c0_72, %c0_73] : memref<272x128xf32, #tpu.memory_space<vmem>>, vector<96x128xf32>
    %c232_74 = arith.constant 232 : index
    %c0_75 = arith.constant 0 : index
    %229 = vector.load %arg0[%c232_74, %c0_75] : memref<272x128xf32, #tpu.memory_space<vmem>>, vector<1x128xf32>
    %c96_76 = arith.constant 96 : index
    %c0_77 = arith.constant 0 : index
    %230 = vector.load %arg0[%c96_76, %c0_77] : memref<272x128xf32, #tpu.memory_space<vmem>>, vector<64x114xf32>
    %c240_78 = arith.constant 240 : index
    %c0_79 = arith.constant 0 : index
    %231 = vector.load %arg0[%c240_78, %c0_79] : memref<272x128xf32, #tpu.memory_space<vmem>>, vector<1x114xf32>
    %c256_80 = arith.constant 256 : index
    %c0_81 = arith.constant 0 : index
    %232 = vector.load %arg0[%c256_80, %c0_81] : memref<272x128xf32, #tpu.memory_space<vmem>>, vector<1x100xf32>
    %c264_82 = arith.constant 264 : index
    %c1_83 = arith.constant 1 : index
    %233 = vector.load %arg0[%c264_82, %c1_83] : memref<272x128xf32, #tpu.memory_space<vmem>>, vector<1x1xf32>
    %234 = vector.broadcast %114 : vector<2x1xf32> to vector<2x8xf32>
    %235 = arith.addf %13, %234 : vector<2x8xf32>
    %cst_84 = arith.constant dense<0xFF800000> : vector<2xf32>
    %236 = vector.multi_reduction <maximumf>, %235, %cst_84 [1] : vector<2x8xf32> to vector<2xf32>
    %237 = vector.shape_cast %236 : vector<2xf32> to vector<2x1xf32>
    %238 = vector.broadcast %237 : vector<2x1xf32> to vector<2x8xf32>
    %239 = arith.subf %235, %238 : vector<2x8xf32>
    %240 = math.exp %239 : vector<2x8xf32>
    %cst_85 = arith.constant dense<0.000000e+00> : vector<2xf32>
    %241 = vector.multi_reduction <add>, %240, %cst_85 [1] : vector<2x8xf32> to vector<2xf32>
    %242 = vector.shape_cast %241 : vector<2xf32> to vector<2x1xf32>
    %243 = tpu.reciprocal %242 {approx = true} : vector<2x1xf32> -> vector<2x1xf32>
    %244 = vector.broadcast %243 : vector<2x1xf32> to vector<2x8xf32>
    %245 = arith.mulf %240, %244 : vector<2x8xf32>
    %246 = vector.shape_cast %245 : vector<2x8xf32> to vector<2x8x1xf32>
    %247 = vector.broadcast %246 : vector<2x8x1xf32> to vector<2x8x32xf32>
    %248 = arith.mulf %247, %6 : vector<2x8x32xf32>
    %cst_86 = arith.constant dense<0.000000e+00> : vector<2x32xf32>
    %249 = vector.multi_reduction <add>, %248, %cst_86 [1] : vector<2x8x32xf32> to vector<2x32xf32>
    %250 = tpu.concatenate %226, %249, %95 in 1 : vector<2x32xf32>, vector<2x32xf32>, vector<2x32xf32> -> vector<2x96xf32>
    %cst_87 = arith.constant dense<0.000000e+00> : vector<2x128xf32>
    %251 = tpu.matmul %250, %228, %cst_87 {dimension_numbers = #tpu.dot_dimension_numbers<[1], [0], [0], [1], [0, 0, 1, 1], [], []>} : vector<2x96xf32>, vector<96x128xf32>, vector<2x128xf32> -> vector<2x128xf32>
    %252 = vector.broadcast %229 : vector<1x128xf32> to vector<2x128xf32>
    %253 = arith.addf %251, %252 : vector<2x128xf32>
    %254 = vector.extract_strided_slice %253 {offsets = [0, 0], sizes = [2, 32], strides = [1, 1]} : vector<2x128xf32> to vector<2x32xf32>
    %255 = arith.negf %254 : vector<2x32xf32>
    %256 = math.exp %255 : vector<2x32xf32>
    %cst_88 = arith.constant 1.000000e+00 : f32
    %257 = vector.broadcast %cst_88 : f32 to vector<2x32xf32>
    %258 = arith.addf %257, %256 : vector<2x32xf32>
    %259 = arith.divf %257, %258 : vector<2x32xf32>
    %260 = vector.extract_strided_slice %253 {offsets = [0, 32], sizes = [2, 32], strides = [1, 1]} : vector<2x128xf32> to vector<2x32xf32>
    %261 = arith.negf %260 : vector<2x32xf32>
    %262 = math.exp %261 : vector<2x32xf32>
    %cst_89 = arith.constant 1.000000e+00 : f32
    %263 = vector.broadcast %cst_89 : f32 to vector<2x32xf32>
    %264 = arith.addf %263, %262 : vector<2x32xf32>
    %265 = arith.divf %263, %264 : vector<2x32xf32>
    %266 = vector.extract_strided_slice %253 {offsets = [0, 64], sizes = [2, 32], strides = [1, 1]} : vector<2x128xf32> to vector<2x32xf32>
    %267 = vector.extract_strided_slice %253 {offsets = [0, 96], sizes = [2, 32], strides = [1, 1]} : vector<2x128xf32> to vector<2x32xf32>
    %268 = arith.mulf %259, %267 : vector<2x32xf32>
    %269 = arith.addf %266, %268 : vector<2x32xf32>
    %270 = math.tanh %269 : vector<2x32xf32>
    %cst_90 = arith.constant 1.000000e+00 : f32
    %271 = vector.broadcast %cst_90 : f32 to vector<2x32xf32>
    %272 = arith.subf %271, %265 : vector<2x32xf32>
    %273 = arith.mulf %272, %270 : vector<2x32xf32>
    %274 = arith.mulf %265, %95 : vector<2x32xf32>
    %275 = arith.addf %273, %274 : vector<2x32xf32>
    %cst_91 = arith.constant 0.000000e+00 : f32
    %276 = vector.broadcast %cst_91 : f32 to vector<2x32xf32>
    %277 = arith.cmpf ogt, %275, %276 : vector<2x32xf32>
    %278 = math.exp %275 : vector<2x32xf32>
    %cst_92 = arith.constant 1.000000e+00 : f32
    %279 = vector.broadcast %cst_92 : f32 to vector<2x32xf32>
    %280 = arith.subf %278, %279 : vector<2x32xf32>
    %cst_93 = arith.constant 1.67326319 : f32
    %281 = vector.broadcast %cst_93 : f32 to vector<2x32xf32>
    %282 = arith.mulf %281, %280 : vector<2x32xf32>
    %283 = arith.select %277, %275, %282 : vector<2x32xi1>, vector<2x32xf32>
    %cst_94 = arith.constant 1.05070102 : f32
    %284 = vector.broadcast %cst_94 : f32 to vector<2x32xf32>
    %285 = arith.mulf %284, %283 : vector<2x32xf32>
    %286 = tpu.concatenate %275, %285 in 1 : vector<2x32xf32>, vector<2x32xf32> -> vector<2x64xf32>
    %cst_95 = arith.constant dense<0.000000e+00> : vector<2x114xf32>
    %287 = tpu.matmul %286, %230, %cst_95 {dimension_numbers = #tpu.dot_dimension_numbers<[1], [0], [0], [1], [0, 0, 1, 1], [], []>} : vector<2x64xf32>, vector<64x114xf32>, vector<2x114xf32> -> vector<2x114xf32>
    %288 = vector.broadcast %231 : vector<1x114xf32> to vector<2x114xf32>
    %289 = arith.addf %287, %288 : vector<2x114xf32>
    %290 = vector.extract_strided_slice %289 {offsets = [0, 0], sizes = [2, 6], strides = [1, 1]} : vector<2x114xf32> to vector<2x6xf32>
    %291 = vector.extract_strided_slice %289 {offsets = [0, 5], sizes = [2, 1], strides = [1, 1]} : vector<2x114xf32> to vector<2x1xf32>
    %292 = vector.extract_strided_slice %289 {offsets = [0, 6], sizes = [2, 7], strides = [1, 1]} : vector<2x114xf32> to vector<2x7xf32>
    %293 = vector.extract_strided_slice %289 {offsets = [0, 13], sizes = [2, 100], strides = [1, 1]} : vector<2x114xf32> to vector<2x100xf32>
    %294 = vector.extract_strided_slice %289 {offsets = [0, 113], sizes = [2, 1], strides = [1, 1]} : vector<2x114xf32> to vector<2x1xf32>
    %cst_96 = arith.constant dense<0xFF800000> : vector<2xf32>
    %295 = vector.multi_reduction <maximumf>, %290, %cst_96 [1] : vector<2x6xf32> to vector<2xf32>
    %296 = vector.shape_cast %295 : vector<2xf32> to vector<2x1xf32>
    %297 = vector.broadcast %296 : vector<2x1xf32> to vector<2x6xf32>
    %298 = arith.subf %290, %297 : vector<2x6xf32>
    %299 = math.exp %298 : vector<2x6xf32>
    %cst_97 = arith.constant dense<0.000000e+00> : vector<2xf32>
    %300 = vector.multi_reduction <add>, %299, %cst_97 [1] : vector<2x6xf32> to vector<2xf32>
    %301 = vector.shape_cast %300 : vector<2xf32> to vector<2x1xf32>
    %302 = math.log %301 : vector<2x1xf32>
    %303 = arith.addf %302, %296 : vector<2x1xf32>
    %304 = vector.broadcast %303 : vector<2x1xf32> to vector<2x6xf32>
    %305 = arith.subf %290, %304 : vector<2x6xf32>
    %306 = vector.shape_cast %293 : vector<2x100xf32> to vector<2x1x100xf32>
    %307 = vector.broadcast %306 : vector<2x1x100xf32> to vector<2x8x100xf32>
    %308 = arith.addf %307, %29 : vector<2x8x100xf32>
    %cst_98 = arith.constant 0.000000e+00 : f32
    %309 = vector.broadcast %cst_98 : f32 to vector<2x8x100xf32>
    %310 = arith.cmpf ogt, %308, %309 : vector<2x8x100xf32>
    %311 = math.exp %308 : vector<2x8x100xf32>
    %cst_99 = arith.constant 1.000000e+00 : f32
    %312 = vector.broadcast %cst_99 : f32 to vector<2x8x100xf32>
    %313 = arith.subf %311, %312 : vector<2x8x100xf32>
    %cst_100 = arith.constant 1.67326319 : f32
    %314 = vector.broadcast %cst_100 : f32 to vector<2x8x100xf32>
    %315 = arith.mulf %314, %313 : vector<2x8x100xf32>
    %316 = arith.select %310, %308, %315 : vector<2x8x100xi1>, vector<2x8x100xf32>
    %cst_101 = arith.constant 1.05070102 : f32
    %317 = vector.broadcast %cst_101 : f32 to vector<2x8x100xf32>
    %318 = arith.mulf %317, %316 : vector<2x8x100xf32>
    %319 = vector.shape_cast %232 : vector<1x100xf32> to vector<1x1x100xf32>
    %320 = vector.broadcast %319 : vector<1x1x100xf32> to vector<2x8x100xf32>
    %321 = arith.mulf %318, %320 : vector<2x8x100xf32>
    %cst_102 = arith.constant dense<0.000000e+00> : vector<2x8xf32>
    %322 = vector.multi_reduction <add>, %321, %cst_102 [2] : vector<2x8x100xf32> to vector<2x8xf32>
    %323 = vector.broadcast %233 : vector<1x1xf32> to vector<2x8xf32>
    %324 = arith.addf %322, %323 : vector<2x8xf32>
    %325 = tpu.concatenate %324, %291 in 1 : vector<2x8xf32>, vector<2x1xf32> -> vector<2x9xf32>
    %cst_103 = arith.constant dense<0xFF800000> : vector<2xf32>
    %326 = vector.multi_reduction <maximumf>, %325, %cst_103 [1] : vector<2x9xf32> to vector<2xf32>
    %327 = vector.shape_cast %326 : vector<2xf32> to vector<2x1xf32>
    %328 = vector.broadcast %327 : vector<2x1xf32> to vector<2x9xf32>
    %329 = arith.subf %325, %328 : vector<2x9xf32>
    %330 = math.exp %329 : vector<2x9xf32>
    %cst_104 = arith.constant dense<0.000000e+00> : vector<2xf32>
    %331 = vector.multi_reduction <add>, %330, %cst_104 [1] : vector<2x9xf32> to vector<2xf32>
    %332 = vector.shape_cast %331 : vector<2xf32> to vector<2x1xf32>
    %333 = math.log %332 : vector<2x1xf32>
    %334 = arith.addf %333, %327 : vector<2x1xf32>
    %335 = vector.broadcast %334 : vector<2x1xf32> to vector<2x9xf32>
    %336 = arith.subf %325, %335 : vector<2x9xf32>
    %c200 = arith.constant 200 : index
    %c0_105 = arith.constant 0 : index
    %337 = vector.load %arg0[%c200, %c0_105] : memref<272x128xf32, #tpu.memory_space<vmem>>, vector<7x7xf32>
    %338 = vector.shape_cast %42 : vector<2x7xf32> to vector<2x1x7xf32>
    %339 = vector.shape_cast %337 : vector<7x7xf32> to vector<1x7x7xf32>
    %340 = vector.broadcast %338 : vector<2x1x7xf32> to vector<2x7x7xf32>
    %341 = vector.broadcast %339 : vector<1x7x7xf32> to vector<2x7x7xf32>
    %342 = arith.addf %340, %341 : vector<2x7x7xf32>
    %cst_106 = arith.constant dense<0xFF800000> : vector<2x7xf32>
    %343 = vector.multi_reduction <maximumf>, %342, %cst_106 [2] : vector<2x7x7xf32> to vector<2x7xf32>
    %344 = vector.shape_cast %343 : vector<2x7xf32> to vector<2x7x1xf32>
    %345 = vector.broadcast %344 : vector<2x7x1xf32> to vector<2x7x7xf32>
    %346 = arith.cmpf oeq, %342, %345 : vector<2x7x7xf32>
    %cst_107 = arith.constant 7.000000e+00 : f32
    %347 = vector.broadcast %cst_107 : f32 to vector<2x7x7xf32>
    %348 = arith.select %346, %46, %347 : vector<2x7x7xi1>, vector<2x7x7xf32>
    %cst_108 = arith.constant dense<0x7F800000> : vector<2x7xf32>
    %349 = vector.multi_reduction <minimumf>, %348, %cst_108 [2] : vector<2x7x7xf32> to vector<2x7xf32>
    %350 = arith.addf %343, %292 : vector<2x7xf32>
    %cst_109 = arith.constant 0.000000e+00 : f32
    %351 = vector.broadcast %cst_109 : f32 to vector<2x1xf32>
    %c0_110 = arith.constant 0 : index
    %c0_111 = arith.constant 0 : index
    %352 = vector.load %arg0[%c0_110, %c0_111] : memref<272x128xf32, #tpu.memory_space<vmem>>, vector<96x128xf32>
    %c232_112 = arith.constant 232 : index
    %c0_113 = arith.constant 0 : index
    %353 = vector.load %arg0[%c232_112, %c0_113] : memref<272x128xf32, #tpu.memory_space<vmem>>, vector<1x128xf32>
    %c96_114 = arith.constant 96 : index
    %c0_115 = arith.constant 0 : index
    %354 = vector.load %arg0[%c96_114, %c0_115] : memref<272x128xf32, #tpu.memory_space<vmem>>, vector<64x114xf32>
    %c240_116 = arith.constant 240 : index
    %c0_117 = arith.constant 0 : index
    %355 = vector.load %arg0[%c240_116, %c0_117] : memref<272x128xf32, #tpu.memory_space<vmem>>, vector<1x114xf32>
    %c256_118 = arith.constant 256 : index
    %c0_119 = arith.constant 0 : index
    %356 = vector.load %arg0[%c256_118, %c0_119] : memref<272x128xf32, #tpu.memory_space<vmem>>, vector<1x100xf32>
    %c264_120 = arith.constant 264 : index
    %c1_121 = arith.constant 1 : index
    %357 = vector.load %arg0[%c264_120, %c1_121] : memref<272x128xf32, #tpu.memory_space<vmem>>, vector<1x1xf32>
    %358 = vector.broadcast %294 : vector<2x1xf32> to vector<2x8xf32>
    %359 = arith.addf %13, %358 : vector<2x8xf32>
    %cst_122 = arith.constant dense<0xFF800000> : vector<2xf32>
    %360 = vector.multi_reduction <maximumf>, %359, %cst_122 [1] : vector<2x8xf32> to vector<2xf32>
    %361 = vector.shape_cast %360 : vector<2xf32> to vector<2x1xf32>
    %362 = vector.broadcast %361 : vector<2x1xf32> to vector<2x8xf32>
    %363 = arith.subf %359, %362 : vector<2x8xf32>
    %364 = math.exp %363 : vector<2x8xf32>
    %cst_123 = arith.constant dense<0.000000e+00> : vector<2xf32>
    %365 = vector.multi_reduction <add>, %364, %cst_123 [1] : vector<2x8xf32> to vector<2xf32>
    %366 = vector.shape_cast %365 : vector<2xf32> to vector<2x1xf32>
    %367 = tpu.reciprocal %366 {approx = true} : vector<2x1xf32> -> vector<2x1xf32>
    %368 = vector.broadcast %367 : vector<2x1xf32> to vector<2x8xf32>
    %369 = arith.mulf %364, %368 : vector<2x8xf32>
    %370 = vector.shape_cast %369 : vector<2x8xf32> to vector<2x8x1xf32>
    %371 = vector.broadcast %370 : vector<2x8x1xf32> to vector<2x8x32xf32>
    %372 = arith.mulf %371, %6 : vector<2x8x32xf32>
    %cst_124 = arith.constant dense<0.000000e+00> : vector<2x32xf32>
    %373 = vector.multi_reduction <add>, %372, %cst_124 [1] : vector<2x8x32xf32> to vector<2x32xf32>
    %374 = tpu.concatenate %226, %373, %275 in 1 : vector<2x32xf32>, vector<2x32xf32>, vector<2x32xf32> -> vector<2x96xf32>
    %cst_125 = arith.constant dense<0.000000e+00> : vector<2x128xf32>
    %375 = tpu.matmul %374, %352, %cst_125 {dimension_numbers = #tpu.dot_dimension_numbers<[1], [0], [0], [1], [0, 0, 1, 1], [], []>} : vector<2x96xf32>, vector<96x128xf32>, vector<2x128xf32> -> vector<2x128xf32>
    %376 = vector.broadcast %353 : vector<1x128xf32> to vector<2x128xf32>
    %377 = arith.addf %375, %376 : vector<2x128xf32>
    %378 = vector.extract_strided_slice %377 {offsets = [0, 0], sizes = [2, 32], strides = [1, 1]} : vector<2x128xf32> to vector<2x32xf32>
    %379 = arith.negf %378 : vector<2x32xf32>
    %380 = math.exp %379 : vector<2x32xf32>
    %cst_126 = arith.constant 1.000000e+00 : f32
    %381 = vector.broadcast %cst_126 : f32 to vector<2x32xf32>
    %382 = arith.addf %381, %380 : vector<2x32xf32>
    %383 = arith.divf %381, %382 : vector<2x32xf32>
    %384 = vector.extract_strided_slice %377 {offsets = [0, 32], sizes = [2, 32], strides = [1, 1]} : vector<2x128xf32> to vector<2x32xf32>
    %385 = arith.negf %384 : vector<2x32xf32>
    %386 = math.exp %385 : vector<2x32xf32>
    %cst_127 = arith.constant 1.000000e+00 : f32
    %387 = vector.broadcast %cst_127 : f32 to vector<2x32xf32>
    %388 = arith.addf %387, %386 : vector<2x32xf32>
    %389 = arith.divf %387, %388 : vector<2x32xf32>
    %390 = vector.extract_strided_slice %377 {offsets = [0, 64], sizes = [2, 32], strides = [1, 1]} : vector<2x128xf32> to vector<2x32xf32>
    %391 = vector.extract_strided_slice %377 {offsets = [0, 96], sizes = [2, 32], strides = [1, 1]} : vector<2x128xf32> to vector<2x32xf32>
    %392 = arith.mulf %383, %391 : vector<2x32xf32>
    %393 = arith.addf %390, %392 : vector<2x32xf32>
    %394 = math.tanh %393 : vector<2x32xf32>
    %cst_128 = arith.constant 1.000000e+00 : f32
    %395 = vector.broadcast %cst_128 : f32 to vector<2x32xf32>
    %396 = arith.subf %395, %389 : vector<2x32xf32>
    %397 = arith.mulf %396, %394 : vector<2x32xf32>
    %398 = arith.mulf %389, %275 : vector<2x32xf32>
    %399 = arith.addf %397, %398 : vector<2x32xf32>
    %cst_129 = arith.constant 0.000000e+00 : f32
    %400 = vector.broadcast %cst_129 : f32 to vector<2x32xf32>
    %401 = arith.cmpf ogt, %399, %400 : vector<2x32xf32>
    %402 = math.exp %399 : vector<2x32xf32>
    %cst_130 = arith.constant 1.000000e+00 : f32
    %403 = vector.broadcast %cst_130 : f32 to vector<2x32xf32>
    %404 = arith.subf %402, %403 : vector<2x32xf32>
    %cst_131 = arith.constant 1.67326319 : f32
    %405 = vector.broadcast %cst_131 : f32 to vector<2x32xf32>
    %406 = arith.mulf %405, %404 : vector<2x32xf32>
    %407 = arith.select %401, %399, %406 : vector<2x32xi1>, vector<2x32xf32>
    %cst_132 = arith.constant 1.05070102 : f32
    %408 = vector.broadcast %cst_132 : f32 to vector<2x32xf32>
    %409 = arith.mulf %408, %407 : vector<2x32xf32>
    %410 = tpu.concatenate %399, %409 in 1 : vector<2x32xf32>, vector<2x32xf32> -> vector<2x64xf32>
    %cst_133 = arith.constant dense<0.000000e+00> : vector<2x114xf32>
    %411 = tpu.matmul %410, %354, %cst_133 {dimension_numbers = #tpu.dot_dimension_numbers<[1], [0], [0], [1], [0, 0, 1, 1], [], []>} : vector<2x64xf32>, vector<64x114xf32>, vector<2x114xf32> -> vector<2x114xf32>
    %412 = vector.broadcast %355 : vector<1x114xf32> to vector<2x114xf32>
    %413 = arith.addf %411, %412 : vector<2x114xf32>
    %414 = vector.extract_strided_slice %413 {offsets = [0, 0], sizes = [2, 6], strides = [1, 1]} : vector<2x114xf32> to vector<2x6xf32>
    %415 = vector.extract_strided_slice %413 {offsets = [0, 5], sizes = [2, 1], strides = [1, 1]} : vector<2x114xf32> to vector<2x1xf32>
    %416 = vector.extract_strided_slice %413 {offsets = [0, 6], sizes = [2, 7], strides = [1, 1]} : vector<2x114xf32> to vector<2x7xf32>
    %417 = vector.extract_strided_slice %413 {offsets = [0, 13], sizes = [2, 100], strides = [1, 1]} : vector<2x114xf32> to vector<2x100xf32>
    %418 = vector.extract_strided_slice %413 {offsets = [0, 113], sizes = [2, 1], strides = [1, 1]} : vector<2x114xf32> to vector<2x1xf32>
    %cst_134 = arith.constant dense<0xFF800000> : vector<2xf32>
    %419 = vector.multi_reduction <maximumf>, %414, %cst_134 [1] : vector<2x6xf32> to vector<2xf32>
    %420 = vector.shape_cast %419 : vector<2xf32> to vector<2x1xf32>
    %421 = vector.broadcast %420 : vector<2x1xf32> to vector<2x6xf32>
    %422 = arith.subf %414, %421 : vector<2x6xf32>
    %423 = math.exp %422 : vector<2x6xf32>
    %cst_135 = arith.constant dense<0.000000e+00> : vector<2xf32>
    %424 = vector.multi_reduction <add>, %423, %cst_135 [1] : vector<2x6xf32> to vector<2xf32>
    %425 = vector.shape_cast %424 : vector<2xf32> to vector<2x1xf32>
    %426 = math.log %425 : vector<2x1xf32>
    %427 = arith.addf %426, %420 : vector<2x1xf32>
    %428 = vector.broadcast %427 : vector<2x1xf32> to vector<2x6xf32>
    %429 = arith.subf %414, %428 : vector<2x6xf32>
    %430 = vector.shape_cast %417 : vector<2x100xf32> to vector<2x1x100xf32>
    %431 = vector.broadcast %430 : vector<2x1x100xf32> to vector<2x8x100xf32>
    %432 = arith.addf %431, %29 : vector<2x8x100xf32>
    %cst_136 = arith.constant 0.000000e+00 : f32
    %433 = vector.broadcast %cst_136 : f32 to vector<2x8x100xf32>
    %434 = arith.cmpf ogt, %432, %433 : vector<2x8x100xf32>
    %435 = math.exp %432 : vector<2x8x100xf32>
    %cst_137 = arith.constant 1.000000e+00 : f32
    %436 = vector.broadcast %cst_137 : f32 to vector<2x8x100xf32>
    %437 = arith.subf %435, %436 : vector<2x8x100xf32>
    %cst_138 = arith.constant 1.67326319 : f32
    %438 = vector.broadcast %cst_138 : f32 to vector<2x8x100xf32>
    %439 = arith.mulf %438, %437 : vector<2x8x100xf32>
    %440 = arith.select %434, %432, %439 : vector<2x8x100xi1>, vector<2x8x100xf32>
    %cst_139 = arith.constant 1.05070102 : f32
    %441 = vector.broadcast %cst_139 : f32 to vector<2x8x100xf32>
    %442 = arith.mulf %441, %440 : vector<2x8x100xf32>
    %443 = vector.shape_cast %356 : vector<1x100xf32> to vector<1x1x100xf32>
    %444 = vector.broadcast %443 : vector<1x1x100xf32> to vector<2x8x100xf32>
    %445 = arith.mulf %442, %444 : vector<2x8x100xf32>
    %cst_140 = arith.constant dense<0.000000e+00> : vector<2x8xf32>
    %446 = vector.multi_reduction <add>, %445, %cst_140 [2] : vector<2x8x100xf32> to vector<2x8xf32>
    %447 = vector.broadcast %357 : vector<1x1xf32> to vector<2x8xf32>
    %448 = arith.addf %446, %447 : vector<2x8xf32>
    %449 = tpu.concatenate %448, %415 in 1 : vector<2x8xf32>, vector<2x1xf32> -> vector<2x9xf32>
    %cst_141 = arith.constant dense<0xFF800000> : vector<2xf32>
    %450 = vector.multi_reduction <maximumf>, %449, %cst_141 [1] : vector<2x9xf32> to vector<2xf32>
    %451 = vector.shape_cast %450 : vector<2xf32> to vector<2x1xf32>
    %452 = vector.broadcast %451 : vector<2x1xf32> to vector<2x9xf32>
    %453 = arith.subf %449, %452 : vector<2x9xf32>
    %454 = math.exp %453 : vector<2x9xf32>
    %cst_142 = arith.constant dense<0.000000e+00> : vector<2xf32>
    %455 = vector.multi_reduction <add>, %454, %cst_142 [1] : vector<2x9xf32> to vector<2xf32>
    %456 = vector.shape_cast %455 : vector<2xf32> to vector<2x1xf32>
    %457 = math.log %456 : vector<2x1xf32>
    %458 = arith.addf %457, %451 : vector<2x1xf32>
    %459 = vector.broadcast %458 : vector<2x1xf32> to vector<2x9xf32>
    %460 = arith.subf %449, %459 : vector<2x9xf32>
    %c200_143 = arith.constant 200 : index
    %c0_144 = arith.constant 0 : index
    %461 = vector.load %arg0[%c200_143, %c0_144] : memref<272x128xf32, #tpu.memory_space<vmem>>, vector<7x7xf32>
    %462 = vector.shape_cast %350 : vector<2x7xf32> to vector<2x1x7xf32>
    %463 = vector.shape_cast %461 : vector<7x7xf32> to vector<1x7x7xf32>
    %464 = vector.broadcast %462 : vector<2x1x7xf32> to vector<2x7x7xf32>
    %465 = vector.broadcast %463 : vector<1x7x7xf32> to vector<2x7x7xf32>
    %466 = arith.addf %464, %465 : vector<2x7x7xf32>
    %cst_145 = arith.constant dense<0xFF800000> : vector<2x7xf32>
    %467 = vector.multi_reduction <maximumf>, %466, %cst_145 [2] : vector<2x7x7xf32> to vector<2x7xf32>
    %468 = vector.shape_cast %467 : vector<2x7xf32> to vector<2x7x1xf32>
    %469 = vector.broadcast %468 : vector<2x7x1xf32> to vector<2x7x7xf32>
    %470 = arith.cmpf oeq, %466, %469 : vector<2x7x7xf32>
    %cst_146 = arith.constant 7.000000e+00 : f32
    %471 = vector.broadcast %cst_146 : f32 to vector<2x7x7xf32>
    %472 = arith.select %470, %46, %471 : vector<2x7x7xi1>, vector<2x7x7xf32>
    %cst_147 = arith.constant dense<0x7F800000> : vector<2x7xf32>
    %473 = vector.multi_reduction <minimumf>, %472, %cst_147 [2] : vector<2x7x7xf32> to vector<2x7xf32>
    %474 = arith.addf %467, %416 : vector<2x7xf32>
    %cst_148 = arith.constant 0.000000e+00 : f32
    %475 = vector.broadcast %cst_148 : f32 to vector<2x1xf32>
    %c0_149 = arith.constant 0 : index
    %c0_150 = arith.constant 0 : index
    %476 = vector.load %arg0[%c0_149, %c0_150] : memref<272x128xf32, #tpu.memory_space<vmem>>, vector<96x128xf32>
    %c232_151 = arith.constant 232 : index
    %c0_152 = arith.constant 0 : index
    %477 = vector.load %arg0[%c232_151, %c0_152] : memref<272x128xf32, #tpu.memory_space<vmem>>, vector<1x128xf32>
    %c96_153 = arith.constant 96 : index
    %c0_154 = arith.constant 0 : index
    %478 = vector.load %arg0[%c96_153, %c0_154] : memref<272x128xf32, #tpu.memory_space<vmem>>, vector<64x114xf32>
    %c240_155 = arith.constant 240 : index
    %c0_156 = arith.constant 0 : index
    %479 = vector.load %arg0[%c240_155, %c0_156] : memref<272x128xf32, #tpu.memory_space<vmem>>, vector<1x114xf32>
    %c256_157 = arith.constant 256 : index
    %c0_158 = arith.constant 0 : index
    %480 = vector.load %arg0[%c256_157, %c0_158] : memref<272x128xf32, #tpu.memory_space<vmem>>, vector<1x100xf32>
    %c264_159 = arith.constant 264 : index
    %c1_160 = arith.constant 1 : index
    %481 = vector.load %arg0[%c264_159, %c1_160] : memref<272x128xf32, #tpu.memory_space<vmem>>, vector<1x1xf32>
    %482 = vector.broadcast %418 : vector<2x1xf32> to vector<2x8xf32>
    %483 = arith.addf %13, %482 : vector<2x8xf32>
    %cst_161 = arith.constant dense<0xFF800000> : vector<2xf32>
    %484 = vector.multi_reduction <maximumf>, %483, %cst_161 [1] : vector<2x8xf32> to vector<2xf32>
    %485 = vector.shape_cast %484 : vector<2xf32> to vector<2x1xf32>
    %486 = vector.broadcast %485 : vector<2x1xf32> to vector<2x8xf32>
    %487 = arith.subf %483, %486 : vector<2x8xf32>
    %488 = math.exp %487 : vector<2x8xf32>
    %cst_162 = arith.constant dense<0.000000e+00> : vector<2xf32>
    %489 = vector.multi_reduction <add>, %488, %cst_162 [1] : vector<2x8xf32> to vector<2xf32>
    %490 = vector.shape_cast %489 : vector<2xf32> to vector<2x1xf32>
    %491 = tpu.reciprocal %490 {approx = true} : vector<2x1xf32> -> vector<2x1xf32>
    %492 = vector.broadcast %491 : vector<2x1xf32> to vector<2x8xf32>
    %493 = arith.mulf %488, %492 : vector<2x8xf32>
    %494 = vector.shape_cast %493 : vector<2x8xf32> to vector<2x8x1xf32>
    %495 = vector.broadcast %494 : vector<2x8x1xf32> to vector<2x8x32xf32>
    %496 = arith.mulf %495, %6 : vector<2x8x32xf32>
    %cst_163 = arith.constant dense<0.000000e+00> : vector<2x32xf32>
    %497 = vector.multi_reduction <add>, %496, %cst_163 [1] : vector<2x8x32xf32> to vector<2x32xf32>
    %498 = tpu.concatenate %226, %497, %399 in 1 : vector<2x32xf32>, vector<2x32xf32>, vector<2x32xf32> -> vector<2x96xf32>
    %cst_164 = arith.constant dense<0.000000e+00> : vector<2x128xf32>
    %499 = tpu.matmul %498, %476, %cst_164 {dimension_numbers = #tpu.dot_dimension_numbers<[1], [0], [0], [1], [0, 0, 1, 1], [], []>} : vector<2x96xf32>, vector<96x128xf32>, vector<2x128xf32> -> vector<2x128xf32>
    %500 = vector.broadcast %477 : vector<1x128xf32> to vector<2x128xf32>
    %501 = arith.addf %499, %500 : vector<2x128xf32>
    %502 = vector.extract_strided_slice %501 {offsets = [0, 0], sizes = [2, 32], strides = [1, 1]} : vector<2x128xf32> to vector<2x32xf32>
    %503 = arith.negf %502 : vector<2x32xf32>
    %504 = math.exp %503 : vector<2x32xf32>
    %cst_165 = arith.constant 1.000000e+00 : f32
    %505 = vector.broadcast %cst_165 : f32 to vector<2x32xf32>
    %506 = arith.addf %505, %504 : vector<2x32xf32>
    %507 = arith.divf %505, %506 : vector<2x32xf32>
    %508 = vector.extract_strided_slice %501 {offsets = [0, 32], sizes = [2, 32], strides = [1, 1]} : vector<2x128xf32> to vector<2x32xf32>
    %509 = arith.negf %508 : vector<2x32xf32>
    %510 = math.exp %509 : vector<2x32xf32>
    %cst_166 = arith.constant 1.000000e+00 : f32
    %511 = vector.broadcast %cst_166 : f32 to vector<2x32xf32>
    %512 = arith.addf %511, %510 : vector<2x32xf32>
    %513 = arith.divf %511, %512 : vector<2x32xf32>
    %514 = vector.extract_strided_slice %501 {offsets = [0, 64], sizes = [2, 32], strides = [1, 1]} : vector<2x128xf32> to vector<2x32xf32>
    %515 = vector.extract_strided_slice %501 {offsets = [0, 96], sizes = [2, 32], strides = [1, 1]} : vector<2x128xf32> to vector<2x32xf32>
    %516 = arith.mulf %507, %515 : vector<2x32xf32>
    %517 = arith.addf %514, %516 : vector<2x32xf32>
    %518 = math.tanh %517 : vector<2x32xf32>
    %cst_167 = arith.constant 1.000000e+00 : f32
    %519 = vector.broadcast %cst_167 : f32 to vector<2x32xf32>
    %520 = arith.subf %519, %513 : vector<2x32xf32>
    %521 = arith.mulf %520, %518 : vector<2x32xf32>
    %522 = arith.mulf %513, %399 : vector<2x32xf32>
    %523 = arith.addf %521, %522 : vector<2x32xf32>
    %cst_168 = arith.constant 0.000000e+00 : f32
    %524 = vector.broadcast %cst_168 : f32 to vector<2x32xf32>
    %525 = arith.cmpf ogt, %523, %524 : vector<2x32xf32>
    %526 = math.exp %523 : vector<2x32xf32>
    %cst_169 = arith.constant 1.000000e+00 : f32
    %527 = vector.broadcast %cst_169 : f32 to vector<2x32xf32>
    %528 = arith.subf %526, %527 : vector<2x32xf32>
    %cst_170 = arith.constant 1.67326319 : f32
    %529 = vector.broadcast %cst_170 : f32 to vector<2x32xf32>
    %530 = arith.mulf %529, %528 : vector<2x32xf32>
    %531 = arith.select %525, %523, %530 : vector<2x32xi1>, vector<2x32xf32>
    %cst_171 = arith.constant 1.05070102 : f32
    %532 = vector.broadcast %cst_171 : f32 to vector<2x32xf32>
    %533 = arith.mulf %532, %531 : vector<2x32xf32>
    %534 = tpu.concatenate %523, %533 in 1 : vector<2x32xf32>, vector<2x32xf32> -> vector<2x64xf32>
    %cst_172 = arith.constant dense<0.000000e+00> : vector<2x114xf32>
    %535 = tpu.matmul %534, %478, %cst_172 {dimension_numbers = #tpu.dot_dimension_numbers<[1], [0], [0], [1], [0, 0, 1, 1], [], []>} : vector<2x64xf32>, vector<64x114xf32>, vector<2x114xf32> -> vector<2x114xf32>
    %536 = vector.broadcast %479 : vector<1x114xf32> to vector<2x114xf32>
    %537 = arith.addf %535, %536 : vector<2x114xf32>
    %538 = vector.extract_strided_slice %537 {offsets = [0, 0], sizes = [2, 6], strides = [1, 1]} : vector<2x114xf32> to vector<2x6xf32>
    %539 = vector.extract_strided_slice %537 {offsets = [0, 5], sizes = [2, 1], strides = [1, 1]} : vector<2x114xf32> to vector<2x1xf32>
    %540 = vector.extract_strided_slice %537 {offsets = [0, 6], sizes = [2, 7], strides = [1, 1]} : vector<2x114xf32> to vector<2x7xf32>
    %541 = vector.extract_strided_slice %537 {offsets = [0, 13], sizes = [2, 100], strides = [1, 1]} : vector<2x114xf32> to vector<2x100xf32>
    %542 = vector.extract_strided_slice %537 {offsets = [0, 113], sizes = [2, 1], strides = [1, 1]} : vector<2x114xf32> to vector<2x1xf32>
    %cst_173 = arith.constant dense<0xFF800000> : vector<2xf32>
    %543 = vector.multi_reduction <maximumf>, %538, %cst_173 [1] : vector<2x6xf32> to vector<2xf32>
    %544 = vector.shape_cast %543 : vector<2xf32> to vector<2x1xf32>
    %545 = vector.broadcast %544 : vector<2x1xf32> to vector<2x6xf32>
    %546 = arith.subf %538, %545 : vector<2x6xf32>
    %547 = math.exp %546 : vector<2x6xf32>
    %cst_174 = arith.constant dense<0.000000e+00> : vector<2xf32>
    %548 = vector.multi_reduction <add>, %547, %cst_174 [1] : vector<2x6xf32> to vector<2xf32>
    %549 = vector.shape_cast %548 : vector<2xf32> to vector<2x1xf32>
    %550 = math.log %549 : vector<2x1xf32>
    %551 = arith.addf %550, %544 : vector<2x1xf32>
    %552 = vector.broadcast %551 : vector<2x1xf32> to vector<2x6xf32>
    %553 = arith.subf %538, %552 : vector<2x6xf32>
    %554 = vector.shape_cast %541 : vector<2x100xf32> to vector<2x1x100xf32>
    %555 = vector.broadcast %554 : vector<2x1x100xf32> to vector<2x8x100xf32>
    %556 = arith.addf %555, %29 : vector<2x8x100xf32>
    %cst_175 = arith.constant 0.000000e+00 : f32
    %557 = vector.broadcast %cst_175 : f32 to vector<2x8x100xf32>
    %558 = arith.cmpf ogt, %556, %557 : vector<2x8x100xf32>
    %559 = math.exp %556 : vector<2x8x100xf32>
    %cst_176 = arith.constant 1.000000e+00 : f32
    %560 = vector.broadcast %cst_176 : f32 to vector<2x8x100xf32>
    %561 = arith.subf %559, %560 : vector<2x8x100xf32>
    %cst_177 = arith.constant 1.67326319 : f32
    %562 = vector.broadcast %cst_177 : f32 to vector<2x8x100xf32>
    %563 = arith.mulf %562, %561 : vector<2x8x100xf32>
    %564 = arith.select %558, %556, %563 : vector<2x8x100xi1>, vector<2x8x100xf32>
    %cst_178 = arith.constant 1.05070102 : f32
    %565 = vector.broadcast %cst_178 : f32 to vector<2x8x100xf32>
    %566 = arith.mulf %565, %564 : vector<2x8x100xf32>
    %567 = vector.shape_cast %480 : vector<1x100xf32> to vector<1x1x100xf32>
    %568 = vector.broadcast %567 : vector<1x1x100xf32> to vector<2x8x100xf32>
    %569 = arith.mulf %566, %568 : vector<2x8x100xf32>
    %cst_179 = arith.constant dense<0.000000e+00> : vector<2x8xf32>
    %570 = vector.multi_reduction <add>, %569, %cst_179 [2] : vector<2x8x100xf32> to vector<2x8xf32>
    %571 = vector.broadcast %481 : vector<1x1xf32> to vector<2x8xf32>
    %572 = arith.addf %570, %571 : vector<2x8xf32>
    %573 = tpu.concatenate %572, %539 in 1 : vector<2x8xf32>, vector<2x1xf32> -> vector<2x9xf32>
    %cst_180 = arith.constant dense<0xFF800000> : vector<2xf32>
    %574 = vector.multi_reduction <maximumf>, %573, %cst_180 [1] : vector<2x9xf32> to vector<2xf32>
    %575 = vector.shape_cast %574 : vector<2xf32> to vector<2x1xf32>
    %576 = vector.broadcast %575 : vector<2x1xf32> to vector<2x9xf32>
    %577 = arith.subf %573, %576 : vector<2x9xf32>
    %578 = math.exp %577 : vector<2x9xf32>
    %cst_181 = arith.constant dense<0.000000e+00> : vector<2xf32>
    %579 = vector.multi_reduction <add>, %578, %cst_181 [1] : vector<2x9xf32> to vector<2xf32>
    %580 = vector.shape_cast %579 : vector<2xf32> to vector<2x1xf32>
    %581 = math.log %580 : vector<2x1xf32>
    %582 = arith.addf %581, %575 : vector<2x1xf32>
    %583 = vector.broadcast %582 : vector<2x1xf32> to vector<2x9xf32>
    %584 = arith.subf %573, %583 : vector<2x9xf32>
    %c200_182 = arith.constant 200 : index
    %c0_183 = arith.constant 0 : index
    %585 = vector.load %arg0[%c200_182, %c0_183] : memref<272x128xf32, #tpu.memory_space<vmem>>, vector<7x7xf32>
    %586 = vector.shape_cast %474 : vector<2x7xf32> to vector<2x1x7xf32>
    %587 = vector.shape_cast %585 : vector<7x7xf32> to vector<1x7x7xf32>
    %588 = vector.broadcast %586 : vector<2x1x7xf32> to vector<2x7x7xf32>
    %589 = vector.broadcast %587 : vector<1x7x7xf32> to vector<2x7x7xf32>
    %590 = arith.addf %588, %589 : vector<2x7x7xf32>
    %cst_184 = arith.constant dense<0xFF800000> : vector<2x7xf32>
    %591 = vector.multi_reduction <maximumf>, %590, %cst_184 [2] : vector<2x7x7xf32> to vector<2x7xf32>
    %592 = vector.shape_cast %591 : vector<2x7xf32> to vector<2x7x1xf32>
    %593 = vector.broadcast %592 : vector<2x7x1xf32> to vector<2x7x7xf32>
    %594 = arith.cmpf oeq, %590, %593 : vector<2x7x7xf32>
    %cst_185 = arith.constant 7.000000e+00 : f32
    %595 = vector.broadcast %cst_185 : f32 to vector<2x7x7xf32>
    %596 = arith.select %594, %46, %595 : vector<2x7x7xi1>, vector<2x7x7xf32>
    %cst_186 = arith.constant dense<0x7F800000> : vector<2x7xf32>
    %597 = vector.multi_reduction <minimumf>, %596, %cst_186 [2] : vector<2x7x7xf32> to vector<2x7xf32>
    %598 = arith.addf %591, %540 : vector<2x7xf32>
    %cst_187 = arith.constant 0.000000e+00 : f32
    %599 = vector.broadcast %cst_187 : f32 to vector<2x1xf32>
    %600 = tpu.concatenate %125, %305, %429, %553 in 0 : vector<2x6xf32>, vector<2x6xf32>, vector<2x6xf32>, vector<2x6xf32> -> vector<8x6xf32>
    %601 = tpu.concatenate %156, %336, %460, %584 in 0 : vector<2x9xf32>, vector<2x9xf32>, vector<2x9xf32>, vector<2x9xf32> -> vector<8x9xf32>
    %602 = tpu.concatenate %112, %292, %416, %540 in 0 : vector<2x7xf32>, vector<2x7xf32>, vector<2x7xf32>, vector<2x7xf32> -> vector<8x7xf32>
    %603 = tpu.concatenate %227, %349, %473, %597 in 0 : vector<2x7xf32>, vector<2x7xf32>, vector<2x7xf32>, vector<2x7xf32> -> vector<8x7xf32>
    %604 = tpu.concatenate %42, %350, %474, %598 in 0 : vector<2x7xf32>, vector<2x7xf32>, vector<2x7xf32>, vector<2x7xf32> -> vector<8x7xf32>
    %605 = tpu.concatenate %165, %351, %475, %599 in 0 : vector<2x1xf32>, vector<2x1xf32>, vector<2x1xf32>, vector<2x1xf32> -> vector<8x1xf32>
    %606 = tpu.concatenate %600, %601, %602, %603, %604, %605, %47 in 1 : vector<8x6xf32>, vector<8x9xf32>, vector<8x7xf32>, vector<8x7xf32>, vector<8x7xf32>, vector<8x1xf32>, vector<8x91xf32> -> vector<8x128xf32>
    %c0_188 = arith.constant 0 : index
    %c0_189 = arith.constant 0 : index
    %607 = vector.load %arg3[%c0_188, %c0_189] : memref<16x128xf32, #tpu.memory_space<vmem>>, vector<8x128xf32>
    tpu.vector_store %arg3[%c0_188, %c0_189], %606 {strides = array<i32>} : memref<16x128xf32, #tpu.memory_space<vmem>>, vector<8x128xf32>,
    %c0_190 = arith.constant 0 : index
    %c0_191 = arith.constant 0 : index
    %608 = vector.load %arg0[%c0_190, %c0_191] : memref<272x128xf32, #tpu.memory_space<vmem>>, vector<96x128xf32>
    %c232_192 = arith.constant 232 : index
    %c0_193 = arith.constant 0 : index
    %609 = vector.load %arg0[%c232_192, %c0_193] : memref<272x128xf32, #tpu.memory_space<vmem>>, vector<1x128xf32>
    %c96_194 = arith.constant 96 : index
    %c0_195 = arith.constant 0 : index
    %610 = vector.load %arg0[%c96_194, %c0_195] : memref<272x128xf32, #tpu.memory_space<vmem>>, vector<64x114xf32>
    %c240_196 = arith.constant 240 : index
    %c0_197 = arith.constant 0 : index
    %611 = vector.load %arg0[%c240_196, %c0_197] : memref<272x128xf32, #tpu.memory_space<vmem>>, vector<1x114xf32>
    %c256_198 = arith.constant 256 : index
    %c0_199 = arith.constant 0 : index
    %612 = vector.load %arg0[%c256_198, %c0_199] : memref<272x128xf32, #tpu.memory_space<vmem>>, vector<1x100xf32>
    %c264_200 = arith.constant 264 : index
    %c1_201 = arith.constant 1 : index
    %613 = vector.load %arg0[%c264_200, %c1_201] : memref<272x128xf32, #tpu.memory_space<vmem>>, vector<1x1xf32>
    %614 = vector.broadcast %542 : vector<2x1xf32> to vector<2x8xf32>
    %615 = arith.addf %13, %614 : vector<2x8xf32>
    %cst_202 = arith.constant dense<0xFF800000> : vector<2xf32>
    %616 = vector.multi_reduction <maximumf>, %615, %cst_202 [1] : vector<2x8xf32> to vector<2xf32>
    %617 = vector.shape_cast %616 : vector<2xf32> to vector<2x1xf32>
    %618 = vector.broadcast %617 : vector<2x1xf32> to vector<2x8xf32>
    %619 = arith.subf %615, %618 : vector<2x8xf32>
    %620 = math.exp %619 : vector<2x8xf32>
    %cst_203 = arith.constant dense<0.000000e+00> : vector<2xf32>
    %621 = vector.multi_reduction <add>, %620, %cst_203 [1] : vector<2x8xf32> to vector<2xf32>
    %622 = vector.shape_cast %621 : vector<2xf32> to vector<2x1xf32>
    %623 = tpu.reciprocal %622 {approx = true} : vector<2x1xf32> -> vector<2x1xf32>
    %624 = vector.broadcast %623 : vector<2x1xf32> to vector<2x8xf32>
    %625 = arith.mulf %620, %624 : vector<2x8xf32>
    %626 = vector.shape_cast %625 : vector<2x8xf32> to vector<2x8x1xf32>
    %627 = vector.broadcast %626 : vector<2x8x1xf32> to vector<2x8x32xf32>
    %628 = arith.mulf %627, %6 : vector<2x8x32xf32>
    %cst_204 = arith.constant dense<0.000000e+00> : vector<2x32xf32>
    %629 = vector.multi_reduction <add>, %628, %cst_204 [1] : vector<2x8x32xf32> to vector<2x32xf32>
    %630 = tpu.concatenate %226, %629, %523 in 1 : vector<2x32xf32>, vector<2x32xf32>, vector<2x32xf32> -> vector<2x96xf32>
    %cst_205 = arith.constant dense<0.000000e+00> : vector<2x128xf32>
    %631 = tpu.matmul %630, %608, %cst_205 {dimension_numbers = #tpu.dot_dimension_numbers<[1], [0], [0], [1], [0, 0, 1, 1], [], []>} : vector<2x96xf32>, vector<96x128xf32>, vector<2x128xf32> -> vector<2x128xf32>
    %632 = vector.broadcast %609 : vector<1x128xf32> to vector<2x128xf32>
    %633 = arith.addf %631, %632 : vector<2x128xf32>
    %634 = vector.extract_strided_slice %633 {offsets = [0, 0], sizes = [2, 32], strides = [1, 1]} : vector<2x128xf32> to vector<2x32xf32>
    %635 = arith.negf %634 : vector<2x32xf32>
    %636 = math.exp %635 : vector<2x32xf32>
    %cst_206 = arith.constant 1.000000e+00 : f32
    %637 = vector.broadcast %cst_206 : f32 to vector<2x32xf32>
    %638 = arith.addf %637, %636 : vector<2x32xf32>
    %639 = arith.divf %637, %638 : vector<2x32xf32>
    %640 = vector.extract_strided_slice %633 {offsets = [0, 32], sizes = [2, 32], strides = [1, 1]} : vector<2x128xf32> to vector<2x32xf32>
    %641 = arith.negf %640 : vector<2x32xf32>
    %642 = math.exp %641 : vector<2x32xf32>
    %cst_207 = arith.constant 1.000000e+00 : f32
    %643 = vector.broadcast %cst_207 : f32 to vector<2x32xf32>
    %644 = arith.addf %643, %642 : vector<2x32xf32>
    %645 = arith.divf %643, %644 : vector<2x32xf32>
    %646 = vector.extract_strided_slice %633 {offsets = [0, 64], sizes = [2, 32], strides = [1, 1]} : vector<2x128xf32> to vector<2x32xf32>
    %647 = vector.extract_strided_slice %633 {offsets = [0, 96], sizes = [2, 32], strides = [1, 1]} : vector<2x128xf32> to vector<2x32xf32>
    %648 = arith.mulf %639, %647 : vector<2x32xf32>
    %649 = arith.addf %646, %648 : vector<2x32xf32>
    %650 = math.tanh %649 : vector<2x32xf32>
    %cst_208 = arith.constant 1.000000e+00 : f32
    %651 = vector.broadcast %cst_208 : f32 to vector<2x32xf32>
    %652 = arith.subf %651, %645 : vector<2x32xf32>
    %653 = arith.mulf %652, %650 : vector<2x32xf32>
    %654 = arith.mulf %645, %523 : vector<2x32xf32>
    %655 = arith.addf %653, %654 : vector<2x32xf32>
    %cst_209 = arith.constant 0.000000e+00 : f32
    %656 = vector.broadcast %cst_209 : f32 to vector<2x32xf32>
    %657 = arith.cmpf ogt, %655, %656 : vector<2x32xf32>
    %658 = math.exp %655 : vector<2x32xf32>
    %cst_210 = arith.constant 1.000000e+00 : f32
    %659 = vector.broadcast %cst_210 : f32 to vector<2x32xf32>
    %660 = arith.subf %658, %659 : vector<2x32xf32>
    %cst_211 = arith.constant 1.67326319 : f32
    %661 = vector.broadcast %cst_211 : f32 to vector<2x32xf32>
    %662 = arith.mulf %661, %660 : vector<2x32xf32>
    %663 = arith.select %657, %655, %662 : vector<2x32xi1>, vector<2x32xf32>
    %cst_212 = arith.constant 1.05070102 : f32
    %664 = vector.broadcast %cst_212 : f32 to vector<2x32xf32>
    %665 = arith.mulf %664, %663 : vector<2x32xf32>
    %666 = tpu.concatenate %655, %665 in 1 : vector<2x32xf32>, vector<2x32xf32> -> vector<2x64xf32>
    %cst_213 = arith.constant dense<0.000000e+00> : vector<2x114xf32>
    %667 = tpu.matmul %666, %610, %cst_213 {dimension_numbers = #tpu.dot_dimension_numbers<[1], [0], [0], [1], [0, 0, 1, 1], [], []>} : vector<2x64xf32>, vector<64x114xf32>, vector<2x114xf32> -> vector<2x114xf32>
    %668 = vector.broadcast %611 : vector<1x114xf32> to vector<2x114xf32>
    %669 = arith.addf %667, %668 : vector<2x114xf32>
    %670 = vector.extract_strided_slice %669 {offsets = [0, 0], sizes = [2, 6], strides = [1, 1]} : vector<2x114xf32> to vector<2x6xf32>
    %671 = vector.extract_strided_slice %669 {offsets = [0, 5], sizes = [2, 1], strides = [1, 1]} : vector<2x114xf32> to vector<2x1xf32>
    %672 = vector.extract_strided_slice %669 {offsets = [0, 6], sizes = [2, 7], strides = [1, 1]} : vector<2x114xf32> to vector<2x7xf32>
    %673 = vector.extract_strided_slice %669 {offsets = [0, 13], sizes = [2, 100], strides = [1, 1]} : vector<2x114xf32> to vector<2x100xf32>
    %674 = vector.extract_strided_slice %669 {offsets = [0, 113], sizes = [2, 1], strides = [1, 1]} : vector<2x114xf32> to vector<2x1xf32>
    %cst_214 = arith.constant dense<0xFF800000> : vector<2xf32>
    %675 = vector.multi_reduction <maximumf>, %670, %cst_214 [1] : vector<2x6xf32> to vector<2xf32>
    %676 = vector.shape_cast %675 : vector<2xf32> to vector<2x1xf32>
    %677 = vector.broadcast %676 : vector<2x1xf32> to vector<2x6xf32>
    %678 = arith.subf %670, %677 : vector<2x6xf32>
    %679 = math.exp %678 : vector<2x6xf32>
    %cst_215 = arith.constant dense<0.000000e+00> : vector<2xf32>
    %680 = vector.multi_reduction <add>, %679, %cst_215 [1] : vector<2x6xf32> to vector<2xf32>
    %681 = vector.shape_cast %680 : vector<2xf32> to vector<2x1xf32>
    %682 = math.log %681 : vector<2x1xf32>
    %683 = arith.addf %682, %676 : vector<2x1xf32>
    %684 = vector.broadcast %683 : vector<2x1xf32> to vector<2x6xf32>
    %685 = arith.subf %670, %684 : vector<2x6xf32>
    %686 = vector.shape_cast %673 : vector<2x100xf32> to vector<2x1x100xf32>
    %687 = vector.broadcast %686 : vector<2x1x100xf32> to vector<2x8x100xf32>
    %688 = arith.addf %687, %29 : vector<2x8x100xf32>
    %cst_216 = arith.constant 0.000000e+00 : f32
    %689 = vector.broadcast %cst_216 : f32 to vector<2x8x100xf32>
    %690 = arith.cmpf ogt, %688, %689 : vector<2x8x100xf32>
    %691 = math.exp %688 : vector<2x8x100xf32>
    %cst_217 = arith.constant 1.000000e+00 : f32
    %692 = vector.broadcast %cst_217 : f32 to vector<2x8x100xf32>
    %693 = arith.subf %691, %692 : vector<2x8x100xf32>
    %cst_218 = arith.constant 1.67326319 : f32
    %694 = vector.broadcast %cst_218 : f32 to vector<2x8x100xf32>
    %695 = arith.mulf %694, %693 : vector<2x8x100xf32>
    %696 = arith.select %690, %688, %695 : vector<2x8x100xi1>, vector<2x8x100xf32>
    %cst_219 = arith.constant 1.05070102 : f32
    %697 = vector.broadcast %cst_219 : f32 to vector<2x8x100xf32>
    %698 = arith.mulf %697, %696 : vector<2x8x100xf32>
    %699 = vector.shape_cast %612 : vector<1x100xf32> to vector<1x1x100xf32>
    %700 = vector.broadcast %699 : vector<1x1x100xf32> to vector<2x8x100xf32>
    %701 = arith.mulf %698, %700 : vector<2x8x100xf32>
    %cst_220 = arith.constant dense<0.000000e+00> : vector<2x8xf32>
    %702 = vector.multi_reduction <add>, %701, %cst_220 [2] : vector<2x8x100xf32> to vector<2x8xf32>
    %703 = vector.broadcast %613 : vector<1x1xf32> to vector<2x8xf32>
    %704 = arith.addf %702, %703 : vector<2x8xf32>
    %705 = tpu.concatenate %704, %671 in 1 : vector<2x8xf32>, vector<2x1xf32> -> vector<2x9xf32>
    %cst_221 = arith.constant dense<0xFF800000> : vector<2xf32>
    %706 = vector.multi_reduction <maximumf>, %705, %cst_221 [1] : vector<2x9xf32> to vector<2xf32>
    %707 = vector.shape_cast %706 : vector<2xf32> to vector<2x1xf32>
    %708 = vector.broadcast %707 : vector<2x1xf32> to vector<2x9xf32>
    %709 = arith.subf %705, %708 : vector<2x9xf32>
    %710 = math.exp %709 : vector<2x9xf32>
    %cst_222 = arith.constant dense<0.000000e+00> : vector<2xf32>
    %711 = vector.multi_reduction <add>, %710, %cst_222 [1] : vector<2x9xf32> to vector<2xf32>
    %712 = vector.shape_cast %711 : vector<2xf32> to vector<2x1xf32>
    %713 = math.log %712 : vector<2x1xf32>
    %714 = arith.addf %713, %707 : vector<2x1xf32>
    %715 = vector.broadcast %714 : vector<2x1xf32> to vector<2x9xf32>
    %716 = arith.subf %705, %715 : vector<2x9xf32>
    %c192_223 = arith.constant 192 : index
    %c0_224 = arith.constant 0 : index
    %717 = vector.load %arg0[%c192_223, %c0_224] : memref<272x128xf32, #tpu.memory_space<vmem>>, vector<6x32xf32>
    %cst_225 = arith.constant dense<0xFF800000> : vector<2xf32>
    %718 = vector.multi_reduction <maximumf>, %685, %cst_225 [1] : vector<2x6xf32> to vector<2xf32>
    %719 = vector.shape_cast %718 : vector<2xf32> to vector<2x1xf32>
    %720 = vector.broadcast %719 : vector<2x1xf32> to vector<2x6xf32>
    %721 = arith.cmpf oeq, %685, %720 : vector<2x6xf32>
    %cst_226 = arith.constant 6.000000e+00 : f32
    %722 = vector.broadcast %cst_226 : f32 to vector<2x6xf32>
    %723 = arith.select %721, %44, %722 : vector<2x6xi1>, vector<2x6xf32>
    %cst_227 = arith.constant dense<0x7F800000> : vector<2xf32>
    %724 = vector.multi_reduction <minimumf>, %723, %cst_227 [1] : vector<2x6xf32> to vector<2xf32>
    %725 = vector.shape_cast %724 : vector<2xf32> to vector<2x1xf32>
    %cst_228 = arith.constant 0.000000e+00 : f32
    %726 = vector.broadcast %cst_228 : f32 to vector<2x32xf32>
    %cst_229 = arith.constant 0.000000e+00 : f32
    %727 = vector.broadcast %cst_229 : f32 to vector<2x1xf32>
    %728 = arith.cmpf oeq, %725, %727 : vector<2x1xf32>
    %cst_230 = arith.constant 1.000000e+00 : f32
    %cst_231 = arith.constant 0.000000e+00 : f32
    %729 = vector.broadcast %cst_230 : f32 to vector<2x1xf32>
    %730 = vector.broadcast %cst_231 : f32 to vector<2x1xf32>
    %731 = arith.select %728, %729, %730 : vector<2x1xi1>, vector<2x1xf32>
    %732 = vector.extract_strided_slice %717 {offsets = [0, 0], sizes = [1, 32], strides = [1, 1]} : vector<6x32xf32> to vector<1x32xf32>
    %733 = vector.broadcast %731 : vector<2x1xf32> to vector<2x32xf32>
    %734 = vector.broadcast %732 : vector<1x32xf32> to vector<2x32xf32>
    %735 = arith.mulf %733, %734 : vector<2x32xf32>
    %736 = arith.addf %726, %735 : vector<2x32xf32>
    %cst_232 = arith.constant 1.000000e+00 : f32
    %737 = vector.broadcast %cst_232 : f32 to vector<2x1xf32>
    %738 = arith.cmpf oeq, %725, %737 : vector<2x1xf32>
    %cst_233 = arith.constant 1.000000e+00 : f32
    %cst_234 = arith.constant 0.000000e+00 : f32
    %739 = vector.broadcast %cst_233 : f32 to vector<2x1xf32>
    %740 = vector.broadcast %cst_234 : f32 to vector<2x1xf32>
    %741 = arith.select %738, %739, %740 : vector<2x1xi1>, vector<2x1xf32>
    %742 = vector.extract_strided_slice %717 {offsets = [1, 0], sizes = [1, 32], strides = [1, 1]} : vector<6x32xf32> to vector<1x32xf32>
    %743 = vector.broadcast %741 : vector<2x1xf32> to vector<2x32xf32>
    %744 = vector.broadcast %742 : vector<1x32xf32> to vector<2x32xf32>
    %745 = arith.mulf %743, %744 : vector<2x32xf32>
    %746 = arith.addf %736, %745 : vector<2x32xf32>
    %cst_235 = arith.constant 2.000000e+00 : f32
    %747 = vector.broadcast %cst_235 : f32 to vector<2x1xf32>
    %748 = arith.cmpf oeq, %725, %747 : vector<2x1xf32>
    %cst_236 = arith.constant 1.000000e+00 : f32
    %cst_237 = arith.constant 0.000000e+00 : f32
    %749 = vector.broadcast %cst_236 : f32 to vector<2x1xf32>
    %750 = vector.broadcast %cst_237 : f32 to vector<2x1xf32>
    %751 = arith.select %748, %749, %750 : vector<2x1xi1>, vector<2x1xf32>
    %752 = vector.extract_strided_slice %717 {offsets = [2, 0], sizes = [1, 32], strides = [1, 1]} : vector<6x32xf32> to vector<1x32xf32>
    %753 = vector.broadcast %751 : vector<2x1xf32> to vector<2x32xf32>
    %754 = vector.broadcast %752 : vector<1x32xf32> to vector<2x32xf32>
    %755 = arith.mulf %753, %754 : vector<2x32xf32>
    %756 = arith.addf %746, %755 : vector<2x32xf32>
    %cst_238 = arith.constant 3.000000e+00 : f32
    %757 = vector.broadcast %cst_238 : f32 to vector<2x1xf32>
    %758 = arith.cmpf oeq, %725, %757 : vector<2x1xf32>
    %cst_239 = arith.constant 1.000000e+00 : f32
    %cst_240 = arith.constant 0.000000e+00 : f32
    %759 = vector.broadcast %cst_239 : f32 to vector<2x1xf32>
    %760 = vector.broadcast %cst_240 : f32 to vector<2x1xf32>
    %761 = arith.select %758, %759, %760 : vector<2x1xi1>, vector<2x1xf32>
    %762 = vector.extract_strided_slice %717 {offsets = [3, 0], sizes = [1, 32], strides = [1, 1]} : vector<6x32xf32> to vector<1x32xf32>
    %763 = vector.broadcast %761 : vector<2x1xf32> to vector<2x32xf32>
    %764 = vector.broadcast %762 : vector<1x32xf32> to vector<2x32xf32>
    %765 = arith.mulf %763, %764 : vector<2x32xf32>
    %766 = arith.addf %756, %765 : vector<2x32xf32>
    %cst_241 = arith.constant 4.000000e+00 : f32
    %767 = vector.broadcast %cst_241 : f32 to vector<2x1xf32>
    %768 = arith.cmpf oeq, %725, %767 : vector<2x1xf32>
    %cst_242 = arith.constant 1.000000e+00 : f32
    %cst_243 = arith.constant 0.000000e+00 : f32
    %769 = vector.broadcast %cst_242 : f32 to vector<2x1xf32>
    %770 = vector.broadcast %cst_243 : f32 to vector<2x1xf32>
    %771 = arith.select %768, %769, %770 : vector<2x1xi1>, vector<2x1xf32>
    %772 = vector.extract_strided_slice %717 {offsets = [4, 0], sizes = [1, 32], strides = [1, 1]} : vector<6x32xf32> to vector<1x32xf32>
    %773 = vector.broadcast %771 : vector<2x1xf32> to vector<2x32xf32>
    %774 = vector.broadcast %772 : vector<1x32xf32> to vector<2x32xf32>
    %775 = arith.mulf %773, %774 : vector<2x32xf32>
    %776 = arith.addf %766, %775 : vector<2x32xf32>
    %cst_244 = arith.constant 5.000000e+00 : f32
    %777 = vector.broadcast %cst_244 : f32 to vector<2x1xf32>
    %778 = arith.cmpf oeq, %725, %777 : vector<2x1xf32>
    %cst_245 = arith.constant 1.000000e+00 : f32
    %cst_246 = arith.constant 0.000000e+00 : f32
    %779 = vector.broadcast %cst_245 : f32 to vector<2x1xf32>
    %780 = vector.broadcast %cst_246 : f32 to vector<2x1xf32>
    %781 = arith.select %778, %779, %780 : vector<2x1xi1>, vector<2x1xf32>
    %782 = vector.extract_strided_slice %717 {offsets = [5, 0], sizes = [1, 32], strides = [1, 1]} : vector<6x32xf32> to vector<1x32xf32>
    %783 = vector.broadcast %781 : vector<2x1xf32> to vector<2x32xf32>
    %784 = vector.broadcast %782 : vector<1x32xf32> to vector<2x32xf32>
    %785 = arith.mulf %783, %784 : vector<2x32xf32>
    %786 = arith.addf %776, %785 : vector<2x32xf32>
    %cst_247 = arith.constant 0.000000e+00 : f32
    %787 = vector.broadcast %cst_247 : f32 to vector<2x7xf32>
    %c0_248 = arith.constant 0 : index
    %c0_249 = arith.constant 0 : index
    %788 = vector.load %arg0[%c0_248, %c0_249] : memref<272x128xf32, #tpu.memory_space<vmem>>, vector<96x128xf32>
    %c232_250 = arith.constant 232 : index
    %c0_251 = arith.constant 0 : index
    %789 = vector.load %arg0[%c232_250, %c0_251] : memref<272x128xf32, #tpu.memory_space<vmem>>, vector<1x128xf32>
    %c96_252 = arith.constant 96 : index
    %c0_253 = arith.constant 0 : index
    %790 = vector.load %arg0[%c96_252, %c0_253] : memref<272x128xf32, #tpu.memory_space<vmem>>, vector<64x114xf32>
    %c240_254 = arith.constant 240 : index
    %c0_255 = arith.constant 0 : index
    %791 = vector.load %arg0[%c240_254, %c0_255] : memref<272x128xf32, #tpu.memory_space<vmem>>, vector<1x114xf32>
    %c256_256 = arith.constant 256 : index
    %c0_257 = arith.constant 0 : index
    %792 = vector.load %arg0[%c256_256, %c0_257] : memref<272x128xf32, #tpu.memory_space<vmem>>, vector<1x100xf32>
    %c264_258 = arith.constant 264 : index
    %c1_259 = arith.constant 1 : index
    %793 = vector.load %arg0[%c264_258, %c1_259] : memref<272x128xf32, #tpu.memory_space<vmem>>, vector<1x1xf32>
    %794 = vector.broadcast %674 : vector<2x1xf32> to vector<2x8xf32>
    %795 = arith.addf %13, %794 : vector<2x8xf32>
    %cst_260 = arith.constant dense<0xFF800000> : vector<2xf32>
    %796 = vector.multi_reduction <maximumf>, %795, %cst_260 [1] : vector<2x8xf32> to vector<2xf32>
    %797 = vector.shape_cast %796 : vector<2xf32> to vector<2x1xf32>
    %798 = vector.broadcast %797 : vector<2x1xf32> to vector<2x8xf32>
    %799 = arith.subf %795, %798 : vector<2x8xf32>
    %800 = math.exp %799 : vector<2x8xf32>
    %cst_261 = arith.constant dense<0.000000e+00> : vector<2xf32>
    %801 = vector.multi_reduction <add>, %800, %cst_261 [1] : vector<2x8xf32> to vector<2xf32>
    %802 = vector.shape_cast %801 : vector<2xf32> to vector<2x1xf32>
    %803 = tpu.reciprocal %802 {approx = true} : vector<2x1xf32> -> vector<2x1xf32>
    %804 = vector.broadcast %803 : vector<2x1xf32> to vector<2x8xf32>
    %805 = arith.mulf %800, %804 : vector<2x8xf32>
    %806 = vector.shape_cast %805 : vector<2x8xf32> to vector<2x8x1xf32>
    %807 = vector.broadcast %806 : vector<2x8x1xf32> to vector<2x8x32xf32>
    %808 = arith.mulf %807, %6 : vector<2x8x32xf32>
    %cst_262 = arith.constant dense<0.000000e+00> : vector<2x32xf32>
    %809 = vector.multi_reduction <add>, %808, %cst_262 [1] : vector<2x8x32xf32> to vector<2x32xf32>
    %810 = tpu.concatenate %786, %809, %655 in 1 : vector<2x32xf32>, vector<2x32xf32>, vector<2x32xf32> -> vector<2x96xf32>
    %cst_263 = arith.constant dense<0.000000e+00> : vector<2x128xf32>
    %811 = tpu.matmul %810, %788, %cst_263 {dimension_numbers = #tpu.dot_dimension_numbers<[1], [0], [0], [1], [0, 0, 1, 1], [], []>} : vector<2x96xf32>, vector<96x128xf32>, vector<2x128xf32> -> vector<2x128xf32>
    %812 = vector.broadcast %789 : vector<1x128xf32> to vector<2x128xf32>
    %813 = arith.addf %811, %812 : vector<2x128xf32>
    %814 = vector.extract_strided_slice %813 {offsets = [0, 0], sizes = [2, 32], strides = [1, 1]} : vector<2x128xf32> to vector<2x32xf32>
    %815 = arith.negf %814 : vector<2x32xf32>
    %816 = math.exp %815 : vector<2x32xf32>
    %cst_264 = arith.constant 1.000000e+00 : f32
    %817 = vector.broadcast %cst_264 : f32 to vector<2x32xf32>
    %818 = arith.addf %817, %816 : vector<2x32xf32>
    %819 = arith.divf %817, %818 : vector<2x32xf32>
    %820 = vector.extract_strided_slice %813 {offsets = [0, 32], sizes = [2, 32], strides = [1, 1]} : vector<2x128xf32> to vector<2x32xf32>
    %821 = arith.negf %820 : vector<2x32xf32>
    %822 = math.exp %821 : vector<2x32xf32>
    %cst_265 = arith.constant 1.000000e+00 : f32
    %823 = vector.broadcast %cst_265 : f32 to vector<2x32xf32>
    %824 = arith.addf %823, %822 : vector<2x32xf32>
    %825 = arith.divf %823, %824 : vector<2x32xf32>
    %826 = vector.extract_strided_slice %813 {offsets = [0, 64], sizes = [2, 32], strides = [1, 1]} : vector<2x128xf32> to vector<2x32xf32>
    %827 = vector.extract_strided_slice %813 {offsets = [0, 96], sizes = [2, 32], strides = [1, 1]} : vector<2x128xf32> to vector<2x32xf32>
    %828 = arith.mulf %819, %827 : vector<2x32xf32>
    %829 = arith.addf %826, %828 : vector<2x32xf32>
    %830 = math.tanh %829 : vector<2x32xf32>
    %cst_266 = arith.constant 1.000000e+00 : f32
    %831 = vector.broadcast %cst_266 : f32 to vector<2x32xf32>
    %832 = arith.subf %831, %825 : vector<2x32xf32>
    %833 = arith.mulf %832, %830 : vector<2x32xf32>
    %834 = arith.mulf %825, %655 : vector<2x32xf32>
    %835 = arith.addf %833, %834 : vector<2x32xf32>
    %cst_267 = arith.constant 0.000000e+00 : f32
    %836 = vector.broadcast %cst_267 : f32 to vector<2x32xf32>
    %837 = arith.cmpf ogt, %835, %836 : vector<2x32xf32>
    %838 = math.exp %835 : vector<2x32xf32>
    %cst_268 = arith.constant 1.000000e+00 : f32
    %839 = vector.broadcast %cst_268 : f32 to vector<2x32xf32>
    %840 = arith.subf %838, %839 : vector<2x32xf32>
    %cst_269 = arith.constant 1.67326319 : f32
    %841 = vector.broadcast %cst_269 : f32 to vector<2x32xf32>
    %842 = arith.mulf %841, %840 : vector<2x32xf32>
    %843 = arith.select %837, %835, %842 : vector<2x32xi1>, vector<2x32xf32>
    %cst_270 = arith.constant 1.05070102 : f32
    %844 = vector.broadcast %cst_270 : f32 to vector<2x32xf32>
    %845 = arith.mulf %844, %843 : vector<2x32xf32>
    %846 = tpu.concatenate %835, %845 in 1 : vector<2x32xf32>, vector<2x32xf32> -> vector<2x64xf32>
    %cst_271 = arith.constant dense<0.000000e+00> : vector<2x114xf32>
    %847 = tpu.matmul %846, %790, %cst_271 {dimension_numbers = #tpu.dot_dimension_numbers<[1], [0], [0], [1], [0, 0, 1, 1], [], []>} : vector<2x64xf32>, vector<64x114xf32>, vector<2x114xf32> -> vector<2x114xf32>
    %848 = vector.broadcast %791 : vector<1x114xf32> to vector<2x114xf32>
    %849 = arith.addf %847, %848 : vector<2x114xf32>
    %850 = vector.extract_strided_slice %849 {offsets = [0, 0], sizes = [2, 6], strides = [1, 1]} : vector<2x114xf32> to vector<2x6xf32>
    %851 = vector.extract_strided_slice %849 {offsets = [0, 5], sizes = [2, 1], strides = [1, 1]} : vector<2x114xf32> to vector<2x1xf32>
    %852 = vector.extract_strided_slice %849 {offsets = [0, 6], sizes = [2, 7], strides = [1, 1]} : vector<2x114xf32> to vector<2x7xf32>
    %853 = vector.extract_strided_slice %849 {offsets = [0, 13], sizes = [2, 100], strides = [1, 1]} : vector<2x114xf32> to vector<2x100xf32>
    %854 = vector.extract_strided_slice %849 {offsets = [0, 113], sizes = [2, 1], strides = [1, 1]} : vector<2x114xf32> to vector<2x1xf32>
    %cst_272 = arith.constant dense<0xFF800000> : vector<2xf32>
    %855 = vector.multi_reduction <maximumf>, %850, %cst_272 [1] : vector<2x6xf32> to vector<2xf32>
    %856 = vector.shape_cast %855 : vector<2xf32> to vector<2x1xf32>
    %857 = vector.broadcast %856 : vector<2x1xf32> to vector<2x6xf32>
    %858 = arith.subf %850, %857 : vector<2x6xf32>
    %859 = math.exp %858 : vector<2x6xf32>
    %cst_273 = arith.constant dense<0.000000e+00> : vector<2xf32>
    %860 = vector.multi_reduction <add>, %859, %cst_273 [1] : vector<2x6xf32> to vector<2xf32>
    %861 = vector.shape_cast %860 : vector<2xf32> to vector<2x1xf32>
    %862 = math.log %861 : vector<2x1xf32>
    %863 = arith.addf %862, %856 : vector<2x1xf32>
    %864 = vector.broadcast %863 : vector<2x1xf32> to vector<2x6xf32>
    %865 = arith.subf %850, %864 : vector<2x6xf32>
    %866 = vector.shape_cast %853 : vector<2x100xf32> to vector<2x1x100xf32>
    %867 = vector.broadcast %866 : vector<2x1x100xf32> to vector<2x8x100xf32>
    %868 = arith.addf %867, %29 : vector<2x8x100xf32>
    %cst_274 = arith.constant 0.000000e+00 : f32
    %869 = vector.broadcast %cst_274 : f32 to vector<2x8x100xf32>
    %870 = arith.cmpf ogt, %868, %869 : vector<2x8x100xf32>
    %871 = math.exp %868 : vector<2x8x100xf32>
    %cst_275 = arith.constant 1.000000e+00 : f32
    %872 = vector.broadcast %cst_275 : f32 to vector<2x8x100xf32>
    %873 = arith.subf %871, %872 : vector<2x8x100xf32>
    %cst_276 = arith.constant 1.67326319 : f32
    %874 = vector.broadcast %cst_276 : f32 to vector<2x8x100xf32>
    %875 = arith.mulf %874, %873 : vector<2x8x100xf32>
    %876 = arith.select %870, %868, %875 : vector<2x8x100xi1>, vector<2x8x100xf32>
    %cst_277 = arith.constant 1.05070102 : f32
    %877 = vector.broadcast %cst_277 : f32 to vector<2x8x100xf32>
    %878 = arith.mulf %877, %876 : vector<2x8x100xf32>
    %879 = vector.shape_cast %792 : vector<1x100xf32> to vector<1x1x100xf32>
    %880 = vector.broadcast %879 : vector<1x1x100xf32> to vector<2x8x100xf32>
    %881 = arith.mulf %878, %880 : vector<2x8x100xf32>
    %cst_278 = arith.constant dense<0.000000e+00> : vector<2x8xf32>
    %882 = vector.multi_reduction <add>, %881, %cst_278 [2] : vector<2x8x100xf32> to vector<2x8xf32>
    %883 = vector.broadcast %793 : vector<1x1xf32> to vector<2x8xf32>
    %884 = arith.addf %882, %883 : vector<2x8xf32>
    %885 = tpu.concatenate %884, %851 in 1 : vector<2x8xf32>, vector<2x1xf32> -> vector<2x9xf32>
    %cst_279 = arith.constant dense<0xFF800000> : vector<2xf32>
    %886 = vector.multi_reduction <maximumf>, %885, %cst_279 [1] : vector<2x9xf32> to vector<2xf32>
    %887 = vector.shape_cast %886 : vector<2xf32> to vector<2x1xf32>
    %888 = vector.broadcast %887 : vector<2x1xf32> to vector<2x9xf32>
    %889 = arith.subf %885, %888 : vector<2x9xf32>
    %890 = math.exp %889 : vector<2x9xf32>
    %cst_280 = arith.constant dense<0.000000e+00> : vector<2xf32>
    %891 = vector.multi_reduction <add>, %890, %cst_280 [1] : vector<2x9xf32> to vector<2xf32>
    %892 = vector.shape_cast %891 : vector<2xf32> to vector<2x1xf32>
    %893 = math.log %892 : vector<2x1xf32>
    %894 = arith.addf %893, %887 : vector<2x1xf32>
    %895 = vector.broadcast %894 : vector<2x1xf32> to vector<2x9xf32>
    %896 = arith.subf %885, %895 : vector<2x9xf32>
    %c200_281 = arith.constant 200 : index
    %c0_282 = arith.constant 0 : index
    %897 = vector.load %arg0[%c200_281, %c0_282] : memref<272x128xf32, #tpu.memory_space<vmem>>, vector<7x7xf32>
    %898 = vector.shape_cast %42 : vector<2x7xf32> to vector<2x1x7xf32>
    %899 = vector.shape_cast %897 : vector<7x7xf32> to vector<1x7x7xf32>
    %900 = vector.broadcast %898 : vector<2x1x7xf32> to vector<2x7x7xf32>
    %901 = vector.broadcast %899 : vector<1x7x7xf32> to vector<2x7x7xf32>
    %902 = arith.addf %900, %901 : vector<2x7x7xf32>
    %cst_283 = arith.constant dense<0xFF800000> : vector<2x7xf32>
    %903 = vector.multi_reduction <maximumf>, %902, %cst_283 [2] : vector<2x7x7xf32> to vector<2x7xf32>
    %904 = vector.shape_cast %903 : vector<2x7xf32> to vector<2x7x1xf32>
    %905 = vector.broadcast %904 : vector<2x7x1xf32> to vector<2x7x7xf32>
    %906 = arith.cmpf oeq, %902, %905 : vector<2x7x7xf32>
    %cst_284 = arith.constant 7.000000e+00 : f32
    %907 = vector.broadcast %cst_284 : f32 to vector<2x7x7xf32>
    %908 = arith.select %906, %46, %907 : vector<2x7x7xi1>, vector<2x7x7xf32>
    %cst_285 = arith.constant dense<0x7F800000> : vector<2x7xf32>
    %909 = vector.multi_reduction <minimumf>, %908, %cst_285 [2] : vector<2x7x7xf32> to vector<2x7xf32>
    %910 = arith.addf %903, %852 : vector<2x7xf32>
    %cst_286 = arith.constant 0.000000e+00 : f32
    %911 = vector.broadcast %cst_286 : f32 to vector<2x1xf32>
    %c0_287 = arith.constant 0 : index
    %c0_288 = arith.constant 0 : index
    %912 = vector.load %arg0[%c0_287, %c0_288] : memref<272x128xf32, #tpu.memory_space<vmem>>, vector<96x128xf32>
    %c232_289 = arith.constant 232 : index
    %c0_290 = arith.constant 0 : index
    %913 = vector.load %arg0[%c232_289, %c0_290] : memref<272x128xf32, #tpu.memory_space<vmem>>, vector<1x128xf32>
    %c96_291 = arith.constant 96 : index
    %c0_292 = arith.constant 0 : index
    %914 = vector.load %arg0[%c96_291, %c0_292] : memref<272x128xf32, #tpu.memory_space<vmem>>, vector<64x114xf32>
    %c240_293 = arith.constant 240 : index
    %c0_294 = arith.constant 0 : index
    %915 = vector.load %arg0[%c240_293, %c0_294] : memref<272x128xf32, #tpu.memory_space<vmem>>, vector<1x114xf32>
    %c256_295 = arith.constant 256 : index
    %c0_296 = arith.constant 0 : index
    %916 = vector.load %arg0[%c256_295, %c0_296] : memref<272x128xf32, #tpu.memory_space<vmem>>, vector<1x100xf32>
    %c264_297 = arith.constant 264 : index
    %c1_298 = arith.constant 1 : index
    %917 = vector.load %arg0[%c264_297, %c1_298] : memref<272x128xf32, #tpu.memory_space<vmem>>, vector<1x1xf32>
    %918 = vector.broadcast %854 : vector<2x1xf32> to vector<2x8xf32>
    %919 = arith.addf %13, %918 : vector<2x8xf32>
    %cst_299 = arith.constant dense<0xFF800000> : vector<2xf32>
    %920 = vector.multi_reduction <maximumf>, %919, %cst_299 [1] : vector<2x8xf32> to vector<2xf32>
    %921 = vector.shape_cast %920 : vector<2xf32> to vector<2x1xf32>
    %922 = vector.broadcast %921 : vector<2x1xf32> to vector<2x8xf32>
    %923 = arith.subf %919, %922 : vector<2x8xf32>
    %924 = math.exp %923 : vector<2x8xf32>
    %cst_300 = arith.constant dense<0.000000e+00> : vector<2xf32>
    %925 = vector.multi_reduction <add>, %924, %cst_300 [1] : vector<2x8xf32> to vector<2xf32>
    %926 = vector.shape_cast %925 : vector<2xf32> to vector<2x1xf32>
    %927 = tpu.reciprocal %926 {approx = true} : vector<2x1xf32> -> vector<2x1xf32>
    %928 = vector.broadcast %927 : vector<2x1xf32> to vector<2x8xf32>
    %929 = arith.mulf %924, %928 : vector<2x8xf32>
    %930 = vector.shape_cast %929 : vector<2x8xf32> to vector<2x8x1xf32>
    %931 = vector.broadcast %930 : vector<2x8x1xf32> to vector<2x8x32xf32>
    %932 = arith.mulf %931, %6 : vector<2x8x32xf32>
    %cst_301 = arith.constant dense<0.000000e+00> : vector<2x32xf32>
    %933 = vector.multi_reduction <add>, %932, %cst_301 [1] : vector<2x8x32xf32> to vector<2x32xf32>
    %934 = tpu.concatenate %786, %933, %835 in 1 : vector<2x32xf32>, vector<2x32xf32>, vector<2x32xf32> -> vector<2x96xf32>
    %cst_302 = arith.constant dense<0.000000e+00> : vector<2x128xf32>
    %935 = tpu.matmul %934, %912, %cst_302 {dimension_numbers = #tpu.dot_dimension_numbers<[1], [0], [0], [1], [0, 0, 1, 1], [], []>} : vector<2x96xf32>, vector<96x128xf32>, vector<2x128xf32> -> vector<2x128xf32>
    %936 = vector.broadcast %913 : vector<1x128xf32> to vector<2x128xf32>
    %937 = arith.addf %935, %936 : vector<2x128xf32>
    %938 = vector.extract_strided_slice %937 {offsets = [0, 0], sizes = [2, 32], strides = [1, 1]} : vector<2x128xf32> to vector<2x32xf32>
    %939 = arith.negf %938 : vector<2x32xf32>
    %940 = math.exp %939 : vector<2x32xf32>
    %cst_303 = arith.constant 1.000000e+00 : f32
    %941 = vector.broadcast %cst_303 : f32 to vector<2x32xf32>
    %942 = arith.addf %941, %940 : vector<2x32xf32>
    %943 = arith.divf %941, %942 : vector<2x32xf32>
    %944 = vector.extract_strided_slice %937 {offsets = [0, 32], sizes = [2, 32], strides = [1, 1]} : vector<2x128xf32> to vector<2x32xf32>
    %945 = arith.negf %944 : vector<2x32xf32>
    %946 = math.exp %945 : vector<2x32xf32>
    %cst_304 = arith.constant 1.000000e+00 : f32
    %947 = vector.broadcast %cst_304 : f32 to vector<2x32xf32>
    %948 = arith.addf %947, %946 : vector<2x32xf32>
    %949 = arith.divf %947, %948 : vector<2x32xf32>
    %950 = vector.extract_strided_slice %937 {offsets = [0, 64], sizes = [2, 32], strides = [1, 1]} : vector<2x128xf32> to vector<2x32xf32>
    %951 = vector.extract_strided_slice %937 {offsets = [0, 96], sizes = [2, 32], strides = [1, 1]} : vector<2x128xf32> to vector<2x32xf32>
    %952 = arith.mulf %943, %951 : vector<2x32xf32>
    %953 = arith.addf %950, %952 : vector<2x32xf32>
    %954 = math.tanh %953 : vector<2x32xf32>
    %cst_305 = arith.constant 1.000000e+00 : f32
    %955 = vector.broadcast %cst_305 : f32 to vector<2x32xf32>
    %956 = arith.subf %955, %949 : vector<2x32xf32>
    %957 = arith.mulf %956, %954 : vector<2x32xf32>
    %958 = arith.mulf %949, %835 : vector<2x32xf32>
    %959 = arith.addf %957, %958 : vector<2x32xf32>
    %cst_306 = arith.constant 0.000000e+00 : f32
    %960 = vector.broadcast %cst_306 : f32 to vector<2x32xf32>
    %961 = arith.cmpf ogt, %959, %960 : vector<2x32xf32>
    %962 = math.exp %959 : vector<2x32xf32>
    %cst_307 = arith.constant 1.000000e+00 : f32
    %963 = vector.broadcast %cst_307 : f32 to vector<2x32xf32>
    %964 = arith.subf %962, %963 : vector<2x32xf32>
    %cst_308 = arith.constant 1.67326319 : f32
    %965 = vector.broadcast %cst_308 : f32 to vector<2x32xf32>
    %966 = arith.mulf %965, %964 : vector<2x32xf32>
    %967 = arith.select %961, %959, %966 : vector<2x32xi1>, vector<2x32xf32>
    %cst_309 = arith.constant 1.05070102 : f32
    %968 = vector.broadcast %cst_309 : f32 to vector<2x32xf32>
    %969 = arith.mulf %968, %967 : vector<2x32xf32>
    %970 = tpu.concatenate %959, %969 in 1 : vector<2x32xf32>, vector<2x32xf32> -> vector<2x64xf32>
    %cst_310 = arith.constant dense<0.000000e+00> : vector<2x114xf32>
    %971 = tpu.matmul %970, %914, %cst_310 {dimension_numbers = #tpu.dot_dimension_numbers<[1], [0], [0], [1], [0, 0, 1, 1], [], []>} : vector<2x64xf32>, vector<64x114xf32>, vector<2x114xf32> -> vector<2x114xf32>
    %972 = vector.broadcast %915 : vector<1x114xf32> to vector<2x114xf32>
    %973 = arith.addf %971, %972 : vector<2x114xf32>
    %974 = vector.extract_strided_slice %973 {offsets = [0, 0], sizes = [2, 6], strides = [1, 1]} : vector<2x114xf32> to vector<2x6xf32>
    %975 = vector.extract_strided_slice %973 {offsets = [0, 5], sizes = [2, 1], strides = [1, 1]} : vector<2x114xf32> to vector<2x1xf32>
    %976 = vector.extract_strided_slice %973 {offsets = [0, 6], sizes = [2, 7], strides = [1, 1]} : vector<2x114xf32> to vector<2x7xf32>
    %977 = vector.extract_strided_slice %973 {offsets = [0, 13], sizes = [2, 100], strides = [1, 1]} : vector<2x114xf32> to vector<2x100xf32>
    %978 = vector.extract_strided_slice %973 {offsets = [0, 113], sizes = [2, 1], strides = [1, 1]} : vector<2x114xf32> to vector<2x1xf32>
    %cst_311 = arith.constant dense<0xFF800000> : vector<2xf32>
    %979 = vector.multi_reduction <maximumf>, %974, %cst_311 [1] : vector<2x6xf32> to vector<2xf32>
    %980 = vector.shape_cast %979 : vector<2xf32> to vector<2x1xf32>
    %981 = vector.broadcast %980 : vector<2x1xf32> to vector<2x6xf32>
    %982 = arith.subf %974, %981 : vector<2x6xf32>
    %983 = math.exp %982 : vector<2x6xf32>
    %cst_312 = arith.constant dense<0.000000e+00> : vector<2xf32>
    %984 = vector.multi_reduction <add>, %983, %cst_312 [1] : vector<2x6xf32> to vector<2xf32>
    %985 = vector.shape_cast %984 : vector<2xf32> to vector<2x1xf32>
    %986 = math.log %985 : vector<2x1xf32>
    %987 = arith.addf %986, %980 : vector<2x1xf32>
    %988 = vector.broadcast %987 : vector<2x1xf32> to vector<2x6xf32>
    %989 = arith.subf %974, %988 : vector<2x6xf32>
    %990 = vector.shape_cast %977 : vector<2x100xf32> to vector<2x1x100xf32>
    %991 = vector.broadcast %990 : vector<2x1x100xf32> to vector<2x8x100xf32>
    %992 = arith.addf %991, %29 : vector<2x8x100xf32>
    %cst_313 = arith.constant 0.000000e+00 : f32
    %993 = vector.broadcast %cst_313 : f32 to vector<2x8x100xf32>
    %994 = arith.cmpf ogt, %992, %993 : vector<2x8x100xf32>
    %995 = math.exp %992 : vector<2x8x100xf32>
    %cst_314 = arith.constant 1.000000e+00 : f32
    %996 = vector.broadcast %cst_314 : f32 to vector<2x8x100xf32>
    %997 = arith.subf %995, %996 : vector<2x8x100xf32>
    %cst_315 = arith.constant 1.67326319 : f32
    %998 = vector.broadcast %cst_315 : f32 to vector<2x8x100xf32>
    %999 = arith.mulf %998, %997 : vector<2x8x100xf32>
    %1000 = arith.select %994, %992, %999 : vector<2x8x100xi1>, vector<2x8x100xf32>
    %cst_316 = arith.constant 1.05070102 : f32
    %1001 = vector.broadcast %cst_316 : f32 to vector<2x8x100xf32>
    %1002 = arith.mulf %1001, %1000 : vector<2x8x100xf32>
    %1003 = vector.shape_cast %916 : vector<1x100xf32> to vector<1x1x100xf32>
    %1004 = vector.broadcast %1003 : vector<1x1x100xf32> to vector<2x8x100xf32>
    %1005 = arith.mulf %1002, %1004 : vector<2x8x100xf32>
    %cst_317 = arith.constant dense<0.000000e+00> : vector<2x8xf32>
    %1006 = vector.multi_reduction <add>, %1005, %cst_317 [2] : vector<2x8x100xf32> to vector<2x8xf32>
    %1007 = vector.broadcast %917 : vector<1x1xf32> to vector<2x8xf32>
    %1008 = arith.addf %1006, %1007 : vector<2x8xf32>
    %1009 = tpu.concatenate %1008, %975 in 1 : vector<2x8xf32>, vector<2x1xf32> -> vector<2x9xf32>
    %cst_318 = arith.constant dense<0xFF800000> : vector<2xf32>
    %1010 = vector.multi_reduction <maximumf>, %1009, %cst_318 [1] : vector<2x9xf32> to vector<2xf32>
    %1011 = vector.shape_cast %1010 : vector<2xf32> to vector<2x1xf32>
    %1012 = vector.broadcast %1011 : vector<2x1xf32> to vector<2x9xf32>
    %1013 = arith.subf %1009, %1012 : vector<2x9xf32>
    %1014 = math.exp %1013 : vector<2x9xf32>
    %cst_319 = arith.constant dense<0.000000e+00> : vector<2xf32>
    %1015 = vector.multi_reduction <add>, %1014, %cst_319 [1] : vector<2x9xf32> to vector<2xf32>
    %1016 = vector.shape_cast %1015 : vector<2xf32> to vector<2x1xf32>
    %1017 = math.log %1016 : vector<2x1xf32>
    %1018 = arith.addf %1017, %1011 : vector<2x1xf32>
    %1019 = vector.broadcast %1018 : vector<2x1xf32> to vector<2x9xf32>
    %1020 = arith.subf %1009, %1019 : vector<2x9xf32>
    %c200_320 = arith.constant 200 : index
    %c0_321 = arith.constant 0 : index
    %1021 = vector.load %arg0[%c200_320, %c0_321] : memref<272x128xf32, #tpu.memory_space<vmem>>, vector<7x7xf32>
    %1022 = vector.shape_cast %910 : vector<2x7xf32> to vector<2x1x7xf32>
    %1023 = vector.shape_cast %1021 : vector<7x7xf32> to vector<1x7x7xf32>
    %1024 = vector.broadcast %1022 : vector<2x1x7xf32> to vector<2x7x7xf32>
    %1025 = vector.broadcast %1023 : vector<1x7x7xf32> to vector<2x7x7xf32>
    %1026 = arith.addf %1024, %1025 : vector<2x7x7xf32>
    %cst_322 = arith.constant dense<0xFF800000> : vector<2x7xf32>
    %1027 = vector.multi_reduction <maximumf>, %1026, %cst_322 [2] : vector<2x7x7xf32> to vector<2x7xf32>
    %1028 = vector.shape_cast %1027 : vector<2x7xf32> to vector<2x7x1xf32>
    %1029 = vector.broadcast %1028 : vector<2x7x1xf32> to vector<2x7x7xf32>
    %1030 = arith.cmpf oeq, %1026, %1029 : vector<2x7x7xf32>
    %cst_323 = arith.constant 7.000000e+00 : f32
    %1031 = vector.broadcast %cst_323 : f32 to vector<2x7x7xf32>
    %1032 = arith.select %1030, %46, %1031 : vector<2x7x7xi1>, vector<2x7x7xf32>
    %cst_324 = arith.constant dense<0x7F800000> : vector<2x7xf32>
    %1033 = vector.multi_reduction <minimumf>, %1032, %cst_324 [2] : vector<2x7x7xf32> to vector<2x7xf32>
    %1034 = arith.addf %1027, %976 : vector<2x7xf32>
    %cst_325 = arith.constant 0.000000e+00 : f32
    %1035 = vector.broadcast %cst_325 : f32 to vector<2x1xf32>
    %c0_326 = arith.constant 0 : index
    %c0_327 = arith.constant 0 : index
    %1036 = vector.load %arg0[%c0_326, %c0_327] : memref<272x128xf32, #tpu.memory_space<vmem>>, vector<96x128xf32>
    %c232_328 = arith.constant 232 : index
    %c0_329 = arith.constant 0 : index
    %1037 = vector.load %arg0[%c232_328, %c0_329] : memref<272x128xf32, #tpu.memory_space<vmem>>, vector<1x128xf32>
    %c96_330 = arith.constant 96 : index
    %c0_331 = arith.constant 0 : index
    %1038 = vector.load %arg0[%c96_330, %c0_331] : memref<272x128xf32, #tpu.memory_space<vmem>>, vector<64x114xf32>
    %c240_332 = arith.constant 240 : index
    %c0_333 = arith.constant 0 : index
    %1039 = vector.load %arg0[%c240_332, %c0_333] : memref<272x128xf32, #tpu.memory_space<vmem>>, vector<1x114xf32>
    %c256_334 = arith.constant 256 : index
    %c0_335 = arith.constant 0 : index
    %1040 = vector.load %arg0[%c256_334, %c0_335] : memref<272x128xf32, #tpu.memory_space<vmem>>, vector<1x100xf32>
    %c264_336 = arith.constant 264 : index
    %c1_337 = arith.constant 1 : index
    %1041 = vector.load %arg0[%c264_336, %c1_337] : memref<272x128xf32, #tpu.memory_space<vmem>>, vector<1x1xf32>
    %1042 = vector.broadcast %978 : vector<2x1xf32> to vector<2x8xf32>
    %1043 = arith.addf %13, %1042 : vector<2x8xf32>
    %cst_338 = arith.constant dense<0xFF800000> : vector<2xf32>
    %1044 = vector.multi_reduction <maximumf>, %1043, %cst_338 [1] : vector<2x8xf32> to vector<2xf32>
    %1045 = vector.shape_cast %1044 : vector<2xf32> to vector<2x1xf32>
    %1046 = vector.broadcast %1045 : vector<2x1xf32> to vector<2x8xf32>
    %1047 = arith.subf %1043, %1046 : vector<2x8xf32>
    %1048 = math.exp %1047 : vector<2x8xf32>
    %cst_339 = arith.constant dense<0.000000e+00> : vector<2xf32>
    %1049 = vector.multi_reduction <add>, %1048, %cst_339 [1] : vector<2x8xf32> to vector<2xf32>
    %1050 = vector.shape_cast %1049 : vector<2xf32> to vector<2x1xf32>
    %1051 = tpu.reciprocal %1050 {approx = true} : vector<2x1xf32> -> vector<2x1xf32>
    %1052 = vector.broadcast %1051 : vector<2x1xf32> to vector<2x8xf32>
    %1053 = arith.mulf %1048, %1052 : vector<2x8xf32>
    %1054 = vector.shape_cast %1053 : vector<2x8xf32> to vector<2x8x1xf32>
    %1055 = vector.broadcast %1054 : vector<2x8x1xf32> to vector<2x8x32xf32>
    %1056 = arith.mulf %1055, %6 : vector<2x8x32xf32>
    %cst_340 = arith.constant dense<0.000000e+00> : vector<2x32xf32>
    %1057 = vector.multi_reduction <add>, %1056, %cst_340 [1] : vector<2x8x32xf32> to vector<2x32xf32>
    %1058 = tpu.concatenate %786, %1057, %959 in 1 : vector<2x32xf32>, vector<2x32xf32>, vector<2x32xf32> -> vector<2x96xf32>
    %cst_341 = arith.constant dense<0.000000e+00> : vector<2x128xf32>
    %1059 = tpu.matmul %1058, %1036, %cst_341 {dimension_numbers = #tpu.dot_dimension_numbers<[1], [0], [0], [1], [0, 0, 1, 1], [], []>} : vector<2x96xf32>, vector<96x128xf32>, vector<2x128xf32> -> vector<2x128xf32>
    %1060 = vector.broadcast %1037 : vector<1x128xf32> to vector<2x128xf32>
    %1061 = arith.addf %1059, %1060 : vector<2x128xf32>
    %1062 = vector.extract_strided_slice %1061 {offsets = [0, 0], sizes = [2, 32], strides = [1, 1]} : vector<2x128xf32> to vector<2x32xf32>
    %1063 = arith.negf %1062 : vector<2x32xf32>
    %1064 = math.exp %1063 : vector<2x32xf32>
    %cst_342 = arith.constant 1.000000e+00 : f32
    %1065 = vector.broadcast %cst_342 : f32 to vector<2x32xf32>
    %1066 = arith.addf %1065, %1064 : vector<2x32xf32>
    %1067 = arith.divf %1065, %1066 : vector<2x32xf32>
    %1068 = vector.extract_strided_slice %1061 {offsets = [0, 32], sizes = [2, 32], strides = [1, 1]} : vector<2x128xf32> to vector<2x32xf32>
    %1069 = arith.negf %1068 : vector<2x32xf32>
    %1070 = math.exp %1069 : vector<2x32xf32>
    %cst_343 = arith.constant 1.000000e+00 : f32
    %1071 = vector.broadcast %cst_343 : f32 to vector<2x32xf32>
    %1072 = arith.addf %1071, %1070 : vector<2x32xf32>
    %1073 = arith.divf %1071, %1072 : vector<2x32xf32>
    %1074 = vector.extract_strided_slice %1061 {offsets = [0, 64], sizes = [2, 32], strides = [1, 1]} : vector<2x128xf32> to vector<2x32xf32>
    %1075 = vector.extract_strided_slice %1061 {offsets = [0, 96], sizes = [2, 32], strides = [1, 1]} : vector<2x128xf32> to vector<2x32xf32>
    %1076 = arith.mulf %1067, %1075 : vector<2x32xf32>
    %1077 = arith.addf %1074, %1076 : vector<2x32xf32>
    %1078 = math.tanh %1077 : vector<2x32xf32>
    %cst_344 = arith.constant 1.000000e+00 : f32
    %1079 = vector.broadcast %cst_344 : f32 to vector<2x32xf32>
    %1080 = arith.subf %1079, %1073 : vector<2x32xf32>
    %1081 = arith.mulf %1080, %1078 : vector<2x32xf32>
    %1082 = arith.mulf %1073, %959 : vector<2x32xf32>
    %1083 = arith.addf %1081, %1082 : vector<2x32xf32>
    %cst_345 = arith.constant 0.000000e+00 : f32
    %1084 = vector.broadcast %cst_345 : f32 to vector<2x32xf32>
    %1085 = arith.cmpf ogt, %1083, %1084 : vector<2x32xf32>
    %1086 = math.exp %1083 : vector<2x32xf32>
    %cst_346 = arith.constant 1.000000e+00 : f32
    %1087 = vector.broadcast %cst_346 : f32 to vector<2x32xf32>
    %1088 = arith.subf %1086, %1087 : vector<2x32xf32>
    %cst_347 = arith.constant 1.67326319 : f32
    %1089 = vector.broadcast %cst_347 : f32 to vector<2x32xf32>
    %1090 = arith.mulf %1089, %1088 : vector<2x32xf32>
    %1091 = arith.select %1085, %1083, %1090 : vector<2x32xi1>, vector<2x32xf32>
    %cst_348 = arith.constant 1.05070102 : f32
    %1092 = vector.broadcast %cst_348 : f32 to vector<2x32xf32>
    %1093 = arith.mulf %1092, %1091 : vector<2x32xf32>
    %1094 = tpu.concatenate %1083, %1093 in 1 : vector<2x32xf32>, vector<2x32xf32> -> vector<2x64xf32>
    %cst_349 = arith.constant dense<0.000000e+00> : vector<2x114xf32>
    %1095 = tpu.matmul %1094, %1038, %cst_349 {dimension_numbers = #tpu.dot_dimension_numbers<[1], [0], [0], [1], [0, 0, 1, 1], [], []>} : vector<2x64xf32>, vector<64x114xf32>, vector<2x114xf32> -> vector<2x114xf32>
    %1096 = vector.broadcast %1039 : vector<1x114xf32> to vector<2x114xf32>
    %1097 = arith.addf %1095, %1096 : vector<2x114xf32>
    %1098 = vector.extract_strided_slice %1097 {offsets = [0, 0], sizes = [2, 6], strides = [1, 1]} : vector<2x114xf32> to vector<2x6xf32>
    %1099 = vector.extract_strided_slice %1097 {offsets = [0, 5], sizes = [2, 1], strides = [1, 1]} : vector<2x114xf32> to vector<2x1xf32>
    %1100 = vector.extract_strided_slice %1097 {offsets = [0, 6], sizes = [2, 7], strides = [1, 1]} : vector<2x114xf32> to vector<2x7xf32>
    %1101 = vector.extract_strided_slice %1097 {offsets = [0, 13], sizes = [2, 100], strides = [1, 1]} : vector<2x114xf32> to vector<2x100xf32>
    %cst_350 = arith.constant dense<0xFF800000> : vector<2xf32>
    %1102 = vector.multi_reduction <maximumf>, %1098, %cst_350 [1] : vector<2x6xf32> to vector<2xf32>
    %1103 = vector.shape_cast %1102 : vector<2xf32> to vector<2x1xf32>
    %1104 = vector.broadcast %1103 : vector<2x1xf32> to vector<2x6xf32>
    %1105 = arith.subf %1098, %1104 : vector<2x6xf32>
    %1106 = math.exp %1105 : vector<2x6xf32>
    %cst_351 = arith.constant dense<0.000000e+00> : vector<2xf32>
    %1107 = vector.multi_reduction <add>, %1106, %cst_351 [1] : vector<2x6xf32> to vector<2xf32>
    %1108 = vector.shape_cast %1107 : vector<2xf32> to vector<2x1xf32>
    %1109 = math.log %1108 : vector<2x1xf32>
    %1110 = arith.addf %1109, %1103 : vector<2x1xf32>
    %1111 = vector.broadcast %1110 : vector<2x1xf32> to vector<2x6xf32>
    %1112 = arith.subf %1098, %1111 : vector<2x6xf32>
    %1113 = vector.shape_cast %1101 : vector<2x100xf32> to vector<2x1x100xf32>
    %1114 = vector.broadcast %1113 : vector<2x1x100xf32> to vector<2x8x100xf32>
    %1115 = arith.addf %1114, %29 : vector<2x8x100xf32>
    %cst_352 = arith.constant 0.000000e+00 : f32
    %1116 = vector.broadcast %cst_352 : f32 to vector<2x8x100xf32>
    %1117 = arith.cmpf ogt, %1115, %1116 : vector<2x8x100xf32>
    %1118 = math.exp %1115 : vector<2x8x100xf32>
    %cst_353 = arith.constant 1.000000e+00 : f32
    %1119 = vector.broadcast %cst_353 : f32 to vector<2x8x100xf32>
    %1120 = arith.subf %1118, %1119 : vector<2x8x100xf32>
    %cst_354 = arith.constant 1.67326319 : f32
    %1121 = vector.broadcast %cst_354 : f32 to vector<2x8x100xf32>
    %1122 = arith.mulf %1121, %1120 : vector<2x8x100xf32>
    %1123 = arith.select %1117, %1115, %1122 : vector<2x8x100xi1>, vector<2x8x100xf32>
    %cst_355 = arith.constant 1.05070102 : f32
    %1124 = vector.broadcast %cst_355 : f32 to vector<2x8x100xf32>
    %1125 = arith.mulf %1124, %1123 : vector<2x8x100xf32>
    %1126 = vector.shape_cast %1040 : vector<1x100xf32> to vector<1x1x100xf32>
    %1127 = vector.broadcast %1126 : vector<1x1x100xf32> to vector<2x8x100xf32>
    %1128 = arith.mulf %1125, %1127 : vector<2x8x100xf32>
    %cst_356 = arith.constant dense<0.000000e+00> : vector<2x8xf32>
    %1129 = vector.multi_reduction <add>, %1128, %cst_356 [2] : vector<2x8x100xf32> to vector<2x8xf32>
    %1130 = vector.broadcast %1041 : vector<1x1xf32> to vector<2x8xf32>
    %1131 = arith.addf %1129, %1130 : vector<2x8xf32>
    %1132 = tpu.concatenate %1131, %1099 in 1 : vector<2x8xf32>, vector<2x1xf32> -> vector<2x9xf32>
    %cst_357 = arith.constant dense<0xFF800000> : vector<2xf32>
    %1133 = vector.multi_reduction <maximumf>, %1132, %cst_357 [1] : vector<2x9xf32> to vector<2xf32>
    %1134 = vector.shape_cast %1133 : vector<2xf32> to vector<2x1xf32>
    %1135 = vector.broadcast %1134 : vector<2x1xf32> to vector<2x9xf32>
    %1136 = arith.subf %1132, %1135 : vector<2x9xf32>
    %1137 = math.exp %1136 : vector<2x9xf32>
    %cst_358 = arith.constant dense<0.000000e+00> : vector<2xf32>
    %1138 = vector.multi_reduction <add>, %1137, %cst_358 [1] : vector<2x9xf32> to vector<2xf32>
    %1139 = vector.shape_cast %1138 : vector<2xf32> to vector<2x1xf32>
    %1140 = math.log %1139 : vector<2x1xf32>
    %1141 = arith.addf %1140, %1134 : vector<2x1xf32>
    %1142 = vector.broadcast %1141 : vector<2x1xf32> to vector<2x9xf32>
    %1143 = arith.subf %1132, %1142 : vector<2x9xf32>
    %c200_359 = arith.constant 200 : index
    %c0_360 = arith.constant 0 : index
    %1144 = vector.load %arg0[%c200_359, %c0_360] : memref<272x128xf32, #tpu.memory_space<vmem>>, vector<7x7xf32>
    %1145 = vector.shape_cast %1034 : vector<2x7xf32> to vector<2x1x7xf32>
    %1146 = vector.shape_cast %1144 : vector<7x7xf32> to vector<1x7x7xf32>
    %1147 = vector.broadcast %1145 : vector<2x1x7xf32> to vector<2x7x7xf32>
    %1148 = vector.broadcast %1146 : vector<1x7x7xf32> to vector<2x7x7xf32>
    %1149 = arith.addf %1147, %1148 : vector<2x7x7xf32>
    %cst_361 = arith.constant dense<0xFF800000> : vector<2x7xf32>
    %1150 = vector.multi_reduction <maximumf>, %1149, %cst_361 [2] : vector<2x7x7xf32> to vector<2x7xf32>
    %1151 = vector.shape_cast %1150 : vector<2x7xf32> to vector<2x7x1xf32>
    %1152 = vector.broadcast %1151 : vector<2x7x1xf32> to vector<2x7x7xf32>
    %1153 = arith.cmpf oeq, %1149, %1152 : vector<2x7x7xf32>
    %cst_362 = arith.constant 7.000000e+00 : f32
    %1154 = vector.broadcast %cst_362 : f32 to vector<2x7x7xf32>
    %1155 = arith.select %1153, %46, %1154 : vector<2x7x7xi1>, vector<2x7x7xf32>
    %cst_363 = arith.constant dense<0x7F800000> : vector<2x7xf32>
    %1156 = vector.multi_reduction <minimumf>, %1155, %cst_363 [2] : vector<2x7x7xf32> to vector<2x7xf32>
    %1157 = arith.addf %1150, %1100 : vector<2x7xf32>
    %cst_364 = arith.constant 0.000000e+00 : f32
    %1158 = vector.broadcast %cst_364 : f32 to vector<2x1xf32>
    %1159 = tpu.concatenate %685, %865, %989, %1112 in 0 : vector<2x6xf32>, vector<2x6xf32>, vector<2x6xf32>, vector<2x6xf32> -> vector<8x6xf32>
    %1160 = tpu.concatenate %716, %896, %1020, %1143 in 0 : vector<2x9xf32>, vector<2x9xf32>, vector<2x9xf32>, vector<2x9xf32> -> vector<8x9xf32>
    %1161 = tpu.concatenate %672, %852, %976, %1100 in 0 : vector<2x7xf32>, vector<2x7xf32>, vector<2x7xf32>, vector<2x7xf32> -> vector<8x7xf32>
    %1162 = tpu.concatenate %787, %909, %1033, %1156 in 0 : vector<2x7xf32>, vector<2x7xf32>, vector<2x7xf32>, vector<2x7xf32> -> vector<8x7xf32>
    %1163 = tpu.concatenate %42, %910, %1034, %1157 in 0 : vector<2x7xf32>, vector<2x7xf32>, vector<2x7xf32>, vector<2x7xf32> -> vector<8x7xf32>
    %1164 = tpu.concatenate %725, %911, %1035, %1158 in 0 : vector<2x1xf32>, vector<2x1xf32>, vector<2x1xf32>, vector<2x1xf32> -> vector<8x1xf32>
    %1165 = tpu.concatenate %1159, %1160, %1161, %1162, %1163, %1164, %47 in 1 : vector<8x6xf32>, vector<8x9xf32>, vector<8x7xf32>, vector<8x7xf32>, vector<8x7xf32>, vector<8x1xf32>, vector<8x91xf32> -> vector<8x128xf32>
    %c8 = arith.constant 8 : index
    %c0_365 = arith.constant 0 : index
    %1166 = vector.load %arg3[%c8, %c0_365] : memref<16x128xf32, #tpu.memory_space<vmem>>, vector<8x128xf32>
    tpu.vector_store %arg3[%c8, %c0_365], %1165 {strides = array<i32>} : memref<16x128xf32, #tpu.memory_space<vmem>>, vector<8x128xf32>,
    return
  }
}

</mosaic_0001>

<llo_original>
// kernel: one_crf_forward.1
$region0: #{one_crf_forward.1}
  #allocation0 [shape = 'u32[]', space=smem, size = 0x4, offset = 0x4, fixed_abs, tag = 'smem constant byte address 0x4 - core index']
  #allocation1 [shape = 'u32[144,128]{1,0:T(1,128)}', space=vmem, size = 0x12000, scoped, tag = 'internal scratch']
  %s0 = inlined_call_operand.hbm [shape: f32[272,128], index: 0, kind: input, shape index: {}]
  %s1 = inlined_call_operand.hbm [shape: f32[2,8,32], index: 1, kind: input, shape index: {}]
  %s2 = inlined_call_operand.vmem [shape: f32[2,32], index: 2, kind: input, shape index: {}]
  %s3 = inlined_call_operand.vmem [shape: f32[16,128], index: 3, kind: output, shape index: {}]
  %s4 = sld [smem:[#allocation0]]
  $region30: #{one_crf_forward.1} parent=0
    _
  %s6 = ssub.s32 1, %s4
  %s7 = scalar_select 0, %s6, %s4
  $region1: #{one_crf_forward.1} parent=0
    #allocation2 [shape = 'u8[139264]{0}', space=vmem, size = 0x22000, scoped, tag = 'input window, operand 0, single buffered']
    #allocation3 [shape = 's32[1]{0}', space=sflag, size = 0x4, scoped, tag = 'scoped memory for one_crf_forward.1']
    #allocation4 [shape = 'u8[8192]{0}', space=vmem, size = 0x2000, scoped, tag = 'input window, operand 1, single buffered']
    #allocation5 [shape = 's32[1]{0}', space=sflag, size = 0x4, scoped, tag = 'scoped memory for one_crf_forward.1']
    %8 = vsyncpa [#allocation3], 0
    %9 = vsyncpa [#allocation5], 0
    // Predicated region
    $region2: #{one_crf_forward.1} parent=1 // pred_check
      _
    $region3: #{one_crf_forward.1} parent=1 // pred_check_branch
      %11 = sbr.rel (0) target = $region5
    $region4: #{one_crf_forward.1} parent=1 // pred_region
      %s13 = ssub.s32 4352, 4352
      %14 = vsyncadd [#allocation3], %s13
      %s15 = sshll.u32 [#allocation2], 4
      %s16 = int_to_ptr.vmem [resolvable:$true] %s15
      %21 = dma.hbm_to_vmem [thread:$0]  %s0, 4352, %s16, [#allocation3], 128, 128, 8
    $region5: #{one_crf_forward.1} parent=1 // pred_fallthru
      _
    // Predicated region
    $region6: #{one_crf_forward.1} parent=1 // pred_check
      _
    $region7: #{one_crf_forward.1} parent=1 // pred_check_branch
      %23 = sbr.rel (0) target = $region9
    $region8: #{one_crf_forward.1} parent=1 // pred_region
      %s25 = ssub.s32 256, 256
      %26 = vsyncadd [#allocation5], %s25
      %s27 = sshll.u32 [#allocation4], 4
      %s28 = int_to_ptr.vmem [resolvable:$true] %s27
      %33 = dma.hbm_to_vmem [thread:$0]  %s1, 256, %s28, [#allocation5], 128, 128, 8
    $region9: #{one_crf_forward.1} parent=1 // pred_fallthru
      _
    // Predicated region
    $region10: #{one_crf_forward.1} parent=1 // pred_check
      _
    $region11: #{one_crf_forward.1} parent=1 // pred_check_branch
      %35 = sbr.rel (0) target = $region13
    $region12: #{one_crf_forward.1} parent=1 // pred_region
      _
    $region13: #{one_crf_forward.1} parent=1 // pred_fallthru
      _
    // Predicated region
    $region14: #{one_crf_forward.1} parent=1 // pred_check
      _
    $region15: #{one_crf_forward.1} parent=1 // pred_check_branch
      %37 = sbr.rel (0) target = $region17
    $region16: #{one_crf_forward.1} parent=1 // pred_region
      %38 = dma.done [#allocation3], 4352
    $region17: #{one_crf_forward.1} parent=1 // pred_fallthru
      _
    // Predicated region
    $region18: #{one_crf_forward.1} parent=1 // pred_check
      _
    $region19: #{one_crf_forward.1} parent=1 // pred_check_branch
      %40 = sbr.rel (0) target = $region21
    $region20: #{one_crf_forward.1} parent=1 // pred_region
      %41 = dma.done [#allocation5], 256
    $region21: #{one_crf_forward.1} parent=1 // pred_fallthru
      _
    %v42 = vld [vmem:[#allocation2 + $0xa0] sm:$0xff]
    %v43 = vld [vmem:[#allocation2 + $0xa8] sm:$0xff]
    %v44 = vld [vmem:[#allocation2 + $0xb0] sm:$0xff]
    %v45 = vld [vmem:[#allocation2 + $0xb8] sm:$0xff]
    %v46 = vld [vmem:[#allocation2 + $0xf8] sm:$0x1]
    %v47 = vld [vmem:[#allocation2 + $0xd0] sm:$0x1]
    %v48 = vld [vmem:[#allocation2 + $0xd8] sm:$0x1]
    %v49 = vld [vmem:[#allocation2 + $0xe0] sm:$0x1]
    %v50 = vld [vmem:[#allocation2 + $0x108] sm:$0x1]
    %v51 = vld [vmem:[#allocation4] sm:$0xff]
    %v52 = vld [vmem:[#allocation4 + $0x8] sm:$0xff]
    %v53 = vld [vmem:[%s2] sm:$0x3]
    %v54 = vlaneseq
    %v55 = vshrl.u32 %v54, 7
    %v56 = vsub.s32 0, %v55
    %v57 = vrot.slane %v48, %v56
    %v58 = vmul.f32 %v51, %v57
    %v59 = vmul.f32 %v52, %v57
    %vm60 = vcmask 261120
    %v61 = vsel %vm60, %v58, 0.0
    %62 = vadd.xlane.f32.xlu0 %v61
    %v63 = vpop.xlane.xlu0 %62
    %v64 = vsel %vm60, %v59, 0.0
    %65 = vadd.xlane.f32.xlu0 %v64
    %v66 = vpop.xlane.xlu0 %65
    %s68 = vtos %v50
    %v69 = vstv %s68
    %v71 = vadd.f32 %v63, %v69
    %v72 = vadd.f32 %v66, %v69
    %vm73 = vcmp.gt.f32.partialorder %v51, 0.0
    %vm74 = vcmp.gt.f32.partialorder %v52, 0.0
    %v75 = vmul.f32 %v51, 1.442695
    %v76 = vpow.pop %v75
    %v77 = vmul.f32 %v52, 1.442695
    %v78 = vpow.pop %v77
    %v79 = vsub.f32 %v76, 1.0
    %v80 = vsub.f32 %v78, 1.0
    %v81 = vmul.f32 %v79, 1.6732632
    %v82 = vmul.f32 %v80, 1.6732632
    %v83 = vsel %vm73, %v51, %v81
    %v84 = vsel %vm74, %v52, %v82
    %v85 = vmul.f32 %v83, 1.050701
    %v86 = vmul.f32 %v84, 1.050701
    %v88 = vsel %vm60, %v85, 0
    %v91 = vsel %vm60, %v86, 0
    %93 = vmatprep.subr.mxu0 0.0
    %94 = vmatpush1.msra.mxu0 %v42
    %95 = vmatprep.subr.mxu0 0.0
    %96 = vmatpush1.msra.mxu0 %v43
    %97 = vmatprep.subr.mxu0 0.0
    %98 = vmatpush1.msra.mxu0 %v44
    %99 = vmatprep.subr.mxu0 0.0
    %100 = vmatpush1.msra.mxu0 %v45
    %101 = vmatprep.subr.mxu0 0.0
    %102 = vmatpush1.msra.mxu0 0.0
    %103 = vmatprep.subr.mxu0 0.0
    %104 = vmatpush1.msra.mxu0 0.0
    %105 = vmatprep.subr.mxu0 0.0
    %106 = vmatpush1.msra.mxu0 0.0
    %107 = vmatprep.subr.mxu0 0.0
    %108 = vmatpush1.msra.mxu0 0.0
    %109 = vmatprep.subr.mxu0 0.0
    %110 = vmatpush1.msra.mxu0 0.0
    %111 = vmatprep.subr.mxu0 0.0
    %112 = vmatpush1.msra.mxu0 0.0
    %113 = vmatprep.subr.mxu0 0.0
    %114 = vmatpush1.msra.mxu0 0.0
    %115 = vmatprep.subr.mxu0 0.0
    %116 = vmatpush1.msra.mxu0 0.0
    %117 = vmatprep.subr.mxu0 0.0
    %118 = vmatpush1.msra.mxu0 0.0
    %119 = vmatprep.subr.mxu0 0.0
    %120 = vmatpush1.msra.mxu0 0.0
    %121 = vmatprep.subr.mxu0 0.0
    %122 = vmatpush1.msra.mxu0 0.0
    %123 = vmatprep.subr.mxu0 0.0
    %124 = vmatpush1.msra.mxu0 0.0
    %125 = vmatprep.subr.mxu0 0.0
    %126 = vmatpush1.msra.mxu0 0.0
    %127 = vmatprep.subr.mxu0 0.0
    %128 = vmatpush1.msra.mxu0 0.0
    %129 = vmatprep.subr.mxu0 0.0
    %130 = vmatpush1.msra.mxu0 0.0
    %131 = vmatprep.subr.mxu0 0.0
    %132 = vmatpush1.msra.mxu0 0.0
    %133 = vmatprep.subr.mxu0 0.0
    %134 = vmatpush1.msra.mxu0 0.0
    %135 = vmatprep.subr.mxu0 0.0
    %136 = vmatpush1.msra.mxu0 0.0
    %137 = vmatprep.subr.mxu0 0.0
    %138 = vmatpush1.msra.mxu0 0.0
    %139 = vmatprep.subr.mxu0 0.0
    %140 = vmatpush1.msra.mxu0 0.0
    %141 = vmatprep.subr.mxu0 0.0
    %142 = vmatpush1.msra.mxu0 0.0
    %143 = vmatprep.subr.mxu0 0.0
    %144 = vmatpush1.msra.mxu0 0.0
    %145 = vmatprep.subr.mxu0 0.0
    %146 = vmatpush1.msra.mxu0 0.0
    %147 = vmatprep.subr.mxu0 0.0
    %148 = vmatpush1.msra.mxu0 0.0
    %149 = vmatprep.subr.mxu0 0.0
    %150 = vmatpush1.msra.mxu0 0.0
    %151 = vmatprep.subr.mxu0 0.0
    %152 = vmatpush1.msra.mxu0 0.0
    %153 = vmatprep.subr.mxu0 0.0
    %154 = vmatpush1.msra.mxu0 0.0
    %155 = vmatprep.subr.mxu0 0.0
    %156 = vmatpush1.msra.mxu0 0.0
    %157 = vmatprep.mubr.f32.mxu0 0.0
    %158 = vmatmul.mubr.f32.gmra.mrb[0].mxu0 %v88
    %v159 = vpop.f32.mrb[0].mxu0
    %v160 = vadd.f32 0.0, %v159
    %v161 = vpop.f32.mrb[0].mxu0
    %162 = vmatprep.mubr.f32.mxu0 0.0
    %163 = vmatmul.mubr.f32.gmra.mrb[0].mxu0 %v91
    %v164 = vpop.f32.mrb[0].mxu0
    %v165 = vadd.f32 0.0, %v164
    %v166 = vpop.f32.mrb[0].mxu0
    %167 = vdwg.mxu0
    %v168 = vlaneseq
    %v169 = vshrl.u32 %v168, 7
    %v170 = vsub.s32 0, %v169
    %v171 = vrot.slane %v46, %v170
    %v172 = vadd.f32 %v160, %v171
    %v173 = vadd.f32 %v165, %v171
    %v174 = vlaneseq
    %v175 = vshrl.u32 %v174, 7
    %v176 = vsub.s32 0, %v175
    %v177 = vrot.slane %v47, %v176
    %v178 = vmul.f32 %v53, %v177
    %vm179 = vcmask 254976
    %v180 = vsel %vm179, %v178, 0.0
    %181 = vadd.xlane.f32.xlu0 %v180
    %v182 = vpop.xlane.xlu0 %181
    %v183 = vlaneseq
    %v184 = vshrl.u32 %v183, 7
    %v185 = vsub.s32 0, %v184
    %v186 = vrot.slane %v49, %v185
    %v187 = vlaneseq
    %v188 = vshrl.u32 %v187, 7
    %v189 = vcvt.s32.f32 %v188
    %vm190 = vcmp.eq.f32.partialorder %v189, 0.0
    %v191 = vsel %vm190, 0.0, -10000.0
    %v192 = vlaneseq
    %v193 = vand.u32 %v192, 127
    %v194 = vcvt.s32.f32 %v193
    %v195 = vld [vmem:[#allocation2] sm:$0xff]
    %v196 = vld [vmem:[#allocation2 + $0x8] sm:$0xff]
    %v197 = vld [vmem:[#allocation2 + $0x10] sm:$0xff]
    %v198 = vld [vmem:[#allocation2 + $0x18] sm:$0xff]
    %v199 = vld [vmem:[#allocation2 + $0x20] sm:$0xff]
    %v200 = vld [vmem:[#allocation2 + $0x28] sm:$0xff]
    %v201 = vld [vmem:[#allocation2 + $0x30] sm:$0xff]
    %v202 = vld [vmem:[#allocation2 + $0x38] sm:$0xff]
    %v203 = vld [vmem:[#allocation2 + $0x40] sm:$0xff]
    %v204 = vld [vmem:[#allocation2 + $0x48] sm:$0xff]
    %v205 = vld [vmem:[#allocation2 + $0x50] sm:$0xff]
    %v206 = vld [vmem:[#allocation2 + $0x58] sm:$0xff]
    %v207 = vld [vmem:[#allocation2 + $0xe8] sm:$0x1]
    %v208 = vld [vmem:[#allocation2 + $0x60] sm:$0xff]
    %v209 = vld [vmem:[#allocation2 + $0x68] sm:$0xff]
    %v210 = vld [vmem:[#allocation2 + $0x70] sm:$0xff]
    %v211 = vld [vmem:[#allocation2 + $0x78] sm:$0xff]
    %v212 = vld [vmem:[#allocation2 + $0x80] sm:$0xff]
    %v213 = vld [vmem:[#allocation2 + $0x88] sm:$0xff]
    %v214 = vld [vmem:[#allocation2 + $0x90] sm:$0xff]
    %v215 = vld [vmem:[#allocation2 + $0x98] sm:$0xff]
    %v216 = vld [vmem:[#allocation2 + $0xf0] sm:$0x1]
    %v217 = vld [vmem:[#allocation2 + $0x100] sm:$0x1]
    %v219 = vlaneseq
    %v220 = vshrl.u32 %v219, 7
    %v221 = vsub.s32 0, %v220
    %v222 = vrot.slane %v182, %v221
    %v223 = vlaneseq
    %v224 = vshrl.u32 %v223, 7
    %v225 = vsub.s32 1, %v224
    %v226 = vrot.slane %v182, %v225
    %v229 = vadd.f32 %v71, %v222
    %v230 = vadd.f32 %v72, %v226
    %233 = vset.pattern.permute.xlu0 0
    %234 = vperm.xlu0 %233, %v229
    %v235 = vpop.permute.xlu0 %234
    %236 = vset.pattern.permute.xlu0 0
    %237 = vperm.xlu0 %236, %v230
    %v238 = vpop.permute.xlu0 %237
    %v239 = vlaneseq
    %v240 = vshrl.u32 %v239, 7
    %v241 = vsub.s32 %v193, %v240
    %v242 = vrot.slane %v235, %v241
    %v243 = vlaneseq
    %v244 = vshrl.u32 %v243, 7
    %v245 = vsub.s32 %v193, %v244
    %v246 = vrot.slane %v238, %v245
    %vm247 = vcmask 1041409
    %v248 = vsel %vm247, %v246, %v242
    %vm250 = vcmask 58368
    %v251 = vsel %vm250, %v248, -inf
    %252 = vmax.xlane.f32.xlu0 %v251
    %v253 = vpop.xlane.xlu0 %252
    %v255 = vlaneseq
    %v256 = vshrl.u32 %v255, 7
    %v257 = vsub.s32 0, %v256
    %v258 = vrot.slane %v253, %v257
    %v259 = vlaneseq
    %v260 = vshrl.u32 %v259, 7
    %v261 = vsub.s32 1, %v260
    %v262 = vrot.slane %v253, %v261
    %v265 = vsub.f32 %v229, %v258
    %v266 = vsub.f32 %v230, %v262
    %v267 = vmul.f32 %v265, 1.442695
    %v268 = vpow.pop %v267
    %v269 = vmul.f32 %v266, 1.442695
    %v270 = vpow.pop %v269
    %273 = vset.pattern.permute.xlu0 0
    %274 = vperm.xlu0 %273, %v268
    %v275 = vpop.permute.xlu0 %274
    %276 = vset.pattern.permute.xlu0 0
    %277 = vperm.xlu0 %276, %v270
    %v278 = vpop.permute.xlu0 %277
    %v279 = vlaneseq
    %v280 = vshrl.u32 %v279, 7
    %v281 = vsub.s32 %v193, %v280
    %v282 = vrot.slane %v275, %v281
    %v283 = vlaneseq
    %v284 = vshrl.u32 %v283, 7
    %v285 = vsub.s32 %v193, %v284
    %v286 = vrot.slane %v278, %v285
    %v287 = vsel %vm247, %v286, %v282
    %v289 = vsel %vm250, %v287, 0.0
    %290 = vadd.xlane.f32.xlu0 %v289
    %v291 = vpop.xlane.xlu0 %290
    %v292 = vrcp.pop %v291
    %v294 = vlaneseq
    %v295 = vshrl.u32 %v294, 7
    %v296 = vsub.s32 0, %v295
    %v297 = vrot.slane %v292, %v296
    %v298 = vlaneseq
    %v299 = vshrl.u32 %v298, 7
    %v300 = vsub.s32 1, %v299
    %v301 = vrot.slane %v292, %v300
    %v304 = vmul.f32 %v268, %v297
    %v305 = vmul.f32 %v270, %v301
    %307 = vset.pattern.permute.xlu0 0
    %308 = vperm.xlu0 %307, %v304
    %v309 = vpop.permute.xlu0 %308
    %312 = vset.pattern.permute.xlu0 0
    %313 = vperm.xlu0 %312, %v305
    %v314 = vpop.permute.xlu0 %313
    %v316 = vmul.f32 %v309, %v51
    %v317 = vmul.f32 %v314, %v52
    %v318 = vsel %vm60, %v316, 0.0
    %v319 = vrot.slane %v318, 4
    %v320 = vadd.f32 %v318, %v319
    %v321 = vrot.slane %v320, 2
    %v322 = vadd.f32 %v320, %v321
    %v323 = vrot.slane %v322, 1
    %v324 = vadd.f32 %v322, %v323
    %v325 = vsel %vm60, %v317, 0.0
    %v326 = vrot.slane %v325, 4
    %v327 = vadd.f32 %v325, %v326
    %v328 = vrot.slane %v327, 2
    %v329 = vadd.f32 %v327, %v328
    %v330 = vrot.slane %v329, 1
    %v331 = vadd.f32 %v329, %v330
    %v334 = vsel %vm247, %v331, %v324
    %335 = vrot.lane.b32.xlu0 %v334, 32
    %v336 = vpop.permute.xlu0 %335
    %339 = vrot.lane.b32.xlu0 %v53, 64
    %v340 = vpop.permute.xlu0 %339
    %v342 = vsel %vm60, %v186, %v336
    %vm343 = vcmask 523264
    %v344 = vsel %vm343, %v342, %v340
    %v345 = vlaneseq
    %v346 = vshrl.u32 %v345, 7
    %v347 = vsub.s32 0, %v346
    %v348 = vrot.slane %v207, %v347
    %vm349 = vcmask 785408
    %v351 = vsel %vm349, %v344, 0
    %353 = vmatprep.subr.mxu0 0.0
    %354 = vmatpush1.msra.mxu0 %v195
    %355 = vmatprep.subr.mxu0 0.0
    %356 = vmatpush1.msra.mxu0 %v196
    %357 = vmatprep.subr.mxu0 0.0
    %358 = vmatpush1.msra.mxu0 %v197
    %359 = vmatprep.subr.mxu0 0.0
    %360 = vmatpush1.msra.mxu0 %v198
    %361 = vmatprep.subr.mxu0 0.0
    %362 = vmatpush1.msra.mxu0 %v199
    %363 = vmatprep.subr.mxu0 0.0
    %364 = vmatpush1.msra.mxu0 %v200
    %365 = vmatprep.subr.mxu0 0.0
    %366 = vmatpush1.msra.mxu0 %v201
    %367 = vmatprep.subr.mxu0 0.0
    %368 = vmatpush1.msra.mxu0 %v202
    %369 = vmatprep.subr.mxu0 0.0
    %370 = vmatpush1.msra.mxu0 %v203
    %371 = vmatprep.subr.mxu0 0.0
    %372 = vmatpush1.msra.mxu0 %v204
    %373 = vmatprep.subr.mxu0 0.0
    %374 = vmatpush1.msra.mxu0 %v205
    %375 = vmatprep.subr.mxu0 0.0
    %376 = vmatpush1.msra.mxu0 %v206
    %377 = vmatprep.subr.mxu0 0.0
    %378 = vmatpush1.msra.mxu0 0.0
    %379 = vmatprep.subr.mxu0 0.0
    %380 = vmatpush1.msra.mxu0 0.0
    %381 = vmatprep.subr.mxu0 0.0
    %382 = vmatpush1.msra.mxu0 0.0
    %383 = vmatprep.subr.mxu0 0.0
    %384 = vmatpush1.msra.mxu0 0.0
    %385 = vmatprep.subr.mxu0 0.0
    %386 = vmatpush1.msra.mxu0 0.0
    %387 = vmatprep.subr.mxu0 0.0
    %388 = vmatpush1.msra.mxu0 0.0
    %389 = vmatprep.subr.mxu0 0.0
    %390 = vmatpush1.msra.mxu0 0.0
    %391 = vmatprep.subr.mxu0 0.0
    %392 = vmatpush1.msra.mxu0 0.0
    %393 = vmatprep.subr.mxu0 0.0
    %394 = vmatpush1.msra.mxu0 0.0
    %395 = vmatprep.subr.mxu0 0.0
    %396 = vmatpush1.msra.mxu0 0.0
    %397 = vmatprep.subr.mxu0 0.0
    %398 = vmatpush1.msra.mxu0 0.0
    %399 = vmatprep.subr.mxu0 0.0
    %400 = vmatpush1.msra.mxu0 0.0
    %401 = vmatprep.subr.mxu0 0.0
    %402 = vmatpush1.msra.mxu0 0.0
    %403 = vmatprep.subr.mxu0 0.0
    %404 = vmatpush1.msra.mxu0 0.0
    %405 = vmatprep.subr.mxu0 0.0
    %406 = vmatpush1.msra.mxu0 0.0
    %407 = vmatprep.subr.mxu0 0.0
    %408 = vmatpush1.msra.mxu0 0.0
    %409 = vmatprep.subr.mxu0 0.0
    %410 = vmatpush1.msra.mxu0 0.0
    %411 = vmatprep.subr.mxu0 0.0
    %412 = vmatpush1.msra.mxu0 0.0
    %413 = vmatprep.subr.mxu0 0.0
    %414 = vmatpush1.msra.mxu0 0.0
    %415 = vmatprep.subr.mxu0 0.0
    %416 = vmatpush1.msra.mxu0 0.0
    %417 = vmatprep.mubr.f32.mxu0 0.0
    %418 = vmatmul.mubr.f32.gmra.mrb[0].mxu0 %v351
    %v419 = vpop.f32.mrb[0].mxu0
    %v420 = vadd.f32 %v348, %v419
    %v421 = vpop.f32.mrb[0].mxu0
    %422 = vdwg.mxu0
    %v423 = vxor.u32 %v420, 2147483648
    %v424 = vmul.f32 %v423, 1.442695
    %v425 = vpow.pop %v424
    %v426 = vadd.f32 %v425, 1.0
    %v427 = vrcp.pop %v426
    %v428 = vmul.f32 1.0, %v427
    %430 = vrot.lane.b32.xlu0 %v420, 32
    %v431 = vpop.permute.xlu0 %430
    %v433 = vmul.f32 %v428, %v431
    %435 = vrot.lane.b32.xlu0 %v433, 64
    %v436 = vpop.permute.xlu0 %435
    %v438 = vadd.f32 %v420, %v436
    %v439 = vtanh.pop %v438
    %v440 = vsub.f32 1.0, %v428
    %442 = vrot.lane.b32.xlu0 %v439, 96
    %v443 = vpop.permute.xlu0 %442
    %v445 = vmul.f32 %v440, %v443
    %446 = vrot.lane.b32.xlu0 %v53, 32
    %v447 = vpop.permute.xlu0 %446
    %v449 = vmul.f32 %v428, %v447
    %v450 = vadd.f32 %v445, %v449
    %vm451 = vcmp.gt.f32.partialorder %v450, 0.0
    %v452 = vmul.f32 %v450, 1.442695
    %v453 = vpow.pop %v452
    %v454 = vsub.f32 %v453, 1.0
    %v455 = vmul.f32 %v454, 1.6732632
    %v456 = vsel %vm451, %v450, %v455
    %v457 = vmul.f32 %v456, 1.050701
    %459 = vrot.lane.b32.xlu0 %v450, 96
    %v460 = vpop.permute.xlu0 %459
    %v462 = vsel %vm60, %v460, %v457
    %v463 = vlaneseq
    %v464 = vshrl.u32 %v463, 7
    %v465 = vsub.s32 0, %v464
    %v466 = vrot.slane %v216, %v465
    %v468 = vsel %vm343, %v462, 0
    %470 = vmatprep.subr.mxu0 0.0
    %471 = vmatpush1.msra.mxu0 %v208
    %472 = vmatprep.subr.mxu0 0.0
    %473 = vmatpush1.msra.mxu0 %v209
    %474 = vmatprep.subr.mxu0 0.0
    %475 = vmatpush1.msra.mxu0 %v210
    %476 = vmatprep.subr.mxu0 0.0
    %477 = vmatpush1.msra.mxu0 %v211
    %478 = vmatprep.subr.mxu0 0.0
    %479 = vmatpush1.msra.mxu0 %v212
    %480 = vmatprep.subr.mxu0 0.0
    %481 = vmatpush1.msra.mxu0 %v213
    %482 = vmatprep.subr.mxu0 0.0
    %483 = vmatpush1.msra.mxu0 %v214
    %484 = vmatprep.subr.mxu0 0.0
    %485 = vmatpush1.msra.mxu0 %v215
    %486 = vmatprep.subr.mxu0 0.0
    %487 = vmatpush1.msra.mxu0 0.0
    %488 = vmatprep.subr.mxu0 0.0
    %489 = vmatpush1.msra.mxu0 0.0
    %490 = vmatprep.subr.mxu0 0.0
    %491 = vmatpush1.msra.mxu0 0.0
    %492 = vmatprep.subr.mxu0 0.0
    %493 = vmatpush1.msra.mxu0 0.0
    %494 = vmatprep.subr.mxu0 0.0
    %495 = vmatpush1.msra.mxu0 0.0
    %496 = vmatprep.subr.mxu0 0.0
    %497 = vmatpush1.msra.mxu0 0.0
    %498 = vmatprep.subr.mxu0 0.0
    %499 = vmatpush1.msra.mxu0 0.0
    %500 = vmatprep.subr.mxu0 0.0
    %501 = vmatpush1.msra.mxu0 0.0
    %502 = vmatprep.subr.mxu0 0.0
    %503 = vmatpush1.msra.mxu0 0.0
    %504 = vmatprep.subr.mxu0 0.0
    %505 = vmatpush1.msra.mxu0 0.0
    %506 = vmatprep.subr.mxu0 0.0
    %507 = vmatpush1.msra.mxu0 0.0
    %508 = vmatprep.subr.mxu0 0.0
    %509 = vmatpush1.msra.mxu0 0.0
    %510 = vmatprep.subr.mxu0 0.0
    %511 = vmatpush1.msra.mxu0 0.0
    %512 = vmatprep.subr.mxu0 0.0
    %513 = vmatpush1.msra.mxu0 0.0
    %514 = vmatprep.subr.mxu0 0.0
    %515 = vmatpush1.msra.mxu0 0.0
    %516 = vmatprep.subr.mxu0 0.0
    %517 = vmatpush1.msra.mxu0 0.0
    %518 = vmatprep.subr.mxu0 0.0
    %519 = vmatpush1.msra.mxu0 0.0
    %520 = vmatprep.subr.mxu0 0.0
    %521 = vmatpush1.msra.mxu0 0.0
    %522 = vmatprep.subr.mxu0 0.0
    %523 = vmatpush1.msra.mxu0 0.0
    %524 = vmatprep.subr.mxu0 0.0
    %525 = vmatpush1.msra.mxu0 0.0
    %526 = vmatprep.subr.mxu0 0.0
    %527 = vmatpush1.msra.mxu0 0.0
    %528 = vmatprep.subr.mxu0 0.0
    %529 = vmatpush1.msra.mxu0 0.0
    %530 = vmatprep.subr.mxu0 0.0
    %531 = vmatpush1.msra.mxu0 0.0
    %532 = vmatprep.subr.mxu0 0.0
    %533 = vmatpush1.msra.mxu0 0.0
    %534 = vmatprep.mubr.f32.mxu0 0.0
    %535 = vmatmul.mubr.f32.gmra.mrb[0].mxu0 %v468
    %v536 = vpop.f32.mrb[0].mxu0
    %v537 = vadd.f32 %v466, %v536
    %v538 = vpop.f32.mrb[0].mxu0
    %539 = vdwg.mxu0
    %vm540 = vcmask 41984
    %v541 = vsel %vm540, %v537, -inf
    %542 = vmax.xlane.f32.xlu0 %v541
    %v543 = vpop.xlane.xlu0 %542
    %v544 = vsub.f32 %v537, %v543
    %v545 = vmul.f32 %v544, 1.442695
    %v546 = vpow.pop %v545
    %v547 = vsel %vm540, %v546, 0.0
    %548 = vadd.xlane.f32.xlu0 %v547
    %v549 = vpop.xlane.xlu0 %548
    %v550 = vlog2.pop %v549
    %v551 = vmul.f32 %v550, 0.6931472
    %v552 = vadd.f32 %v551, %v543
    %v553 = vsub.f32 %v537, %v552
    %v556 = vunpack.c.l.s4 1966171168
    %v557 = vunpack.c.0.s8 %v556
    %v558 = vlaneseq
    %v559 = vshrl.u32 %v558, 7
    %v560 = vsub.s32 %v557, %v559
    %v561 = vrot.slane %v537, %v560
    %v562 = vcombine.high %v561, %v561
    %v564 = vunpack.c.l.s4 1966171168
    %v565 = vunpack.c.0.s8 %v564
    %v566 = vlaneseq
    %v567 = vshrl.u32 %v566, 7
    %v568 = vsub.s32 %v565, %v567
    %v569 = vrot.slane %v561, %v568
    %v571 = vunpack.c.l.s4 1966171168
    %v572 = vunpack.c.0.s8 %v571
    %v573 = vlaneseq
    %v574 = vshrl.u32 %v573, 7
    %v575 = vsub.s32 %v572, %v574
    %v576 = vrot.slane %v562, %v575
    %v577 = vlaneseq
    %v578 = vshrl.u32 %v577, 7
    %v579 = vsub.s32 0, %v578
    %v580 = vrot.slane %v569, %v579
    %v581 = vlaneseq
    %v582 = vshrl.u32 %v581, 7
    %v583 = vsub.s32 0, %v582
    %v584 = vrot.slane %v576, %v583
    %589 = vrot.lane.b32.xlu0 %v172, 13
    %v590 = vpop.permute.xlu0 %589
    %591 = vrot.lane.b32.xlu0 %v173, 13
    %v592 = vpop.permute.xlu0 %591
    %v595 = vadd.f32 %v580, %v590
    %v596 = vadd.f32 %v584, %v592
    %vm597 = vcmp.gt.f32.partialorder %v595, 0.0
    %vm598 = vcmp.gt.f32.partialorder %v596, 0.0
    %v599 = vmul.f32 %v595, 1.442695
    %v600 = vpow.pop %v599
    %v601 = vmul.f32 %v596, 1.442695
    %v602 = vpow.pop %v601
    %v603 = vsub.f32 %v600, 1.0
    %v604 = vsub.f32 %v602, 1.0
    %v605 = vmul.f32 %v603, 1.6732632
    %v606 = vmul.f32 %v604, 1.6732632
    %v607 = vsel %vm597, %v595, %v605
    %v608 = vsel %vm598, %v596, %v606
    %v609 = vmul.f32 %v607, 1.050701
    %v610 = vmul.f32 %v608, 1.050701
    %v611 = vlaneseq
    %v612 = vshrl.u32 %v611, 7
    %v613 = vsub.s32 0, %v612
    %v614 = vrot.slane %v217, %v613
    %616 = vrot.lane.b32.xlu0 %v614, 13
    %v617 = vpop.permute.xlu0 %616
    %v619 = vmul.f32 %v609, %v617
    %v620 = vmul.f32 %v610, %v617
    %623 = vrot.lane.b32.xlu0 %v619, 115
    %v624 = vpop.permute.xlu0 %623
    %625 = vrot.lane.b32.xlu0 %v620, 115
    %v626 = vpop.permute.xlu0 %625
    %vm629 = vcmask 818176
    %v630 = vsel %vm629, %v624, 0.0
    %631 = vadd.xlane.f32.xlu0 %v630
    %v632 = vpop.xlane.xlu0 %631
    %v633 = vsel %vm629, %v626, 0.0
    %634 = vadd.xlane.f32.xlu0 %v633
    %v635 = vpop.xlane.xlu0 %634
    %636 = vrot.lane.b32.xlu0 %v50, 127
    %v637 = vpop.permute.xlu0 %636
    %s638 = vtos %v637
    %v639 = vstv %s638
    %v641 = vadd.f32 %v632, %v639
    %v642 = vadd.f32 %v635, %v639
    %v645 = vlaneseq
    %v646 = vshrl.u32 %v645, 7
    %v647 = vsub.s32 %v193, %v646
    %v648 = vrot.slane %v641, %v647
    %v649 = vlaneseq
    %v650 = vshrl.u32 %v649, 7
    %v651 = vsub.s32 %v193, %v650
    %v652 = vrot.slane %v642, %v651
    %v653 = vsel %vm247, %v652, %v648
    %655 = vrot.lane.b32.xlu0 %v537, 3
    %v656 = vpop.permute.xlu0 %655
    %vm658 = vcmask 64512
    %v659 = vsel %vm658, %v653, %v656
    %vm660 = vcmask 66560
    %v661 = vsel %vm660, %v659, -inf
    %662 = vmax.xlane.f32.xlu0 %v661
    %v663 = vpop.xlane.xlu0 %662
    %v664 = vsub.f32 %v659, %v663
    %v665 = vmul.f32 %v664, 1.442695
    %v666 = vpow.pop %v665
    %v667 = vsel %vm660, %v666, 0.0
    %668 = vadd.xlane.f32.xlu0 %v667
    %v669 = vpop.xlane.xlu0 %668
    %v670 = vlog2.pop %v669
    %v671 = vmul.f32 %v670, 0.6931472
    %v672 = vadd.f32 %v671, %v663
    %v673 = vsub.f32 %v659, %v672
    %v674 = vld [vmem:[#allocation2 + $0xc0] sm:$0x3f]
    %v675 = vsel %vm540, %v553, -inf
    %676 = vmax.xlane.f32.xlu0 %v675
    %v677 = vpop.xlane.xlu0 %676
    %vm678 = vcmp.eq.f32.partialorder %v553, %v677
    %v679 = vsel %vm678, %v194, 6.0
    %v680 = vsel %vm540, %v679, inf
    %681 = vmin.xlane.f32.xlu0 %v680
    %v682 = vpop.xlane.xlu0 %681
    %vm683 = vcmp.eq.f32.partialorder %v682, 0.0
    %v684 = vsel %vm683, 1.0, 0.0
    %v685 = vlaneseq
    %v686 = vshrl.u32 %v685, 7
    %v687 = vsub.s32 0, %v686
    %v688 = vrot.slane %v674, %v687
    %v689 = vmul.f32 %v684, %v688
    %v690 = vadd.f32 %v689, 0.0
    %vm691 = vcmp.eq.f32.partialorder %v682, 1.0
    %v692 = vsel %vm691, 1.0, 0.0
    %v693 = vlaneseq
    %v694 = vshrl.u32 %v693, 7
    %v695 = vsub.s32 1, %v694
    %v696 = vrot.slane %v674, %v695
    %v697 = vmul.f32 %v692, %v696
    %v698 = vadd.f32 %v690, %v697
    %vm699 = vcmp.eq.f32.partialorder %v682, 2.0
    %v700 = vsel %vm699, 1.0, 0.0
    %v701 = vlaneseq
    %v702 = vshrl.u32 %v701, 7
    %v703 = vsub.s32 2, %v702
    %v704 = vrot.slane %v674, %v703
    %v705 = vmul.f32 %v700, %v704
    %v706 = vadd.f32 %v698, %v705
    %vm707 = vcmp.eq.f32.partialorder %v682, 3.0
    %v708 = vsel %vm707, 1.0, 0.0
    %v709 = vlaneseq
    %v710 = vshrl.u32 %v709, 7
    %v711 = vsub.s32 3, %v710
    %v712 = vrot.slane %v674, %v711
    %v713 = vmul.f32 %v708, %v712
    %v714 = vadd.f32 %v706, %v713
    %vm715 = vcmp.eq.f32.partialorder %v682, 4.0
    %v716 = vsel %vm715, 1.0, 0.0
    %v717 = vlaneseq
    %v718 = vshrl.u32 %v717, 7
    %v719 = vsub.s32 4, %v718
    %v720 = vrot.slane %v674, %v719
    %v721 = vmul.f32 %v716, %v720
    %v722 = vadd.f32 %v714, %v721
    %vm723 = vcmp.eq.f32.partialorder %v682, 5.0
    %v724 = vsel %vm723, 1.0, 0.0
    %v725 = vlaneseq
    %v726 = vshrl.u32 %v725, 7
    %v727 = vsub.s32 5, %v726
    %v728 = vrot.slane %v674, %v727
    %v729 = vmul.f32 %v724, %v728
    %v730 = vadd.f32 %v722, %v729
    %731 = vset.pattern.permute.xlu0 113
    %732 = vperm.xlu0 %731, %v537
    %v733 = vpop.permute.xlu0 %732
    %v734 = vlaneseq
    %v735 = vshrl.u32 %v734, 7
    %v736 = vsub.s32 0, %v735
    %v737 = vrot.slane %v733, %v736
    %v738 = vlaneseq
    %v739 = vshrl.u32 %v738, 7
    %v740 = vsub.s32 1, %v739
    %v741 = vrot.slane %v733, %v740
    %v744 = vadd.f32 %v71, %v737
    %v745 = vadd.f32 %v72, %v741
    %748 = vset.pattern.permute.xlu0 0
    %749 = vperm.xlu0 %748, %v744
    %v750 = vpop.permute.xlu0 %749
    %751 = vset.pattern.permute.xlu0 0
    %752 = vperm.xlu0 %751, %v745
    %v753 = vpop.permute.xlu0 %752
    %v754 = vlaneseq
    %v755 = vshrl.u32 %v754, 7
    %v756 = vsub.s32 %v193, %v755
    %v757 = vrot.slane %v750, %v756
    %v758 = vlaneseq
    %v759 = vshrl.u32 %v758, 7
    %v760 = vsub.s32 %v193, %v759
    %v761 = vrot.slane %v753, %v760
    %v762 = vsel %vm247, %v761, %v757
    %v764 = vsel %vm250, %v762, -inf
    %765 = vmax.xlane.f32.xlu0 %v764
    %v766 = vpop.xlane.xlu0 %765
    %v768 = vlaneseq
    %v769 = vshrl.u32 %v768, 7
    %v770 = vsub.s32 0, %v769
    %v771 = vrot.slane %v766, %v770
    %v772 = vlaneseq
    %v773 = vshrl.u32 %v772, 7
    %v774 = vsub.s32 1, %v773
    %v775 = vrot.slane %v766, %v774
    %v778 = vsub.f32 %v744, %v771
    %v779 = vsub.f32 %v745, %v775
    %v780 = vmul.f32 %v778, 1.442695
    %v781 = vpow.pop %v780
    %v782 = vmul.f32 %v779, 1.442695
    %v783 = vpow.pop %v782
    %786 = vset.pattern.permute.xlu0 0
    %787 = vperm.xlu0 %786, %v781
    %v788 = vpop.permute.xlu0 %787
    %789 = vset.pattern.permute.xlu0 0
    %790 = vperm.xlu0 %789, %v783
    %v791 = vpop.permute.xlu0 %790
    %v792 = vlaneseq
    %v793 = vshrl.u32 %v792, 7
    %v794 = vsub.s32 %v193, %v793
    %v795 = vrot.slane %v788, %v794
    %v796 = vlaneseq
    %v797 = vshrl.u32 %v796, 7
    %v798 = vsub.s32 %v193, %v797
    %v799 = vrot.slane %v791, %v798
    %v800 = vsel %vm247, %v799, %v795
    %v802 = vsel %vm250, %v800, 0.0
    %803 = vadd.xlane.f32.xlu0 %v802
    %v804 = vpop.xlane.xlu0 %803
    %v805 = vrcp.pop %v804
    %v807 = vlaneseq
    %v808 = vshrl.u32 %v807, 7
    %v809 = vsub.s32 0, %v808
    %v810 = vrot.slane %v805, %v809
    %v811 = vlaneseq
    %v812 = vshrl.u32 %v811, 7
    %v813 = vsub.s32 1, %v812
    %v814 = vrot.slane %v805, %v813
    %v817 = vmul.f32 %v781, %v810
    %v818 = vmul.f32 %v783, %v814
    %820 = vset.pattern.permute.xlu0 0
    %821 = vperm.xlu0 %820, %v817
    %v822 = vpop.permute.xlu0 %821
    %825 = vset.pattern.permute.xlu0 0
    %826 = vperm.xlu0 %825, %v818
    %v827 = vpop.permute.xlu0 %826
    %v829 = vmul.f32 %v822, %v51
    %v830 = vmul.f32 %v827, %v52
    %v831 = vsel %vm60, %v829, 0.0
    %v832 = vrot.slane %v831, 4
    %v833 = vadd.f32 %v831, %v832
    %v834 = vrot.slane %v833, 2
    %v835 = vadd.f32 %v833, %v834
    %v836 = vrot.slane %v835, 1
    %v837 = vadd.f32 %v835, %v836
    %v838 = vsel %vm60, %v830, 0.0
    %v839 = vrot.slane %v838, 4
    %v840 = vadd.f32 %v838, %v839
    %v841 = vrot.slane %v840, 2
    %v842 = vadd.f32 %v840, %v841
    %v843 = vrot.slane %v842, 1
    %v844 = vadd.f32 %v842, %v843
    %v847 = vsel %vm247, %v844, %v837
    %848 = vrot.lane.b32.xlu0 %v847, 32
    %v849 = vpop.permute.xlu0 %848
    %851 = vrot.lane.b32.xlu0 %v450, 32
    %v852 = vpop.permute.xlu0 %851
    %v854 = vsel %vm60, %v730, %v849
    %v855 = vsel %vm343, %v854, %v852
    %v857 = vsel %vm349, %v855, 0
    %859 = vmatprep.subr.mxu0 0.0
    %860 = vmatpush1.msra.mxu0 %v195
    %861 = vmatprep.subr.mxu0 0.0
    %862 = vmatpush1.msra.mxu0 %v196
    %863 = vmatprep.subr.mxu0 0.0
    %864 = vmatpush1.msra.mxu0 %v197
    %865 = vmatprep.subr.mxu0 0.0
    %866 = vmatpush1.msra.mxu0 %v198
    %867 = vmatprep.subr.mxu0 0.0
    %868 = vmatpush1.msra.mxu0 %v199
    %869 = vmatprep.subr.mxu0 0.0
    %870 = vmatpush1.msra.mxu0 %v200
    %871 = vmatprep.subr.mxu0 0.0
    %872 = vmatpush1.msra.mxu0 %v201
    %873 = vmatprep.subr.mxu0 0.0
    %874 = vmatpush1.msra.mxu0 %v202
    %875 = vmatprep.subr.mxu0 0.0
    %876 = vmatpush1.msra.mxu0 %v203
    %877 = vmatprep.subr.mxu0 0.0
    %878 = vmatpush1.msra.mxu0 %v204
    %879 = vmatprep.subr.mxu0 0.0
    %880 = vmatpush1.msra.mxu0 %v205
    %881 = vmatprep.subr.mxu0 0.0
    %882 = vmatpush1.msra.mxu0 %v206
    %883 = vmatprep.subr.mxu0 0.0
    %884 = vmatpush1.msra.mxu0 0.0
    %885 = vmatprep.subr.mxu0 0.0
    %886 = vmatpush1.msra.mxu0 0.0
    %887 = vmatprep.subr.mxu0 0.0
    %888 = vmatpush1.msra.mxu0 0.0
    %889 = vmatprep.subr.mxu0 0.0
    %890 = vmatpush1.msra.mxu0 0.0
    %891 = vmatprep.subr.mxu0 0.0
    %892 = vmatpush1.msra.mxu0 0.0
    %893 = vmatprep.subr.mxu0 0.0
    %894 = vmatpush1.msra.mxu0 0.0
    %895 = vmatprep.subr.mxu0 0.0
    %896 = vmatpush1.msra.mxu0 0.0
    %897 = vmatprep.subr.mxu0 0.0
    %898 = vmatpush1.msra.mxu0 0.0
    %899 = vmatprep.subr.mxu0 0.0
    %900 = vmatpush1.msra.mxu0 0.0
    %901 = vmatprep.subr.mxu0 0.0
    %902 = vmatpush1.msra.mxu0 0.0
    %903 = vmatprep.subr.mxu0 0.0
    %904 = vmatpush1.msra.mxu0 0.0
    %905 = vmatprep.subr.mxu0 0.0
    %906 = vmatpush1.msra.mxu0 0.0
    %907 = vmatprep.subr.mxu0 0.0
    %908 = vmatpush1.msra.mxu0 0.0
    %909 = vmatprep.subr.mxu0 0.0
    %910 = vmatpush1.msra.mxu0 0.0
    %911 = vmatprep.subr.mxu0 0.0
    %912 = vmatpush1.msra.mxu0 0.0
    %913 = vmatprep.subr.mxu0 0.0
    %914 = vmatpush1.msra.mxu0 0.0
    %915 = vmatprep.subr.mxu0 0.0
    %916 = vmatpush1.msra.mxu0 0.0
    %917 = vmatprep.subr.mxu0 0.0
    %918 = vmatpush1.msra.mxu0 0.0
    %919 = vmatprep.subr.mxu0 0.0
    %920 = vmatpush1.msra.mxu0 0.0
    %921 = vmatprep.subr.mxu0 0.0
    %922 = vmatpush1.msra.mxu0 0.0
    %923 = vmatprep.mubr.f32.mxu0 0.0
    %924 = vmatmul.mubr.f32.gmra.mrb[0].mxu0 %v857
    %v925 = vpop.f32.mrb[0].mxu0
    %v926 = vadd.f32 %v348, %v925
    %v927 = vpop.f32.mrb[0].mxu0
    %928 = vdwg.mxu0
    %v929 = vxor.u32 %v926, 2147483648
    %v930 = vmul.f32 %v929, 1.442695
    %v931 = vpow.pop %v930
    %v932 = vadd.f32 %v931, 1.0
    %v933 = vrcp.pop %v932
    %v934 = vmul.f32 1.0, %v933
    %936 = vrot.lane.b32.xlu0 %v926, 32
    %v937 = vpop.permute.xlu0 %936
    %v939 = vmul.f32 %v934, %v937
    %941 = vrot.lane.b32.xlu0 %v939, 64
    %v942 = vpop.permute.xlu0 %941
    %v944 = vadd.f32 %v926, %v942
    %v945 = vtanh.pop %v944
    %v946 = vsub.f32 1.0, %v934
    %948 = vrot.lane.b32.xlu0 %v945, 96
    %v949 = vpop.permute.xlu0 %948
    %v951 = vmul.f32 %v946, %v949
    %v952 = vmul.f32 %v934, %v450
    %v953 = vadd.f32 %v951, %v952
    %vm954 = vcmp.gt.f32.partialorder %v953, 0.0
    %v955 = vmul.f32 %v953, 1.442695
    %v956 = vpow.pop %v955
    %v957 = vsub.f32 %v956, 1.0
    %v958 = vmul.f32 %v957, 1.6732632
    %v959 = vsel %vm954, %v953, %v958
    %v960 = vmul.f32 %v959, 1.050701
    %962 = vrot.lane.b32.xlu0 %v953, 96
    %v963 = vpop.permute.xlu0 %962
    %v965 = vsel %vm60, %v963, %v960
    %v967 = vsel %vm343, %v965, 0
    %969 = vmatprep.subr.mxu0 0.0
    %970 = vmatpush1.msra.mxu0 %v208
    %971 = vmatprep.subr.mxu0 0.0
    %972 = vmatpush1.msra.mxu0 %v209
    %973 = vmatprep.subr.mxu0 0.0
    %974 = vmatpush1.msra.mxu0 %v210
    %975 = vmatprep.subr.mxu0 0.0
    %976 = vmatpush1.msra.mxu0 %v211
    %977 = vmatprep.subr.mxu0 0.0
    %978 = vmatpush1.msra.mxu0 %v212
    %979 = vmatprep.subr.mxu0 0.0
    %980 = vmatpush1.msra.mxu0 %v213
    %981 = vmatprep.subr.mxu0 0.0
    %982 = vmatpush1.msra.mxu0 %v214
    %983 = vmatprep.subr.mxu0 0.0
    %984 = vmatpush1.msra.mxu0 %v215
    %985 = vmatprep.subr.mxu0 0.0
    %986 = vmatpush1.msra.mxu0 0.0
    %987 = vmatprep.subr.mxu0 0.0
    %988 = vmatpush1.msra.mxu0 0.0
    %989 = vmatprep.subr.mxu0 0.0
    %990 = vmatpush1.msra.mxu0 0.0
    %991 = vmatprep.subr.mxu0 0.0
    %992 = vmatpush1.msra.mxu0 0.0
    %993 = vmatprep.subr.mxu0 0.0
    %994 = vmatpush1.msra.mxu0 0.0
    %995 = vmatprep.subr.mxu0 0.0
    %996 = vmatpush1.msra.mxu0 0.0
    %997 = vmatprep.subr.mxu0 0.0
    %998 = vmatpush1.msra.mxu0 0.0
    %999 = vmatprep.subr.mxu0 0.0
    %1000 = vmatpush1.msra.mxu0 0.0
    %1001 = vmatprep.subr.mxu0 0.0
    %1002 = vmatpush1.msra.mxu0 0.0
    %1003 = vmatprep.subr.mxu0 0.0
    %1004 = vmatpush1.msra.mxu0 0.0
    %1005 = vmatprep.subr.mxu0 0.0
    %1006 = vmatpush1.msra.mxu0 0.0
    %1007 = vmatprep.subr.mxu0 0.0
    %1008 = vmatpush1.msra.mxu0 0.0
    %1009 = vmatprep.subr.mxu0 0.0
    %1010 = vmatpush1.msra.mxu0 0.0
    %1011 = vmatprep.subr.mxu0 0.0
    %1012 = vmatpush1.msra.mxu0 0.0
    %1013 = vmatprep.subr.mxu0 0.0
    %1014 = vmatpush1.msra.mxu0 0.0
    %1015 = vmatprep.subr.mxu0 0.0
    %1016 = vmatpush1.msra.mxu0 0.0
    %1017 = vmatprep.subr.mxu0 0.0
    %1018 = vmatpush1.msra.mxu0 0.0
    %1019 = vmatprep.subr.mxu0 0.0
    %1020 = vmatpush1.msra.mxu0 0.0
    %1021 = vmatprep.subr.mxu0 0.0
    %1022 = vmatpush1.msra.mxu0 0.0
    %1023 = vmatprep.subr.mxu0 0.0
    %1024 = vmatpush1.msra.mxu0 0.0
    %1025 = vmatprep.subr.mxu0 0.0
    %1026 = vmatpush1.msra.mxu0 0.0
    %1027 = vmatprep.subr.mxu0 0.0
    %1028 = vmatpush1.msra.mxu0 0.0
    %1029 = vmatprep.subr.mxu0 0.0
    %1030 = vmatpush1.msra.mxu0 0.0
    %1031 = vmatprep.subr.mxu0 0.0
    %1032 = vmatpush1.msra.mxu0 0.0
    %1033 = vmatprep.mubr.f32.mxu0 0.0
    %1034 = vmatmul.mubr.f32.gmra.mrb[0].mxu0 %v967
    %v1035 = vpop.f32.mrb[0].mxu0
    %v1036 = vadd.f32 %v466, %v1035
    %v1037 = vpop.f32.mrb[0].mxu0
    %1038 = vdwg.mxu0
    %v1039 = vsel %vm540, %v1036, -inf
    %1040 = vmax.xlane.f32.xlu0 %v1039
    %v1041 = vpop.xlane.xlu0 %1040
    %v1042 = vsub.f32 %v1036, %v1041
    %v1043 = vmul.f32 %v1042, 1.442695
    %v1044 = vpow.pop %v1043
    %v1045 = vsel %vm540, %v1044, 0.0
    %1046 = vadd.xlane.f32.xlu0 %v1045
    %v1047 = vpop.xlane.xlu0 %1046
    %v1048 = vlog2.pop %v1047
    %v1049 = vmul.f32 %v1048, 0.6931472
    %v1050 = vadd.f32 %v1049, %v1041
    %v1051 = vsub.f32 %v1036, %v1050
    %v1054 = vunpack.c.l.s4 1966171168
    %v1055 = vunpack.c.0.s8 %v1054
    %v1056 = vlaneseq
    %v1057 = vshrl.u32 %v1056, 7
    %v1058 = vsub.s32 %v1055, %v1057
    %v1059 = vrot.slane %v1036, %v1058
    %v1060 = vcombine.high %v1059, %v1059
    %v1062 = vunpack.c.l.s4 1966171168
    %v1063 = vunpack.c.0.s8 %v1062
    %v1064 = vlaneseq
    %v1065 = vshrl.u32 %v1064, 7
    %v1066 = vsub.s32 %v1063, %v1065
    %v1067 = vrot.slane %v1059, %v1066
    %v1069 = vunpack.c.l.s4 1966171168
    %v1070 = vunpack.c.0.s8 %v1069
    %v1071 = vlaneseq
    %v1072 = vshrl.u32 %v1071, 7
    %v1073 = vsub.s32 %v1070, %v1072
    %v1074 = vrot.slane %v1060, %v1073
    %v1075 = vlaneseq
    %v1076 = vshrl.u32 %v1075, 7
    %v1077 = vsub.s32 0, %v1076
    %v1078 = vrot.slane %v1067, %v1077
    %v1079 = vlaneseq
    %v1080 = vshrl.u32 %v1079, 7
    %v1081 = vsub.s32 0, %v1080
    %v1082 = vrot.slane %v1074, %v1081
    %v1085 = vadd.f32 %v1078, %v590
    %v1086 = vadd.f32 %v1082, %v592
    %vm1087 = vcmp.gt.f32.partialorder %v1085, 0.0
    %vm1088 = vcmp.gt.f32.partialorder %v1086, 0.0
    %v1089 = vmul.f32 %v1085, 1.442695
    %v1090 = vpow.pop %v1089
    %v1091 = vmul.f32 %v1086, 1.442695
    %v1092 = vpow.pop %v1091
    %v1093 = vsub.f32 %v1090, 1.0
    %v1094 = vsub.f32 %v1092, 1.0
    %v1095 = vmul.f32 %v1093, 1.6732632
    %v1096 = vmul.f32 %v1094, 1.6732632
    %v1097 = vsel %vm1087, %v1085, %v1095
    %v1098 = vsel %vm1088, %v1086, %v1096
    %v1099 = vmul.f32 %v1097, 1.050701
    %v1100 = vmul.f32 %v1098, 1.050701
    %v1101 = vmul.f32 %v1099, %v617
    %v1102 = vmul.f32 %v1100, %v617
    %1105 = vrot.lane.b32.xlu0 %v1101, 115
    %v1106 = vpop.permute.xlu0 %1105
    %1107 = vrot.lane.b32.xlu0 %v1102, 115
    %v1108 = vpop.permute.xlu0 %1107
    %v1111 = vsel %vm629, %v1106, 0.0
    %1112 = vadd.xlane.f32.xlu0 %v1111
    %v1113 = vpop.xlane.xlu0 %1112
    %v1114 = vsel %vm629, %v1108, 0.0
    %1115 = vadd.xlane.f32.xlu0 %v1114
    %v1116 = vpop.xlane.xlu0 %1115
    %v1117 = vadd.f32 %v1113, %v639
    %v1118 = vadd.f32 %v1116, %v639
    %v1121 = vlaneseq
    %v1122 = vshrl.u32 %v1121, 7
    %v1123 = vsub.s32 %v193, %v1122
    %v1124 = vrot.slane %v1117, %v1123
    %v1125 = vlaneseq
    %v1126 = vshrl.u32 %v1125, 7
    %v1127 = vsub.s32 %v193, %v1126
    %v1128 = vrot.slane %v1118, %v1127
    %v1129 = vsel %vm247, %v1128, %v1124
    %1131 = vrot.lane.b32.xlu0 %v1036, 3
    %v1132 = vpop.permute.xlu0 %1131
    %v1134 = vsel %vm658, %v1129, %v1132
    %v1135 = vsel %vm660, %v1134, -inf
    %1136 = vmax.xlane.f32.xlu0 %v1135
    %v1137 = vpop.xlane.xlu0 %1136
    %v1138 = vsub.f32 %v1134, %v1137
    %v1139 = vmul.f32 %v1138, 1.442695
    %v1140 = vpow.pop %v1139
    %v1141 = vsel %vm660, %v1140, 0.0
    %1142 = vadd.xlane.f32.xlu0 %v1141
    %v1143 = vpop.xlane.xlu0 %1142
    %v1144 = vlog2.pop %v1143
    %v1145 = vmul.f32 %v1144, 0.6931472
    %v1146 = vadd.f32 %v1145, %v1137
    %v1147 = vsub.f32 %v1134, %v1146
    %v1148 = vld [vmem:[#allocation2 + $0xc8] sm:$0x7f]
    %v1150 = vlaneseq
    %v1151 = vshrl.u32 %v1150, 7
    %v1152 = vsub.s32 0, %v1151
    %v1153 = vrot.slane %v191, %v1152
    %v1154 = vlaneseq
    %v1155 = vshrl.u32 %v1154, 7
    %v1156 = vsub.s32 1, %v1155
    %v1157 = vrot.slane %v191, %v1156
    %v1160 = vadd.f32 %v1153, %v1148
    %v1161 = vadd.f32 %v1157, %v1148
    %vm1162 = vcmask 55296
    %v1163 = vsel %vm1162, %v1160, -inf
    %1164 = vmax.xlane.f32.xlu0 %v1163
    %v1165 = vpop.xlane.xlu0 %1164
    %v1166 = vsel %vm1162, %v1161, -inf
    %1167 = vmax.xlane.f32.xlu0 %v1166
    %v1168 = vpop.xlane.xlu0 %1167
    %vm1169 = vcmp.eq.f32.partialorder %v1160, %v1165
    %vm1170 = vcmp.eq.f32.partialorder %v1161, %v1168
    %v1171 = vsel %vm1169, %v194, 7.0
    %v1172 = vsel %vm1170, %v194, 7.0
    %v1173 = vsel %vm1162, %v1171, inf
    %1174 = vmin.xlane.f32.xlu0 %v1173
    %v1175 = vpop.xlane.xlu0 %1174
    %v1176 = vsel %vm1162, %v1172, inf
    %1177 = vmin.xlane.f32.xlu0 %v1176
    %v1178 = vpop.xlane.xlu0 %1177
    %v1179 = vlaneseq
    %v1180 = vshrl.u32 %v1179, 7
    %v1181 = vsub.s32 0, %v1180
    %v1182 = vrot.slane %v1036, %v1181
    %s1184 = sor.u32 256, 6
    %1185 = vbcast.lane.b32.xlu0 %v1182, %s1184
    %v1186 = vpop.permute.xlu0 %1185
    %v1187 = vlaneseq
    %v1188 = vshrl.u32 %v1187, 7
    %v1189 = vsub.s32 1, %v1188
    %v1190 = vrot.slane %v1036, %v1189
    %s1192 = sor.u32 256, 6
    %1193 = vbcast.lane.b32.xlu0 %v1190, %s1192
    %v1194 = vpop.permute.xlu0 %1193
    %v1197 = vadd.f32 %v1165, %v1186
    %v1198 = vadd.f32 %v1168, %v1194
    %1199 = vset.pattern.permute.xlu0 113
    %1200 = vperm.xlu0 %1199, %v1036
    %v1201 = vpop.permute.xlu0 %1200
    %v1202 = vlaneseq
    %v1203 = vshrl.u32 %v1202, 7
    %v1204 = vsub.s32 0, %v1203
    %v1205 = vrot.slane %v1201, %v1204
    %v1206 = vlaneseq
    %v1207 = vshrl.u32 %v1206, 7
    %v1208 = vsub.s32 1, %v1207
    %v1209 = vrot.slane %v1201, %v1208
    %v1212 = vadd.f32 %v71, %v1205
    %v1213 = vadd.f32 %v72, %v1209
    %1216 = vset.pattern.permute.xlu0 0
    %1217 = vperm.xlu0 %1216, %v1212
    %v1218 = vpop.permute.xlu0 %1217
    %1219 = vset.pattern.permute.xlu0 0
    %1220 = vperm.xlu0 %1219, %v1213
    %v1221 = vpop.permute.xlu0 %1220
    %v1222 = vlaneseq
    %v1223 = vshrl.u32 %v1222, 7
    %v1224 = vsub.s32 %v193, %v1223
    %v1225 = vrot.slane %v1218, %v1224
    %v1226 = vlaneseq
    %v1227 = vshrl.u32 %v1226, 7
    %v1228 = vsub.s32 %v193, %v1227
    %v1229 = vrot.slane %v1221, %v1228
    %v1230 = vsel %vm247, %v1229, %v1225
    %v1232 = vsel %vm250, %v1230, -inf
    %1233 = vmax.xlane.f32.xlu0 %v1232
    %v1234 = vpop.xlane.xlu0 %1233
    %v1236 = vlaneseq
    %v1237 = vshrl.u32 %v1236, 7
    %v1238 = vsub.s32 0, %v1237
    %v1239 = vrot.slane %v1234, %v1238
    %v1240 = vlaneseq
    %v1241 = vshrl.u32 %v1240, 7
    %v1242 = vsub.s32 1, %v1241
    %v1243 = vrot.slane %v1234, %v1242
    %v1246 = vsub.f32 %v1212, %v1239
    %v1247 = vsub.f32 %v1213, %v1243
    %v1248 = vmul.f32 %v1246, 1.442695
    %v1249 = vpow.pop %v1248
    %v1250 = vmul.f32 %v1247, 1.442695
    %v1251 = vpow.pop %v1250
    %1254 = vset.pattern.permute.xlu0 0
    %1255 = vperm.xlu0 %1254, %v1249
    %v1256 = vpop.permute.xlu0 %1255
    %1257 = vset.pattern.permute.xlu0 0
    %1258 = vperm.xlu0 %1257, %v1251
    %v1259 = vpop.permute.xlu0 %1258
    %v1260 = vlaneseq
    %v1261 = vshrl.u32 %v1260, 7
    %v1262 = vsub.s32 %v193, %v1261
    %v1263 = vrot.slane %v1256, %v1262
    %v1264 = vlaneseq
    %v1265 = vshrl.u32 %v1264, 7
    %v1266 = vsub.s32 %v193, %v1265
    %v1267 = vrot.slane %v1259, %v1266
    %v1268 = vsel %vm247, %v1267, %v1263
    %v1270 = vsel %vm250, %v1268, 0.0
    %1271 = vadd.xlane.f32.xlu0 %v1270
    %v1272 = vpop.xlane.xlu0 %1271
    %v1273 = vrcp.pop %v1272
    %v1275 = vlaneseq
    %v1276 = vshrl.u32 %v1275, 7
    %v1277 = vsub.s32 0, %v1276
    %v1278 = vrot.slane %v1273, %v1277
    %v1279 = vlaneseq
    %v1280 = vshrl.u32 %v1279, 7
    %v1281 = vsub.s32 1, %v1280
    %v1282 = vrot.slane %v1273, %v1281
    %v1285 = vmul.f32 %v1249, %v1278
    %v1286 = vmul.f32 %v1251, %v1282
    %1288 = vset.pattern.permute.xlu0 0
    %1289 = vperm.xlu0 %1288, %v1285
    %v1290 = vpop.permute.xlu0 %1289
    %1293 = vset.pattern.permute.xlu0 0
    %1294 = vperm.xlu0 %1293, %v1286
    %v1295 = vpop.permute.xlu0 %1294
    %v1297 = vmul.f32 %v1290, %v51
    %v1298 = vmul.f32 %v1295, %v52
    %v1299 = vsel %vm60, %v1297, 0.0
    %v1300 = vrot.slane %v1299, 4
    %v1301 = vadd.f32 %v1299, %v1300
    %v1302 = vrot.slane %v1301, 2
    %v1303 = vadd.f32 %v1301, %v1302
    %v1304 = vrot.slane %v1303, 1
    %v1305 = vadd.f32 %v1303, %v1304
    %v1306 = vsel %vm60, %v1298, 0.0
    %v1307 = vrot.slane %v1306, 4
    %v1308 = vadd.f32 %v1306, %v1307
    %v1309 = vrot.slane %v1308, 2
    %v1310 = vadd.f32 %v1308, %v1309
    %v1311 = vrot.slane %v1310, 1
    %v1312 = vadd.f32 %v1310, %v1311
    %v1315 = vsel %vm247, %v1312, %v1305
    %1316 = vrot.lane.b32.xlu0 %v1315, 32
    %v1317 = vpop.permute.xlu0 %1316
    %1319 = vrot.lane.b32.xlu0 %v953, 32
    %v1320 = vpop.permute.xlu0 %1319
    %v1322 = vsel %vm60, %v730, %v1317
    %v1323 = vsel %vm343, %v1322, %v1320
    %v1325 = vsel %vm349, %v1323, 0
    %1327 = vmatprep.subr.mxu0 0.0
    %1328 = vmatpush1.msra.mxu0 %v195
    %1329 = vmatprep.subr.mxu0 0.0
    %1330 = vmatpush1.msra.mxu0 %v196
    %1331 = vmatprep.subr.mxu0 0.0
    %1332 = vmatpush1.msra.mxu0 %v197
    %1333 = vmatprep.subr.mxu0 0.0
    %1334 = vmatpush1.msra.mxu0 %v198
    %1335 = vmatprep.subr.mxu0 0.0
    %1336 = vmatpush1.msra.mxu0 %v199
    %1337 = vmatprep.subr.mxu0 0.0
    %1338 = vmatpush1.msra.mxu0 %v200
    %1339 = vmatprep.subr.mxu0 0.0
    %1340 = vmatpush1.msra.mxu0 %v201
    %1341 = vmatprep.subr.mxu0 0.0
    %1342 = vmatpush1.msra.mxu0 %v202
    %1343 = vmatprep.subr.mxu0 0.0
    %1344 = vmatpush1.msra.mxu0 %v203
    %1345 = vmatprep.subr.mxu0 0.0
    %1346 = vmatpush1.msra.mxu0 %v204
    %1347 = vmatprep.subr.mxu0 0.0
    %1348 = vmatpush1.msra.mxu0 %v205
    %1349 = vmatprep.subr.mxu0 0.0
    %1350 = vmatpush1.msra.mxu0 %v206
    %1351 = vmatprep.subr.mxu0 0.0
    %1352 = vmatpush1.msra.mxu0 0.0
    %1353 = vmatprep.subr.mxu0 0.0
    %1354 = vmatpush1.msra.mxu0 0.0
    %1355 = vmatprep.subr.mxu0 0.0
    %1356 = vmatpush1.msra.mxu0 0.0
    %1357 = vmatprep.subr.mxu0 0.0
    %1358 = vmatpush1.msra.mxu0 0.0
    %1359 = vmatprep.subr.mxu0 0.0
    %1360 = vmatpush1.msra.mxu0 0.0
    %1361 = vmatprep.subr.mxu0 0.0
    %1362 = vmatpush1.msra.mxu0 0.0
    %1363 = vmatprep.subr.mxu0 0.0
    %1364 = vmatpush1.msra.mxu0 0.0
    %1365 = vmatprep.subr.mxu0 0.0
    %1366 = vmatpush1.msra.mxu0 0.0
    %1367 = vmatprep.subr.mxu0 0.0
    %1368 = vmatpush1.msra.mxu0 0.0
    %1369 = vmatprep.subr.mxu0 0.0
    %1370 = vmatpush1.msra.mxu0 0.0
    %1371 = vmatprep.subr.mxu0 0.0
    %1372 = vmatpush1.msra.mxu0 0.0
    %1373 = vmatprep.subr.mxu0 0.0
    %1374 = vmatpush1.msra.mxu0 0.0
    %1375 = vmatprep.subr.mxu0 0.0
    %1376 = vmatpush1.msra.mxu0 0.0
    %1377 = vmatprep.subr.mxu0 0.0
    %1378 = vmatpush1.msra.mxu0 0.0
    %1379 = vmatprep.subr.mxu0 0.0
    %1380 = vmatpush1.msra.mxu0 0.0
    %1381 = vmatprep.subr.mxu0 0.0
    %1382 = vmatpush1.msra.mxu0 0.0
    %1383 = vmatprep.subr.mxu0 0.0
    %1384 = vmatpush1.msra.mxu0 0.0
    %1385 = vmatprep.subr.mxu0 0.0
    %1386 = vmatpush1.msra.mxu0 0.0
    %1387 = vmatprep.subr.mxu0 0.0
    %1388 = vmatpush1.msra.mxu0 0.0
    %1389 = vmatprep.subr.mxu0 0.0
    %1390 = vmatpush1.msra.mxu0 0.0
    %1391 = vmatprep.mubr.f32.mxu0 0.0
    %1392 = vmatmul.mubr.f32.gmra.mrb[0].mxu0 %v1325
    %v1393 = vpop.f32.mrb[0].mxu0
    %v1394 = vadd.f32 %v348, %v1393
    %v1395 = vpop.f32.mrb[0].mxu0
    %1396 = vdwg.mxu0
    %v1397 = vxor.u32 %v1394, 2147483648
    %v1398 = vmul.f32 %v1397, 1.442695
    %v1399 = vpow.pop %v1398
    %v1400 = vadd.f32 %v1399, 1.0
    %v1401 = vrcp.pop %v1400
    %v1402 = vmul.f32 1.0, %v1401
    %1404 = vrot.lane.b32.xlu0 %v1394, 32
    %v1405 = vpop.permute.xlu0 %1404
    %v1407 = vmul.f32 %v1402, %v1405
    %1409 = vrot.lane.b32.xlu0 %v1407, 64
    %v1410 = vpop.permute.xlu0 %1409
    %v1412 = vadd.f32 %v1394, %v1410
    %v1413 = vtanh.pop %v1412
    %v1414 = vsub.f32 1.0, %v1402
    %1416 = vrot.lane.b32.xlu0 %v1413, 96
    %v1417 = vpop.permute.xlu0 %1416
    %v1419 = vmul.f32 %v1414, %v1417
    %v1420 = vmul.f32 %v1402, %v953
    %v1421 = vadd.f32 %v1419, %v1420
    %vm1422 = vcmp.gt.f32.partialorder %v1421, 0.0
    %v1423 = vmul.f32 %v1421, 1.442695
    %v1424 = vpow.pop %v1423
    %v1425 = vsub.f32 %v1424, 1.0
    %v1426 = vmul.f32 %v1425, 1.6732632
    %v1427 = vsel %vm1422, %v1421, %v1426
    %v1428 = vmul.f32 %v1427, 1.050701
    %1430 = vrot.lane.b32.xlu0 %v1421, 96
    %v1431 = vpop.permute.xlu0 %1430
    %v1433 = vsel %vm60, %v1431, %v1428
    %v1435 = vsel %vm343, %v1433, 0
    %1437 = vmatprep.subr.mxu0 0.0
    %1438 = vmatpush1.msra.mxu0 %v208
    %1439 = vmatprep.subr.mxu0 0.0
    %1440 = vmatpush1.msra.mxu0 %v209
    %1441 = vmatprep.subr.mxu0 0.0
    %1442 = vmatpush1.msra.mxu0 %v210
    %1443 = vmatprep.subr.mxu0 0.0
    %1444 = vmatpush1.msra.mxu0 %v211
    %1445 = vmatprep.subr.mxu0 0.0
    %1446 = vmatpush1.msra.mxu0 %v212
    %1447 = vmatprep.subr.mxu0 0.0
    %1448 = vmatpush1.msra.mxu0 %v213
    %1449 = vmatprep.subr.mxu0 0.0
    %1450 = vmatpush1.msra.mxu0 %v214
    %1451 = vmatprep.subr.mxu0 0.0
    %1452 = vmatpush1.msra.mxu0 %v215
    %1453 = vmatprep.subr.mxu0 0.0
    %1454 = vmatpush1.msra.mxu0 0.0
    %1455 = vmatprep.subr.mxu0 0.0
    %1456 = vmatpush1.msra.mxu0 0.0
    %1457 = vmatprep.subr.mxu0 0.0
    %1458 = vmatpush1.msra.mxu0 0.0
    %1459 = vmatprep.subr.mxu0 0.0
    %1460 = vmatpush1.msra.mxu0 0.0
    %1461 = vmatprep.subr.mxu0 0.0
    %1462 = vmatpush1.msra.mxu0 0.0
    %1463 = vmatprep.subr.mxu0 0.0
    %1464 = vmatpush1.msra.mxu0 0.0
    %1465 = vmatprep.subr.mxu0 0.0
    %1466 = vmatpush1.msra.mxu0 0.0
    %1467 = vmatprep.subr.mxu0 0.0
    %1468 = vmatpush1.msra.mxu0 0.0
    %1469 = vmatprep.subr.mxu0 0.0
    %1470 = vmatpush1.msra.mxu0 0.0
    %1471 = vmatprep.subr.mxu0 0.0
    %1472 = vmatpush1.msra.mxu0 0.0
    %1473 = vmatprep.subr.mxu0 0.0
    %1474 = vmatpush1.msra.mxu0 0.0
    %1475 = vmatprep.subr.mxu0 0.0
    %1476 = vmatpush1.msra.mxu0 0.0
    %1477 = vmatprep.subr.mxu0 0.0
    %1478 = vmatpush1.msra.mxu0 0.0
    %1479 = vmatprep.subr.mxu0 0.0
    %1480 = vmatpush1.msra.mxu0 0.0
    %1481 = vmatprep.subr.mxu0 0.0
    %1482 = vmatpush1.msra.mxu0 0.0
    %1483 = vmatprep.subr.mxu0 0.0
    %1484 = vmatpush1.msra.mxu0 0.0
    %1485 = vmatprep.subr.mxu0 0.0
    %1486 = vmatpush1.msra.mxu0 0.0
    %1487 = vmatprep.subr.mxu0 0.0
    %1488 = vmatpush1.msra.mxu0 0.0
    %1489 = vmatprep.subr.mxu0 0.0
    %1490 = vmatpush1.msra.mxu0 0.0
    %1491 = vmatprep.subr.mxu0 0.0
    %1492 = vmatpush1.msra.mxu0 0.0
    %1493 = vmatprep.subr.mxu0 0.0
    %1494 = vmatpush1.msra.mxu0 0.0
    %1495 = vmatprep.subr.mxu0 0.0
    %1496 = vmatpush1.msra.mxu0 0.0
    %1497 = vmatprep.subr.mxu0 0.0
    %1498 = vmatpush1.msra.mxu0 0.0
    %1499 = vmatprep.subr.mxu0 0.0
    %1500 = vmatpush1.msra.mxu0 0.0
    %1501 = vmatprep.mubr.f32.mxu0 0.0
    %1502 = vmatmul.mubr.f32.gmra.mrb[0].mxu0 %v1435
    %v1503 = vpop.f32.mrb[0].mxu0
    %v1504 = vadd.f32 %v466, %v1503
    %v1505 = vpop.f32.mrb[0].mxu0
    %1506 = vdwg.mxu0
    %v1507 = vsel %vm540, %v1504, -inf
    %1508 = vmax.xlane.f32.xlu0 %v1507
    %v1509 = vpop.xlane.xlu0 %1508
    %v1510 = vsub.f32 %v1504, %v1509
    %v1511 = vmul.f32 %v1510, 1.442695
    %v1512 = vpow.pop %v1511
    %v1513 = vsel %vm540, %v1512, 0.0
    %1514 = vadd.xlane.f32.xlu0 %v1513
    %v1515 = vpop.xlane.xlu0 %1514
    %v1516 = vlog2.pop %v1515
    %v1517 = vmul.f32 %v1516, 0.6931472
    %v1518 = vadd.f32 %v1517, %v1509
    %v1519 = vsub.f32 %v1504, %v1518
    %v1522 = vunpack.c.l.s4 1966171168
    %v1523 = vunpack.c.0.s8 %v1522
    %v1524 = vlaneseq
    %v1525 = vshrl.u32 %v1524, 7
    %v1526 = vsub.s32 %v1523, %v1525
    %v1527 = vrot.slane %v1504, %v1526
    %v1528 = vcombine.high %v1527, %v1527
    %v1530 = vunpack.c.l.s4 1966171168
    %v1531 = vunpack.c.0.s8 %v1530
    %v1532 = vlaneseq
    %v1533 = vshrl.u32 %v1532, 7
    %v1534 = vsub.s32 %v1531, %v1533
    %v1535 = vrot.slane %v1527, %v1534
    %v1537 = vunpack.c.l.s4 1966171168
    %v1538 = vunpack.c.0.s8 %v1537
    %v1539 = vlaneseq
    %v1540 = vshrl.u32 %v1539, 7
    %v1541 = vsub.s32 %v1538, %v1540
    %v1542 = vrot.slane %v1528, %v1541
    %v1543 = vlaneseq
    %v1544 = vshrl.u32 %v1543, 7
    %v1545 = vsub.s32 0, %v1544
    %v1546 = vrot.slane %v1535, %v1545
    %v1547 = vlaneseq
    %v1548 = vshrl.u32 %v1547, 7
    %v1549 = vsub.s32 0, %v1548
    %v1550 = vrot.slane %v1542, %v1549
    %v1553 = vadd.f32 %v1546, %v590
    %v1554 = vadd.f32 %v1550, %v592
    %vm1555 = vcmp.gt.f32.partialorder %v1553, 0.0
    %vm1556 = vcmp.gt.f32.partialorder %v1554, 0.0
    %v1557 = vmul.f32 %v1553, 1.442695
    %v1558 = vpow.pop %v1557
    %v1559 = vmul.f32 %v1554, 1.442695
    %v1560 = vpow.pop %v1559
    %v1561 = vsub.f32 %v1558, 1.0
    %v1562 = vsub.f32 %v1560, 1.0
    %v1563 = vmul.f32 %v1561, 1.6732632
    %v1564 = vmul.f32 %v1562, 1.6732632
    %v1565 = vsel %vm1555, %v1553, %v1563
    %v1566 = vsel %vm1556, %v1554, %v1564
    %v1567 = vmul.f32 %v1565, 1.050701
    %v1568 = vmul.f32 %v1566, 1.050701
    %v1569 = vmul.f32 %v1567, %v617
    %v1570 = vmul.f32 %v1568, %v617
    %1573 = vrot.lane.b32.xlu0 %v1569, 115
    %v1574 = vpop.permute.xlu0 %1573
    %1575 = vrot.lane.b32.xlu0 %v1570, 115
    %v1576 = vpop.permute.xlu0 %1575
    %v1579 = vsel %vm629, %v1574, 0.0
    %1580 = vadd.xlane.f32.xlu0 %v1579
    %v1581 = vpop.xlane.xlu0 %1580
    %v1582 = vsel %vm629, %v1576, 0.0
    %1583 = vadd.xlane.f32.xlu0 %v1582
    %v1584 = vpop.xlane.xlu0 %1583
    %v1585 = vadd.f32 %v1581, %v639
    %v1586 = vadd.f32 %v1584, %v639
    %v1589 = vlaneseq
    %v1590 = vshrl.u32 %v1589, 7
    %v1591 = vsub.s32 %v193, %v1590
    %v1592 = vrot.slane %v1585, %v1591
    %v1593 = vlaneseq
    %v1594 = vshrl.u32 %v1593, 7
    %v1595 = vsub.s32 %v193, %v1594
    %v1596 = vrot.slane %v1586, %v1595
    %v1597 = vsel %vm247, %v1596, %v1592
    %1599 = vrot.lane.b32.xlu0 %v1504, 3
    %v1600 = vpop.permute.xlu0 %1599
    %v1602 = vsel %vm658, %v1597, %v1600
    %v1603 = vsel %vm660, %v1602, -inf
    %1604 = vmax.xlane.f32.xlu0 %v1603
    %v1605 = vpop.xlane.xlu0 %1604
    %v1606 = vsub.f32 %v1602, %v1605
    %v1607 = vmul.f32 %v1606, 1.442695
    %v1608 = vpow.pop %v1607
    %v1609 = vsel %vm660, %v1608, 0.0
    %1610 = vadd.xlane.f32.xlu0 %v1609
    %v1611 = vpop.xlane.xlu0 %1610
    %v1612 = vlog2.pop %v1611
    %v1613 = vmul.f32 %v1612, 0.6931472
    %v1614 = vadd.f32 %v1613, %v1605
    %v1615 = vsub.f32 %v1602, %v1614
    %v1617 = vlaneseq
    %v1618 = vshrl.u32 %v1617, 7
    %v1619 = vsub.s32 0, %v1618
    %v1620 = vrot.slane %v1148, %v1619
    %1622 = vbcast.lane.b32.xlu0 %v1620, 256
    %v1623 = vpop.permute.xlu0 %1622
    %v1624 = vlaneseq
    %v1625 = vshrl.u32 %v1624, 7
    %v1626 = vsub.s32 1, %v1625
    %v1627 = vrot.slane %v1148, %v1626
    %1629 = vbcast.lane.b32.xlu0 %v1627, 256
    %v1630 = vpop.permute.xlu0 %1629
    %v1631 = vlaneseq
    %v1632 = vshrl.u32 %v1631, 7
    %v1633 = vsub.s32 2, %v1632
    %v1634 = vrot.slane %v1148, %v1633
    %1636 = vbcast.lane.b32.xlu0 %v1634, 256
    %v1637 = vpop.permute.xlu0 %1636
    %v1638 = vlaneseq
    %v1639 = vshrl.u32 %v1638, 7
    %v1640 = vsub.s32 3, %v1639
    %v1641 = vrot.slane %v1148, %v1640
    %1643 = vbcast.lane.b32.xlu0 %v1641, 256
    %v1644 = vpop.permute.xlu0 %1643
    %v1645 = vlaneseq
    %v1646 = vshrl.u32 %v1645, 7
    %v1647 = vsub.s32 4, %v1646
    %v1648 = vrot.slane %v1148, %v1647
    %1650 = vbcast.lane.b32.xlu0 %v1648, 256
    %v1651 = vpop.permute.xlu0 %1650
    %v1652 = vlaneseq
    %v1653 = vshrl.u32 %v1652, 7
    %v1654 = vsub.s32 5, %v1653
    %v1655 = vrot.slane %v1148, %v1654
    %1657 = vbcast.lane.b32.xlu0 %v1655, 256
    %v1658 = vpop.permute.xlu0 %1657
    %v1659 = vlaneseq
    %v1660 = vshrl.u32 %v1659, 7
    %v1661 = vsub.s32 6, %v1660
    %v1662 = vrot.slane %v1148, %v1661
    %1664 = vbcast.lane.b32.xlu0 %v1662, 256
    %v1665 = vpop.permute.xlu0 %1664
    %v1673 = vadd.f32 %v1197, %v1623
    %v1674 = vadd.f32 %v1197, %v1630
    %v1675 = vadd.f32 %v1197, %v1637
    %v1676 = vadd.f32 %v1197, %v1644
    %v1677 = vadd.f32 %v1197, %v1651
    %v1678 = vadd.f32 %v1197, %v1658
    %v1679 = vadd.f32 %v1197, %v1665
    %v1680 = vadd.f32 %v1198, %v1623
    %v1681 = vadd.f32 %v1198, %v1630
    %v1682 = vadd.f32 %v1198, %v1637
    %v1683 = vadd.f32 %v1198, %v1644
    %v1684 = vadd.f32 %v1198, %v1651
    %v1685 = vadd.f32 %v1198, %v1658
    %v1686 = vadd.f32 %v1198, %v1665
    %1701 = vset.pattern.permute.xlu0 0
    %1702 = vperm.xlu0 %1701, %v1673
    %v1703 = vpop.permute.xlu0 %1702
    %1704 = vset.pattern.permute.xlu0 0
    %1705 = vperm.xlu0 %1704, %v1674
    %v1706 = vpop.permute.xlu0 %1705
    %1707 = vset.pattern.permute.xlu0 0
    %1708 = vperm.xlu0 %1707, %v1675
    %v1709 = vpop.permute.xlu0 %1708
    %1710 = vset.pattern.permute.xlu0 0
    %1711 = vperm.xlu0 %1710, %v1676
    %v1712 = vpop.permute.xlu0 %1711
    %1713 = vset.pattern.permute.xlu0 0
    %1714 = vperm.xlu0 %1713, %v1677
    %v1715 = vpop.permute.xlu0 %1714
    %1716 = vset.pattern.permute.xlu0 0
    %1717 = vperm.xlu0 %1716, %v1678
    %v1718 = vpop.permute.xlu0 %1717
    %1719 = vset.pattern.permute.xlu0 0
    %1720 = vperm.xlu0 %1719, %v1679
    %v1721 = vpop.permute.xlu0 %1720
    %1722 = vset.pattern.permute.xlu0 0
    %1723 = vperm.xlu0 %1722, %v1680
    %v1724 = vpop.permute.xlu0 %1723
    %1725 = vset.pattern.permute.xlu0 0
    %1726 = vperm.xlu0 %1725, %v1681
    %v1727 = vpop.permute.xlu0 %1726
    %1728 = vset.pattern.permute.xlu0 0
    %1729 = vperm.xlu0 %1728, %v1682
    %v1730 = vpop.permute.xlu0 %1729
    %1731 = vset.pattern.permute.xlu0 0
    %1732 = vperm.xlu0 %1731, %v1683
    %v1733 = vpop.permute.xlu0 %1732
    %1734 = vset.pattern.permute.xlu0 0
    %1735 = vperm.xlu0 %1734, %v1684
    %v1736 = vpop.permute.xlu0 %1735
    %1737 = vset.pattern.permute.xlu0 0
    %1738 = vperm.xlu0 %1737, %v1685
    %v1739 = vpop.permute.xlu0 %1738
    %1740 = vset.pattern.permute.xlu0 0
    %1741 = vperm.xlu0 %1740, %v1686
    %v1742 = vpop.permute.xlu0 %1741
    %v1743 = vlaneseq
    %v1744 = vshrl.u32 %v1743, 7
    %v1745 = vsub.s32 %v193, %v1744
    %v1746 = vrot.slane %v1703, %v1745
    %v1747 = vlaneseq
    %v1748 = vshrl.u32 %v1747, 7
    %v1749 = vsub.s32 %v193, %v1748
    %v1750 = vrot.slane %v1706, %v1749
    %v1751 = vlaneseq
    %v1752 = vshrl.u32 %v1751, 7
    %v1753 = vsub.s32 %v193, %v1752
    %v1754 = vrot.slane %v1709, %v1753
    %v1755 = vlaneseq
    %v1756 = vshrl.u32 %v1755, 7
    %v1757 = vsub.s32 %v193, %v1756
    %v1758 = vrot.slane %v1712, %v1757
    %v1759 = vlaneseq
    %v1760 = vshrl.u32 %v1759, 7
    %v1761 = vsub.s32 %v193, %v1760
    %v1762 = vrot.slane %v1715, %v1761
    %v1763 = vlaneseq
    %v1764 = vshrl.u32 %v1763, 7
    %v1765 = vsub.s32 %v193, %v1764
    %v1766 = vrot.slane %v1718, %v1765
    %v1767 = vlaneseq
    %v1768 = vshrl.u32 %v1767, 7
    %v1769 = vsub.s32 %v193, %v1768
    %v1770 = vrot.slane %v1721, %v1769
    %v1771 = vlaneseq
    %v1772 = vshrl.u32 %v1771, 7
    %v1773 = vsub.s32 %v193, %v1772
    %v1774 = vrot.slane %v1724, %v1773
    %v1775 = vlaneseq
    %v1776 = vshrl.u32 %v1775, 7
    %v1777 = vsub.s32 %v193, %v1776
    %v1778 = vrot.slane %v1727, %v1777
    %v1779 = vlaneseq
    %v1780 = vshrl.u32 %v1779, 7
    %v1781 = vsub.s32 %v193, %v1780
    %v1782 = vrot.slane %v1730, %v1781
    %v1783 = vlaneseq
    %v1784 = vshrl.u32 %v1783, 7
    %v1785 = vsub.s32 %v193, %v1784
    %v1786 = vrot.slane %v1733, %v1785
    %v1787 = vlaneseq
    %v1788 = vshrl.u32 %v1787, 7
    %v1789 = vsub.s32 %v193, %v1788
    %v1790 = vrot.slane %v1736, %v1789
    %v1791 = vlaneseq
    %v1792 = vshrl.u32 %v1791, 7
    %v1793 = vsub.s32 %v193, %v1792
    %v1794 = vrot.slane %v1739, %v1793
    %v1795 = vlaneseq
    %v1796 = vshrl.u32 %v1795, 7
    %v1797 = vsub.s32 %v193, %v1796
    %v1798 = vrot.slane %v1742, %v1797
    %v1799 = vsel %vm247, %v1750, %v1746
    %vm1800 = vcmask 1042434
    %v1801 = vsel %vm1800, %v1754, %v1799
    %vm1802 = vcmask 1043459
    %v1803 = vsel %vm1802, %v1758, %v1801
    %vm1804 = vcmask 1044484
    %v1805 = vsel %vm1804, %v1762, %v1803
    %vm1806 = vcmask 1045509
    %v1807 = vsel %vm1806, %v1766, %v1805
    %vm1808 = vcmask 1046534
    %v1809 = vsel %vm1808, %v1770, %v1807
    %v1810 = vsel %vm247, %v1778, %v1774
    %v1811 = vsel %vm1800, %v1782, %v1810
    %v1812 = vsel %vm1802, %v1786, %v1811
    %v1813 = vsel %vm1804, %v1790, %v1812
    %v1814 = vsel %vm1806, %v1794, %v1813
    %v1815 = vsel %vm1808, %v1798, %v1814
    %v1818 = vsel %vm1162, %v1809, -inf
    %1819 = vmax.xlane.f32.xlu0 %v1818
    %v1820 = vpop.xlane.xlu0 %1819
    %v1821 = vsel %vm1162, %v1815, -inf
    %1822 = vmax.xlane.f32.xlu0 %v1821
    %v1823 = vpop.xlane.xlu0 %1822
    %v1826 = vlaneseq
    %v1827 = vshrl.u32 %v1826, 7
    %v1828 = vsub.s32 0, %v1827
    %v1829 = vrot.slane %v1820, %v1828
    %v1830 = vlaneseq
    %v1831 = vshrl.u32 %v1830, 7
    %v1832 = vsub.s32 1, %v1831
    %v1833 = vrot.slane %v1820, %v1832
    %v1834 = vlaneseq
    %v1835 = vshrl.u32 %v1834, 7
    %v1836 = vsub.s32 2, %v1835
    %v1837 = vrot.slane %v1820, %v1836
    %v1838 = vlaneseq
    %v1839 = vshrl.u32 %v1838, 7
    %v1840 = vsub.s32 3, %v1839
    %v1841 = vrot.slane %v1820, %v1840
    %v1842 = vlaneseq
    %v1843 = vshrl.u32 %v1842, 7
    %v1844 = vsub.s32 4, %v1843
    %v1845 = vrot.slane %v1820, %v1844
    %v1846 = vlaneseq
    %v1847 = vshrl.u32 %v1846, 7
    %v1848 = vsub.s32 5, %v1847
    %v1849 = vrot.slane %v1820, %v1848
    %v1850 = vlaneseq
    %v1851 = vshrl.u32 %v1850, 7
    %v1852 = vsub.s32 6, %v1851
    %v1853 = vrot.slane %v1820, %v1852
    %v1854 = vlaneseq
    %v1855 = vshrl.u32 %v1854, 7
    %v1856 = vsub.s32 0, %v1855
    %v1857 = vrot.slane %v1823, %v1856
    %v1858 = vlaneseq
    %v1859 = vshrl.u32 %v1858, 7
    %v1860 = vsub.s32 1, %v1859
    %v1861 = vrot.slane %v1823, %v1860
    %v1862 = vlaneseq
    %v1863 = vshrl.u32 %v1862, 7
    %v1864 = vsub.s32 2, %v1863
    %v1865 = vrot.slane %v1823, %v1864
    %v1866 = vlaneseq
    %v1867 = vshrl.u32 %v1866, 7
    %v1868 = vsub.s32 3, %v1867
    %v1869 = vrot.slane %v1823, %v1868
    %v1870 = vlaneseq
    %v1871 = vshrl.u32 %v1870, 7
    %v1872 = vsub.s32 4, %v1871
    %v1873 = vrot.slane %v1823, %v1872
    %v1874 = vlaneseq
    %v1875 = vshrl.u32 %v1874, 7
    %v1876 = vsub.s32 5, %v1875
    %v1877 = vrot.slane %v1823, %v1876
    %v1878 = vlaneseq
    %v1879 = vshrl.u32 %v1878, 7
    %v1880 = vsub.s32 6, %v1879
    %v1881 = vrot.slane %v1823, %v1880
    %vm1896 = vcmp.eq.f32.partialorder %v1673, %v1829
    %vm1897 = vcmp.eq.f32.partialorder %v1674, %v1833
    %vm1898 = vcmp.eq.f32.partialorder %v1675, %v1837
    %vm1899 = vcmp.eq.f32.partialorder %v1676, %v1841
    %vm1900 = vcmp.eq.f32.partialorder %v1677, %v1845
    %vm1901 = vcmp.eq.f32.partialorder %v1678, %v1849
    %vm1902 = vcmp.eq.f32.partialorder %v1679, %v1853
    %vm1903 = vcmp.eq.f32.partialorder %v1680, %v1857
    %vm1904 = vcmp.eq.f32.partialorder %v1681, %v1861
    %vm1905 = vcmp.eq.f32.partialorder %v1682, %v1865
    %vm1906 = vcmp.eq.f32.partialorder %v1683, %v1869
    %vm1907 = vcmp.eq.f32.partialorder %v1684, %v1873
    %vm1908 = vcmp.eq.f32.partialorder %v1685, %v1877
    %vm1909 = vcmp.eq.f32.partialorder %v1686, %v1881
    %1912 = vbcast.lane.b32.xlu0 %v194, 256
    %v1913 = vpop.permute.xlu0 %1912
    %v1915 = vsel %vm1896, %v1913, 7.0
    %v1916 = vsel %vm1897, %v1913, 7.0
    %v1917 = vsel %vm1898, %v1913, 7.0
    %v1918 = vsel %vm1899, %v1913, 7.0
    %v1919 = vsel %vm1900, %v1913, 7.0
    %v1920 = vsel %vm1901, %v1913, 7.0
    %v1921 = vsel %vm1902, %v1913, 7.0
    %v1922 = vsel %vm1903, %v1913, 7.0
    %v1923 = vsel %vm1904, %v1913, 7.0
    %v1924 = vsel %vm1905, %v1913, 7.0
    %v1925 = vsel %vm1906, %v1913, 7.0
    %v1926 = vsel %vm1907, %v1913, 7.0
    %v1927 = vsel %vm1908, %v1913, 7.0
    %v1928 = vsel %vm1909, %v1913, 7.0
    %1943 = vset.pattern.permute.xlu0 0
    %1944 = vperm.xlu0 %1943, %v1915
    %v1945 = vpop.permute.xlu0 %1944
    %1946 = vset.pattern.permute.xlu0 0
    %1947 = vperm.xlu0 %1946, %v1916
    %v1948 = vpop.permute.xlu0 %1947
    %1949 = vset.pattern.permute.xlu0 0
    %1950 = vperm.xlu0 %1949, %v1917
    %v1951 = vpop.permute.xlu0 %1950
    %1952 = vset.pattern.permute.xlu0 0
    %1953 = vperm.xlu0 %1952, %v1918
    %v1954 = vpop.permute.xlu0 %1953
    %1955 = vset.pattern.permute.xlu0 0
    %1956 = vperm.xlu0 %1955, %v1919
    %v1957 = vpop.permute.xlu0 %1956
    %1958 = vset.pattern.permute.xlu0 0
    %1959 = vperm.xlu0 %1958, %v1920
    %v1960 = vpop.permute.xlu0 %1959
    %1961 = vset.pattern.permute.xlu0 0
    %1962 = vperm.xlu0 %1961, %v1921
    %v1963 = vpop.permute.xlu0 %1962
    %1964 = vset.pattern.permute.xlu0 0
    %1965 = vperm.xlu0 %1964, %v1922
    %v1966 = vpop.permute.xlu0 %1965
    %1967 = vset.pattern.permute.xlu0 0
    %1968 = vperm.xlu0 %1967, %v1923
    %v1969 = vpop.permute.xlu0 %1968
    %1970 = vset.pattern.permute.xlu0 0
    %1971 = vperm.xlu0 %1970, %v1924
    %v1972 = vpop.permute.xlu0 %1971
    %1973 = vset.pattern.permute.xlu0 0
    %1974 = vperm.xlu0 %1973, %v1925
    %v1975 = vpop.permute.xlu0 %1974
    %1976 = vset.pattern.permute.xlu0 0
    %1977 = vperm.xlu0 %1976, %v1926
    %v1978 = vpop.permute.xlu0 %1977
    %1979 = vset.pattern.permute.xlu0 0
    %1980 = vperm.xlu0 %1979, %v1927
    %v1981 = vpop.permute.xlu0 %1980
    %1982 = vset.pattern.permute.xlu0 0
    %1983 = vperm.xlu0 %1982, %v1928
    %v1984 = vpop.permute.xlu0 %1983
    %v1985 = vlaneseq
    %v1986 = vshrl.u32 %v1985, 7
    %v1987 = vsub.s32 %v193, %v1986
    %v1988 = vrot.slane %v1945, %v1987
    %v1989 = vlaneseq
    %v1990 = vshrl.u32 %v1989, 7
    %v1991 = vsub.s32 %v193, %v1990
    %v1992 = vrot.slane %v1948, %v1991
    %v1993 = vlaneseq
    %v1994 = vshrl.u32 %v1993, 7
    %v1995 = vsub.s32 %v193, %v1994
    %v1996 = vrot.slane %v1951, %v1995
    %v1997 = vlaneseq
    %v1998 = vshrl.u32 %v1997, 7
    %v1999 = vsub.s32 %v193, %v1998
    %v2000 = vrot.slane %v1954, %v1999
    %v2001 = vlaneseq
    %v2002 = vshrl.u32 %v2001, 7
    %v2003 = vsub.s32 %v193, %v2002
    %v2004 = vrot.slane %v1957, %v2003
    %v2005 = vlaneseq
    %v2006 = vshrl.u32 %v2005, 7
    %v2007 = vsub.s32 %v193, %v2006
    %v2008 = vrot.slane %v1960, %v2007
    %v2009 = vlaneseq
    %v2010 = vshrl.u32 %v2009, 7
    %v2011 = vsub.s32 %v193, %v2010
    %v2012 = vrot.slane %v1963, %v2011
    %v2013 = vlaneseq
    %v2014 = vshrl.u32 %v2013, 7
    %v2015 = vsub.s32 %v193, %v2014
    %v2016 = vrot.slane %v1966, %v2015
    %v2017 = vlaneseq
    %v2018 = vshrl.u32 %v2017, 7
    %v2019 = vsub.s32 %v193, %v2018
    %v2020 = vrot.slane %v1969, %v2019
    %v2021 = vlaneseq
    %v2022 = vshrl.u32 %v2021, 7
    %v2023 = vsub.s32 %v193, %v2022
    %v2024 = vrot.slane %v1972, %v2023
    %v2025 = vlaneseq
    %v2026 = vshrl.u32 %v2025, 7
    %v2027 = vsub.s32 %v193, %v2026
    %v2028 = vrot.slane %v1975, %v2027
    %v2029 = vlaneseq
    %v2030 = vshrl.u32 %v2029, 7
    %v2031 = vsub.s32 %v193, %v2030
    %v2032 = vrot.slane %v1978, %v2031
    %v2033 = vlaneseq
    %v2034 = vshrl.u32 %v2033, 7
    %v2035 = vsub.s32 %v193, %v2034
    %v2036 = vrot.slane %v1981, %v2035
    %v2037 = vlaneseq
    %v2038 = vshrl.u32 %v2037, 7
    %v2039 = vsub.s32 %v193, %v2038
    %v2040 = vrot.slane %v1984, %v2039
    %v2041 = vsel %vm247, %v1992, %v1988
    %v2042 = vsel %vm1800, %v1996, %v2041
    %v2043 = vsel %vm1802, %v2000, %v2042
    %v2044 = vsel %vm1804, %v2004, %v2043
    %v2045 = vsel %vm1806, %v2008, %v2044
    %v2046 = vsel %vm1808, %v2012, %v2045
    %v2047 = vsel %vm247, %v2020, %v2016
    %v2048 = vsel %vm1800, %v2024, %v2047
    %v2049 = vsel %vm1802, %v2028, %v2048
    %v2050 = vsel %vm1804, %v2032, %v2049
    %v2051 = vsel %vm1806, %v2036, %v2050
    %v2052 = vsel %vm1808, %v2040, %v2051
    %v2055 = vsel %vm1162, %v2046, inf
    %2056 = vmin.xlane.f32.xlu0 %v2055
    %v2057 = vpop.xlane.xlu0 %2056
    %v2058 = vsel %vm1162, %v2052, inf
    %2059 = vmin.xlane.f32.xlu0 %v2058
    %v2060 = vpop.xlane.xlu0 %2059
    %v2061 = vlaneseq
    %v2062 = vshrl.u32 %v2061, 7
    %v2063 = vsub.s32 0, %v2062
    %v2064 = vrot.slane %v1504, %v2063
    %s2066 = sor.u32 256, 6
    %2067 = vbcast.lane.b32.xlu0 %v2064, %s2066
    %v2068 = vpop.permute.xlu0 %2067
    %v2069 = vlaneseq
    %v2070 = vshrl.u32 %v2069, 7
    %v2071 = vsub.s32 1, %v2070
    %v2072 = vrot.slane %v1504, %v2071
    %s2074 = sor.u32 256, 6
    %2075 = vbcast.lane.b32.xlu0 %v2072, %s2074
    %v2076 = vpop.permute.xlu0 %2075
    %v2079 = vadd.f32 %v1820, %v2068
    %v2080 = vadd.f32 %v1823, %v2076
    %2081 = vset.pattern.permute.xlu0 113
    %2082 = vperm.xlu0 %2081, %v1504
    %v2083 = vpop.permute.xlu0 %2082
    %v2084 = vlaneseq
    %v2085 = vshrl.u32 %v2084, 7
    %v2086 = vsub.s32 0, %v2085
    %v2087 = vrot.slane %v2083, %v2086
    %v2088 = vlaneseq
    %v2089 = vshrl.u32 %v2088, 7
    %v2090 = vsub.s32 1, %v2089
    %v2091 = vrot.slane %v2083, %v2090
    %v2094 = vadd.f32 %v71, %v2087
    %v2095 = vadd.f32 %v72, %v2091
    %2098 = vset.pattern.permute.xlu0 0
    %2099 = vperm.xlu0 %2098, %v2094
    %v2100 = vpop.permute.xlu0 %2099
    %2101 = vset.pattern.permute.xlu0 0
    %2102 = vperm.xlu0 %2101, %v2095
    %v2103 = vpop.permute.xlu0 %2102
    %v2104 = vlaneseq
    %v2105 = vshrl.u32 %v2104, 7
    %v2106 = vsub.s32 %v193, %v2105
    %v2107 = vrot.slane %v2100, %v2106
    %v2108 = vlaneseq
    %v2109 = vshrl.u32 %v2108, 7
    %v2110 = vsub.s32 %v193, %v2109
    %v2111 = vrot.slane %v2103, %v2110
    %v2112 = vsel %vm247, %v2111, %v2107
    %v2114 = vsel %vm250, %v2112, -inf
    %2115 = vmax.xlane.f32.xlu0 %v2114
    %v2116 = vpop.xlane.xlu0 %2115
    %v2118 = vlaneseq
    %v2119 = vshrl.u32 %v2118, 7
    %v2120 = vsub.s32 0, %v2119
    %v2121 = vrot.slane %v2116, %v2120
    %v2122 = vlaneseq
    %v2123 = vshrl.u32 %v2122, 7
    %v2124 = vsub.s32 1, %v2123
    %v2125 = vrot.slane %v2116, %v2124
    %v2128 = vsub.f32 %v2094, %v2121
    %v2129 = vsub.f32 %v2095, %v2125
    %v2130 = vmul.f32 %v2128, 1.442695
    %v2131 = vpow.pop %v2130
    %v2132 = vmul.f32 %v2129, 1.442695
    %v2133 = vpow.pop %v2132
    %2136 = vset.pattern.permute.xlu0 0
    %2137 = vperm.xlu0 %2136, %v2131
    %v2138 = vpop.permute.xlu0 %2137
    %2139 = vset.pattern.permute.xlu0 0
    %2140 = vperm.xlu0 %2139, %v2133
    %v2141 = vpop.permute.xlu0 %2140
    %v2142 = vlaneseq
    %v2143 = vshrl.u32 %v2142, 7
    %v2144 = vsub.s32 %v193, %v2143
    %v2145 = vrot.slane %v2138, %v2144
    %v2146 = vlaneseq
    %v2147 = vshrl.u32 %v2146, 7
    %v2148 = vsub.s32 %v193, %v2147
    %v2149 = vrot.slane %v2141, %v2148
    %v2150 = vsel %vm247, %v2149, %v2145
    %v2152 = vsel %vm250, %v2150, 0.0
    %2153 = vadd.xlane.f32.xlu0 %v2152
    %v2154 = vpop.xlane.xlu0 %2153
    %v2155 = vrcp.pop %v2154
    %v2157 = vlaneseq
    %v2158 = vshrl.u32 %v2157, 7
    %v2159 = vsub.s32 0, %v2158
    %v2160 = vrot.slane %v2155, %v2159
    %v2161 = vlaneseq
    %v2162 = vshrl.u32 %v2161, 7
    %v2163 = vsub.s32 1, %v2162
    %v2164 = vrot.slane %v2155, %v2163
    %v2167 = vmul.f32 %v2131, %v2160
    %v2168 = vmul.f32 %v2133, %v2164
    %2170 = vset.pattern.permute.xlu0 0
    %2171 = vperm.xlu0 %2170, %v2167
    %v2172 = vpop.permute.xlu0 %2171
    %2175 = vset.pattern.permute.xlu0 0
    %2176 = vperm.xlu0 %2175, %v2168
    %v2177 = vpop.permute.xlu0 %2176
    %v2179 = vmul.f32 %v2172, %v51
    %v2180 = vmul.f32 %v2177, %v52
    %v2181 = vsel %vm60, %v2179, 0.0
    %v2182 = vrot.slane %v2181, 4
    %v2183 = vadd.f32 %v2181, %v2182
    %v2184 = vrot.slane %v2183, 2
    %v2185 = vadd.f32 %v2183, %v2184
    %v2186 = vrot.slane %v2185, 1
    %v2187 = vadd.f32 %v2185, %v2186
    %v2188 = vsel %vm60, %v2180, 0.0
    %v2189 = vrot.slane %v2188, 4
    %v2190 = vadd.f32 %v2188, %v2189
    %v2191 = vrot.slane %v2190, 2
    %v2192 = vadd.f32 %v2190, %v2191
    %v2193 = vrot.slane %v2192, 1
    %v2194 = vadd.f32 %v2192, %v2193
    %v2197 = vsel %vm247, %v2194, %v2187
    %2198 = vrot.lane.b32.xlu0 %v2197, 32
    %v2199 = vpop.permute.xlu0 %2198
    %2201 = vrot.lane.b32.xlu0 %v1421, 32
    %v2202 = vpop.permute.xlu0 %2201
    %v2204 = vsel %vm60, %v730, %v2199
    %v2205 = vsel %vm343, %v2204, %v2202
    %v2207 = vsel %vm349, %v2205, 0
    %2209 = vmatprep.subr.mxu0 0.0
    %2210 = vmatpush1.msra.mxu0 %v195
    %2211 = vmatprep.subr.mxu0 0.0
    %2212 = vmatpush1.msra.mxu0 %v196
    %2213 = vmatprep.subr.mxu0 0.0
    %2214 = vmatpush1.msra.mxu0 %v197
    %2215 = vmatprep.subr.mxu0 0.0
    %2216 = vmatpush1.msra.mxu0 %v198
    %2217 = vmatprep.subr.mxu0 0.0
    %2218 = vmatpush1.msra.mxu0 %v199
    %2219 = vmatprep.subr.mxu0 0.0
    %2220 = vmatpush1.msra.mxu0 %v200
    %2221 = vmatprep.subr.mxu0 0.0
    %2222 = vmatpush1.msra.mxu0 %v201
    %2223 = vmatprep.subr.mxu0 0.0
    %2224 = vmatpush1.msra.mxu0 %v202
    %2225 = vmatprep.subr.mxu0 0.0
    %2226 = vmatpush1.msra.mxu0 %v203
    %2227 = vmatprep.subr.mxu0 0.0
    %2228 = vmatpush1.msra.mxu0 %v204
    %2229 = vmatprep.subr.mxu0 0.0
    %2230 = vmatpush1.msra.mxu0 %v205
    %2231 = vmatprep.subr.mxu0 0.0
    %2232 = vmatpush1.msra.mxu0 %v206
    %2233 = vmatprep.subr.mxu0 0.0
    %2234 = vmatpush1.msra.mxu0 0.0
    %2235 = vmatprep.subr.mxu0 0.0
    %2236 = vmatpush1.msra.mxu0 0.0
    %2237 = vmatprep.subr.mxu0 0.0
    %2238 = vmatpush1.msra.mxu0 0.0
    %2239 = vmatprep.subr.mxu0 0.0
    %2240 = vmatpush1.msra.mxu0 0.0
    %2241 = vmatprep.subr.mxu0 0.0
    %2242 = vmatpush1.msra.mxu0 0.0
    %2243 = vmatprep.subr.mxu0 0.0
    %2244 = vmatpush1.msra.mxu0 0.0
    %2245 = vmatprep.subr.mxu0 0.0
    %2246 = vmatpush1.msra.mxu0 0.0
    %2247 = vmatprep.subr.mxu0 0.0
    %2248 = vmatpush1.msra.mxu0 0.0
    %2249 = vmatprep.subr.mxu0 0.0
    %2250 = vmatpush1.msra.mxu0 0.0
    %2251 = vmatprep.subr.mxu0 0.0
    %2252 = vmatpush1.msra.mxu0 0.0
    %2253 = vmatprep.subr.mxu0 0.0
    %2254 = vmatpush1.msra.mxu0 0.0
    %2255 = vmatprep.subr.mxu0 0.0
    %2256 = vmatpush1.msra.mxu0 0.0
    %2257 = vmatprep.subr.mxu0 0.0
    %2258 = vmatpush1.msra.mxu0 0.0
    %2259 = vmatprep.subr.mxu0 0.0
    %2260 = vmatpush1.msra.mxu0 0.0
    %2261 = vmatprep.subr.mxu0 0.0
    %2262 = vmatpush1.msra.mxu0 0.0
    %2263 = vmatprep.subr.mxu0 0.0
    %2264 = vmatpush1.msra.mxu0 0.0
    %2265 = vmatprep.subr.mxu0 0.0
    %2266 = vmatpush1.msra.mxu0 0.0
    %2267 = vmatprep.subr.mxu0 0.0
    %2268 = vmatpush1.msra.mxu0 0.0
    %2269 = vmatprep.subr.mxu0 0.0
    %2270 = vmatpush1.msra.mxu0 0.0
    %2271 = vmatprep.subr.mxu0 0.0
    %2272 = vmatpush1.msra.mxu0 0.0
    %2273 = vmatprep.mubr.f32.mxu0 0.0
    %2274 = vmatmul.mubr.f32.gmra.mrb[0].mxu0 %v2207
    %v2275 = vpop.f32.mrb[0].mxu0
    %v2276 = vadd.f32 %v348, %v2275
    %v2277 = vpop.f32.mrb[0].mxu0
    %2278 = vdwg.mxu0
    %v2279 = vxor.u32 %v2276, 2147483648
    %v2280 = vmul.f32 %v2279, 1.442695
    %v2281 = vpow.pop %v2280
    %v2282 = vadd.f32 %v2281, 1.0
    %v2283 = vrcp.pop %v2282
    %v2284 = vmul.f32 1.0, %v2283
    %2286 = vrot.lane.b32.xlu0 %v2276, 32
    %v2287 = vpop.permute.xlu0 %2286
    %v2289 = vmul.f32 %v2284, %v2287
    %2291 = vrot.lane.b32.xlu0 %v2289, 64
    %v2292 = vpop.permute.xlu0 %2291
    %v2294 = vadd.f32 %v2276, %v2292
    %v2295 = vtanh.pop %v2294
    %v2296 = vsub.f32 1.0, %v2284
    %2298 = vrot.lane.b32.xlu0 %v2295, 96
    %v2299 = vpop.permute.xlu0 %2298
    %v2301 = vmul.f32 %v2296, %v2299
    %v2302 = vmul.f32 %v2284, %v1421
    %v2303 = vadd.f32 %v2301, %v2302
    %vm2304 = vcmp.gt.f32.partialorder %v2303, 0.0
    %v2305 = vmul.f32 %v2303, 1.442695
    %v2306 = vpow.pop %v2305
    %v2307 = vsub.f32 %v2306, 1.0
    %v2308 = vmul.f32 %v2307, 1.6732632
    %v2309 = vsel %vm2304, %v2303, %v2308
    %v2310 = vmul.f32 %v2309, 1.050701
    %2312 = vrot.lane.b32.xlu0 %v2303, 96
    %v2313 = vpop.permute.xlu0 %2312
    %v2315 = vsel %vm60, %v2313, %v2310
    %v2317 = vsel %vm343, %v2315, 0
    %2319 = vmatprep.subr.mxu0 0.0
    %2320 = vmatpush1.msra.mxu0 %v208
    %2321 = vmatprep.subr.mxu0 0.0
    %2322 = vmatpush1.msra.mxu0 %v209
    %2323 = vmatprep.subr.mxu0 0.0
    %2324 = vmatpush1.msra.mxu0 %v210
    %2325 = vmatprep.subr.mxu0 0.0
    %2326 = vmatpush1.msra.mxu0 %v211
    %2327 = vmatprep.subr.mxu0 0.0
    %2328 = vmatpush1.msra.mxu0 %v212
    %2329 = vmatprep.subr.mxu0 0.0
    %2330 = vmatpush1.msra.mxu0 %v213
    %2331 = vmatprep.subr.mxu0 0.0
    %2332 = vmatpush1.msra.mxu0 %v214
    %2333 = vmatprep.subr.mxu0 0.0
    %2334 = vmatpush1.msra.mxu0 %v215
    %2335 = vmatprep.subr.mxu0 0.0
    %2336 = vmatpush1.msra.mxu0 0.0
    %2337 = vmatprep.subr.mxu0 0.0
    %2338 = vmatpush1.msra.mxu0 0.0
    %2339 = vmatprep.subr.mxu0 0.0
    %2340 = vmatpush1.msra.mxu0 0.0
    %2341 = vmatprep.subr.mxu0 0.0
    %2342 = vmatpush1.msra.mxu0 0.0
    %2343 = vmatprep.subr.mxu0 0.0
    %2344 = vmatpush1.msra.mxu0 0.0
    %2345 = vmatprep.subr.mxu0 0.0
    %2346 = vmatpush1.msra.mxu0 0.0
    %2347 = vmatprep.subr.mxu0 0.0
    %2348 = vmatpush1.msra.mxu0 0.0
    %2349 = vmatprep.subr.mxu0 0.0
    %2350 = vmatpush1.msra.mxu0 0.0
    %2351 = vmatprep.subr.mxu0 0.0
    %2352 = vmatpush1.msra.mxu0 0.0
    %2353 = vmatprep.subr.mxu0 0.0
    %2354 = vmatpush1.msra.mxu0 0.0
    %2355 = vmatprep.subr.mxu0 0.0
    %2356 = vmatpush1.msra.mxu0 0.0
    %2357 = vmatprep.subr.mxu0 0.0
    %2358 = vmatpush1.msra.mxu0 0.0
    %2359 = vmatprep.subr.mxu0 0.0
    %2360 = vmatpush1.msra.mxu0 0.0
    %2361 = vmatprep.subr.mxu0 0.0
    %2362 = vmatpush1.msra.mxu0 0.0
    %2363 = vmatprep.subr.mxu0 0.0
    %2364 = vmatpush1.msra.mxu0 0.0
    %2365 = vmatprep.subr.mxu0 0.0
    %2366 = vmatpush1.msra.mxu0 0.0
    %2367 = vmatprep.subr.mxu0 0.0
    %2368 = vmatpush1.msra.mxu0 0.0
    %2369 = vmatprep.subr.mxu0 0.0
    %2370 = vmatpush1.msra.mxu0 0.0
    %2371 = vmatprep.subr.mxu0 0.0
    %2372 = vmatpush1.msra.mxu0 0.0
    %2373 = vmatprep.subr.mxu0 0.0
    %2374 = vmatpush1.msra.mxu0 0.0
    %2375 = vmatprep.subr.mxu0 0.0
    %2376 = vmatpush1.msra.mxu0 0.0
    %2377 = vmatprep.subr.mxu0 0.0
    %2378 = vmatpush1.msra.mxu0 0.0
    %2379 = vmatprep.subr.mxu0 0.0
    %2380 = vmatpush1.msra.mxu0 0.0
    %2381 = vmatprep.subr.mxu0 0.0
    %2382 = vmatpush1.msra.mxu0 0.0
    %2383 = vmatprep.mubr.f32.mxu0 0.0
    %2384 = vmatmul.mubr.f32.gmra.mrb[0].mxu0 %v2317
    %v2385 = vpop.f32.mrb[0].mxu0
    %v2386 = vadd.f32 %v466, %v2385
    %v2387 = vpop.f32.mrb[0].mxu0
    %2388 = vdwg.mxu0
    %v2389 = vsel %vm540, %v2386, -inf
    %2390 = vmax.xlane.f32.xlu0 %v2389
    %v2391 = vpop.xlane.xlu0 %2390
    %v2392 = vsub.f32 %v2386, %v2391
    %v2393 = vmul.f32 %v2392, 1.442695
    %v2394 = vpow.pop %v2393
    %v2395 = vsel %vm540, %v2394, 0.0
    %2396 = vadd.xlane.f32.xlu0 %v2395
    %v2397 = vpop.xlane.xlu0 %2396
    %v2398 = vlog2.pop %v2397
    %v2399 = vmul.f32 %v2398, 0.6931472
    %v2400 = vadd.f32 %v2399, %v2391
    %v2401 = vsub.f32 %v2386, %v2400
    %v2404 = vunpack.c.l.s4 1966171168
    %v2405 = vunpack.c.0.s8 %v2404
    %v2406 = vlaneseq
    %v2407 = vshrl.u32 %v2406, 7
    %v2408 = vsub.s32 %v2405, %v2407
    %v2409 = vrot.slane %v2386, %v2408
    %v2410 = vcombine.high %v2409, %v2409
    %v2412 = vunpack.c.l.s4 1966171168
    %v2413 = vunpack.c.0.s8 %v2412
    %v2414 = vlaneseq
    %v2415 = vshrl.u32 %v2414, 7
    %v2416 = vsub.s32 %v2413, %v2415
    %v2417 = vrot.slane %v2409, %v2416
    %v2419 = vunpack.c.l.s4 1966171168
    %v2420 = vunpack.c.0.s8 %v2419
    %v2421 = vlaneseq
    %v2422 = vshrl.u32 %v2421, 7
    %v2423 = vsub.s32 %v2420, %v2422
    %v2424 = vrot.slane %v2410, %v2423
    %v2425 = vlaneseq
    %v2426 = vshrl.u32 %v2425, 7
    %v2427 = vsub.s32 0, %v2426
    %v2428 = vrot.slane %v2417, %v2427
    %v2429 = vlaneseq
    %v2430 = vshrl.u32 %v2429, 7
    %v2431 = vsub.s32 0, %v2430
    %v2432 = vrot.slane %v2424, %v2431
    %v2435 = vadd.f32 %v2428, %v590
    %v2436 = vadd.f32 %v2432, %v592
    %vm2437 = vcmp.gt.f32.partialorder %v2435, 0.0
    %vm2438 = vcmp.gt.f32.partialorder %v2436, 0.0
    %v2439 = vmul.f32 %v2435, 1.442695
    %v2440 = vpow.pop %v2439
    %v2441 = vmul.f32 %v2436, 1.442695
    %v2442 = vpow.pop %v2441
    %v2443 = vsub.f32 %v2440, 1.0
    %v2444 = vsub.f32 %v2442, 1.0
    %v2445 = vmul.f32 %v2443, 1.6732632
    %v2446 = vmul.f32 %v2444, 1.6732632
    %v2447 = vsel %vm2437, %v2435, %v2445
    %v2448 = vsel %vm2438, %v2436, %v2446
    %v2449 = vmul.f32 %v2447, 1.050701
    %v2450 = vmul.f32 %v2448, 1.050701
    %v2451 = vmul.f32 %v2449, %v617
    %v2452 = vmul.f32 %v2450, %v617
    %2455 = vrot.lane.b32.xlu0 %v2451, 115
    %v2456 = vpop.permute.xlu0 %2455
    %2457 = vrot.lane.b32.xlu0 %v2452, 115
    %v2458 = vpop.permute.xlu0 %2457
    %v2461 = vsel %vm629, %v2456, 0.0
    %2462 = vadd.xlane.f32.xlu0 %v2461
    %v2463 = vpop.xlane.xlu0 %2462
    %v2464 = vsel %vm629, %v2458, 0.0
    %2465 = vadd.xlane.f32.xlu0 %v2464
    %v2466 = vpop.xlane.xlu0 %2465
    %v2467 = vadd.f32 %v2463, %v639
    %v2468 = vadd.f32 %v2466, %v639
    %v2471 = vlaneseq
    %v2472 = vshrl.u32 %v2471, 7
    %v2473 = vsub.s32 %v193, %v2472
    %v2474 = vrot.slane %v2467, %v2473
    %v2475 = vlaneseq
    %v2476 = vshrl.u32 %v2475, 7
    %v2477 = vsub.s32 %v193, %v2476
    %v2478 = vrot.slane %v2468, %v2477
    %v2479 = vsel %vm247, %v2478, %v2474
    %2481 = vrot.lane.b32.xlu0 %v2386, 3
    %v2482 = vpop.permute.xlu0 %2481
    %v2484 = vsel %vm658, %v2479, %v2482
    %v2485 = vsel %vm660, %v2484, -inf
    %2486 = vmax.xlane.f32.xlu0 %v2485
    %v2487 = vpop.xlane.xlu0 %2486
    %v2488 = vsub.f32 %v2484, %v2487
    %v2489 = vmul.f32 %v2488, 1.442695
    %v2490 = vpow.pop %v2489
    %v2491 = vsel %vm660, %v2490, 0.0
    %2492 = vadd.xlane.f32.xlu0 %v2491
    %v2493 = vpop.xlane.xlu0 %2492
    %v2494 = vlog2.pop %v2493
    %v2495 = vmul.f32 %v2494, 0.6931472
    %v2496 = vadd.f32 %v2495, %v2487
    %v2497 = vsub.f32 %v2484, %v2496
    %v2498 = vadd.f32 %v2079, %v1623
    %v2499 = vadd.f32 %v2079, %v1630
    %v2500 = vadd.f32 %v2079, %v1637
    %v2501 = vadd.f32 %v2079, %v1644
    %v2502 = vadd.f32 %v2079, %v1651
    %v2503 = vadd.f32 %v2079, %v1658
    %v2504 = vadd.f32 %v2079, %v1665
    %v2505 = vadd.f32 %v2080, %v1623
    %v2506 = vadd.f32 %v2080, %v1630
    %v2507 = vadd.f32 %v2080, %v1637
    %v2508 = vadd.f32 %v2080, %v1644
    %v2509 = vadd.f32 %v2080, %v1651
    %v2510 = vadd.f32 %v2080, %v1658
    %v2511 = vadd.f32 %v2080, %v1665
    %2526 = vset.pattern.permute.xlu0 0
    %2527 = vperm.xlu0 %2526, %v2498
    %v2528 = vpop.permute.xlu0 %2527
    %2529 = vset.pattern.permute.xlu0 0
    %2530 = vperm.xlu0 %2529, %v2499
    %v2531 = vpop.permute.xlu0 %2530
    %2532 = vset.pattern.permute.xlu0 0
    %2533 = vperm.xlu0 %2532, %v2500
    %v2534 = vpop.permute.xlu0 %2533
    %2535 = vset.pattern.permute.xlu0 0
    %2536 = vperm.xlu0 %2535, %v2501
    %v2537 = vpop.permute.xlu0 %2536
    %2538 = vset.pattern.permute.xlu0 0
    %2539 = vperm.xlu0 %2538, %v2502
    %v2540 = vpop.permute.xlu0 %2539
    %2541 = vset.pattern.permute.xlu0 0
    %2542 = vperm.xlu0 %2541, %v2503
    %v2543 = vpop.permute.xlu0 %2542
    %2544 = vset.pattern.permute.xlu0 0
    %2545 = vperm.xlu0 %2544, %v2504
    %v2546 = vpop.permute.xlu0 %2545
    %2547 = vset.pattern.permute.xlu0 0
    %2548 = vperm.xlu0 %2547, %v2505
    %v2549 = vpop.permute.xlu0 %2548
    %2550 = vset.pattern.permute.xlu0 0
    %2551 = vperm.xlu0 %2550, %v2506
    %v2552 = vpop.permute.xlu0 %2551
    %2553 = vset.pattern.permute.xlu0 0
    %2554 = vperm.xlu0 %2553, %v2507
    %v2555 = vpop.permute.xlu0 %2554
    %2556 = vset.pattern.permute.xlu0 0
    %2557 = vperm.xlu0 %2556, %v2508
    %v2558 = vpop.permute.xlu0 %2557
    %2559 = vset.pattern.permute.xlu0 0
    %2560 = vperm.xlu0 %2559, %v2509
    %v2561 = vpop.permute.xlu0 %2560
    %2562 = vset.pattern.permute.xlu0 0
    %2563 = vperm.xlu0 %2562, %v2510
    %v2564 = vpop.permute.xlu0 %2563
    %2565 = vset.pattern.permute.xlu0 0
    %2566 = vperm.xlu0 %2565, %v2511
    %v2567 = vpop.permute.xlu0 %2566
    %v2568 = vlaneseq
    %v2569 = vshrl.u32 %v2568, 7
    %v2570 = vsub.s32 %v193, %v2569
    %v2571 = vrot.slane %v2528, %v2570
    %v2572 = vlaneseq
    %v2573 = vshrl.u32 %v2572, 7
    %v2574 = vsub.s32 %v193, %v2573
    %v2575 = vrot.slane %v2531, %v2574
    %v2576 = vlaneseq
    %v2577 = vshrl.u32 %v2576, 7
    %v2578 = vsub.s32 %v193, %v2577
    %v2579 = vrot.slane %v2534, %v2578
    %v2580 = vlaneseq
    %v2581 = vshrl.u32 %v2580, 7
    %v2582 = vsub.s32 %v193, %v2581
    %v2583 = vrot.slane %v2537, %v2582
    %v2584 = vlaneseq
    %v2585 = vshrl.u32 %v2584, 7
    %v2586 = vsub.s32 %v193, %v2585
    %v2587 = vrot.slane %v2540, %v2586
    %v2588 = vlaneseq
    %v2589 = vshrl.u32 %v2588, 7
    %v2590 = vsub.s32 %v193, %v2589
    %v2591 = vrot.slane %v2543, %v2590
    %v2592 = vlaneseq
    %v2593 = vshrl.u32 %v2592, 7
    %v2594 = vsub.s32 %v193, %v2593
    %v2595 = vrot.slane %v2546, %v2594
    %v2596 = vlaneseq
    %v2597 = vshrl.u32 %v2596, 7
    %v2598 = vsub.s32 %v193, %v2597
    %v2599 = vrot.slane %v2549, %v2598
    %v2600 = vlaneseq
    %v2601 = vshrl.u32 %v2600, 7
    %v2602 = vsub.s32 %v193, %v2601
    %v2603 = vrot.slane %v2552, %v2602
    %v2604 = vlaneseq
    %v2605 = vshrl.u32 %v2604, 7
    %v2606 = vsub.s32 %v193, %v2605
    %v2607 = vrot.slane %v2555, %v2606
    %v2608 = vlaneseq
    %v2609 = vshrl.u32 %v2608, 7
    %v2610 = vsub.s32 %v193, %v2609
    %v2611 = vrot.slane %v2558, %v2610
    %v2612 = vlaneseq
    %v2613 = vshrl.u32 %v2612, 7
    %v2614 = vsub.s32 %v193, %v2613
    %v2615 = vrot.slane %v2561, %v2614
    %v2616 = vlaneseq
    %v2617 = vshrl.u32 %v2616, 7
    %v2618 = vsub.s32 %v193, %v2617
    %v2619 = vrot.slane %v2564, %v2618
    %v2620 = vlaneseq
    %v2621 = vshrl.u32 %v2620, 7
    %v2622 = vsub.s32 %v193, %v2621
    %v2623 = vrot.slane %v2567, %v2622
    %v2624 = vsel %vm247, %v2575, %v2571
    %v2625 = vsel %vm1800, %v2579, %v2624
    %v2626 = vsel %vm1802, %v2583, %v2625
    %v2627 = vsel %vm1804, %v2587, %v2626
    %v2628 = vsel %vm1806, %v2591, %v2627
    %v2629 = vsel %vm1808, %v2595, %v2628
    %v2630 = vsel %vm247, %v2603, %v2599
    %v2631 = vsel %vm1800, %v2607, %v2630
    %v2632 = vsel %vm1802, %v2611, %v2631
    %v2633 = vsel %vm1804, %v2615, %v2632
    %v2634 = vsel %vm1806, %v2619, %v2633
    %v2635 = vsel %vm1808, %v2623, %v2634
    %v2638 = vsel %vm1162, %v2629, -inf
    %2639 = vmax.xlane.f32.xlu0 %v2638
    %v2640 = vpop.xlane.xlu0 %2639
    %v2641 = vsel %vm1162, %v2635, -inf
    %2642 = vmax.xlane.f32.xlu0 %v2641
    %v2643 = vpop.xlane.xlu0 %2642
    %v2646 = vlaneseq
    %v2647 = vshrl.u32 %v2646, 7
    %v2648 = vsub.s32 0, %v2647
    %v2649 = vrot.slane %v2640, %v2648
    %v2650 = vlaneseq
    %v2651 = vshrl.u32 %v2650, 7
    %v2652 = vsub.s32 1, %v2651
    %v2653 = vrot.slane %v2640, %v2652
    %v2654 = vlaneseq
    %v2655 = vshrl.u32 %v2654, 7
    %v2656 = vsub.s32 2, %v2655
    %v2657 = vrot.slane %v2640, %v2656
    %v2658 = vlaneseq
    %v2659 = vshrl.u32 %v2658, 7
    %v2660 = vsub.s32 3, %v2659
    %v2661 = vrot.slane %v2640, %v2660
    %v2662 = vlaneseq
    %v2663 = vshrl.u32 %v2662, 7
    %v2664 = vsub.s32 4, %v2663
    %v2665 = vrot.slane %v2640, %v2664
    %v2666 = vlaneseq
    %v2667 = vshrl.u32 %v2666, 7
    %v2668 = vsub.s32 5, %v2667
    %v2669 = vrot.slane %v2640, %v2668
    %v2670 = vlaneseq
    %v2671 = vshrl.u32 %v2670, 7
    %v2672 = vsub.s32 6, %v2671
    %v2673 = vrot.slane %v2640, %v2672
    %v2674 = vlaneseq
    %v2675 = vshrl.u32 %v2674, 7
    %v2676 = vsub.s32 0, %v2675
    %v2677 = vrot.slane %v2643, %v2676
    %v2678 = vlaneseq
    %v2679 = vshrl.u32 %v2678, 7
    %v2680 = vsub.s32 1, %v2679
    %v2681 = vrot.slane %v2643, %v2680
    %v2682 = vlaneseq
    %v2683 = vshrl.u32 %v2682, 7
    %v2684 = vsub.s32 2, %v2683
    %v2685 = vrot.slane %v2643, %v2684
    %v2686 = vlaneseq
    %v2687 = vshrl.u32 %v2686, 7
    %v2688 = vsub.s32 3, %v2687
    %v2689 = vrot.slane %v2643, %v2688
    %v2690 = vlaneseq
    %v2691 = vshrl.u32 %v2690, 7
    %v2692 = vsub.s32 4, %v2691
    %v2693 = vrot.slane %v2643, %v2692
    %v2694 = vlaneseq
    %v2695 = vshrl.u32 %v2694, 7
    %v2696 = vsub.s32 5, %v2695
    %v2697 = vrot.slane %v2643, %v2696
    %v2698 = vlaneseq
    %v2699 = vshrl.u32 %v2698, 7
    %v2700 = vsub.s32 6, %v2699
    %v2701 = vrot.slane %v2643, %v2700
    %vm2716 = vcmp.eq.f32.partialorder %v2498, %v2649
    %vm2717 = vcmp.eq.f32.partialorder %v2499, %v2653
    %vm2718 = vcmp.eq.f32.partialorder %v2500, %v2657
    %vm2719 = vcmp.eq.f32.partialorder %v2501, %v2661
    %vm2720 = vcmp.eq.f32.partialorder %v2502, %v2665
    %vm2721 = vcmp.eq.f32.partialorder %v2503, %v2669
    %vm2722 = vcmp.eq.f32.partialorder %v2504, %v2673
    %vm2723 = vcmp.eq.f32.partialorder %v2505, %v2677
    %vm2724 = vcmp.eq.f32.partialorder %v2506, %v2681
    %vm2725 = vcmp.eq.f32.partialorder %v2507, %v2685
    %vm2726 = vcmp.eq.f32.partialorder %v2508, %v2689
    %vm2727 = vcmp.eq.f32.partialorder %v2509, %v2693
    %vm2728 = vcmp.eq.f32.partialorder %v2510, %v2697
    %vm2729 = vcmp.eq.f32.partialorder %v2511, %v2701
    %v2730 = vsel %vm2716, %v1913, 7.0
    %v2731 = vsel %vm2717, %v1913, 7.0
    %v2732 = vsel %vm2718, %v1913, 7.0
    %v2733 = vsel %vm2719, %v1913, 7.0
    %v2734 = vsel %vm2720, %v1913, 7.0
    %v2735 = vsel %vm2721, %v1913, 7.0
    %v2736 = vsel %vm2722, %v1913, 7.0
    %v2737 = vsel %vm2723, %v1913, 7.0
    %v2738 = vsel %vm2724, %v1913, 7.0
    %v2739 = vsel %vm2725, %v1913, 7.0
    %v2740 = vsel %vm2726, %v1913, 7.0
    %v2741 = vsel %vm2727, %v1913, 7.0
    %v2742 = vsel %vm2728, %v1913, 7.0
    %v2743 = vsel %vm2729, %v1913, 7.0
    %2758 = vset.pattern.permute.xlu0 0
    %2759 = vperm.xlu0 %2758, %v2730
    %v2760 = vpop.permute.xlu0 %2759
    %2761 = vset.pattern.permute.xlu0 0
    %2762 = vperm.xlu0 %2761, %v2731
    %v2763 = vpop.permute.xlu0 %2762
    %2764 = vset.pattern.permute.xlu0 0
    %2765 = vperm.xlu0 %2764, %v2732
    %v2766 = vpop.permute.xlu0 %2765
    %2767 = vset.pattern.permute.xlu0 0
    %2768 = vperm.xlu0 %2767, %v2733
    %v2769 = vpop.permute.xlu0 %2768
    %2770 = vset.pattern.permute.xlu0 0
    %2771 = vperm.xlu0 %2770, %v2734
    %v2772 = vpop.permute.xlu0 %2771
    %2773 = vset.pattern.permute.xlu0 0
    %2774 = vperm.xlu0 %2773, %v2735
    %v2775 = vpop.permute.xlu0 %2774
    %2776 = vset.pattern.permute.xlu0 0
    %2777 = vperm.xlu0 %2776, %v2736
    %v2778 = vpop.permute.xlu0 %2777
    %2779 = vset.pattern.permute.xlu0 0
    %2780 = vperm.xlu0 %2779, %v2737
    %v2781 = vpop.permute.xlu0 %2780
    %2782 = vset.pattern.permute.xlu0 0
    %2783 = vperm.xlu0 %2782, %v2738
    %v2784 = vpop.permute.xlu0 %2783
    %2785 = vset.pattern.permute.xlu0 0
    %2786 = vperm.xlu0 %2785, %v2739
    %v2787 = vpop.permute.xlu0 %2786
    %2788 = vset.pattern.permute.xlu0 0
    %2789 = vperm.xlu0 %2788, %v2740
    %v2790 = vpop.permute.xlu0 %2789
    %2791 = vset.pattern.permute.xlu0 0
    %2792 = vperm.xlu0 %2791, %v2741
    %v2793 = vpop.permute.xlu0 %2792
    %2794 = vset.pattern.permute.xlu0 0
    %2795 = vperm.xlu0 %2794, %v2742
    %v2796 = vpop.permute.xlu0 %2795
    %2797 = vset.pattern.permute.xlu0 0
    %2798 = vperm.xlu0 %2797, %v2743
    %v2799 = vpop.permute.xlu0 %2798
    %v2800 = vlaneseq
    %v2801 = vshrl.u32 %v2800, 7
    %v2802 = vsub.s32 %v193, %v2801
    %v2803 = vrot.slane %v2760, %v2802
    %v2804 = vlaneseq
    %v2805 = vshrl.u32 %v2804, 7
    %v2806 = vsub.s32 %v193, %v2805
    %v2807 = vrot.slane %v2763, %v2806
    %v2808 = vlaneseq
    %v2809 = vshrl.u32 %v2808, 7
    %v2810 = vsub.s32 %v193, %v2809
    %v2811 = vrot.slane %v2766, %v2810
    %v2812 = vlaneseq
    %v2813 = vshrl.u32 %v2812, 7
    %v2814 = vsub.s32 %v193, %v2813
    %v2815 = vrot.slane %v2769, %v2814
    %v2816 = vlaneseq
    %v2817 = vshrl.u32 %v2816, 7
    %v2818 = vsub.s32 %v193, %v2817
    %v2819 = vrot.slane %v2772, %v2818
    %v2820 = vlaneseq
    %v2821 = vshrl.u32 %v2820, 7
    %v2822 = vsub.s32 %v193, %v2821
    %v2823 = vrot.slane %v2775, %v2822
    %v2824 = vlaneseq
    %v2825 = vshrl.u32 %v2824, 7
    %v2826 = vsub.s32 %v193, %v2825
    %v2827 = vrot.slane %v2778, %v2826
    %v2828 = vlaneseq
    %v2829 = vshrl.u32 %v2828, 7
    %v2830 = vsub.s32 %v193, %v2829
    %v2831 = vrot.slane %v2781, %v2830
    %v2832 = vlaneseq
    %v2833 = vshrl.u32 %v2832, 7
    %v2834 = vsub.s32 %v193, %v2833
    %v2835 = vrot.slane %v2784, %v2834
    %v2836 = vlaneseq
    %v2837 = vshrl.u32 %v2836, 7
    %v2838 = vsub.s32 %v193, %v2837
    %v2839 = vrot.slane %v2787, %v2838
    %v2840 = vlaneseq
    %v2841 = vshrl.u32 %v2840, 7
    %v2842 = vsub.s32 %v193, %v2841
    %v2843 = vrot.slane %v2790, %v2842
    %v2844 = vlaneseq
    %v2845 = vshrl.u32 %v2844, 7
    %v2846 = vsub.s32 %v193, %v2845
    %v2847 = vrot.slane %v2793, %v2846
    %v2848 = vlaneseq
    %v2849 = vshrl.u32 %v2848, 7
    %v2850 = vsub.s32 %v193, %v2849
    %v2851 = vrot.slane %v2796, %v2850
    %v2852 = vlaneseq
    %v2853 = vshrl.u32 %v2852, 7
    %v2854 = vsub.s32 %v193, %v2853
    %v2855 = vrot.slane %v2799, %v2854
    %v2856 = vsel %vm247, %v2807, %v2803
    %v2857 = vsel %vm1800, %v2811, %v2856
    %v2858 = vsel %vm1802, %v2815, %v2857
    %v2859 = vsel %vm1804, %v2819, %v2858
    %v2860 = vsel %vm1806, %v2823, %v2859
    %v2861 = vsel %vm1808, %v2827, %v2860
    %v2862 = vsel %vm247, %v2835, %v2831
    %v2863 = vsel %vm1800, %v2839, %v2862
    %v2864 = vsel %vm1802, %v2843, %v2863
    %v2865 = vsel %vm1804, %v2847, %v2864
    %v2866 = vsel %vm1806, %v2851, %v2865
    %v2867 = vsel %vm1808, %v2855, %v2866
    %v2870 = vsel %vm1162, %v2861, inf
    %2871 = vmin.xlane.f32.xlu0 %v2870
    %v2872 = vpop.xlane.xlu0 %2871
    %v2873 = vsel %vm1162, %v2867, inf
    %2874 = vmin.xlane.f32.xlu0 %v2873
    %v2875 = vpop.xlane.xlu0 %2874
    %v2876 = vlaneseq
    %v2877 = vshrl.u32 %v2876, 7
    %v2878 = vsub.s32 0, %v2877
    %v2879 = vrot.slane %v2386, %v2878
    %s2881 = sor.u32 256, 6
    %2882 = vbcast.lane.b32.xlu0 %v2879, %s2881
    %v2883 = vpop.permute.xlu0 %2882
    %v2884 = vlaneseq
    %v2885 = vshrl.u32 %v2884, 7
    %v2886 = vsub.s32 1, %v2885
    %v2887 = vrot.slane %v2386, %v2886
    %s2889 = sor.u32 256, 6
    %2890 = vbcast.lane.b32.xlu0 %v2887, %s2889
    %v2891 = vpop.permute.xlu0 %2890
    %v2894 = vadd.f32 %v2640, %v2883
    %v2895 = vadd.f32 %v2643, %v2891
    %v2897 = vrot.slane %v1051, 6
    %v2900 = vrot.slane %v1519, 4
    %v2903 = vrot.slane %v2401, 2
    %vm2905 = vcmask 1041408
    %v2906 = vsel %vm2905, %v553, %v2897
    %vm2907 = vcmask 1043456
    %v2908 = vsel %vm2907, %v2906, %v2900
    %vm2909 = vcmask 1045504
    %v2910 = vsel %vm2909, %v2908, %v2903
    %v2912 = vrot.slane %v1147, 6
    %v2915 = vrot.slane %v1615, 4
    %v2918 = vrot.slane %v2497, 2
    %v2920 = vsel %vm2905, %v673, %v2912
    %v2921 = vsel %vm2907, %v2920, %v2915
    %v2922 = vsel %vm2909, %v2921, %v2918
    %v2923 = vrot.slane %v1036, 6
    %v2925 = vrot.slane %v1504, 4
    %v2927 = vrot.slane %v2386, 2
    %v2929 = vsel %vm2905, %v537, %v2923
    %v2930 = vsel %vm2907, %v2929, %v2925
    %v2931 = vsel %vm2909, %v2930, %v2927
    %v2934 = vlaneseq
    %v2935 = vshrl.u32 %v2934, 7
    %v2936 = vsub.s32 %v193, %v2935
    %v2937 = vrot.slane %v1175, %v2936
    %v2938 = vlaneseq
    %v2939 = vshrl.u32 %v2938, 7
    %v2940 = vsub.s32 %v193, %v2939
    %v2941 = vrot.slane %v1178, %v2940
    %v2942 = vsel %vm1802, %v2941, %v2937
    %v2946 = vlaneseq
    %v2947 = vshrl.u32 %v2946, 7
    %v2948 = vsub.s32 %v193, %v2947
    %v2949 = vrot.slane %v2057, %v2948
    %v2950 = vlaneseq
    %v2951 = vshrl.u32 %v2950, 7
    %v2952 = vsub.s32 %v193, %v2951
    %v2953 = vrot.slane %v2060, %v2952
    %v2954 = vsel %vm1806, %v2953, %v2949
    %v2958 = vlaneseq
    %v2959 = vshrl.u32 %v2958, 7
    %v2960 = vsub.s32 %v193, %v2959
    %v2961 = vrot.slane %v2872, %v2960
    %v2962 = vlaneseq
    %v2963 = vshrl.u32 %v2962, 7
    %v2964 = vsub.s32 %v193, %v2963
    %v2965 = vrot.slane %v2875, %v2964
    %vm2966 = vcmask 1047559
    %v2967 = vsel %vm2966, %v2965, %v2961
    %v2969 = vsel %vm2905, 0.0, %v2942
    %v2970 = vsel %vm2907, %v2969, %v2954
    %v2971 = vsel %vm2909, %v2970, %v2967
    %2974 = vset.pattern.permute.xlu0 0
    %2975 = vperm.xlu0 %2974, %v1197
    %v2976 = vpop.permute.xlu0 %2975
    %2977 = vset.pattern.permute.xlu0 0
    %2978 = vperm.xlu0 %2977, %v1198
    %v2979 = vpop.permute.xlu0 %2978
    %v2980 = vlaneseq
    %v2981 = vshrl.u32 %v2980, 7
    %v2982 = vsub.s32 %v193, %v2981
    %v2983 = vrot.slane %v2976, %v2982
    %v2984 = vlaneseq
    %v2985 = vshrl.u32 %v2984, 7
    %v2986 = vsub.s32 %v193, %v2985
    %v2987 = vrot.slane %v2979, %v2986
    %v2988 = vsel %vm1802, %v2987, %v2983
    %2992 = vset.pattern.permute.xlu0 0
    %2993 = vperm.xlu0 %2992, %v2079
    %v2994 = vpop.permute.xlu0 %2993
    %2995 = vset.pattern.permute.xlu0 0
    %2996 = vperm.xlu0 %2995, %v2080
    %v2997 = vpop.permute.xlu0 %2996
    %v2998 = vlaneseq
    %v2999 = vshrl.u32 %v2998, 7
    %v3000 = vsub.s32 %v193, %v2999
    %v3001 = vrot.slane %v2994, %v3000
    %v3002 = vlaneseq
    %v3003 = vshrl.u32 %v3002, 7
    %v3004 = vsub.s32 %v193, %v3003
    %v3005 = vrot.slane %v2997, %v3004
    %v3006 = vsel %vm1806, %v3005, %v3001
    %3010 = vset.pattern.permute.xlu0 0
    %3011 = vperm.xlu0 %3010, %v2894
    %v3012 = vpop.permute.xlu0 %3011
    %3013 = vset.pattern.permute.xlu0 0
    %3014 = vperm.xlu0 %3013, %v2895
    %v3015 = vpop.permute.xlu0 %3014
    %v3016 = vlaneseq
    %v3017 = vshrl.u32 %v3016, 7
    %v3018 = vsub.s32 %v193, %v3017
    %v3019 = vrot.slane %v3012, %v3018
    %v3020 = vlaneseq
    %v3021 = vshrl.u32 %v3020, 7
    %v3022 = vsub.s32 %v193, %v3021
    %v3023 = vrot.slane %v3015, %v3022
    %v3024 = vsel %vm2966, %v3023, %v3019
    %v3026 = vsel %vm2905, %v191, %v2988
    %v3027 = vsel %vm2907, %v3026, %v3006
    %v3028 = vsel %vm2909, %v3027, %v3024
    %v3029 = vsel %vm2905, %v682, 0.0
    %v3030 = vsel %vm2907, %v3029, 0.0
    %v3031 = vsel %vm2909, %v3030, 0.0
    %3033 = vrot.lane.b32.xlu0 %v2922, 6
    %v3034 = vpop.permute.xlu0 %3033
    %3037 = vrot.lane.b32.xlu0 %v2931, 9
    %v3038 = vpop.permute.xlu0 %3037
    %3041 = vrot.lane.b32.xlu0 %v2971, 22
    %v3042 = vpop.permute.xlu0 %3041
    %3045 = vrot.lane.b32.xlu0 %v3028, 29
    %v3046 = vpop.permute.xlu0 %3045
    %3049 = vrot.lane.b32.xlu0 %v3031, 36
    %v3050 = vpop.permute.xlu0 %3049
    %vm3052 = vcmask 48128
    %v3053 = vsel %vm3052, %v2910, %v3034
    %vm3054 = vcmask 121856
    %v3055 = vsel %vm3054, %v3053, %v3038
    %vm3056 = vcmask 179200
    %v3057 = vsel %vm3056, %v3055, %v3042
    %vm3058 = vcmask 236544
    %v3059 = vsel %vm3058, %v3057, %v3046
    %vm3060 = vcmask 293888
    %v3061 = vsel %vm3060, %v3059, %v3050
    %vm3062 = vcmask 302080
    %v3063 = vsel %vm3062, %v3061, 0.0
    %3064 = vst [vmem:[%s3] sm:$0xff] %v3063
    %v3065 = vld [vmem:[#allocation2] sm:$0xff]
    %v3066 = vld [vmem:[#allocation2 + $0x8] sm:$0xff]
    %v3067 = vld [vmem:[#allocation2 + $0x10] sm:$0xff]
    %v3068 = vld [vmem:[#allocation2 + $0x18] sm:$0xff]
    %v3069 = vld [vmem:[#allocation2 + $0x20] sm:$0xff]
    %v3070 = vld [vmem:[#allocation2 + $0x28] sm:$0xff]
    %v3071 = vld [vmem:[#allocation2 + $0x30] sm:$0xff]
    %v3072 = vld [vmem:[#allocation2 + $0x38] sm:$0xff]
    %v3073 = vld [vmem:[#allocation2 + $0x40] sm:$0xff]
    %v3074 = vld [vmem:[#allocation2 + $0x48] sm:$0xff]
    %v3075 = vld [vmem:[#allocation2 + $0x50] sm:$0xff]
    %v3076 = vld [vmem:[#allocation2 + $0x58] sm:$0xff]
    %v3077 = vld [vmem:[#allocation2 + $0xe8] sm:$0x1]
    %v3078 = vld [vmem:[#allocation2 + $0x60] sm:$0xff]
    %v3079 = vld [vmem:[#allocation2 + $0x68] sm:$0xff]
    %v3080 = vld [vmem:[#allocation2 + $0x70] sm:$0xff]
    %v3081 = vld [vmem:[#allocation2 + $0x78] sm:$0xff]
    %v3082 = vld [vmem:[#allocation2 + $0x80] sm:$0xff]
    %v3083 = vld [vmem:[#allocation2 + $0x88] sm:$0xff]
    %v3084 = vld [vmem:[#allocation2 + $0x90] sm:$0xff]
    %v3085 = vld [vmem:[#allocation2 + $0x98] sm:$0xff]
    %v3086 = vld [vmem:[#allocation2 + $0xf0] sm:$0x1]
    %v3087 = vld [vmem:[#allocation2 + $0x100] sm:$0x1]
    %v3088 = vld [vmem:[#allocation2 + $0x108] sm:$0x1]
    %3089 = vset.pattern.permute.xlu0 113
    %3090 = vperm.xlu0 %3089, %v2386
    %v3091 = vpop.permute.xlu0 %3090
    %v3092 = vlaneseq
    %v3093 = vshrl.u32 %v3092, 7
    %v3094 = vsub.s32 0, %v3093
    %v3095 = vrot.slane %v3091, %v3094
    %v3096 = vlaneseq
    %v3097 = vshrl.u32 %v3096, 7
    %v3098 = vsub.s32 1, %v3097
    %v3099 = vrot.slane %v3091, %v3098
    %v3102 = vadd.f32 %v71, %v3095
    %v3103 = vadd.f32 %v72, %v3099
    %3106 = vset.pattern.permute.xlu0 0
    %3107 = vperm.xlu0 %3106, %v3102
    %v3108 = vpop.permute.xlu0 %3107
    %3109 = vset.pattern.permute.xlu0 0
    %3110 = vperm.xlu0 %3109, %v3103
    %v3111 = vpop.permute.xlu0 %3110
    %v3112 = vlaneseq
    %v3113 = vshrl.u32 %v3112, 7
    %v3114 = vsub.s32 %v193, %v3113
    %v3115 = vrot.slane %v3108, %v3114
    %v3116 = vlaneseq
    %v3117 = vshrl.u32 %v3116, 7
    %v3118 = vsub.s32 %v193, %v3117
    %v3119 = vrot.slane %v3111, %v3118
    %v3120 = vsel %vm247, %v3119, %v3115
    %v3122 = vsel %vm250, %v3120, -inf
    %3123 = vmax.xlane.f32.xlu0 %v3122
    %v3124 = vpop.xlane.xlu0 %3123
    %v3126 = vlaneseq
    %v3127 = vshrl.u32 %v3126, 7
    %v3128 = vsub.s32 0, %v3127
    %v3129 = vrot.slane %v3124, %v3128
    %v3130 = vlaneseq
    %v3131 = vshrl.u32 %v3130, 7
    %v3132 = vsub.s32 1, %v3131
    %v3133 = vrot.slane %v3124, %v3132
    %v3136 = vsub.f32 %v3102, %v3129
    %v3137 = vsub.f32 %v3103, %v3133
    %v3138 = vmul.f32 %v3136, 1.442695
    %v3139 = vpow.pop %v3138
    %v3140 = vmul.f32 %v3137, 1.442695
    %v3141 = vpow.pop %v3140
    %3144 = vset.pattern.permute.xlu0 0
    %3145 = vperm.xlu0 %3144, %v3139
    %v3146 = vpop.permute.xlu0 %3145
    %3147 = vset.pattern.permute.xlu0 0
    %3148 = vperm.xlu0 %3147, %v3141
    %v3149 = vpop.permute.xlu0 %3148
    %v3150 = vlaneseq
    %v3151 = vshrl.u32 %v3150, 7
    %v3152 = vsub.s32 %v193, %v3151
    %v3153 = vrot.slane %v3146, %v3152
    %v3154 = vlaneseq
    %v3155 = vshrl.u32 %v3154, 7
    %v3156 = vsub.s32 %v193, %v3155
    %v3157 = vrot.slane %v3149, %v3156
    %v3158 = vsel %vm247, %v3157, %v3153
    %v3160 = vsel %vm250, %v3158, 0.0
    %3161 = vadd.xlane.f32.xlu0 %v3160
    %v3162 = vpop.xlane.xlu0 %3161
    %v3163 = vrcp.pop %v3162
    %v3165 = vlaneseq
    %v3166 = vshrl.u32 %v3165, 7
    %v3167 = vsub.s32 0, %v3166
    %v3168 = vrot.slane %v3163, %v3167
    %v3169 = vlaneseq
    %v3170 = vshrl.u32 %v3169, 7
    %v3171 = vsub.s32 1, %v3170
    %v3172 = vrot.slane %v3163, %v3171
    %v3175 = vmul.f32 %v3139, %v3168
    %v3176 = vmul.f32 %v3141, %v3172
    %3178 = vset.pattern.permute.xlu0 0
    %3179 = vperm.xlu0 %3178, %v3175
    %v3180 = vpop.permute.xlu0 %3179
    %3183 = vset.pattern.permute.xlu0 0
    %3184 = vperm.xlu0 %3183, %v3176
    %v3185 = vpop.permute.xlu0 %3184
    %v3187 = vmul.f32 %v3180, %v51
    %v3188 = vmul.f32 %v3185, %v52
    %v3189 = vsel %vm60, %v3187, 0.0
    %v3190 = vrot.slane %v3189, 4
    %v3191 = vadd.f32 %v3189, %v3190
    %v3192 = vrot.slane %v3191, 2
    %v3193 = vadd.f32 %v3191, %v3192
    %v3194 = vrot.slane %v3193, 1
    %v3195 = vadd.f32 %v3193, %v3194
    %v3196 = vsel %vm60, %v3188, 0.0
    %v3197 = vrot.slane %v3196, 4
    %v3198 = vadd.f32 %v3196, %v3197
    %v3199 = vrot.slane %v3198, 2
    %v3200 = vadd.f32 %v3198, %v3199
    %v3201 = vrot.slane %v3200, 1
    %v3202 = vadd.f32 %v3200, %v3201
    %v3205 = vsel %vm247, %v3202, %v3195
    %3206 = vrot.lane.b32.xlu0 %v3205, 32
    %v3207 = vpop.permute.xlu0 %3206
    %3209 = vrot.lane.b32.xlu0 %v2303, 32
    %v3210 = vpop.permute.xlu0 %3209
    %v3212 = vsel %vm60, %v730, %v3207
    %v3213 = vsel %vm343, %v3212, %v3210
    %v3214 = vlaneseq
    %v3215 = vshrl.u32 %v3214, 7
    %v3216 = vsub.s32 0, %v3215
    %v3217 = vrot.slane %v3077, %v3216
    %v3219 = vsel %vm349, %v3213, 0
    %3221 = vmatprep.subr.mxu0 0.0
    %3222 = vmatpush1.msra.mxu0 %v3065
    %3223 = vmatprep.subr.mxu0 0.0
    %3224 = vmatpush1.msra.mxu0 %v3066
    %3225 = vmatprep.subr.mxu0 0.0
    %3226 = vmatpush1.msra.mxu0 %v3067
    %3227 = vmatprep.subr.mxu0 0.0
    %3228 = vmatpush1.msra.mxu0 %v3068
    %3229 = vmatprep.subr.mxu0 0.0
    %3230 = vmatpush1.msra.mxu0 %v3069
    %3231 = vmatprep.subr.mxu0 0.0
    %3232 = vmatpush1.msra.mxu0 %v3070
    %3233 = vmatprep.subr.mxu0 0.0
    %3234 = vmatpush1.msra.mxu0 %v3071
    %3235 = vmatprep.subr.mxu0 0.0
    %3236 = vmatpush1.msra.mxu0 %v3072
    %3237 = vmatprep.subr.mxu0 0.0
    %3238 = vmatpush1.msra.mxu0 %v3073
    %3239 = vmatprep.subr.mxu0 0.0
    %3240 = vmatpush1.msra.mxu0 %v3074
    %3241 = vmatprep.subr.mxu0 0.0
    %3242 = vmatpush1.msra.mxu0 %v3075
    %3243 = vmatprep.subr.mxu0 0.0
    %3244 = vmatpush1.msra.mxu0 %v3076
    %3245 = vmatprep.subr.mxu0 0.0
    %3246 = vmatpush1.msra.mxu0 0.0
    %3247 = vmatprep.subr.mxu0 0.0
    %3248 = vmatpush1.msra.mxu0 0.0
    %3249 = vmatprep.subr.mxu0 0.0
    %3250 = vmatpush1.msra.mxu0 0.0
    %3251 = vmatprep.subr.mxu0 0.0
    %3252 = vmatpush1.msra.mxu0 0.0
    %3253 = vmatprep.subr.mxu0 0.0
    %3254 = vmatpush1.msra.mxu0 0.0
    %3255 = vmatprep.subr.mxu0 0.0
    %3256 = vmatpush1.msra.mxu0 0.0
    %3257 = vmatprep.subr.mxu0 0.0
    %3258 = vmatpush1.msra.mxu0 0.0
    %3259 = vmatprep.subr.mxu0 0.0
    %3260 = vmatpush1.msra.mxu0 0.0
    %3261 = vmatprep.subr.mxu0 0.0
    %3262 = vmatpush1.msra.mxu0 0.0
    %3263 = vmatprep.subr.mxu0 0.0
    %3264 = vmatpush1.msra.mxu0 0.0
    %3265 = vmatprep.subr.mxu0 0.0
    %3266 = vmatpush1.msra.mxu0 0.0
    %3267 = vmatprep.subr.mxu0 0.0
    %3268 = vmatpush1.msra.mxu0 0.0
    %3269 = vmatprep.subr.mxu0 0.0
    %3270 = vmatpush1.msra.mxu0 0.0
    %3271 = vmatprep.subr.mxu0 0.0
    %3272 = vmatpush1.msra.mxu0 0.0
    %3273 = vmatprep.subr.mxu0 0.0
    %3274 = vmatpush1.msra.mxu0 0.0
    %3275 = vmatprep.subr.mxu0 0.0
    %3276 = vmatpush1.msra.mxu0 0.0
    %3277 = vmatprep.subr.mxu0 0.0
    %3278 = vmatpush1.msra.mxu0 0.0
    %3279 = vmatprep.subr.mxu0 0.0
    %3280 = vmatpush1.msra.mxu0 0.0
    %3281 = vmatprep.subr.mxu0 0.0
    %3282 = vmatpush1.msra.mxu0 0.0
    %3283 = vmatprep.subr.mxu0 0.0
    %3284 = vmatpush1.msra.mxu0 0.0
    %3285 = vmatprep.mubr.f32.mxu0 0.0
    %3286 = vmatmul.mubr.f32.gmra.mrb[0].mxu0 %v3219
    %v3287 = vpop.f32.mrb[0].mxu0
    %v3288 = vadd.f32 %v3217, %v3287
    %v3289 = vpop.f32.mrb[0].mxu0
    %3290 = vdwg.mxu0
    %v3291 = vxor.u32 %v3288, 2147483648
    %v3292 = vmul.f32 %v3291, 1.442695
    %v3293 = vpow.pop %v3292
    %v3294 = vadd.f32 %v3293, 1.0
    %v3295 = vrcp.pop %v3294
    %v3296 = vmul.f32 1.0, %v3295
    %3298 = vrot.lane.b32.xlu0 %v3288, 32
    %v3299 = vpop.permute.xlu0 %3298
    %v3301 = vmul.f32 %v3296, %v3299
    %3303 = vrot.lane.b32.xlu0 %v3301, 64
    %v3304 = vpop.permute.xlu0 %3303
    %v3306 = vadd.f32 %v3288, %v3304
    %v3307 = vtanh.pop %v3306
    %v3308 = vsub.f32 1.0, %v3296
    %3310 = vrot.lane.b32.xlu0 %v3307, 96
    %v3311 = vpop.permute.xlu0 %3310
    %v3313 = vmul.f32 %v3308, %v3311
    %v3314 = vmul.f32 %v3296, %v2303
    %v3315 = vadd.f32 %v3313, %v3314
    %vm3316 = vcmp.gt.f32.partialorder %v3315, 0.0
    %v3317 = vmul.f32 %v3315, 1.442695
    %v3318 = vpow.pop %v3317
    %v3319 = vsub.f32 %v3318, 1.0
    %v3320 = vmul.f32 %v3319, 1.6732632
    %v3321 = vsel %vm3316, %v3315, %v3320
    %v3322 = vmul.f32 %v3321, 1.050701
    %3324 = vrot.lane.b32.xlu0 %v3315, 96
    %v3325 = vpop.permute.xlu0 %3324
    %v3327 = vsel %vm60, %v3325, %v3322
    %v3328 = vlaneseq
    %v3329 = vshrl.u32 %v3328, 7
    %v3330 = vsub.s32 0, %v3329
    %v3331 = vrot.slane %v3086, %v3330
    %v3333 = vsel %vm343, %v3327, 0
    %3335 = vmatprep.subr.mxu0 0.0
    %3336 = vmatpush1.msra.mxu0 %v3078
    %3337 = vmatprep.subr.mxu0 0.0
    %3338 = vmatpush1.msra.mxu0 %v3079
    %3339 = vmatprep.subr.mxu0 0.0
    %3340 = vmatpush1.msra.mxu0 %v3080
    %3341 = vmatprep.subr.mxu0 0.0
    %3342 = vmatpush1.msra.mxu0 %v3081
    %3343 = vmatprep.subr.mxu0 0.0
    %3344 = vmatpush1.msra.mxu0 %v3082
    %3345 = vmatprep.subr.mxu0 0.0
    %3346 = vmatpush1.msra.mxu0 %v3083
    %3347 = vmatprep.subr.mxu0 0.0
    %3348 = vmatpush1.msra.mxu0 %v3084
    %3349 = vmatprep.subr.mxu0 0.0
    %3350 = vmatpush1.msra.mxu0 %v3085
    %3351 = vmatprep.subr.mxu0 0.0
    %3352 = vmatpush1.msra.mxu0 0.0
    %3353 = vmatprep.subr.mxu0 0.0
    %3354 = vmatpush1.msra.mxu0 0.0
    %3355 = vmatprep.subr.mxu0 0.0
    %3356 = vmatpush1.msra.mxu0 0.0
    %3357 = vmatprep.subr.mxu0 0.0
    %3358 = vmatpush1.msra.mxu0 0.0
    %3359 = vmatprep.subr.mxu0 0.0
    %3360 = vmatpush1.msra.mxu0 0.0
    %3361 = vmatprep.subr.mxu0 0.0
    %3362 = vmatpush1.msra.mxu0 0.0
    %3363 = vmatprep.subr.mxu0 0.0
    %3364 = vmatpush1.msra.mxu0 0.0
    %3365 = vmatprep.subr.mxu0 0.0
    %3366 = vmatpush1.msra.mxu0 0.0
    %3367 = vmatprep.subr.mxu0 0.0
    %3368 = vmatpush1.msra.mxu0 0.0
    %3369 = vmatprep.subr.mxu0 0.0
    %3370 = vmatpush1.msra.mxu0 0.0
    %3371 = vmatprep.subr.mxu0 0.0
    %3372 = vmatpush1.msra.mxu0 0.0
    %3373 = vmatprep.subr.mxu0 0.0
    %3374 = vmatpush1.msra.mxu0 0.0
    %3375 = vmatprep.subr.mxu0 0.0
    %3376 = vmatpush1.msra.mxu0 0.0
    %3377 = vmatprep.subr.mxu0 0.0
    %3378 = vmatpush1.msra.mxu0 0.0
    %3379 = vmatprep.subr.mxu0 0.0
    %3380 = vmatpush1.msra.mxu0 0.0
    %3381 = vmatprep.subr.mxu0 0.0
    %3382 = vmatpush1.msra.mxu0 0.0
    %3383 = vmatprep.subr.mxu0 0.0
    %3384 = vmatpush1.msra.mxu0 0.0
    %3385 = vmatprep.subr.mxu0 0.0
    %3386 = vmatpush1.msra.mxu0 0.0
    %3387 = vmatprep.subr.mxu0 0.0
    %3388 = vmatpush1.msra.mxu0 0.0
    %3389 = vmatprep.subr.mxu0 0.0
    %3390 = vmatpush1.msra.mxu0 0.0
    %3391 = vmatprep.subr.mxu0 0.0
    %3392 = vmatpush1.msra.mxu0 0.0
    %3393 = vmatprep.subr.mxu0 0.0
    %3394 = vmatpush1.msra.mxu0 0.0
    %3395 = vmatprep.subr.mxu0 0.0
    %3396 = vmatpush1.msra.mxu0 0.0
    %3397 = vmatprep.subr.mxu0 0.0
    %3398 = vmatpush1.msra.mxu0 0.0
    %3399 = vmatprep.mubr.f32.mxu0 0.0
    %3400 = vmatmul.mubr.f32.gmra.mrb[0].mxu0 %v3333
    %v3401 = vpop.f32.mrb[0].mxu0
    %v3402 = vadd.f32 %v3331, %v3401
    %v3403 = vpop.f32.mrb[0].mxu0
    %3404 = vdwg.mxu0
    %v3405 = vsel %vm540, %v3402, -inf
    %3406 = vmax.xlane.f32.xlu0 %v3405
    %v3407 = vpop.xlane.xlu0 %3406
    %v3408 = vsub.f32 %v3402, %v3407
    %v3409 = vmul.f32 %v3408, 1.442695
    %v3410 = vpow.pop %v3409
    %v3411 = vsel %vm540, %v3410, 0.0
    %3412 = vadd.xlane.f32.xlu0 %v3411
    %v3413 = vpop.xlane.xlu0 %3412
    %v3414 = vlog2.pop %v3413
    %v3415 = vmul.f32 %v3414, 0.6931472
    %v3416 = vadd.f32 %v3415, %v3407
    %v3417 = vsub.f32 %v3402, %v3416
    %v3420 = vunpack.c.l.s4 1966171168
    %v3421 = vunpack.c.0.s8 %v3420
    %v3422 = vlaneseq
    %v3423 = vshrl.u32 %v3422, 7
    %v3424 = vsub.s32 %v3421, %v3423
    %v3425 = vrot.slane %v3402, %v3424
    %v3426 = vcombine.high %v3425, %v3425
    %v3428 = vunpack.c.l.s4 1966171168
    %v3429 = vunpack.c.0.s8 %v3428
    %v3430 = vlaneseq
    %v3431 = vshrl.u32 %v3430, 7
    %v3432 = vsub.s32 %v3429, %v3431
    %v3433 = vrot.slane %v3425, %v3432
    %v3435 = vunpack.c.l.s4 1966171168
    %v3436 = vunpack.c.0.s8 %v3435
    %v3437 = vlaneseq
    %v3438 = vshrl.u32 %v3437, 7
    %v3439 = vsub.s32 %v3436, %v3438
    %v3440 = vrot.slane %v3426, %v3439
    %v3441 = vlaneseq
    %v3442 = vshrl.u32 %v3441, 7
    %v3443 = vsub.s32 0, %v3442
    %v3444 = vrot.slane %v3433, %v3443
    %v3445 = vlaneseq
    %v3446 = vshrl.u32 %v3445, 7
    %v3447 = vsub.s32 0, %v3446
    %v3448 = vrot.slane %v3440, %v3447
    %v3451 = vadd.f32 %v3444, %v590
    %v3452 = vadd.f32 %v3448, %v592
    %vm3453 = vcmp.gt.f32.partialorder %v3451, 0.0
    %vm3454 = vcmp.gt.f32.partialorder %v3452, 0.0
    %v3455 = vmul.f32 %v3451, 1.442695
    %v3456 = vpow.pop %v3455
    %v3457 = vmul.f32 %v3452, 1.442695
    %v3458 = vpow.pop %v3457
    %v3459 = vsub.f32 %v3456, 1.0
    %v3460 = vsub.f32 %v3458, 1.0
    %v3461 = vmul.f32 %v3459, 1.6732632
    %v3462 = vmul.f32 %v3460, 1.6732632
    %v3463 = vsel %vm3453, %v3451, %v3461
    %v3464 = vsel %vm3454, %v3452, %v3462
    %v3465 = vmul.f32 %v3463, 1.050701
    %v3466 = vmul.f32 %v3464, 1.050701
    %v3467 = vlaneseq
    %v3468 = vshrl.u32 %v3467, 7
    %v3469 = vsub.s32 0, %v3468
    %v3470 = vrot.slane %v3087, %v3469
    %3472 = vrot.lane.b32.xlu0 %v3470, 13
    %v3473 = vpop.permute.xlu0 %3472
    %v3475 = vmul.f32 %v3465, %v3473
    %v3476 = vmul.f32 %v3466, %v3473
    %3479 = vrot.lane.b32.xlu0 %v3475, 115
    %v3480 = vpop.permute.xlu0 %3479
    %3481 = vrot.lane.b32.xlu0 %v3476, 115
    %v3482 = vpop.permute.xlu0 %3481
    %v3485 = vsel %vm629, %v3480, 0.0
    %3486 = vadd.xlane.f32.xlu0 %v3485
    %v3487 = vpop.xlane.xlu0 %3486
    %v3488 = vsel %vm629, %v3482, 0.0
    %3489 = vadd.xlane.f32.xlu0 %v3488
    %v3490 = vpop.xlane.xlu0 %3489
    %3492 = vrot.lane.b32.xlu0 %v3088, 127
    %v3493 = vpop.permute.xlu0 %3492
    %s3494 = vtos %v3493
    %v3495 = vstv %s3494
    %v3497 = vadd.f32 %v3487, %v3495
    %v3498 = vadd.f32 %v3490, %v3495
    %v3501 = vlaneseq
    %v3502 = vshrl.u32 %v3501, 7
    %v3503 = vsub.s32 %v193, %v3502
    %v3504 = vrot.slane %v3497, %v3503
    %v3505 = vlaneseq
    %v3506 = vshrl.u32 %v3505, 7
    %v3507 = vsub.s32 %v193, %v3506
    %v3508 = vrot.slane %v3498, %v3507
    %v3509 = vsel %vm247, %v3508, %v3504
    %3511 = vrot.lane.b32.xlu0 %v3402, 3
    %v3512 = vpop.permute.xlu0 %3511
    %v3514 = vsel %vm658, %v3509, %v3512
    %v3515 = vsel %vm660, %v3514, -inf
    %3516 = vmax.xlane.f32.xlu0 %v3515
    %v3517 = vpop.xlane.xlu0 %3516
    %v3518 = vsub.f32 %v3514, %v3517
    %v3519 = vmul.f32 %v3518, 1.442695
    %v3520 = vpow.pop %v3519
    %v3521 = vsel %vm660, %v3520, 0.0
    %3522 = vadd.xlane.f32.xlu0 %v3521
    %v3523 = vpop.xlane.xlu0 %3522
    %v3524 = vlog2.pop %v3523
    %v3525 = vmul.f32 %v3524, 0.6931472
    %v3526 = vadd.f32 %v3525, %v3517
    %v3527 = vsub.f32 %v3514, %v3526
    %v3528 = vld [vmem:[#allocation2 + $0xc0] sm:$0x3f]
    %v3529 = vsel %vm540, %v3417, -inf
    %3530 = vmax.xlane.f32.xlu0 %v3529
    %v3531 = vpop.xlane.xlu0 %3530
    %vm3532 = vcmp.eq.f32.partialorder %v3417, %v3531
    %v3533 = vsel %vm3532, %v194, 6.0
    %v3534 = vsel %vm540, %v3533, inf
    %3535 = vmin.xlane.f32.xlu0 %v3534
    %v3536 = vpop.xlane.xlu0 %3535
    %vm3537 = vcmp.eq.f32.partialorder %v3536, 0.0
    %v3538 = vsel %vm3537, 1.0, 0.0
    %v3539 = vlaneseq
    %v3540 = vshrl.u32 %v3539, 7
    %v3541 = vsub.s32 0, %v3540
    %v3542 = vrot.slane %v3528, %v3541
    %v3543 = vmul.f32 %v3538, %v3542
    %v3544 = vadd.f32 %v3543, 0.0
    %vm3545 = vcmp.eq.f32.partialorder %v3536, 1.0
    %v3546 = vsel %vm3545, 1.0, 0.0
    %v3547 = vlaneseq
    %v3548 = vshrl.u32 %v3547, 7
    %v3549 = vsub.s32 1, %v3548
    %v3550 = vrot.slane %v3528, %v3549
    %v3551 = vmul.f32 %v3546, %v3550
    %v3552 = vadd.f32 %v3544, %v3551
    %vm3553 = vcmp.eq.f32.partialorder %v3536, 2.0
    %v3554 = vsel %vm3553, 1.0, 0.0
    %v3555 = vlaneseq
    %v3556 = vshrl.u32 %v3555, 7
    %v3557 = vsub.s32 2, %v3556
    %v3558 = vrot.slane %v3528, %v3557
    %v3559 = vmul.f32 %v3554, %v3558
    %v3560 = vadd.f32 %v3552, %v3559
    %vm3561 = vcmp.eq.f32.partialorder %v3536, 3.0
    %v3562 = vsel %vm3561, 1.0, 0.0
    %v3563 = vlaneseq
    %v3564 = vshrl.u32 %v3563, 7
    %v3565 = vsub.s32 3, %v3564
    %v3566 = vrot.slane %v3528, %v3565
    %v3567 = vmul.f32 %v3562, %v3566
    %v3568 = vadd.f32 %v3560, %v3567
    %vm3569 = vcmp.eq.f32.partialorder %v3536, 4.0
    %v3570 = vsel %vm3569, 1.0, 0.0
    %v3571 = vlaneseq
    %v3572 = vshrl.u32 %v3571, 7
    %v3573 = vsub.s32 4, %v3572
    %v3574 = vrot.slane %v3528, %v3573
    %v3575 = vmul.f32 %v3570, %v3574
    %v3576 = vadd.f32 %v3568, %v3575
    %vm3577 = vcmp.eq.f32.partialorder %v3536, 5.0
    %v3578 = vsel %vm3577, 1.0, 0.0
    %v3579 = vlaneseq
    %v3580 = vshrl.u32 %v3579, 7
    %v3581 = vsub.s32 5, %v3580
    %v3582 = vrot.slane %v3528, %v3581
    %v3583 = vmul.f32 %v3578, %v3582
    %v3584 = vadd.f32 %v3576, %v3583
    %3585 = vset.pattern.permute.xlu0 113
    %3586 = vperm.xlu0 %3585, %v3402
    %v3587 = vpop.permute.xlu0 %3586
    %v3588 = vlaneseq
    %v3589 = vshrl.u32 %v3588, 7
    %v3590 = vsub.s32 0, %v3589
    %v3591 = vrot.slane %v3587, %v3590
    %v3592 = vlaneseq
    %v3593 = vshrl.u32 %v3592, 7
    %v3594 = vsub.s32 1, %v3593
    %v3595 = vrot.slane %v3587, %v3594
    %v3598 = vadd.f32 %v71, %v3591
    %v3599 = vadd.f32 %v72, %v3595
    %3602 = vset.pattern.permute.xlu0 0
    %3603 = vperm.xlu0 %3602, %v3598
    %v3604 = vpop.permute.xlu0 %3603
    %3605 = vset.pattern.permute.xlu0 0
    %3606 = vperm.xlu0 %3605, %v3599
    %v3607 = vpop.permute.xlu0 %3606
    %v3608 = vlaneseq
    %v3609 = vshrl.u32 %v3608, 7
    %v3610 = vsub.s32 %v193, %v3609
    %v3611 = vrot.slane %v3604, %v3610
    %v3612 = vlaneseq
    %v3613 = vshrl.u32 %v3612, 7
    %v3614 = vsub.s32 %v193, %v3613
    %v3615 = vrot.slane %v3607, %v3614
    %v3616 = vsel %vm247, %v3615, %v3611
    %v3618 = vsel %vm250, %v3616, -inf
    %3619 = vmax.xlane.f32.xlu0 %v3618
    %v3620 = vpop.xlane.xlu0 %3619
    %v3622 = vlaneseq
    %v3623 = vshrl.u32 %v3622, 7
    %v3624 = vsub.s32 0, %v3623
    %v3625 = vrot.slane %v3620, %v3624
    %v3626 = vlaneseq
    %v3627 = vshrl.u32 %v3626, 7
    %v3628 = vsub.s32 1, %v3627
    %v3629 = vrot.slane %v3620, %v3628
    %v3632 = vsub.f32 %v3598, %v3625
    %v3633 = vsub.f32 %v3599, %v3629
    %v3634 = vmul.f32 %v3632, 1.442695
    %v3635 = vpow.pop %v3634
    %v3636 = vmul.f32 %v3633, 1.442695
    %v3637 = vpow.pop %v3636
    %3640 = vset.pattern.permute.xlu0 0
    %3641 = vperm.xlu0 %3640, %v3635
    %v3642 = vpop.permute.xlu0 %3641
    %3643 = vset.pattern.permute.xlu0 0
    %3644 = vperm.xlu0 %3643, %v3637
    %v3645 = vpop.permute.xlu0 %3644
    %v3646 = vlaneseq
    %v3647 = vshrl.u32 %v3646, 7
    %v3648 = vsub.s32 %v193, %v3647
    %v3649 = vrot.slane %v3642, %v3648
    %v3650 = vlaneseq
    %v3651 = vshrl.u32 %v3650, 7
    %v3652 = vsub.s32 %v193, %v3651
    %v3653 = vrot.slane %v3645, %v3652
    %v3654 = vsel %vm247, %v3653, %v3649
    %v3656 = vsel %vm250, %v3654, 0.0
    %3657 = vadd.xlane.f32.xlu0 %v3656
    %v3658 = vpop.xlane.xlu0 %3657
    %v3659 = vrcp.pop %v3658
    %v3661 = vlaneseq
    %v3662 = vshrl.u32 %v3661, 7
    %v3663 = vsub.s32 0, %v3662
    %v3664 = vrot.slane %v3659, %v3663
    %v3665 = vlaneseq
    %v3666 = vshrl.u32 %v3665, 7
    %v3667 = vsub.s32 1, %v3666
    %v3668 = vrot.slane %v3659, %v3667
    %v3671 = vmul.f32 %v3635, %v3664
    %v3672 = vmul.f32 %v3637, %v3668
    %3674 = vset.pattern.permute.xlu0 0
    %3675 = vperm.xlu0 %3674, %v3671
    %v3676 = vpop.permute.xlu0 %3675
    %3679 = vset.pattern.permute.xlu0 0
    %3680 = vperm.xlu0 %3679, %v3672
    %v3681 = vpop.permute.xlu0 %3680
    %v3683 = vmul.f32 %v3676, %v51
    %v3684 = vmul.f32 %v3681, %v52
    %v3685 = vsel %vm60, %v3683, 0.0
    %v3686 = vrot.slane %v3685, 4
    %v3687 = vadd.f32 %v3685, %v3686
    %v3688 = vrot.slane %v3687, 2
    %v3689 = vadd.f32 %v3687, %v3688
    %v3690 = vrot.slane %v3689, 1
    %v3691 = vadd.f32 %v3689, %v3690
    %v3692 = vsel %vm60, %v3684, 0.0
    %v3693 = vrot.slane %v3692, 4
    %v3694 = vadd.f32 %v3692, %v3693
    %v3695 = vrot.slane %v3694, 2
    %v3696 = vadd.f32 %v3694, %v3695
    %v3697 = vrot.slane %v3696, 1
    %v3698 = vadd.f32 %v3696, %v3697
    %v3701 = vsel %vm247, %v3698, %v3691
    %3702 = vrot.lane.b32.xlu0 %v3701, 32
    %v3703 = vpop.permute.xlu0 %3702
    %3705 = vrot.lane.b32.xlu0 %v3315, 32
    %v3706 = vpop.permute.xlu0 %3705
    %v3708 = vsel %vm60, %v3584, %v3703
    %v3709 = vsel %vm343, %v3708, %v3706
    %v3711 = vsel %vm349, %v3709, 0
    %3713 = vmatprep.subr.mxu0 0.0
    %3714 = vmatpush1.msra.mxu0 %v3065
    %3715 = vmatprep.subr.mxu0 0.0
    %3716 = vmatpush1.msra.mxu0 %v3066
    %3717 = vmatprep.subr.mxu0 0.0
    %3718 = vmatpush1.msra.mxu0 %v3067
    %3719 = vmatprep.subr.mxu0 0.0
    %3720 = vmatpush1.msra.mxu0 %v3068
    %3721 = vmatprep.subr.mxu0 0.0
    %3722 = vmatpush1.msra.mxu0 %v3069
    %3723 = vmatprep.subr.mxu0 0.0
    %3724 = vmatpush1.msra.mxu0 %v3070
    %3725 = vmatprep.subr.mxu0 0.0
    %3726 = vmatpush1.msra.mxu0 %v3071
    %3727 = vmatprep.subr.mxu0 0.0
    %3728 = vmatpush1.msra.mxu0 %v3072
    %3729 = vmatprep.subr.mxu0 0.0
    %3730 = vmatpush1.msra.mxu0 %v3073
    %3731 = vmatprep.subr.mxu0 0.0
    %3732 = vmatpush1.msra.mxu0 %v3074
    %3733 = vmatprep.subr.mxu0 0.0
    %3734 = vmatpush1.msra.mxu0 %v3075
    %3735 = vmatprep.subr.mxu0 0.0
    %3736 = vmatpush1.msra.mxu0 %v3076
    %3737 = vmatprep.subr.mxu0 0.0
    %3738 = vmatpush1.msra.mxu0 0.0
    %3739 = vmatprep.subr.mxu0 0.0
    %3740 = vmatpush1.msra.mxu0 0.0
    %3741 = vmatprep.subr.mxu0 0.0
    %3742 = vmatpush1.msra.mxu0 0.0
    %3743 = vmatprep.subr.mxu0 0.0
    %3744 = vmatpush1.msra.mxu0 0.0
    %3745 = vmatprep.subr.mxu0 0.0
    %3746 = vmatpush1.msra.mxu0 0.0
    %3747 = vmatprep.subr.mxu0 0.0
    %3748 = vmatpush1.msra.mxu0 0.0
    %3749 = vmatprep.subr.mxu0 0.0
    %3750 = vmatpush1.msra.mxu0 0.0
    %3751 = vmatprep.subr.mxu0 0.0
    %3752 = vmatpush1.msra.mxu0 0.0
    %3753 = vmatprep.subr.mxu0 0.0
    %3754 = vmatpush1.msra.mxu0 0.0
    %3755 = vmatprep.subr.mxu0 0.0
    %3756 = vmatpush1.msra.mxu0 0.0
    %3757 = vmatprep.subr.mxu0 0.0
    %3758 = vmatpush1.msra.mxu0 0.0
    %3759 = vmatprep.subr.mxu0 0.0
    %3760 = vmatpush1.msra.mxu0 0.0
    %3761 = vmatprep.subr.mxu0 0.0
    %3762 = vmatpush1.msra.mxu0 0.0
    %3763 = vmatprep.subr.mxu0 0.0
    %3764 = vmatpush1.msra.mxu0 0.0
    %3765 = vmatprep.subr.mxu0 0.0
    %3766 = vmatpush1.msra.mxu0 0.0
    %3767 = vmatprep.subr.mxu0 0.0
    %3768 = vmatpush1.msra.mxu0 0.0
    %3769 = vmatprep.subr.mxu0 0.0
    %3770 = vmatpush1.msra.mxu0 0.0
    %3771 = vmatprep.subr.mxu0 0.0
    %3772 = vmatpush1.msra.mxu0 0.0
    %3773 = vmatprep.subr.mxu0 0.0
    %3774 = vmatpush1.msra.mxu0 0.0
    %3775 = vmatprep.subr.mxu0 0.0
    %3776 = vmatpush1.msra.mxu0 0.0
    %3777 = vmatprep.mubr.f32.mxu0 0.0
    %3778 = vmatmul.mubr.f32.gmra.mrb[0].mxu0 %v3711
    %v3779 = vpop.f32.mrb[0].mxu0
    %v3780 = vadd.f32 %v3217, %v3779
    %v3781 = vpop.f32.mrb[0].mxu0
    %3782 = vdwg.mxu0
    %v3783 = vxor.u32 %v3780, 2147483648
    %v3784 = vmul.f32 %v3783, 1.442695
    %v3785 = vpow.pop %v3784
    %v3786 = vadd.f32 %v3785, 1.0
    %v3787 = vrcp.pop %v3786
    %v3788 = vmul.f32 1.0, %v3787
    %3790 = vrot.lane.b32.xlu0 %v3780, 32
    %v3791 = vpop.permute.xlu0 %3790
    %v3793 = vmul.f32 %v3788, %v3791
    %3795 = vrot.lane.b32.xlu0 %v3793, 64
    %v3796 = vpop.permute.xlu0 %3795
    %v3798 = vadd.f32 %v3780, %v3796
    %v3799 = vtanh.pop %v3798
    %v3800 = vsub.f32 1.0, %v3788
    %3802 = vrot.lane.b32.xlu0 %v3799, 96
    %v3803 = vpop.permute.xlu0 %3802
    %v3805 = vmul.f32 %v3800, %v3803
    %v3806 = vmul.f32 %v3788, %v3315
    %v3807 = vadd.f32 %v3805, %v3806
    %vm3808 = vcmp.gt.f32.partialorder %v3807, 0.0
    %v3809 = vmul.f32 %v3807, 1.442695
    %v3810 = vpow.pop %v3809
    %v3811 = vsub.f32 %v3810, 1.0
    %v3812 = vmul.f32 %v3811, 1.6732632
    %v3813 = vsel %vm3808, %v3807, %v3812
    %v3814 = vmul.f32 %v3813, 1.050701
    %3816 = vrot.lane.b32.xlu0 %v3807, 96
    %v3817 = vpop.permute.xlu0 %3816
    %v3819 = vsel %vm60, %v3817, %v3814
    %v3821 = vsel %vm343, %v3819, 0
    %3823 = vmatprep.subr.mxu0 0.0
    %3824 = vmatpush1.msra.mxu0 %v3078
    %3825 = vmatprep.subr.mxu0 0.0
    %3826 = vmatpush1.msra.mxu0 %v3079
    %3827 = vmatprep.subr.mxu0 0.0
    %3828 = vmatpush1.msra.mxu0 %v3080
    %3829 = vmatprep.subr.mxu0 0.0
    %3830 = vmatpush1.msra.mxu0 %v3081
    %3831 = vmatprep.subr.mxu0 0.0
    %3832 = vmatpush1.msra.mxu0 %v3082
    %3833 = vmatprep.subr.mxu0 0.0
    %3834 = vmatpush1.msra.mxu0 %v3083
    %3835 = vmatprep.subr.mxu0 0.0
    %3836 = vmatpush1.msra.mxu0 %v3084
    %3837 = vmatprep.subr.mxu0 0.0
    %3838 = vmatpush1.msra.mxu0 %v3085
    %3839 = vmatprep.subr.mxu0 0.0
    %3840 = vmatpush1.msra.mxu0 0.0
    %3841 = vmatprep.subr.mxu0 0.0
    %3842 = vmatpush1.msra.mxu0 0.0
    %3843 = vmatprep.subr.mxu0 0.0
    %3844 = vmatpush1.msra.mxu0 0.0
    %3845 = vmatprep.subr.mxu0 0.0
    %3846 = vmatpush1.msra.mxu0 0.0
    %3847 = vmatprep.subr.mxu0 0.0
    %3848 = vmatpush1.msra.mxu0 0.0
    %3849 = vmatprep.subr.mxu0 0.0
    %3850 = vmatpush1.msra.mxu0 0.0
    %3851 = vmatprep.subr.mxu0 0.0
    %3852 = vmatpush1.msra.mxu0 0.0
    %3853 = vmatprep.subr.mxu0 0.0
    %3854 = vmatpush1.msra.mxu0 0.0
    %3855 = vmatprep.subr.mxu0 0.0
    %3856 = vmatpush1.msra.mxu0 0.0
    %3857 = vmatprep.subr.mxu0 0.0
    %3858 = vmatpush1.msra.mxu0 0.0
    %3859 = vmatprep.subr.mxu0 0.0
    %3860 = vmatpush1.msra.mxu0 0.0
    %3861 = vmatprep.subr.mxu0 0.0
    %3862 = vmatpush1.msra.mxu0 0.0
    %3863 = vmatprep.subr.mxu0 0.0
    %3864 = vmatpush1.msra.mxu0 0.0
    %3865 = vmatprep.subr.mxu0 0.0
    %3866 = vmatpush1.msra.mxu0 0.0
    %3867 = vmatprep.subr.mxu0 0.0
    %3868 = vmatpush1.msra.mxu0 0.0
    %3869 = vmatprep.subr.mxu0 0.0
    %3870 = vmatpush1.msra.mxu0 0.0
    %3871 = vmatprep.subr.mxu0 0.0
    %3872 = vmatpush1.msra.mxu0 0.0
    %3873 = vmatprep.subr.mxu0 0.0
    %3874 = vmatpush1.msra.mxu0 0.0
    %3875 = vmatprep.subr.mxu0 0.0
    %3876 = vmatpush1.msra.mxu0 0.0
    %3877 = vmatprep.subr.mxu0 0.0
    %3878 = vmatpush1.msra.mxu0 0.0
    %3879 = vmatprep.subr.mxu0 0.0
    %3880 = vmatpush1.msra.mxu0 0.0
    %3881 = vmatprep.subr.mxu0 0.0
    %3882 = vmatpush1.msra.mxu0 0.0
    %3883 = vmatprep.subr.mxu0 0.0
    %3884 = vmatpush1.msra.mxu0 0.0
    %3885 = vmatprep.subr.mxu0 0.0
    %3886 = vmatpush1.msra.mxu0 0.0
    %3887 = vmatprep.mubr.f32.mxu0 0.0
    %3888 = vmatmul.mubr.f32.gmra.mrb[0].mxu0 %v3821
    %v3889 = vpop.f32.mrb[0].mxu0
    %v3890 = vadd.f32 %v3331, %v3889
    %v3891 = vpop.f32.mrb[0].mxu0
    %3892 = vdwg.mxu0
    %v3893 = vsel %vm540, %v3890, -inf
    %3894 = vmax.xlane.f32.xlu0 %v3893
    %v3895 = vpop.xlane.xlu0 %3894
    %v3896 = vsub.f32 %v3890, %v3895
    %v3897 = vmul.f32 %v3896, 1.442695
    %v3898 = vpow.pop %v3897
    %v3899 = vsel %vm540, %v3898, 0.0
    %3900 = vadd.xlane.f32.xlu0 %v3899
    %v3901 = vpop.xlane.xlu0 %3900
    %v3902 = vlog2.pop %v3901
    %v3903 = vmul.f32 %v3902, 0.6931472
    %v3904 = vadd.f32 %v3903, %v3895
    %v3905 = vsub.f32 %v3890, %v3904
    %v3908 = vunpack.c.l.s4 1966171168
    %v3909 = vunpack.c.0.s8 %v3908
    %v3910 = vlaneseq
    %v3911 = vshrl.u32 %v3910, 7
    %v3912 = vsub.s32 %v3909, %v3911
    %v3913 = vrot.slane %v3890, %v3912
    %v3914 = vcombine.high %v3913, %v3913
    %v3916 = vunpack.c.l.s4 1966171168
    %v3917 = vunpack.c.0.s8 %v3916
    %v3918 = vlaneseq
    %v3919 = vshrl.u32 %v3918, 7
    %v3920 = vsub.s32 %v3917, %v3919
    %v3921 = vrot.slane %v3913, %v3920
    %v3923 = vunpack.c.l.s4 1966171168
    %v3924 = vunpack.c.0.s8 %v3923
    %v3925 = vlaneseq
    %v3926 = vshrl.u32 %v3925, 7
    %v3927 = vsub.s32 %v3924, %v3926
    %v3928 = vrot.slane %v3914, %v3927
    %v3929 = vlaneseq
    %v3930 = vshrl.u32 %v3929, 7
    %v3931 = vsub.s32 0, %v3930
    %v3932 = vrot.slane %v3921, %v3931
    %v3933 = vlaneseq
    %v3934 = vshrl.u32 %v3933, 7
    %v3935 = vsub.s32 0, %v3934
    %v3936 = vrot.slane %v3928, %v3935
    %v3939 = vadd.f32 %v3932, %v590
    %v3940 = vadd.f32 %v3936, %v592
    %vm3941 = vcmp.gt.f32.partialorder %v3939, 0.0
    %vm3942 = vcmp.gt.f32.partialorder %v3940, 0.0
    %v3943 = vmul.f32 %v3939, 1.442695
    %v3944 = vpow.pop %v3943
    %v3945 = vmul.f32 %v3940, 1.442695
    %v3946 = vpow.pop %v3945
    %v3947 = vsub.f32 %v3944, 1.0
    %v3948 = vsub.f32 %v3946, 1.0
    %v3949 = vmul.f32 %v3947, 1.6732632
    %v3950 = vmul.f32 %v3948, 1.6732632
    %v3951 = vsel %vm3941, %v3939, %v3949
    %v3952 = vsel %vm3942, %v3940, %v3950
    %v3953 = vmul.f32 %v3951, 1.050701
    %v3954 = vmul.f32 %v3952, 1.050701
    %v3955 = vmul.f32 %v3953, %v3473
    %v3956 = vmul.f32 %v3954, %v3473
    %3959 = vrot.lane.b32.xlu0 %v3955, 115
    %v3960 = vpop.permute.xlu0 %3959
    %3961 = vrot.lane.b32.xlu0 %v3956, 115
    %v3962 = vpop.permute.xlu0 %3961
    %v3965 = vsel %vm629, %v3960, 0.0
    %3966 = vadd.xlane.f32.xlu0 %v3965
    %v3967 = vpop.xlane.xlu0 %3966
    %v3968 = vsel %vm629, %v3962, 0.0
    %3969 = vadd.xlane.f32.xlu0 %v3968
    %v3970 = vpop.xlane.xlu0 %3969
    %v3971 = vadd.f32 %v3967, %v3495
    %v3972 = vadd.f32 %v3970, %v3495
    %v3975 = vlaneseq
    %v3976 = vshrl.u32 %v3975, 7
    %v3977 = vsub.s32 %v193, %v3976
    %v3978 = vrot.slane %v3971, %v3977
    %v3979 = vlaneseq
    %v3980 = vshrl.u32 %v3979, 7
    %v3981 = vsub.s32 %v193, %v3980
    %v3982 = vrot.slane %v3972, %v3981
    %v3983 = vsel %vm247, %v3982, %v3978
    %3985 = vrot.lane.b32.xlu0 %v3890, 3
    %v3986 = vpop.permute.xlu0 %3985
    %v3988 = vsel %vm658, %v3983, %v3986
    %v3989 = vsel %vm660, %v3988, -inf
    %3990 = vmax.xlane.f32.xlu0 %v3989
    %v3991 = vpop.xlane.xlu0 %3990
    %v3992 = vsub.f32 %v3988, %v3991
    %v3993 = vmul.f32 %v3992, 1.442695
    %v3994 = vpow.pop %v3993
    %v3995 = vsel %vm660, %v3994, 0.0
    %3996 = vadd.xlane.f32.xlu0 %v3995
    %v3997 = vpop.xlane.xlu0 %3996
    %v3998 = vlog2.pop %v3997
    %v3999 = vmul.f32 %v3998, 0.6931472
    %v4000 = vadd.f32 %v3999, %v3991
    %v4001 = vsub.f32 %v3988, %v4000
    %v4002 = vld [vmem:[#allocation2 + $0xc8] sm:$0x7f]
    %v4003 = vadd.f32 %v1153, %v4002
    %v4004 = vadd.f32 %v1157, %v4002
    %v4005 = vsel %vm1162, %v4003, -inf
    %4006 = vmax.xlane.f32.xlu0 %v4005
    %v4007 = vpop.xlane.xlu0 %4006
    %v4008 = vsel %vm1162, %v4004, -inf
    %4009 = vmax.xlane.f32.xlu0 %v4008
    %v4010 = vpop.xlane.xlu0 %4009
    %vm4011 = vcmp.eq.f32.partialorder %v4003, %v4007
    %vm4012 = vcmp.eq.f32.partialorder %v4004, %v4010
    %v4013 = vsel %vm4011, %v194, 7.0
    %v4014 = vsel %vm4012, %v194, 7.0
    %v4015 = vsel %vm1162, %v4013, inf
    %4016 = vmin.xlane.f32.xlu0 %v4015
    %v4017 = vpop.xlane.xlu0 %4016
    %v4018 = vsel %vm1162, %v4014, inf
    %4019 = vmin.xlane.f32.xlu0 %v4018
    %v4020 = vpop.xlane.xlu0 %4019
    %v4021 = vlaneseq
    %v4022 = vshrl.u32 %v4021, 7
    %v4023 = vsub.s32 0, %v4022
    %v4024 = vrot.slane %v3890, %v4023
    %s4026 = sor.u32 256, 6
    %4027 = vbcast.lane.b32.xlu0 %v4024, %s4026
    %v4028 = vpop.permute.xlu0 %4027
    %v4029 = vlaneseq
    %v4030 = vshrl.u32 %v4029, 7
    %v4031 = vsub.s32 1, %v4030
    %v4032 = vrot.slane %v3890, %v4031
    %s4034 = sor.u32 256, 6
    %4035 = vbcast.lane.b32.xlu0 %v4032, %s4034
    %v4036 = vpop.permute.xlu0 %4035
    %v4039 = vadd.f32 %v4007, %v4028
    %v4040 = vadd.f32 %v4010, %v4036
    %4041 = vset.pattern.permute.xlu0 113
    %4042 = vperm.xlu0 %4041, %v3890
    %v4043 = vpop.permute.xlu0 %4042
    %v4044 = vlaneseq
    %v4045 = vshrl.u32 %v4044, 7
    %v4046 = vsub.s32 0, %v4045
    %v4047 = vrot.slane %v4043, %v4046
    %v4048 = vlaneseq
    %v4049 = vshrl.u32 %v4048, 7
    %v4050 = vsub.s32 1, %v4049
    %v4051 = vrot.slane %v4043, %v4050
    %v4054 = vadd.f32 %v71, %v4047
    %v4055 = vadd.f32 %v72, %v4051
    %4058 = vset.pattern.permute.xlu0 0
    %4059 = vperm.xlu0 %4058, %v4054
    %v4060 = vpop.permute.xlu0 %4059
    %4061 = vset.pattern.permute.xlu0 0
    %4062 = vperm.xlu0 %4061, %v4055
    %v4063 = vpop.permute.xlu0 %4062
    %v4064 = vlaneseq
    %v4065 = vshrl.u32 %v4064, 7
    %v4066 = vsub.s32 %v193, %v4065
    %v4067 = vrot.slane %v4060, %v4066
    %v4068 = vlaneseq
    %v4069 = vshrl.u32 %v4068, 7
    %v4070 = vsub.s32 %v193, %v4069
    %v4071 = vrot.slane %v4063, %v4070
    %v4072 = vsel %vm247, %v4071, %v4067
    %v4074 = vsel %vm250, %v4072, -inf
    %4075 = vmax.xlane.f32.xlu0 %v4074
    %v4076 = vpop.xlane.xlu0 %4075
    %v4078 = vlaneseq
    %v4079 = vshrl.u32 %v4078, 7
    %v4080 = vsub.s32 0, %v4079
    %v4081 = vrot.slane %v4076, %v4080
    %v4082 = vlaneseq
    %v4083 = vshrl.u32 %v4082, 7
    %v4084 = vsub.s32 1, %v4083
    %v4085 = vrot.slane %v4076, %v4084
    %v4088 = vsub.f32 %v4054, %v4081
    %v4089 = vsub.f32 %v4055, %v4085
    %v4090 = vmul.f32 %v4088, 1.442695
    %v4091 = vpow.pop %v4090
    %v4092 = vmul.f32 %v4089, 1.442695
    %v4093 = vpow.pop %v4092
    %4096 = vset.pattern.permute.xlu0 0
    %4097 = vperm.xlu0 %4096, %v4091
    %v4098 = vpop.permute.xlu0 %4097
    %4099 = vset.pattern.permute.xlu0 0
    %4100 = vperm.xlu0 %4099, %v4093
    %v4101 = vpop.permute.xlu0 %4100
    %v4102 = vlaneseq
    %v4103 = vshrl.u32 %v4102, 7
    %v4104 = vsub.s32 %v193, %v4103
    %v4105 = vrot.slane %v4098, %v4104
    %v4106 = vlaneseq
    %v4107 = vshrl.u32 %v4106, 7
    %v4108 = vsub.s32 %v193, %v4107
    %v4109 = vrot.slane %v4101, %v4108
    %v4110 = vsel %vm247, %v4109, %v4105
    %v4112 = vsel %vm250, %v4110, 0.0
    %4113 = vadd.xlane.f32.xlu0 %v4112
    %v4114 = vpop.xlane.xlu0 %4113
    %v4115 = vrcp.pop %v4114
    %v4117 = vlaneseq
    %v4118 = vshrl.u32 %v4117, 7
    %v4119 = vsub.s32 0, %v4118
    %v4120 = vrot.slane %v4115, %v4119
    %v4121 = vlaneseq
    %v4122 = vshrl.u32 %v4121, 7
    %v4123 = vsub.s32 1, %v4122
    %v4124 = vrot.slane %v4115, %v4123
    %v4127 = vmul.f32 %v4091, %v4120
    %v4128 = vmul.f32 %v4093, %v4124
    %4130 = vset.pattern.permute.xlu0 0
    %4131 = vperm.xlu0 %4130, %v4127
    %v4132 = vpop.permute.xlu0 %4131
    %4135 = vset.pattern.permute.xlu0 0
    %4136 = vperm.xlu0 %4135, %v4128
    %v4137 = vpop.permute.xlu0 %4136
    %v4139 = vmul.f32 %v4132, %v51
    %v4140 = vmul.f32 %v4137, %v52
    %v4141 = vsel %vm60, %v4139, 0.0
    %v4142 = vrot.slane %v4141, 4
    %v4143 = vadd.f32 %v4141, %v4142
    %v4144 = vrot.slane %v4143, 2
    %v4145 = vadd.f32 %v4143, %v4144
    %v4146 = vrot.slane %v4145, 1
    %v4147 = vadd.f32 %v4145, %v4146
    %v4148 = vsel %vm60, %v4140, 0.0
    %v4149 = vrot.slane %v4148, 4
    %v4150 = vadd.f32 %v4148, %v4149
    %v4151 = vrot.slane %v4150, 2
    %v4152 = vadd.f32 %v4150, %v4151
    %v4153 = vrot.slane %v4152, 1
    %v4154 = vadd.f32 %v4152, %v4153
    %v4157 = vsel %vm247, %v4154, %v4147
    %4158 = vrot.lane.b32.xlu0 %v4157, 32
    %v4159 = vpop.permute.xlu0 %4158
    %4161 = vrot.lane.b32.xlu0 %v3807, 32
    %v4162 = vpop.permute.xlu0 %4161
    %v4164 = vsel %vm60, %v3584, %v4159
    %v4165 = vsel %vm343, %v4164, %v4162
    %v4167 = vsel %vm349, %v4165, 0
    %4169 = vmatprep.subr.mxu0 0.0
    %4170 = vmatpush1.msra.mxu0 %v3065
    %4171 = vmatprep.subr.mxu0 0.0
    %4172 = vmatpush1.msra.mxu0 %v3066
    %4173 = vmatprep.subr.mxu0 0.0
    %4174 = vmatpush1.msra.mxu0 %v3067
    %4175 = vmatprep.subr.mxu0 0.0
    %4176 = vmatpush1.msra.mxu0 %v3068
    %4177 = vmatprep.subr.mxu0 0.0
    %4178 = vmatpush1.msra.mxu0 %v3069
    %4179 = vmatprep.subr.mxu0 0.0
    %4180 = vmatpush1.msra.mxu0 %v3070
    %4181 = vmatprep.subr.mxu0 0.0
    %4182 = vmatpush1.msra.mxu0 %v3071
    %4183 = vmatprep.subr.mxu0 0.0
    %4184 = vmatpush1.msra.mxu0 %v3072
    %4185 = vmatprep.subr.mxu0 0.0
    %4186 = vmatpush1.msra.mxu0 %v3073
    %4187 = vmatprep.subr.mxu0 0.0
    %4188 = vmatpush1.msra.mxu0 %v3074
    %4189 = vmatprep.subr.mxu0 0.0
    %4190 = vmatpush1.msra.mxu0 %v3075
    %4191 = vmatprep.subr.mxu0 0.0
    %4192 = vmatpush1.msra.mxu0 %v3076
    %4193 = vmatprep.subr.mxu0 0.0
    %4194 = vmatpush1.msra.mxu0 0.0
    %4195 = vmatprep.subr.mxu0 0.0
    %4196 = vmatpush1.msra.mxu0 0.0
    %4197 = vmatprep.subr.mxu0 0.0
    %4198 = vmatpush1.msra.mxu0 0.0
    %4199 = vmatprep.subr.mxu0 0.0
    %4200 = vmatpush1.msra.mxu0 0.0
    %4201 = vmatprep.subr.mxu0 0.0
    %4202 = vmatpush1.msra.mxu0 0.0
    %4203 = vmatprep.subr.mxu0 0.0
    %4204 = vmatpush1.msra.mxu0 0.0
    %4205 = vmatprep.subr.mxu0 0.0
    %4206 = vmatpush1.msra.mxu0 0.0
    %4207 = vmatprep.subr.mxu0 0.0
    %4208 = vmatpush1.msra.mxu0 0.0
    %4209 = vmatprep.subr.mxu0 0.0
    %4210 = vmatpush1.msra.mxu0 0.0
    %4211 = vmatprep.subr.mxu0 0.0
    %4212 = vmatpush1.msra.mxu0 0.0
    %4213 = vmatprep.subr.mxu0 0.0
    %4214 = vmatpush1.msra.mxu0 0.0
    %4215 = vmatprep.subr.mxu0 0.0
    %4216 = vmatpush1.msra.mxu0 0.0
    %4217 = vmatprep.subr.mxu0 0.0
    %4218 = vmatpush1.msra.mxu0 0.0
    %4219 = vmatprep.subr.mxu0 0.0
    %4220 = vmatpush1.msra.mxu0 0.0
    %4221 = vmatprep.subr.mxu0 0.0
    %4222 = vmatpush1.msra.mxu0 0.0
    %4223 = vmatprep.subr.mxu0 0.0
    %4224 = vmatpush1.msra.mxu0 0.0
    %4225 = vmatprep.subr.mxu0 0.0
    %4226 = vmatpush1.msra.mxu0 0.0
    %4227 = vmatprep.subr.mxu0 0.0
    %4228 = vmatpush1.msra.mxu0 0.0
    %4229 = vmatprep.subr.mxu0 0.0
    %4230 = vmatpush1.msra.mxu0 0.0
    %4231 = vmatprep.subr.mxu0 0.0
    %4232 = vmatpush1.msra.mxu0 0.0
    %4233 = vmatprep.mubr.f32.mxu0 0.0
    %4234 = vmatmul.mubr.f32.gmra.mrb[0].mxu0 %v4167
    %v4235 = vpop.f32.mrb[0].mxu0
    %v4236 = vadd.f32 %v3217, %v4235
    %v4237 = vpop.f32.mrb[0].mxu0
    %4238 = vdwg.mxu0
    %v4239 = vxor.u32 %v4236, 2147483648
    %v4240 = vmul.f32 %v4239, 1.442695
    %v4241 = vpow.pop %v4240
    %v4242 = vadd.f32 %v4241, 1.0
    %v4243 = vrcp.pop %v4242
    %v4244 = vmul.f32 1.0, %v4243
    %4246 = vrot.lane.b32.xlu0 %v4236, 32
    %v4247 = vpop.permute.xlu0 %4246
    %v4249 = vmul.f32 %v4244, %v4247
    %4251 = vrot.lane.b32.xlu0 %v4249, 64
    %v4252 = vpop.permute.xlu0 %4251
    %v4254 = vadd.f32 %v4236, %v4252
    %v4255 = vtanh.pop %v4254
    %v4256 = vsub.f32 1.0, %v4244
    %4258 = vrot.lane.b32.xlu0 %v4255, 96
    %v4259 = vpop.permute.xlu0 %4258
    %v4261 = vmul.f32 %v4256, %v4259
    %v4262 = vmul.f32 %v4244, %v3807
    %v4263 = vadd.f32 %v4261, %v4262
    %vm4264 = vcmp.gt.f32.partialorder %v4263, 0.0
    %v4265 = vmul.f32 %v4263, 1.442695
    %v4266 = vpow.pop %v4265
    %v4267 = vsub.f32 %v4266, 1.0
    %v4268 = vmul.f32 %v4267, 1.6732632
    %v4269 = vsel %vm4264, %v4263, %v4268
    %v4270 = vmul.f32 %v4269, 1.050701
    %4272 = vrot.lane.b32.xlu0 %v4263, 96
    %v4273 = vpop.permute.xlu0 %4272
    %v4275 = vsel %vm60, %v4273, %v4270
    %v4277 = vsel %vm343, %v4275, 0
    %4279 = vmatprep.subr.mxu0 0.0
    %4280 = vmatpush1.msra.mxu0 %v3078
    %4281 = vmatprep.subr.mxu0 0.0
    %4282 = vmatpush1.msra.mxu0 %v3079
    %4283 = vmatprep.subr.mxu0 0.0
    %4284 = vmatpush1.msra.mxu0 %v3080
    %4285 = vmatprep.subr.mxu0 0.0
    %4286 = vmatpush1.msra.mxu0 %v3081
    %4287 = vmatprep.subr.mxu0 0.0
    %4288 = vmatpush1.msra.mxu0 %v3082
    %4289 = vmatprep.subr.mxu0 0.0
    %4290 = vmatpush1.msra.mxu0 %v3083
    %4291 = vmatprep.subr.mxu0 0.0
    %4292 = vmatpush1.msra.mxu0 %v3084
    %4293 = vmatprep.subr.mxu0 0.0
    %4294 = vmatpush1.msra.mxu0 %v3085
    %4295 = vmatprep.subr.mxu0 0.0
    %4296 = vmatpush1.msra.mxu0 0.0
    %4297 = vmatprep.subr.mxu0 0.0
    %4298 = vmatpush1.msra.mxu0 0.0
    %4299 = vmatprep.subr.mxu0 0.0
    %4300 = vmatpush1.msra.mxu0 0.0
    %4301 = vmatprep.subr.mxu0 0.0
    %4302 = vmatpush1.msra.mxu0 0.0
    %4303 = vmatprep.subr.mxu0 0.0
    %4304 = vmatpush1.msra.mxu0 0.0
    %4305 = vmatprep.subr.mxu0 0.0
    %4306 = vmatpush1.msra.mxu0 0.0
    %4307 = vmatprep.subr.mxu0 0.0
    %4308 = vmatpush1.msra.mxu0 0.0
    %4309 = vmatprep.subr.mxu0 0.0
    %4310 = vmatpush1.msra.mxu0 0.0
    %4311 = vmatprep.subr.mxu0 0.0
    %4312 = vmatpush1.msra.mxu0 0.0
    %4313 = vmatprep.subr.mxu0 0.0
    %4314 = vmatpush1.msra.mxu0 0.0
    %4315 = vmatprep.subr.mxu0 0.0
    %4316 = vmatpush1.msra.mxu0 0.0
    %4317 = vmatprep.subr.mxu0 0.0
    %4318 = vmatpush1.msra.mxu0 0.0
    %4319 = vmatprep.subr.mxu0 0.0
    %4320 = vmatpush1.msra.mxu0 0.0
    %4321 = vmatprep.subr.mxu0 0.0
    %4322 = vmatpush1.msra.mxu0 0.0
    %4323 = vmatprep.subr.mxu0 0.0
    %4324 = vmatpush1.msra.mxu0 0.0
    %4325 = vmatprep.subr.mxu0 0.0
    %4326 = vmatpush1.msra.mxu0 0.0
    %4327 = vmatprep.subr.mxu0 0.0
    %4328 = vmatpush1.msra.mxu0 0.0
    %4329 = vmatprep.subr.mxu0 0.0
    %4330 = vmatpush1.msra.mxu0 0.0
    %4331 = vmatprep.subr.mxu0 0.0
    %4332 = vmatpush1.msra.mxu0 0.0
    %4333 = vmatprep.subr.mxu0 0.0
    %4334 = vmatpush1.msra.mxu0 0.0
    %4335 = vmatprep.subr.mxu0 0.0
    %4336 = vmatpush1.msra.mxu0 0.0
    %4337 = vmatprep.subr.mxu0 0.0
    %4338 = vmatpush1.msra.mxu0 0.0
    %4339 = vmatprep.subr.mxu0 0.0
    %4340 = vmatpush1.msra.mxu0 0.0
    %4341 = vmatprep.subr.mxu0 0.0
    %4342 = vmatpush1.msra.mxu0 0.0
    %4343 = vmatprep.mubr.f32.mxu0 0.0
    %4344 = vmatmul.mubr.f32.gmra.mrb[0].mxu0 %v4277
    %v4345 = vpop.f32.mrb[0].mxu0
    %v4346 = vadd.f32 %v3331, %v4345
    %v4347 = vpop.f32.mrb[0].mxu0
    %4348 = vdwg.mxu0
    %v4349 = vsel %vm540, %v4346, -inf
    %4350 = vmax.xlane.f32.xlu0 %v4349
    %v4351 = vpop.xlane.xlu0 %4350
    %v4352 = vsub.f32 %v4346, %v4351
    %v4353 = vmul.f32 %v4352, 1.442695
    %v4354 = vpow.pop %v4353
    %v4355 = vsel %vm540, %v4354, 0.0
    %4356 = vadd.xlane.f32.xlu0 %v4355
    %v4357 = vpop.xlane.xlu0 %4356
    %v4358 = vlog2.pop %v4357
    %v4359 = vmul.f32 %v4358, 0.6931472
    %v4360 = vadd.f32 %v4359, %v4351
    %v4361 = vsub.f32 %v4346, %v4360
    %v4364 = vunpack.c.l.s4 1966171168
    %v4365 = vunpack.c.0.s8 %v4364
    %v4366 = vlaneseq
    %v4367 = vshrl.u32 %v4366, 7
    %v4368 = vsub.s32 %v4365, %v4367
    %v4369 = vrot.slane %v4346, %v4368
    %v4370 = vcombine.high %v4369, %v4369
    %v4372 = vunpack.c.l.s4 1966171168
    %v4373 = vunpack.c.0.s8 %v4372
    %v4374 = vlaneseq
    %v4375 = vshrl.u32 %v4374, 7
    %v4376 = vsub.s32 %v4373, %v4375
    %v4377 = vrot.slane %v4369, %v4376
    %v4379 = vunpack.c.l.s4 1966171168
    %v4380 = vunpack.c.0.s8 %v4379
    %v4381 = vlaneseq
    %v4382 = vshrl.u32 %v4381, 7
    %v4383 = vsub.s32 %v4380, %v4382
    %v4384 = vrot.slane %v4370, %v4383
    %v4385 = vlaneseq
    %v4386 = vshrl.u32 %v4385, 7
    %v4387 = vsub.s32 0, %v4386
    %v4388 = vrot.slane %v4377, %v4387
    %v4389 = vlaneseq
    %v4390 = vshrl.u32 %v4389, 7
    %v4391 = vsub.s32 0, %v4390
    %v4392 = vrot.slane %v4384, %v4391
    %v4395 = vadd.f32 %v4388, %v590
    %v4396 = vadd.f32 %v4392, %v592
    %vm4397 = vcmp.gt.f32.partialorder %v4395, 0.0
    %vm4398 = vcmp.gt.f32.partialorder %v4396, 0.0
    %v4399 = vmul.f32 %v4395, 1.442695
    %v4400 = vpow.pop %v4399
    %v4401 = vmul.f32 %v4396, 1.442695
    %v4402 = vpow.pop %v4401
    %v4403 = vsub.f32 %v4400, 1.0
    %v4404 = vsub.f32 %v4402, 1.0
    %v4405 = vmul.f32 %v4403, 1.6732632
    %v4406 = vmul.f32 %v4404, 1.6732632
    %v4407 = vsel %vm4397, %v4395, %v4405
    %v4408 = vsel %vm4398, %v4396, %v4406
    %v4409 = vmul.f32 %v4407, 1.050701
    %v4410 = vmul.f32 %v4408, 1.050701
    %v4411 = vmul.f32 %v4409, %v3473
    %v4412 = vmul.f32 %v4410, %v3473
    %4415 = vrot.lane.b32.xlu0 %v4411, 115
    %v4416 = vpop.permute.xlu0 %4415
    %4417 = vrot.lane.b32.xlu0 %v4412, 115
    %v4418 = vpop.permute.xlu0 %4417
    %v4421 = vsel %vm629, %v4416, 0.0
    %4422 = vadd.xlane.f32.xlu0 %v4421
    %v4423 = vpop.xlane.xlu0 %4422
    %v4424 = vsel %vm629, %v4418, 0.0
    %4425 = vadd.xlane.f32.xlu0 %v4424
    %v4426 = vpop.xlane.xlu0 %4425
    %v4427 = vadd.f32 %v4423, %v3495
    %v4428 = vadd.f32 %v4426, %v3495
    %v4431 = vlaneseq
    %v4432 = vshrl.u32 %v4431, 7
    %v4433 = vsub.s32 %v193, %v4432
    %v4434 = vrot.slane %v4427, %v4433
    %v4435 = vlaneseq
    %v4436 = vshrl.u32 %v4435, 7
    %v4437 = vsub.s32 %v193, %v4436
    %v4438 = vrot.slane %v4428, %v4437
    %v4439 = vsel %vm247, %v4438, %v4434
    %4441 = vrot.lane.b32.xlu0 %v4346, 3
    %v4442 = vpop.permute.xlu0 %4441
    %v4444 = vsel %vm658, %v4439, %v4442
    %v4445 = vsel %vm660, %v4444, -inf
    %4446 = vmax.xlane.f32.xlu0 %v4445
    %v4447 = vpop.xlane.xlu0 %4446
    %v4448 = vsub.f32 %v4444, %v4447
    %v4449 = vmul.f32 %v4448, 1.442695
    %v4450 = vpow.pop %v4449
    %v4451 = vsel %vm660, %v4450, 0.0
    %4452 = vadd.xlane.f32.xlu0 %v4451
    %v4453 = vpop.xlane.xlu0 %4452
    %v4454 = vlog2.pop %v4453
    %v4455 = vmul.f32 %v4454, 0.6931472
    %v4456 = vadd.f32 %v4455, %v4447
    %v4457 = vsub.f32 %v4444, %v4456
    %v4459 = vlaneseq
    %v4460 = vshrl.u32 %v4459, 7
    %v4461 = vsub.s32 0, %v4460
    %v4462 = vrot.slane %v4002, %v4461
    %4464 = vbcast.lane.b32.xlu0 %v4462, 256
    %v4465 = vpop.permute.xlu0 %4464
    %v4466 = vlaneseq
    %v4467 = vshrl.u32 %v4466, 7
    %v4468 = vsub.s32 1, %v4467
    %v4469 = vrot.slane %v4002, %v4468
    %4471 = vbcast.lane.b32.xlu0 %v4469, 256
    %v4472 = vpop.permute.xlu0 %4471
    %v4473 = vlaneseq
    %v4474 = vshrl.u32 %v4473, 7
    %v4475 = vsub.s32 2, %v4474
    %v4476 = vrot.slane %v4002, %v4475
    %4478 = vbcast.lane.b32.xlu0 %v4476, 256
    %v4479 = vpop.permute.xlu0 %4478
    %v4480 = vlaneseq
    %v4481 = vshrl.u32 %v4480, 7
    %v4482 = vsub.s32 3, %v4481
    %v4483 = vrot.slane %v4002, %v4482
    %4485 = vbcast.lane.b32.xlu0 %v4483, 256
    %v4486 = vpop.permute.xlu0 %4485
    %v4487 = vlaneseq
    %v4488 = vshrl.u32 %v4487, 7
    %v4489 = vsub.s32 4, %v4488
    %v4490 = vrot.slane %v4002, %v4489
    %4492 = vbcast.lane.b32.xlu0 %v4490, 256
    %v4493 = vpop.permute.xlu0 %4492
    %v4494 = vlaneseq
    %v4495 = vshrl.u32 %v4494, 7
    %v4496 = vsub.s32 5, %v4495
    %v4497 = vrot.slane %v4002, %v4496
    %4499 = vbcast.lane.b32.xlu0 %v4497, 256
    %v4500 = vpop.permute.xlu0 %4499
    %v4501 = vlaneseq
    %v4502 = vshrl.u32 %v4501, 7
    %v4503 = vsub.s32 6, %v4502
    %v4504 = vrot.slane %v4002, %v4503
    %4506 = vbcast.lane.b32.xlu0 %v4504, 256
    %v4507 = vpop.permute.xlu0 %4506
    %v4515 = vadd.f32 %v4039, %v4465
    %v4516 = vadd.f32 %v4039, %v4472
    %v4517 = vadd.f32 %v4039, %v4479
    %v4518 = vadd.f32 %v4039, %v4486
    %v4519 = vadd.f32 %v4039, %v4493
    %v4520 = vadd.f32 %v4039, %v4500
    %v4521 = vadd.f32 %v4039, %v4507
    %v4522 = vadd.f32 %v4040, %v4465
    %v4523 = vadd.f32 %v4040, %v4472
    %v4524 = vadd.f32 %v4040, %v4479
    %v4525 = vadd.f32 %v4040, %v4486
    %v4526 = vadd.f32 %v4040, %v4493
    %v4527 = vadd.f32 %v4040, %v4500
    %v4528 = vadd.f32 %v4040, %v4507
    %4543 = vset.pattern.permute.xlu0 0
    %4544 = vperm.xlu0 %4543, %v4515
    %v4545 = vpop.permute.xlu0 %4544
    %4546 = vset.pattern.permute.xlu0 0
    %4547 = vperm.xlu0 %4546, %v4516
    %v4548 = vpop.permute.xlu0 %4547
    %4549 = vset.pattern.permute.xlu0 0
    %4550 = vperm.xlu0 %4549, %v4517
    %v4551 = vpop.permute.xlu0 %4550
    %4552 = vset.pattern.permute.xlu0 0
    %4553 = vperm.xlu0 %4552, %v4518
    %v4554 = vpop.permute.xlu0 %4553
    %4555 = vset.pattern.permute.xlu0 0
    %4556 = vperm.xlu0 %4555, %v4519
    %v4557 = vpop.permute.xlu0 %4556
    %4558 = vset.pattern.permute.xlu0 0
    %4559 = vperm.xlu0 %4558, %v4520
    %v4560 = vpop.permute.xlu0 %4559
    %4561 = vset.pattern.permute.xlu0 0
    %4562 = vperm.xlu0 %4561, %v4521
    %v4563 = vpop.permute.xlu0 %4562
    %4564 = vset.pattern.permute.xlu0 0
    %4565 = vperm.xlu0 %4564, %v4522
    %v4566 = vpop.permute.xlu0 %4565
    %4567 = vset.pattern.permute.xlu0 0
    %4568 = vperm.xlu0 %4567, %v4523
    %v4569 = vpop.permute.xlu0 %4568
    %4570 = vset.pattern.permute.xlu0 0
    %4571 = vperm.xlu0 %4570, %v4524
    %v4572 = vpop.permute.xlu0 %4571
    %4573 = vset.pattern.permute.xlu0 0
    %4574 = vperm.xlu0 %4573, %v4525
    %v4575 = vpop.permute.xlu0 %4574
    %4576 = vset.pattern.permute.xlu0 0
    %4577 = vperm.xlu0 %4576, %v4526
    %v4578 = vpop.permute.xlu0 %4577
    %4579 = vset.pattern.permute.xlu0 0
    %4580 = vperm.xlu0 %4579, %v4527
    %v4581 = vpop.permute.xlu0 %4580
    %4582 = vset.pattern.permute.xlu0 0
    %4583 = vperm.xlu0 %4582, %v4528
    %v4584 = vpop.permute.xlu0 %4583
    %v4585 = vlaneseq
    %v4586 = vshrl.u32 %v4585, 7
    %v4587 = vsub.s32 %v193, %v4586
    %v4588 = vrot.slane %v4545, %v4587
    %v4589 = vlaneseq
    %v4590 = vshrl.u32 %v4589, 7
    %v4591 = vsub.s32 %v193, %v4590
    %v4592 = vrot.slane %v4548, %v4591
    %v4593 = vlaneseq
    %v4594 = vshrl.u32 %v4593, 7
    %v4595 = vsub.s32 %v193, %v4594
    %v4596 = vrot.slane %v4551, %v4595
    %v4597 = vlaneseq
    %v4598 = vshrl.u32 %v4597, 7
    %v4599 = vsub.s32 %v193, %v4598
    %v4600 = vrot.slane %v4554, %v4599
    %v4601 = vlaneseq
    %v4602 = vshrl.u32 %v4601, 7
    %v4603 = vsub.s32 %v193, %v4602
    %v4604 = vrot.slane %v4557, %v4603
    %v4605 = vlaneseq
    %v4606 = vshrl.u32 %v4605, 7
    %v4607 = vsub.s32 %v193, %v4606
    %v4608 = vrot.slane %v4560, %v4607
    %v4609 = vlaneseq
    %v4610 = vshrl.u32 %v4609, 7
    %v4611 = vsub.s32 %v193, %v4610
    %v4612 = vrot.slane %v4563, %v4611
    %v4613 = vlaneseq
    %v4614 = vshrl.u32 %v4613, 7
    %v4615 = vsub.s32 %v193, %v4614
    %v4616 = vrot.slane %v4566, %v4615
    %v4617 = vlaneseq
    %v4618 = vshrl.u32 %v4617, 7
    %v4619 = vsub.s32 %v193, %v4618
    %v4620 = vrot.slane %v4569, %v4619
    %v4621 = vlaneseq
    %v4622 = vshrl.u32 %v4621, 7
    %v4623 = vsub.s32 %v193, %v4622
    %v4624 = vrot.slane %v4572, %v4623
    %v4625 = vlaneseq
    %v4626 = vshrl.u32 %v4625, 7
    %v4627 = vsub.s32 %v193, %v4626
    %v4628 = vrot.slane %v4575, %v4627
    %v4629 = vlaneseq
    %v4630 = vshrl.u32 %v4629, 7
    %v4631 = vsub.s32 %v193, %v4630
    %v4632 = vrot.slane %v4578, %v4631
    %v4633 = vlaneseq
    %v4634 = vshrl.u32 %v4633, 7
    %v4635 = vsub.s32 %v193, %v4634
    %v4636 = vrot.slane %v4581, %v4635
    %v4637 = vlaneseq
    %v4638 = vshrl.u32 %v4637, 7
    %v4639 = vsub.s32 %v193, %v4638
    %v4640 = vrot.slane %v4584, %v4639
    %v4641 = vsel %vm247, %v4592, %v4588
    %v4642 = vsel %vm1800, %v4596, %v4641
    %v4643 = vsel %vm1802, %v4600, %v4642
    %v4644 = vsel %vm1804, %v4604, %v4643
    %v4645 = vsel %vm1806, %v4608, %v4644
    %v4646 = vsel %vm1808, %v4612, %v4645
    %v4647 = vsel %vm247, %v4620, %v4616
    %v4648 = vsel %vm1800, %v4624, %v4647
    %v4649 = vsel %vm1802, %v4628, %v4648
    %v4650 = vsel %vm1804, %v4632, %v4649
    %v4651 = vsel %vm1806, %v4636, %v4650
    %v4652 = vsel %vm1808, %v4640, %v4651
    %v4655 = vsel %vm1162, %v4646, -inf
    %4656 = vmax.xlane.f32.xlu0 %v4655
    %v4657 = vpop.xlane.xlu0 %4656
    %v4658 = vsel %vm1162, %v4652, -inf
    %4659 = vmax.xlane.f32.xlu0 %v4658
    %v4660 = vpop.xlane.xlu0 %4659
    %v4663 = vlaneseq
    %v4664 = vshrl.u32 %v4663, 7
    %v4665 = vsub.s32 0, %v4664
    %v4666 = vrot.slane %v4657, %v4665
    %v4667 = vlaneseq
    %v4668 = vshrl.u32 %v4667, 7
    %v4669 = vsub.s32 1, %v4668
    %v4670 = vrot.slane %v4657, %v4669
    %v4671 = vlaneseq
    %v4672 = vshrl.u32 %v4671, 7
    %v4673 = vsub.s32 2, %v4672
    %v4674 = vrot.slane %v4657, %v4673
    %v4675 = vlaneseq
    %v4676 = vshrl.u32 %v4675, 7
    %v4677 = vsub.s32 3, %v4676
    %v4678 = vrot.slane %v4657, %v4677
    %v4679 = vlaneseq
    %v4680 = vshrl.u32 %v4679, 7
    %v4681 = vsub.s32 4, %v4680
    %v4682 = vrot.slane %v4657, %v4681
    %v4683 = vlaneseq
    %v4684 = vshrl.u32 %v4683, 7
    %v4685 = vsub.s32 5, %v4684
    %v4686 = vrot.slane %v4657, %v4685
    %v4687 = vlaneseq
    %v4688 = vshrl.u32 %v4687, 7
    %v4689 = vsub.s32 6, %v4688
    %v4690 = vrot.slane %v4657, %v4689
    %v4691 = vlaneseq
    %v4692 = vshrl.u32 %v4691, 7
    %v4693 = vsub.s32 0, %v4692
    %v4694 = vrot.slane %v4660, %v4693
    %v4695 = vlaneseq
    %v4696 = vshrl.u32 %v4695, 7
    %v4697 = vsub.s32 1, %v4696
    %v4698 = vrot.slane %v4660, %v4697
    %v4699 = vlaneseq
    %v4700 = vshrl.u32 %v4699, 7
    %v4701 = vsub.s32 2, %v4700
    %v4702 = vrot.slane %v4660, %v4701
    %v4703 = vlaneseq
    %v4704 = vshrl.u32 %v4703, 7
    %v4705 = vsub.s32 3, %v4704
    %v4706 = vrot.slane %v4660, %v4705
    %v4707 = vlaneseq
    %v4708 = vshrl.u32 %v4707, 7
    %v4709 = vsub.s32 4, %v4708
    %v4710 = vrot.slane %v4660, %v4709
    %v4711 = vlaneseq
    %v4712 = vshrl.u32 %v4711, 7
    %v4713 = vsub.s32 5, %v4712
    %v4714 = vrot.slane %v4660, %v4713
    %v4715 = vlaneseq
    %v4716 = vshrl.u32 %v4715, 7
    %v4717 = vsub.s32 6, %v4716
    %v4718 = vrot.slane %v4660, %v4717
    %vm4733 = vcmp.eq.f32.partialorder %v4515, %v4666
    %vm4734 = vcmp.eq.f32.partialorder %v4516, %v4670
    %vm4735 = vcmp.eq.f32.partialorder %v4517, %v4674
    %vm4736 = vcmp.eq.f32.partialorder %v4518, %v4678
    %vm4737 = vcmp.eq.f32.partialorder %v4519, %v4682
    %vm4738 = vcmp.eq.f32.partialorder %v4520, %v4686
    %vm4739 = vcmp.eq.f32.partialorder %v4521, %v4690
    %vm4740 = vcmp.eq.f32.partialorder %v4522, %v4694
    %vm4741 = vcmp.eq.f32.partialorder %v4523, %v4698
    %vm4742 = vcmp.eq.f32.partialorder %v4524, %v4702
    %vm4743 = vcmp.eq.f32.partialorder %v4525, %v4706
    %vm4744 = vcmp.eq.f32.partialorder %v4526, %v4710
    %vm4745 = vcmp.eq.f32.partialorder %v4527, %v4714
    %vm4746 = vcmp.eq.f32.partialorder %v4528, %v4718
    %v4747 = vsel %vm4733, %v1913, 7.0
    %v4748 = vsel %vm4734, %v1913, 7.0
    %v4749 = vsel %vm4735, %v1913, 7.0
    %v4750 = vsel %vm4736, %v1913, 7.0
    %v4751 = vsel %vm4737, %v1913, 7.0
    %v4752 = vsel %vm4738, %v1913, 7.0
    %v4753 = vsel %vm4739, %v1913, 7.0
    %v4754 = vsel %vm4740, %v1913, 7.0
    %v4755 = vsel %vm4741, %v1913, 7.0
    %v4756 = vsel %vm4742, %v1913, 7.0
    %v4757 = vsel %vm4743, %v1913, 7.0
    %v4758 = vsel %vm4744, %v1913, 7.0
    %v4759 = vsel %vm4745, %v1913, 7.0
    %v4760 = vsel %vm4746, %v1913, 7.0
    %4775 = vset.pattern.permute.xlu0 0
    %4776 = vperm.xlu0 %4775, %v4747
    %v4777 = vpop.permute.xlu0 %4776
    %4778 = vset.pattern.permute.xlu0 0
    %4779 = vperm.xlu0 %4778, %v4748
    %v4780 = vpop.permute.xlu0 %4779
    %4781 = vset.pattern.permute.xlu0 0
    %4782 = vperm.xlu0 %4781, %v4749
    %v4783 = vpop.permute.xlu0 %4782
    %4784 = vset.pattern.permute.xlu0 0
    %4785 = vperm.xlu0 %4784, %v4750
    %v4786 = vpop.permute.xlu0 %4785
    %4787 = vset.pattern.permute.xlu0 0
    %4788 = vperm.xlu0 %4787, %v4751
    %v4789 = vpop.permute.xlu0 %4788
    %4790 = vset.pattern.permute.xlu0 0
    %4791 = vperm.xlu0 %4790, %v4752
    %v4792 = vpop.permute.xlu0 %4791
    %4793 = vset.pattern.permute.xlu0 0
    %4794 = vperm.xlu0 %4793, %v4753
    %v4795 = vpop.permute.xlu0 %4794
    %4796 = vset.pattern.permute.xlu0 0
    %4797 = vperm.xlu0 %4796, %v4754
    %v4798 = vpop.permute.xlu0 %4797
    %4799 = vset.pattern.permute.xlu0 0
    %4800 = vperm.xlu0 %4799, %v4755
    %v4801 = vpop.permute.xlu0 %4800
    %4802 = vset.pattern.permute.xlu0 0
    %4803 = vperm.xlu0 %4802, %v4756
    %v4804 = vpop.permute.xlu0 %4803
    %4805 = vset.pattern.permute.xlu0 0
    %4806 = vperm.xlu0 %4805, %v4757
    %v4807 = vpop.permute.xlu0 %4806
    %4808 = vset.pattern.permute.xlu0 0
    %4809 = vperm.xlu0 %4808, %v4758
    %v4810 = vpop.permute.xlu0 %4809
    %4811 = vset.pattern.permute.xlu0 0
    %4812 = vperm.xlu0 %4811, %v4759
    %v4813 = vpop.permute.xlu0 %4812
    %4814 = vset.pattern.permute.xlu0 0
    %4815 = vperm.xlu0 %4814, %v4760
    %v4816 = vpop.permute.xlu0 %4815
    %v4817 = vlaneseq
    %v4818 = vshrl.u32 %v4817, 7
    %v4819 = vsub.s32 %v193, %v4818
    %v4820 = vrot.slane %v4777, %v4819
    %v4821 = vlaneseq
    %v4822 = vshrl.u32 %v4821, 7
    %v4823 = vsub.s32 %v193, %v4822
    %v4824 = vrot.slane %v4780, %v4823
    %v4825 = vlaneseq
    %v4826 = vshrl.u32 %v4825, 7
    %v4827 = vsub.s32 %v193, %v4826
    %v4828 = vrot.slane %v4783, %v4827
    %v4829 = vlaneseq
    %v4830 = vshrl.u32 %v4829, 7
    %v4831 = vsub.s32 %v193, %v4830
    %v4832 = vrot.slane %v4786, %v4831
    %v4833 = vlaneseq
    %v4834 = vshrl.u32 %v4833, 7
    %v4835 = vsub.s32 %v193, %v4834
    %v4836 = vrot.slane %v4789, %v4835
    %v4837 = vlaneseq
    %v4838 = vshrl.u32 %v4837, 7
    %v4839 = vsub.s32 %v193, %v4838
    %v4840 = vrot.slane %v4792, %v4839
    %v4841 = vlaneseq
    %v4842 = vshrl.u32 %v4841, 7
    %v4843 = vsub.s32 %v193, %v4842
    %v4844 = vrot.slane %v4795, %v4843
    %v4845 = vlaneseq
    %v4846 = vshrl.u32 %v4845, 7
    %v4847 = vsub.s32 %v193, %v4846
    %v4848 = vrot.slane %v4798, %v4847
    %v4849 = vlaneseq
    %v4850 = vshrl.u32 %v4849, 7
    %v4851 = vsub.s32 %v193, %v4850
    %v4852 = vrot.slane %v4801, %v4851
    %v4853 = vlaneseq
    %v4854 = vshrl.u32 %v4853, 7
    %v4855 = vsub.s32 %v193, %v4854
    %v4856 = vrot.slane %v4804, %v4855
    %v4857 = vlaneseq
    %v4858 = vshrl.u32 %v4857, 7
    %v4859 = vsub.s32 %v193, %v4858
    %v4860 = vrot.slane %v4807, %v4859
    %v4861 = vlaneseq
    %v4862 = vshrl.u32 %v4861, 7
    %v4863 = vsub.s32 %v193, %v4862
    %v4864 = vrot.slane %v4810, %v4863
    %v4865 = vlaneseq
    %v4866 = vshrl.u32 %v4865, 7
    %v4867 = vsub.s32 %v193, %v4866
    %v4868 = vrot.slane %v4813, %v4867
    %v4869 = vlaneseq
    %v4870 = vshrl.u32 %v4869, 7
    %v4871 = vsub.s32 %v193, %v4870
    %v4872 = vrot.slane %v4816, %v4871
    %v4873 = vsel %vm247, %v4824, %v4820
    %v4874 = vsel %vm1800, %v4828, %v4873
    %v4875 = vsel %vm1802, %v4832, %v4874
    %v4876 = vsel %vm1804, %v4836, %v4875
    %v4877 = vsel %vm1806, %v4840, %v4876
    %v4878 = vsel %vm1808, %v4844, %v4877
    %v4879 = vsel %vm247, %v4852, %v4848
    %v4880 = vsel %vm1800, %v4856, %v4879
    %v4881 = vsel %vm1802, %v4860, %v4880
    %v4882 = vsel %vm1804, %v4864, %v4881
    %v4883 = vsel %vm1806, %v4868, %v4882
    %v4884 = vsel %vm1808, %v4872, %v4883
    %v4887 = vsel %vm1162, %v4878, inf
    %4888 = vmin.xlane.f32.xlu0 %v4887
    %v4889 = vpop.xlane.xlu0 %4888
    %v4890 = vsel %vm1162, %v4884, inf
    %4891 = vmin.xlane.f32.xlu0 %v4890
    %v4892 = vpop.xlane.xlu0 %4891
    %v4893 = vlaneseq
    %v4894 = vshrl.u32 %v4893, 7
    %v4895 = vsub.s32 0, %v4894
    %v4896 = vrot.slane %v4346, %v4895
    %s4898 = sor.u32 256, 6
    %4899 = vbcast.lane.b32.xlu0 %v4896, %s4898
    %v4900 = vpop.permute.xlu0 %4899
    %v4901 = vlaneseq
    %v4902 = vshrl.u32 %v4901, 7
    %v4903 = vsub.s32 1, %v4902
    %v4904 = vrot.slane %v4346, %v4903
    %s4906 = sor.u32 256, 6
    %4907 = vbcast.lane.b32.xlu0 %v4904, %s4906
    %v4908 = vpop.permute.xlu0 %4907
    %v4911 = vadd.f32 %v4657, %v4900
    %v4912 = vadd.f32 %v4660, %v4908
    %4913 = vset.pattern.permute.xlu0 113
    %4914 = vperm.xlu0 %4913, %v4346
    %v4915 = vpop.permute.xlu0 %4914
    %v4916 = vlaneseq
    %v4917 = vshrl.u32 %v4916, 7
    %v4918 = vsub.s32 0, %v4917
    %v4919 = vrot.slane %v4915, %v4918
    %v4920 = vlaneseq
    %v4921 = vshrl.u32 %v4920, 7
    %v4922 = vsub.s32 1, %v4921
    %v4923 = vrot.slane %v4915, %v4922
    %v4926 = vadd.f32 %v71, %v4919
    %v4927 = vadd.f32 %v72, %v4923
    %4930 = vset.pattern.permute.xlu0 0
    %4931 = vperm.xlu0 %4930, %v4926
    %v4932 = vpop.permute.xlu0 %4931
    %4933 = vset.pattern.permute.xlu0 0
    %4934 = vperm.xlu0 %4933, %v4927
    %v4935 = vpop.permute.xlu0 %4934
    %v4936 = vlaneseq
    %v4937 = vshrl.u32 %v4936, 7
    %v4938 = vsub.s32 %v193, %v4937
    %v4939 = vrot.slane %v4932, %v4938
    %v4940 = vlaneseq
    %v4941 = vshrl.u32 %v4940, 7
    %v4942 = vsub.s32 %v193, %v4941
    %v4943 = vrot.slane %v4935, %v4942
    %v4944 = vsel %vm247, %v4943, %v4939
    %v4946 = vsel %vm250, %v4944, -inf
    %4947 = vmax.xlane.f32.xlu0 %v4946
    %v4948 = vpop.xlane.xlu0 %4947
    %v4950 = vlaneseq
    %v4951 = vshrl.u32 %v4950, 7
    %v4952 = vsub.s32 0, %v4951
    %v4953 = vrot.slane %v4948, %v4952
    %v4954 = vlaneseq
    %v4955 = vshrl.u32 %v4954, 7
    %v4956 = vsub.s32 1, %v4955
    %v4957 = vrot.slane %v4948, %v4956
    %v4960 = vsub.f32 %v4926, %v4953
    %v4961 = vsub.f32 %v4927, %v4957
    %v4962 = vmul.f32 %v4960, 1.442695
    %v4963 = vpow.pop %v4962
    %v4964 = vmul.f32 %v4961, 1.442695
    %v4965 = vpow.pop %v4964
    %4968 = vset.pattern.permute.xlu0 0
    %4969 = vperm.xlu0 %4968, %v4963
    %v4970 = vpop.permute.xlu0 %4969
    %4971 = vset.pattern.permute.xlu0 0
    %4972 = vperm.xlu0 %4971, %v4965
    %v4973 = vpop.permute.xlu0 %4972
    %v4974 = vlaneseq
    %v4975 = vshrl.u32 %v4974, 7
    %v4976 = vsub.s32 %v193, %v4975
    %v4977 = vrot.slane %v4970, %v4976
    %v4978 = vlaneseq
    %v4979 = vshrl.u32 %v4978, 7
    %v4980 = vsub.s32 %v193, %v4979
    %v4981 = vrot.slane %v4973, %v4980
    %v4982 = vsel %vm247, %v4981, %v4977
    %v4984 = vsel %vm250, %v4982, 0.0
    %4985 = vadd.xlane.f32.xlu0 %v4984
    %v4986 = vpop.xlane.xlu0 %4985
    %v4987 = vrcp.pop %v4986
    %v4989 = vlaneseq
    %v4990 = vshrl.u32 %v4989, 7
    %v4991 = vsub.s32 0, %v4990
    %v4992 = vrot.slane %v4987, %v4991
    %v4993 = vlaneseq
    %v4994 = vshrl.u32 %v4993, 7
    %v4995 = vsub.s32 1, %v4994
    %v4996 = vrot.slane %v4987, %v4995
    %v4999 = vmul.f32 %v4963, %v4992
    %v5000 = vmul.f32 %v4965, %v4996
    %5002 = vset.pattern.permute.xlu0 0
    %5003 = vperm.xlu0 %5002, %v4999
    %v5004 = vpop.permute.xlu0 %5003
    %5007 = vset.pattern.permute.xlu0 0
    %5008 = vperm.xlu0 %5007, %v5000
    %v5009 = vpop.permute.xlu0 %5008
    %v5011 = vmul.f32 %v5004, %v51
    %v5012 = vmul.f32 %v5009, %v52
    %v5013 = vsel %vm60, %v5011, 0.0
    %v5014 = vrot.slane %v5013, 4
    %v5015 = vadd.f32 %v5013, %v5014
    %v5016 = vrot.slane %v5015, 2
    %v5017 = vadd.f32 %v5015, %v5016
    %v5018 = vrot.slane %v5017, 1
    %v5019 = vadd.f32 %v5017, %v5018
    %v5020 = vsel %vm60, %v5012, 0.0
    %v5021 = vrot.slane %v5020, 4
    %v5022 = vadd.f32 %v5020, %v5021
    %v5023 = vrot.slane %v5022, 2
    %v5024 = vadd.f32 %v5022, %v5023
    %v5025 = vrot.slane %v5024, 1
    %v5026 = vadd.f32 %v5024, %v5025
    %v5029 = vsel %vm247, %v5026, %v5019
    %5030 = vrot.lane.b32.xlu0 %v5029, 32
    %v5031 = vpop.permute.xlu0 %5030
    %5033 = vrot.lane.b32.xlu0 %v4263, 32
    %v5034 = vpop.permute.xlu0 %5033
    %v5036 = vsel %vm60, %v3584, %v5031
    %v5037 = vsel %vm343, %v5036, %v5034
    %v5039 = vsel %vm349, %v5037, 0
    %5041 = vmatprep.subr.mxu0 0.0
    %5042 = vmatpush1.msra.mxu0 %v3065
    %5043 = vmatprep.subr.mxu0 0.0
    %5044 = vmatpush1.msra.mxu0 %v3066
    %5045 = vmatprep.subr.mxu0 0.0
    %5046 = vmatpush1.msra.mxu0 %v3067
    %5047 = vmatprep.subr.mxu0 0.0
    %5048 = vmatpush1.msra.mxu0 %v3068
    %5049 = vmatprep.subr.mxu0 0.0
    %5050 = vmatpush1.msra.mxu0 %v3069
    %5051 = vmatprep.subr.mxu0 0.0
    %5052 = vmatpush1.msra.mxu0 %v3070
    %5053 = vmatprep.subr.mxu0 0.0
    %5054 = vmatpush1.msra.mxu0 %v3071
    %5055 = vmatprep.subr.mxu0 0.0
    %5056 = vmatpush1.msra.mxu0 %v3072
    %5057 = vmatprep.subr.mxu0 0.0
    %5058 = vmatpush1.msra.mxu0 %v3073
    %5059 = vmatprep.subr.mxu0 0.0
    %5060 = vmatpush1.msra.mxu0 %v3074
    %5061 = vmatprep.subr.mxu0 0.0
    %5062 = vmatpush1.msra.mxu0 %v3075
    %5063 = vmatprep.subr.mxu0 0.0
    %5064 = vmatpush1.msra.mxu0 %v3076
    %5065 = vmatprep.subr.mxu0 0.0
    %5066 = vmatpush1.msra.mxu0 0.0
    %5067 = vmatprep.subr.mxu0 0.0
    %5068 = vmatpush1.msra.mxu0 0.0
    %5069 = vmatprep.subr.mxu0 0.0
    %5070 = vmatpush1.msra.mxu0 0.0
    %5071 = vmatprep.subr.mxu0 0.0
    %5072 = vmatpush1.msra.mxu0 0.0
    %5073 = vmatprep.subr.mxu0 0.0
    %5074 = vmatpush1.msra.mxu0 0.0
    %5075 = vmatprep.subr.mxu0 0.0
    %5076 = vmatpush1.msra.mxu0 0.0
    %5077 = vmatprep.subr.mxu0 0.0
    %5078 = vmatpush1.msra.mxu0 0.0
    %5079 = vmatprep.subr.mxu0 0.0
    %5080 = vmatpush1.msra.mxu0 0.0
    %5081 = vmatprep.subr.mxu0 0.0
    %5082 = vmatpush1.msra.mxu0 0.0
    %5083 = vmatprep.subr.mxu0 0.0
    %5084 = vmatpush1.msra.mxu0 0.0
    %5085 = vmatprep.subr.mxu0 0.0
    %5086 = vmatpush1.msra.mxu0 0.0
    %5087 = vmatprep.subr.mxu0 0.0
    %5088 = vmatpush1.msra.mxu0 0.0
    %5089 = vmatprep.subr.mxu0 0.0
    %5090 = vmatpush1.msra.mxu0 0.0
    %5091 = vmatprep.subr.mxu0 0.0
    %5092 = vmatpush1.msra.mxu0 0.0
    %5093 = vmatprep.subr.mxu0 0.0
    %5094 = vmatpush1.msra.mxu0 0.0
    %5095 = vmatprep.subr.mxu0 0.0
    %5096 = vmatpush1.msra.mxu0 0.0
    %5097 = vmatprep.subr.mxu0 0.0
    %5098 = vmatpush1.msra.mxu0 0.0
    %5099 = vmatprep.subr.mxu0 0.0
    %5100 = vmatpush1.msra.mxu0 0.0
    %5101 = vmatprep.subr.mxu0 0.0
    %5102 = vmatpush1.msra.mxu0 0.0
    %5103 = vmatprep.subr.mxu0 0.0
    %5104 = vmatpush1.msra.mxu0 0.0
    %5105 = vmatprep.mubr.f32.mxu0 0.0
    %5106 = vmatmul.mubr.f32.gmra.mrb[0].mxu0 %v5039
    %v5107 = vpop.f32.mrb[0].mxu0
    %v5108 = vadd.f32 %v3217, %v5107
    %v5109 = vpop.f32.mrb[0].mxu0
    %5110 = vdwg.mxu0
    %v5111 = vxor.u32 %v5108, 2147483648
    %v5112 = vmul.f32 %v5111, 1.442695
    %v5113 = vpow.pop %v5112
    %v5114 = vadd.f32 %v5113, 1.0
    %v5115 = vrcp.pop %v5114
    %v5116 = vmul.f32 1.0, %v5115
    %5118 = vrot.lane.b32.xlu0 %v5108, 32
    %v5119 = vpop.permute.xlu0 %5118
    %v5121 = vmul.f32 %v5116, %v5119
    %5123 = vrot.lane.b32.xlu0 %v5121, 64
    %v5124 = vpop.permute.xlu0 %5123
    %v5126 = vadd.f32 %v5108, %v5124
    %v5127 = vtanh.pop %v5126
    %v5128 = vsub.f32 1.0, %v5116
    %5130 = vrot.lane.b32.xlu0 %v5127, 96
    %v5131 = vpop.permute.xlu0 %5130
    %v5133 = vmul.f32 %v5128, %v5131
    %v5134 = vmul.f32 %v5116, %v4263
    %v5135 = vadd.f32 %v5133, %v5134
    %vm5136 = vcmp.gt.f32.partialorder %v5135, 0.0
    %v5137 = vmul.f32 %v5135, 1.442695
    %v5138 = vpow.pop %v5137
    %v5139 = vsub.f32 %v5138, 1.0
    %v5140 = vmul.f32 %v5139, 1.6732632
    %v5141 = vsel %vm5136, %v5135, %v5140
    %v5142 = vmul.f32 %v5141, 1.050701
    %5144 = vrot.lane.b32.xlu0 %v5135, 96
    %v5145 = vpop.permute.xlu0 %5144
    %v5147 = vsel %vm60, %v5145, %v5142
    %v5149 = vsel %vm343, %v5147, 0
    %5151 = vmatprep.subr.mxu0 0.0
    %5152 = vmatpush1.msra.mxu0 %v3078
    %5153 = vmatprep.subr.mxu0 0.0
    %5154 = vmatpush1.msra.mxu0 %v3079
    %5155 = vmatprep.subr.mxu0 0.0
    %5156 = vmatpush1.msra.mxu0 %v3080
    %5157 = vmatprep.subr.mxu0 0.0
    %5158 = vmatpush1.msra.mxu0 %v3081
    %5159 = vmatprep.subr.mxu0 0.0
    %5160 = vmatpush1.msra.mxu0 %v3082
    %5161 = vmatprep.subr.mxu0 0.0
    %5162 = vmatpush1.msra.mxu0 %v3083
    %5163 = vmatprep.subr.mxu0 0.0
    %5164 = vmatpush1.msra.mxu0 %v3084
    %5165 = vmatprep.subr.mxu0 0.0
    %5166 = vmatpush1.msra.mxu0 %v3085
    %5167 = vmatprep.subr.mxu0 0.0
    %5168 = vmatpush1.msra.mxu0 0.0
    %5169 = vmatprep.subr.mxu0 0.0
    %5170 = vmatpush1.msra.mxu0 0.0
    %5171 = vmatprep.subr.mxu0 0.0
    %5172 = vmatpush1.msra.mxu0 0.0
    %5173 = vmatprep.subr.mxu0 0.0
    %5174 = vmatpush1.msra.mxu0 0.0
    %5175 = vmatprep.subr.mxu0 0.0
    %5176 = vmatpush1.msra.mxu0 0.0
    %5177 = vmatprep.subr.mxu0 0.0
    %5178 = vmatpush1.msra.mxu0 0.0
    %5179 = vmatprep.subr.mxu0 0.0
    %5180 = vmatpush1.msra.mxu0 0.0
    %5181 = vmatprep.subr.mxu0 0.0
    %5182 = vmatpush1.msra.mxu0 0.0
    %5183 = vmatprep.subr.mxu0 0.0
    %5184 = vmatpush1.msra.mxu0 0.0
    %5185 = vmatprep.subr.mxu0 0.0
    %5186 = vmatpush1.msra.mxu0 0.0
    %5187 = vmatprep.subr.mxu0 0.0
    %5188 = vmatpush1.msra.mxu0 0.0
    %5189 = vmatprep.subr.mxu0 0.0
    %5190 = vmatpush1.msra.mxu0 0.0
    %5191 = vmatprep.subr.mxu0 0.0
    %5192 = vmatpush1.msra.mxu0 0.0
    %5193 = vmatprep.subr.mxu0 0.0
    %5194 = vmatpush1.msra.mxu0 0.0
    %5195 = vmatprep.subr.mxu0 0.0
    %5196 = vmatpush1.msra.mxu0 0.0
    %5197 = vmatprep.subr.mxu0 0.0
    %5198 = vmatpush1.msra.mxu0 0.0
    %5199 = vmatprep.subr.mxu0 0.0
    %5200 = vmatpush1.msra.mxu0 0.0
    %5201 = vmatprep.subr.mxu0 0.0
    %5202 = vmatpush1.msra.mxu0 0.0
    %5203 = vmatprep.subr.mxu0 0.0
    %5204 = vmatpush1.msra.mxu0 0.0
    %5205 = vmatprep.subr.mxu0 0.0
    %5206 = vmatpush1.msra.mxu0 0.0
    %5207 = vmatprep.subr.mxu0 0.0
    %5208 = vmatpush1.msra.mxu0 0.0
    %5209 = vmatprep.subr.mxu0 0.0
    %5210 = vmatpush1.msra.mxu0 0.0
    %5211 = vmatprep.subr.mxu0 0.0
    %5212 = vmatpush1.msra.mxu0 0.0
    %5213 = vmatprep.subr.mxu0 0.0
    %5214 = vmatpush1.msra.mxu0 0.0
    %5215 = vmatprep.mubr.f32.mxu0 0.0
    %5216 = vmatmul.mubr.f32.gmra.mrb[0].mxu0 %v5149
    %v5217 = vpop.f32.mrb[0].mxu0
    %v5218 = vadd.f32 %v3331, %v5217
    %v5219 = vpop.f32.mrb[0].mxu0
    %5220 = vdwg.mxu0
    %v5221 = vsel %vm540, %v5218, -inf
    %5222 = vmax.xlane.f32.xlu0 %v5221
    %v5223 = vpop.xlane.xlu0 %5222
    %v5224 = vsub.f32 %v5218, %v5223
    %v5225 = vmul.f32 %v5224, 1.442695
    %v5226 = vpow.pop %v5225
    %v5227 = vsel %vm540, %v5226, 0.0
    %5228 = vadd.xlane.f32.xlu0 %v5227
    %v5229 = vpop.xlane.xlu0 %5228
    %v5230 = vlog2.pop %v5229
    %v5231 = vmul.f32 %v5230, 0.6931472
    %v5232 = vadd.f32 %v5231, %v5223
    %v5233 = vsub.f32 %v5218, %v5232
    %v5236 = vunpack.c.l.s4 1966171168
    %v5237 = vunpack.c.0.s8 %v5236
    %v5238 = vlaneseq
    %v5239 = vshrl.u32 %v5238, 7
    %v5240 = vsub.s32 %v5237, %v5239
    %v5241 = vrot.slane %v5218, %v5240
    %v5242 = vcombine.high %v5241, %v5241
    %v5244 = vunpack.c.l.s4 1966171168
    %v5245 = vunpack.c.0.s8 %v5244
    %v5246 = vlaneseq
    %v5247 = vshrl.u32 %v5246, 7
    %v5248 = vsub.s32 %v5245, %v5247
    %v5249 = vrot.slane %v5241, %v5248
    %v5251 = vunpack.c.l.s4 1966171168
    %v5252 = vunpack.c.0.s8 %v5251
    %v5253 = vlaneseq
    %v5254 = vshrl.u32 %v5253, 7
    %v5255 = vsub.s32 %v5252, %v5254
    %v5256 = vrot.slane %v5242, %v5255
    %v5257 = vlaneseq
    %v5258 = vshrl.u32 %v5257, 7
    %v5259 = vsub.s32 0, %v5258
    %v5260 = vrot.slane %v5249, %v5259
    %v5261 = vlaneseq
    %v5262 = vshrl.u32 %v5261, 7
    %v5263 = vsub.s32 0, %v5262
    %v5264 = vrot.slane %v5256, %v5263
    %v5267 = vadd.f32 %v5260, %v590
    %v5268 = vadd.f32 %v5264, %v592
    %vm5269 = vcmp.gt.f32.partialorder %v5267, 0.0
    %vm5270 = vcmp.gt.f32.partialorder %v5268, 0.0
    %v5271 = vmul.f32 %v5267, 1.442695
    %v5272 = vpow.pop %v5271
    %v5273 = vmul.f32 %v5268, 1.442695
    %v5274 = vpow.pop %v5273
    %v5275 = vsub.f32 %v5272, 1.0
    %v5276 = vsub.f32 %v5274, 1.0
    %v5277 = vmul.f32 %v5275, 1.6732632
    %v5278 = vmul.f32 %v5276, 1.6732632
    %v5279 = vsel %vm5269, %v5267, %v5277
    %v5280 = vsel %vm5270, %v5268, %v5278
    %v5281 = vmul.f32 %v5279, 1.050701
    %v5282 = vmul.f32 %v5280, 1.050701
    %v5283 = vmul.f32 %v5281, %v3473
    %v5284 = vmul.f32 %v5282, %v3473
    %5287 = vrot.lane.b32.xlu0 %v5283, 115
    %v5288 = vpop.permute.xlu0 %5287
    %5289 = vrot.lane.b32.xlu0 %v5284, 115
    %v5290 = vpop.permute.xlu0 %5289
    %v5293 = vsel %vm629, %v5288, 0.0
    %5294 = vadd.xlane.f32.xlu0 %v5293
    %v5295 = vpop.xlane.xlu0 %5294
    %v5296 = vsel %vm629, %v5290, 0.0
    %5297 = vadd.xlane.f32.xlu0 %v5296
    %v5298 = vpop.xlane.xlu0 %5297
    %v5299 = vadd.f32 %v5295, %v3495
    %v5300 = vadd.f32 %v5298, %v3495
    %v5303 = vlaneseq
    %v5304 = vshrl.u32 %v5303, 7
    %v5305 = vsub.s32 %v193, %v5304
    %v5306 = vrot.slane %v5299, %v5305
    %v5307 = vlaneseq
    %v5308 = vshrl.u32 %v5307, 7
    %v5309 = vsub.s32 %v193, %v5308
    %v5310 = vrot.slane %v5300, %v5309
    %v5311 = vsel %vm247, %v5310, %v5306
    %5313 = vrot.lane.b32.xlu0 %v5218, 3
    %v5314 = vpop.permute.xlu0 %5313
    %v5316 = vsel %vm658, %v5311, %v5314
    %v5317 = vsel %vm660, %v5316, -inf
    %5318 = vmax.xlane.f32.xlu0 %v5317
    %v5319 = vpop.xlane.xlu0 %5318
    %v5320 = vsub.f32 %v5316, %v5319
    %v5321 = vmul.f32 %v5320, 1.442695
    %v5322 = vpow.pop %v5321
    %v5323 = vsel %vm660, %v5322, 0.0
    %5324 = vadd.xlane.f32.xlu0 %v5323
    %v5325 = vpop.xlane.xlu0 %5324
    %v5326 = vlog2.pop %v5325
    %v5327 = vmul.f32 %v5326, 0.6931472
    %v5328 = vadd.f32 %v5327, %v5319
    %v5329 = vsub.f32 %v5316, %v5328
    %v5330 = vadd.f32 %v4911, %v4465
    %v5331 = vadd.f32 %v4911, %v4472
    %v5332 = vadd.f32 %v4911, %v4479
    %v5333 = vadd.f32 %v4911, %v4486
    %v5334 = vadd.f32 %v4911, %v4493
    %v5335 = vadd.f32 %v4911, %v4500
    %v5336 = vadd.f32 %v4911, %v4507
    %v5337 = vadd.f32 %v4912, %v4465
    %v5338 = vadd.f32 %v4912, %v4472
    %v5339 = vadd.f32 %v4912, %v4479
    %v5340 = vadd.f32 %v4912, %v4486
    %v5341 = vadd.f32 %v4912, %v4493
    %v5342 = vadd.f32 %v4912, %v4500
    %v5343 = vadd.f32 %v4912, %v4507
    %5358 = vset.pattern.permute.xlu0 0
    %5359 = vperm.xlu0 %5358, %v5330
    %v5360 = vpop.permute.xlu0 %5359
    %5361 = vset.pattern.permute.xlu0 0
    %5362 = vperm.xlu0 %5361, %v5331
    %v5363 = vpop.permute.xlu0 %5362
    %5364 = vset.pattern.permute.xlu0 0
    %5365 = vperm.xlu0 %5364, %v5332
    %v5366 = vpop.permute.xlu0 %5365
    %5367 = vset.pattern.permute.xlu0 0
    %5368 = vperm.xlu0 %5367, %v5333
    %v5369 = vpop.permute.xlu0 %5368
    %5370 = vset.pattern.permute.xlu0 0
    %5371 = vperm.xlu0 %5370, %v5334
    %v5372 = vpop.permute.xlu0 %5371
    %5373 = vset.pattern.permute.xlu0 0
    %5374 = vperm.xlu0 %5373, %v5335
    %v5375 = vpop.permute.xlu0 %5374
    %5376 = vset.pattern.permute.xlu0 0
    %5377 = vperm.xlu0 %5376, %v5336
    %v5378 = vpop.permute.xlu0 %5377
    %5379 = vset.pattern.permute.xlu0 0
    %5380 = vperm.xlu0 %5379, %v5337
    %v5381 = vpop.permute.xlu0 %5380
    %5382 = vset.pattern.permute.xlu0 0
    %5383 = vperm.xlu0 %5382, %v5338
    %v5384 = vpop.permute.xlu0 %5383
    %5385 = vset.pattern.permute.xlu0 0
    %5386 = vperm.xlu0 %5385, %v5339
    %v5387 = vpop.permute.xlu0 %5386
    %5388 = vset.pattern.permute.xlu0 0
    %5389 = vperm.xlu0 %5388, %v5340
    %v5390 = vpop.permute.xlu0 %5389
    %5391 = vset.pattern.permute.xlu0 0
    %5392 = vperm.xlu0 %5391, %v5341
    %v5393 = vpop.permute.xlu0 %5392
    %5394 = vset.pattern.permute.xlu0 0
    %5395 = vperm.xlu0 %5394, %v5342
    %v5396 = vpop.permute.xlu0 %5395
    %5397 = vset.pattern.permute.xlu0 0
    %5398 = vperm.xlu0 %5397, %v5343
    %v5399 = vpop.permute.xlu0 %5398
    %v5400 = vlaneseq
    %v5401 = vshrl.u32 %v5400, 7
    %v5402 = vsub.s32 %v193, %v5401
    %v5403 = vrot.slane %v5360, %v5402
    %v5404 = vlaneseq
    %v5405 = vshrl.u32 %v5404, 7
    %v5406 = vsub.s32 %v193, %v5405
    %v5407 = vrot.slane %v5363, %v5406
    %v5408 = vlaneseq
    %v5409 = vshrl.u32 %v5408, 7
    %v5410 = vsub.s32 %v193, %v5409
    %v5411 = vrot.slane %v5366, %v5410
    %v5412 = vlaneseq
    %v5413 = vshrl.u32 %v5412, 7
    %v5414 = vsub.s32 %v193, %v5413
    %v5415 = vrot.slane %v5369, %v5414
    %v5416 = vlaneseq
    %v5417 = vshrl.u32 %v5416, 7
    %v5418 = vsub.s32 %v193, %v5417
    %v5419 = vrot.slane %v5372, %v5418
    %v5420 = vlaneseq
    %v5421 = vshrl.u32 %v5420, 7
    %v5422 = vsub.s32 %v193, %v5421
    %v5423 = vrot.slane %v5375, %v5422
    %v5424 = vlaneseq
    %v5425 = vshrl.u32 %v5424, 7
    %v5426 = vsub.s32 %v193, %v5425
    %v5427 = vrot.slane %v5378, %v5426
    %v5428 = vlaneseq
    %v5429 = vshrl.u32 %v5428, 7
    %v5430 = vsub.s32 %v193, %v5429
    %v5431 = vrot.slane %v5381, %v5430
    %v5432 = vlaneseq
    %v5433 = vshrl.u32 %v5432, 7
    %v5434 = vsub.s32 %v193, %v5433
    %v5435 = vrot.slane %v5384, %v5434
    %v5436 = vlaneseq
    %v5437 = vshrl.u32 %v5436, 7
    %v5438 = vsub.s32 %v193, %v5437
    %v5439 = vrot.slane %v5387, %v5438
    %v5440 = vlaneseq
    %v5441 = vshrl.u32 %v5440, 7
    %v5442 = vsub.s32 %v193, %v5441
    %v5443 = vrot.slane %v5390, %v5442
    %v5444 = vlaneseq
    %v5445 = vshrl.u32 %v5444, 7
    %v5446 = vsub.s32 %v193, %v5445
    %v5447 = vrot.slane %v5393, %v5446
    %v5448 = vlaneseq
    %v5449 = vshrl.u32 %v5448, 7
    %v5450 = vsub.s32 %v193, %v5449
    %v5451 = vrot.slane %v5396, %v5450
    %v5452 = vlaneseq
    %v5453 = vshrl.u32 %v5452, 7
    %v5454 = vsub.s32 %v193, %v5453
    %v5455 = vrot.slane %v5399, %v5454
    %v5456 = vsel %vm247, %v5407, %v5403
    %v5457 = vsel %vm1800, %v5411, %v5456
    %v5458 = vsel %vm1802, %v5415, %v5457
    %v5459 = vsel %vm1804, %v5419, %v5458
    %v5460 = vsel %vm1806, %v5423, %v5459
    %v5461 = vsel %vm1808, %v5427, %v5460
    %v5462 = vsel %vm247, %v5435, %v5431
    %v5463 = vsel %vm1800, %v5439, %v5462
    %v5464 = vsel %vm1802, %v5443, %v5463
    %v5465 = vsel %vm1804, %v5447, %v5464
    %v5466 = vsel %vm1806, %v5451, %v5465
    %v5467 = vsel %vm1808, %v5455, %v5466
    %v5470 = vsel %vm1162, %v5461, -inf
    %5471 = vmax.xlane.f32.xlu0 %v5470
    %v5472 = vpop.xlane.xlu0 %5471
    %v5473 = vsel %vm1162, %v5467, -inf
    %5474 = vmax.xlane.f32.xlu0 %v5473
    %v5475 = vpop.xlane.xlu0 %5474
    %v5478 = vlaneseq
    %v5479 = vshrl.u32 %v5478, 7
    %v5480 = vsub.s32 0, %v5479
    %v5481 = vrot.slane %v5472, %v5480
    %v5482 = vlaneseq
    %v5483 = vshrl.u32 %v5482, 7
    %v5484 = vsub.s32 1, %v5483
    %v5485 = vrot.slane %v5472, %v5484
    %v5486 = vlaneseq
    %v5487 = vshrl.u32 %v5486, 7
    %v5488 = vsub.s32 2, %v5487
    %v5489 = vrot.slane %v5472, %v5488
    %v5490 = vlaneseq
    %v5491 = vshrl.u32 %v5490, 7
    %v5492 = vsub.s32 3, %v5491
    %v5493 = vrot.slane %v5472, %v5492
    %v5494 = vlaneseq
    %v5495 = vshrl.u32 %v5494, 7
    %v5496 = vsub.s32 4, %v5495
    %v5497 = vrot.slane %v5472, %v5496
    %v5498 = vlaneseq
    %v5499 = vshrl.u32 %v5498, 7
    %v5500 = vsub.s32 5, %v5499
    %v5501 = vrot.slane %v5472, %v5500
    %v5502 = vlaneseq
    %v5503 = vshrl.u32 %v5502, 7
    %v5504 = vsub.s32 6, %v5503
    %v5505 = vrot.slane %v5472, %v5504
    %v5506 = vlaneseq
    %v5507 = vshrl.u32 %v5506, 7
    %v5508 = vsub.s32 0, %v5507
    %v5509 = vrot.slane %v5475, %v5508
    %v5510 = vlaneseq
    %v5511 = vshrl.u32 %v5510, 7
    %v5512 = vsub.s32 1, %v5511
    %v5513 = vrot.slane %v5475, %v5512
    %v5514 = vlaneseq
    %v5515 = vshrl.u32 %v5514, 7
    %v5516 = vsub.s32 2, %v5515
    %v5517 = vrot.slane %v5475, %v5516
    %v5518 = vlaneseq
    %v5519 = vshrl.u32 %v5518, 7
    %v5520 = vsub.s32 3, %v5519
    %v5521 = vrot.slane %v5475, %v5520
    %v5522 = vlaneseq
    %v5523 = vshrl.u32 %v5522, 7
    %v5524 = vsub.s32 4, %v5523
    %v5525 = vrot.slane %v5475, %v5524
    %v5526 = vlaneseq
    %v5527 = vshrl.u32 %v5526, 7
    %v5528 = vsub.s32 5, %v5527
    %v5529 = vrot.slane %v5475, %v5528
    %v5530 = vlaneseq
    %v5531 = vshrl.u32 %v5530, 7
    %v5532 = vsub.s32 6, %v5531
    %v5533 = vrot.slane %v5475, %v5532
    %vm5548 = vcmp.eq.f32.partialorder %v5330, %v5481
    %vm5549 = vcmp.eq.f32.partialorder %v5331, %v5485
    %vm5550 = vcmp.eq.f32.partialorder %v5332, %v5489
    %vm5551 = vcmp.eq.f32.partialorder %v5333, %v5493
    %vm5552 = vcmp.eq.f32.partialorder %v5334, %v5497
    %vm5553 = vcmp.eq.f32.partialorder %v5335, %v5501
    %vm5554 = vcmp.eq.f32.partialorder %v5336, %v5505
    %vm5555 = vcmp.eq.f32.partialorder %v5337, %v5509
    %vm5556 = vcmp.eq.f32.partialorder %v5338, %v5513
    %vm5557 = vcmp.eq.f32.partialorder %v5339, %v5517
    %vm5558 = vcmp.eq.f32.partialorder %v5340, %v5521
    %vm5559 = vcmp.eq.f32.partialorder %v5341, %v5525
    %vm5560 = vcmp.eq.f32.partialorder %v5342, %v5529
    %vm5561 = vcmp.eq.f32.partialorder %v5343, %v5533
    %v5562 = vsel %vm5548, %v1913, 7.0
    %v5563 = vsel %vm5549, %v1913, 7.0
    %v5564 = vsel %vm5550, %v1913, 7.0
    %v5565 = vsel %vm5551, %v1913, 7.0
    %v5566 = vsel %vm5552, %v1913, 7.0
    %v5567 = vsel %vm5553, %v1913, 7.0
    %v5568 = vsel %vm5554, %v1913, 7.0
    %v5569 = vsel %vm5555, %v1913, 7.0
    %v5570 = vsel %vm5556, %v1913, 7.0
    %v5571 = vsel %vm5557, %v1913, 7.0
    %v5572 = vsel %vm5558, %v1913, 7.0
    %v5573 = vsel %vm5559, %v1913, 7.0
    %v5574 = vsel %vm5560, %v1913, 7.0
    %v5575 = vsel %vm5561, %v1913, 7.0
    %5590 = vset.pattern.permute.xlu0 0
    %5591 = vperm.xlu0 %5590, %v5562
    %v5592 = vpop.permute.xlu0 %5591
    %5593 = vset.pattern.permute.xlu0 0
    %5594 = vperm.xlu0 %5593, %v5563
    %v5595 = vpop.permute.xlu0 %5594
    %5596 = vset.pattern.permute.xlu0 0
    %5597 = vperm.xlu0 %5596, %v5564
    %v5598 = vpop.permute.xlu0 %5597
    %5599 = vset.pattern.permute.xlu0 0
    %5600 = vperm.xlu0 %5599, %v5565
    %v5601 = vpop.permute.xlu0 %5600
    %5602 = vset.pattern.permute.xlu0 0
    %5603 = vperm.xlu0 %5602, %v5566
    %v5604 = vpop.permute.xlu0 %5603
    %5605 = vset.pattern.permute.xlu0 0
    %5606 = vperm.xlu0 %5605, %v5567
    %v5607 = vpop.permute.xlu0 %5606
    %5608 = vset.pattern.permute.xlu0 0
    %5609 = vperm.xlu0 %5608, %v5568
    %v5610 = vpop.permute.xlu0 %5609
    %5611 = vset.pattern.permute.xlu0 0
    %5612 = vperm.xlu0 %5611, %v5569
    %v5613 = vpop.permute.xlu0 %5612
    %5614 = vset.pattern.permute.xlu0 0
    %5615 = vperm.xlu0 %5614, %v5570
    %v5616 = vpop.permute.xlu0 %5615
    %5617 = vset.pattern.permute.xlu0 0
    %5618 = vperm.xlu0 %5617, %v5571
    %v5619 = vpop.permute.xlu0 %5618
    %5620 = vset.pattern.permute.xlu0 0
    %5621 = vperm.xlu0 %5620, %v5572
    %v5622 = vpop.permute.xlu0 %5621
    %5623 = vset.pattern.permute.xlu0 0
    %5624 = vperm.xlu0 %5623, %v5573
    %v5625 = vpop.permute.xlu0 %5624
    %5626 = vset.pattern.permute.xlu0 0
    %5627 = vperm.xlu0 %5626, %v5574
    %v5628 = vpop.permute.xlu0 %5627
    %5629 = vset.pattern.permute.xlu0 0
    %5630 = vperm.xlu0 %5629, %v5575
    %v5631 = vpop.permute.xlu0 %5630
    %v5632 = vlaneseq
    %v5633 = vshrl.u32 %v5632, 7
    %v5634 = vsub.s32 %v193, %v5633
    %v5635 = vrot.slane %v5592, %v5634
    %v5636 = vlaneseq
    %v5637 = vshrl.u32 %v5636, 7
    %v5638 = vsub.s32 %v193, %v5637
    %v5639 = vrot.slane %v5595, %v5638
    %v5640 = vlaneseq
    %v5641 = vshrl.u32 %v5640, 7
    %v5642 = vsub.s32 %v193, %v5641
    %v5643 = vrot.slane %v5598, %v5642
    %v5644 = vlaneseq
    %v5645 = vshrl.u32 %v5644, 7
    %v5646 = vsub.s32 %v193, %v5645
    %v5647 = vrot.slane %v5601, %v5646
    %v5648 = vlaneseq
    %v5649 = vshrl.u32 %v5648, 7
    %v5650 = vsub.s32 %v193, %v5649
    %v5651 = vrot.slane %v5604, %v5650
    %v5652 = vlaneseq
    %v5653 = vshrl.u32 %v5652, 7
    %v5654 = vsub.s32 %v193, %v5653
    %v5655 = vrot.slane %v5607, %v5654
    %v5656 = vlaneseq
    %v5657 = vshrl.u32 %v5656, 7
    %v5658 = vsub.s32 %v193, %v5657
    %v5659 = vrot.slane %v5610, %v5658
    %v5660 = vlaneseq
    %v5661 = vshrl.u32 %v5660, 7
    %v5662 = vsub.s32 %v193, %v5661
    %v5663 = vrot.slane %v5613, %v5662
    %v5664 = vlaneseq
    %v5665 = vshrl.u32 %v5664, 7
    %v5666 = vsub.s32 %v193, %v5665
    %v5667 = vrot.slane %v5616, %v5666
    %v5668 = vlaneseq
    %v5669 = vshrl.u32 %v5668, 7
    %v5670 = vsub.s32 %v193, %v5669
    %v5671 = vrot.slane %v5619, %v5670
    %v5672 = vlaneseq
    %v5673 = vshrl.u32 %v5672, 7
    %v5674 = vsub.s32 %v193, %v5673
    %v5675 = vrot.slane %v5622, %v5674
    %v5676 = vlaneseq
    %v5677 = vshrl.u32 %v5676, 7
    %v5678 = vsub.s32 %v193, %v5677
    %v5679 = vrot.slane %v5625, %v5678
    %v5680 = vlaneseq
    %v5681 = vshrl.u32 %v5680, 7
    %v5682 = vsub.s32 %v193, %v5681
    %v5683 = vrot.slane %v5628, %v5682
    %v5684 = vlaneseq
    %v5685 = vshrl.u32 %v5684, 7
    %v5686 = vsub.s32 %v193, %v5685
    %v5687 = vrot.slane %v5631, %v5686
    %v5688 = vsel %vm247, %v5639, %v5635
    %v5689 = vsel %vm1800, %v5643, %v5688
    %v5690 = vsel %vm1802, %v5647, %v5689
    %v5691 = vsel %vm1804, %v5651, %v5690
    %v5692 = vsel %vm1806, %v5655, %v5691
    %v5693 = vsel %vm1808, %v5659, %v5692
    %v5694 = vsel %vm247, %v5667, %v5663
    %v5695 = vsel %vm1800, %v5671, %v5694
    %v5696 = vsel %vm1802, %v5675, %v5695
    %v5697 = vsel %vm1804, %v5679, %v5696
    %v5698 = vsel %vm1806, %v5683, %v5697
    %v5699 = vsel %vm1808, %v5687, %v5698
    %v5702 = vsel %vm1162, %v5693, inf
    %5703 = vmin.xlane.f32.xlu0 %v5702
    %v5704 = vpop.xlane.xlu0 %5703
    %v5705 = vsel %vm1162, %v5699, inf
    %5706 = vmin.xlane.f32.xlu0 %v5705
    %v5707 = vpop.xlane.xlu0 %5706
    %v5708 = vlaneseq
    %v5709 = vshrl.u32 %v5708, 7
    %v5710 = vsub.s32 0, %v5709
    %v5711 = vrot.slane %v5218, %v5710
    %s5713 = sor.u32 256, 6
    %5714 = vbcast.lane.b32.xlu0 %v5711, %s5713
    %v5715 = vpop.permute.xlu0 %5714
    %v5716 = vlaneseq
    %v5717 = vshrl.u32 %v5716, 7
    %v5718 = vsub.s32 1, %v5717
    %v5719 = vrot.slane %v5218, %v5718
    %s5721 = sor.u32 256, 6
    %5722 = vbcast.lane.b32.xlu0 %v5719, %s5721
    %v5723 = vpop.permute.xlu0 %5722
    %v5726 = vadd.f32 %v5472, %v5715
    %v5727 = vadd.f32 %v5475, %v5723
    %v5729 = vrot.slane %v3905, 6
    %v5732 = vrot.slane %v4361, 4
    %v5735 = vrot.slane %v5233, 2
    %v5737 = vsel %vm2905, %v3417, %v5729
    %v5738 = vsel %vm2907, %v5737, %v5732
    %v5739 = vsel %vm2909, %v5738, %v5735
    %v5741 = vrot.slane %v4001, 6
    %v5744 = vrot.slane %v4457, 4
    %v5747 = vrot.slane %v5329, 2
    %v5749 = vsel %vm2905, %v3527, %v5741
    %v5750 = vsel %vm2907, %v5749, %v5744
    %v5751 = vsel %vm2909, %v5750, %v5747
    %v5752 = vrot.slane %v3890, 6
    %v5754 = vrot.slane %v4346, 4
    %v5756 = vrot.slane %v5218, 2
    %v5758 = vsel %vm2905, %v3402, %v5752
    %v5759 = vsel %vm2907, %v5758, %v5754
    %v5760 = vsel %vm2909, %v5759, %v5756
    %v5763 = vlaneseq
    %v5764 = vshrl.u32 %v5763, 7
    %v5765 = vsub.s32 %v193, %v5764
    %v5766 = vrot.slane %v4017, %v5765
    %v5767 = vlaneseq
    %v5768 = vshrl.u32 %v5767, 7
    %v5769 = vsub.s32 %v193, %v5768
    %v5770 = vrot.slane %v4020, %v5769
    %v5771 = vsel %vm1802, %v5770, %v5766
    %v5775 = vlaneseq
    %v5776 = vshrl.u32 %v5775, 7
    %v5777 = vsub.s32 %v193, %v5776
    %v5778 = vrot.slane %v4889, %v5777
    %v5779 = vlaneseq
    %v5780 = vshrl.u32 %v5779, 7
    %v5781 = vsub.s32 %v193, %v5780
    %v5782 = vrot.slane %v4892, %v5781
    %v5783 = vsel %vm1806, %v5782, %v5778
    %v5787 = vlaneseq
    %v5788 = vshrl.u32 %v5787, 7
    %v5789 = vsub.s32 %v193, %v5788
    %v5790 = vrot.slane %v5704, %v5789
    %v5791 = vlaneseq
    %v5792 = vshrl.u32 %v5791, 7
    %v5793 = vsub.s32 %v193, %v5792
    %v5794 = vrot.slane %v5707, %v5793
    %v5795 = vsel %vm2966, %v5794, %v5790
    %v5797 = vsel %vm2905, 0.0, %v5771
    %v5798 = vsel %vm2907, %v5797, %v5783
    %v5799 = vsel %vm2909, %v5798, %v5795
    %5802 = vset.pattern.permute.xlu0 0
    %5803 = vperm.xlu0 %5802, %v4039
    %v5804 = vpop.permute.xlu0 %5803
    %5805 = vset.pattern.permute.xlu0 0
    %5806 = vperm.xlu0 %5805, %v4040
    %v5807 = vpop.permute.xlu0 %5806
    %v5808 = vlaneseq
    %v5809 = vshrl.u32 %v5808, 7
    %v5810 = vsub.s32 %v193, %v5809
    %v5811 = vrot.slane %v5804, %v5810
    %v5812 = vlaneseq
    %v5813 = vshrl.u32 %v5812, 7
    %v5814 = vsub.s32 %v193, %v5813
    %v5815 = vrot.slane %v5807, %v5814
    %v5816 = vsel %vm1802, %v5815, %v5811
    %5820 = vset.pattern.permute.xlu0 0
    %5821 = vperm.xlu0 %5820, %v4911
    %v5822 = vpop.permute.xlu0 %5821
    %5823 = vset.pattern.permute.xlu0 0
    %5824 = vperm.xlu0 %5823, %v4912
    %v5825 = vpop.permute.xlu0 %5824
    %v5826 = vlaneseq
    %v5827 = vshrl.u32 %v5826, 7
    %v5828 = vsub.s32 %v193, %v5827
    %v5829 = vrot.slane %v5822, %v5828
    %v5830 = vlaneseq
    %v5831 = vshrl.u32 %v5830, 7
    %v5832 = vsub.s32 %v193, %v5831
    %v5833 = vrot.slane %v5825, %v5832
    %v5834 = vsel %vm1806, %v5833, %v5829
    %5838 = vset.pattern.permute.xlu0 0
    %5839 = vperm.xlu0 %5838, %v5726
    %v5840 = vpop.permute.xlu0 %5839
    %5841 = vset.pattern.permute.xlu0 0
    %5842 = vperm.xlu0 %5841, %v5727
    %v5843 = vpop.permute.xlu0 %5842
    %v5844 = vlaneseq
    %v5845 = vshrl.u32 %v5844, 7
    %v5846 = vsub.s32 %v193, %v5845
    %v5847 = vrot.slane %v5840, %v5846
    %v5848 = vlaneseq
    %v5849 = vshrl.u32 %v5848, 7
    %v5850 = vsub.s32 %v193, %v5849
    %v5851 = vrot.slane %v5843, %v5850
    %v5852 = vsel %vm2966, %v5851, %v5847
    %v5854 = vsel %vm2905, %v191, %v5816
    %v5855 = vsel %vm2907, %v5854, %v5834
    %v5856 = vsel %vm2909, %v5855, %v5852
    %v5857 = vsel %vm2905, %v3536, 0.0
    %v5858 = vsel %vm2907, %v5857, 0.0
    %v5859 = vsel %vm2909, %v5858, 0.0
    %5861 = vrot.lane.b32.xlu0 %v5751, 6
    %v5862 = vpop.permute.xlu0 %5861
    %5865 = vrot.lane.b32.xlu0 %v5760, 9
    %v5866 = vpop.permute.xlu0 %5865
    %5869 = vrot.lane.b32.xlu0 %v5799, 22
    %v5870 = vpop.permute.xlu0 %5869
    %5873 = vrot.lane.b32.xlu0 %v5856, 29
    %v5874 = vpop.permute.xlu0 %5873
    %5877 = vrot.lane.b32.xlu0 %v5859, 36
    %v5878 = vpop.permute.xlu0 %5877
    %v5880 = vsel %vm3052, %v5739, %v5862
    %v5881 = vsel %vm3054, %v5880, %v5866
    %v5882 = vsel %vm3056, %v5881, %v5870
    %v5883 = vsel %vm3058, %v5882, %v5874
    %v5884 = vsel %vm3060, %v5883, %v5878
    %v5885 = vsel %vm3062, %v5884, 0.0
    %5886 = vst [vmem:[%s3 + $0x8] sm:$0xff] %v5885
    // Predicated region
    $region22: #{one_crf_forward.1} parent=1 // pred_check
      _
    $region23: #{one_crf_forward.1} parent=1 // pred_check_branch
      %5888 = sbr.rel (0) target = $region25
    $region24: #{one_crf_forward.1} parent=1 // pred_region
      _
    $region25: #{one_crf_forward.1} parent=1 // pred_fallthru
      _
    // Predicated region
    $region26: #{one_crf_forward.1} parent=1 // pred_check
      _
    $region27: #{one_crf_forward.1} parent=1 // pred_check_branch
      %5890 = sbr.rel (0) target = $region29
    $region28: #{one_crf_forward.1} parent=1 // pred_region
      _
    $region29: #{one_crf_forward.1} parent=1 // pred_fallthru
      _
    %5891 = vsyncpa [#allocation3], 1
    %5892 = vsyncpa [#allocation5], 1

</llo_original>
